<compile_context>
chip_gen: v7x
topology: tpu7x:2x2x1
jax: 0.10.0
libtpu: 0.0.40
codegen_flags: <defaults>
</compile_context>

<pallas_src>
import jax
import jax.numpy as jnp
from jax.experimental import pallas as pl
from jax.experimental.pallas import tpu as pltpu

NZ = 100
EPS = 1e-5


def round_up(x, m):
    return ((x + m - 1) // m) * m


def pick_tm(m, cap):
    """Largest row tile <= cap that divides m (m is always a multiple of 8)."""
    if m <= cap:
        return m
    t = cap - (cap % 8)
    while m % t:
        t -= 8
    return max(t, 8)


# ----------------------------- Pallas kernels ------------------------------

def gemm_stats_kernel(a_ref, b_ref, y_ref, ps_ref, sq_ref):
    # Full-K, full-Cout tile: one MXU pass, BN statistics fused in the epilogue.
    acc = jnp.dot(a_ref[...], b_ref[...], preferred_element_type=jnp.float32)
    y_ref[...] = acc.astype(y_ref.dtype)
    s = jnp.sum(acc, axis=0, keepdims=True)          # (1, C) partial sum
    q = jnp.sum(acc * acc, axis=0, keepdims=True)    # (1, C) partial sum of squares
    ps_ref[...] = jnp.broadcast_to(s, ps_ref.shape)
    sq_ref[...] = jnp.broadcast_to(q, sq_ref.shape)


def gemm_tanh_kernel(a_ref, b_ref, y_ref):
    # Last layer: tanh fused into the GEMM epilogue on the lane-padded output.
    acc = jnp.dot(a_ref[...], b_ref[...], preferred_element_type=jnp.float32)
    y_ref[...] = jnp.tanh(acc)


def bn_relu_kernel(x_ref, scale_ref, shift_ref, o_ref):
    x = x_ref[...].astype(jnp.float32)
    y = x * scale_ref[...] + shift_ref[...]
    o_ref[...] = jnp.maximum(y, 0.0).astype(o_ref.dtype)


# ------------------------------ kernel wrappers -----------------------------

def gemm_grouped_stats(a, b, tm):
    """Per-group GEMM with fused per-column sum / sum-of-squares.

    a: (G, Mg, K) bf16, b: (G, K, C) bf16.
    Returns y (G*Mg, C) bf16 and psum/psq (G*ni*8, C) f32, where each 8-row
    block of psum/psq holds one grid cell's per-column partial sums
    (broadcast over the 8 sublanes).
    """
    G, Mg, K = a.shape
    _, _, C = b.shape
    ni = Mg // tm
    a_spec = pl.BlockSpec((None, tm, K), lambda g, i: (g, i, 0))
    b_spec = pl.BlockSpec((None, K, C), lambda g, i: (g, 0, 0))
    y_spec = pl.BlockSpec((tm, C), lambda g, i: (g * ni + i, 0))
    st_spec = pl.BlockSpec((8, C), lambda g, i: (g * ni + i, 0))
    return pl.pallas_call(
        gemm_stats_kernel,
        out_shape=(jax.ShapeDtypeStruct((G * Mg, C), jnp.bfloat16),
                   jax.ShapeDtypeStruct((G * ni * 8, C), jnp.float32),
                   jax.ShapeDtypeStruct((G * ni * 8, C), jnp.float32)),
        grid=(G, ni),
        in_specs=[a_spec, b_spec],
        out_specs=(y_spec, st_spec, st_spec),
        compiler_params=pltpu.CompilerParams(
            dimension_semantics=("parallel", "parallel")),
    )(a, b)


def gemm_grouped_tanh(a, b, tm):
    """Per-group GEMM with fused tanh.  a: (G, Mg, K) bf16, b: (G, K, C) bf16."""
    G, Mg, K = a.shape
    _, _, C = b.shape
    ni = Mg // tm
    return pl.pallas_call(
        gemm_tanh_kernel,
        out_shape=jax.ShapeDtypeStruct((G * Mg, C), jnp.float32),
        grid=(G, ni),
        in_specs=[pl.BlockSpec((None, tm, K), lambda g, i: (g, i, 0)),
                  pl.BlockSpec((None, K, C), lambda g, i: (g, 0, 0))],
        out_specs=pl.BlockSpec((tm, C), lambda g, i: (g * ni + i, 0)),
        compiler_params=pltpu.CompilerParams(
            dimension_semantics=("parallel", "parallel")),
    )(a, b)


def bn_relu(y, scale, shift):
    """Per-channel affine + ReLU on a (M, C) slab, bf16 in / bf16 out."""
    M, C = y.shape
    tm = pick_tm(M, 1024)
    return pl.pallas_call(
        bn_relu_kernel,
        out_shape=jax.ShapeDtypeStruct((M, C), jnp.bfloat16),
        grid=(M // tm,),
        in_specs=[pl.BlockSpec((tm, C), lambda i: (i, 0)),
                  pl.BlockSpec((1, C), lambda i: (0, 0)),
                  pl.BlockSpec((1, C), lambda i: (0, 0))],
        out_specs=pl.BlockSpec((tm, C), lambda i: (i, 0)),
        compiler_params=pltpu.CompilerParams(
            dimension_semantics=("parallel",)),
    )(y, scale.reshape(1, C), shift.reshape(1, C))


# ----------------------------- glue (XLA side) ------------------------------

def bn_scale_shift(psum, psq, count, gamma, beta):
    """Reduce the per-tile partial sums to per-channel BN scale/shift."""
    C = psum.shape[-1]
    s = jnp.sum(psum.reshape(-1, 8, C)[:, 0, :], axis=0)
    q = jnp.sum(psq.reshape(-1, 8, C)[:, 0, :], axis=0)
    mean = s / count
    var = jnp.maximum(q / count - mean * mean, 0.0)   # clamp E[x^2]-m^2 cancellation
    scale = gamma * jax.lax.rsqrt(var + EPS)
    shift = beta - mean * scale
    return scale.astype(jnp.float32), shift.astype(jnp.float32)


def convT_first_inputs(z, w):
    """ConvTranspose2d(nz, C, 4, 1, 0) on a 1x1 input as 16 per-pixel GEMMs.

    z: (N, nz) f32.  w: (nz, Cout, 4, 4) (PyTorch ConvTranspose2d layout).
    Returns A (16, Mp, Kp) bf16 (z replicated per output pixel, zero-padded),
            B (16, Kp, Cout) bf16 with B[oy*4+ox] = w[:, :, oy, ox], and Mp.
    """
    N, K = z.shape
    Cout = w.shape[1]
    Mp, Kp = round_up(N, 8), round_up(K, 128)
    zp = jnp.zeros((Mp, Kp), jnp.float32).at[:N, :K].set(z)
    A = jnp.broadcast_to(zp[None], (16, Mp, Kp)).astype(jnp.bfloat16)
    wp = jnp.transpose(w, (2, 3, 0, 1)).reshape(16, K, Cout)
    B = jnp.zeros((16, Kp, Cout), jnp.float32).at[:, :K, :].set(wp)
    return A, B.astype(jnp.bfloat16), Mp


def convT_s2_inputs(x, w):
    """Stride-2 ConvTranspose2d(4, 2, 1) as 4 stride-1 sub-GEMMs (stride-phase).

    x: (N, H, W, Cin) bf16, w: (Cin, Cout, 4, 4).
    Returns A (4, N*H*W, 4*Cin) bf16, B (4, 4*Cin, Cout) bf16 with
    out[:, 2q+py, 2r+px, :] = (A[g] @ B[g]) at row (n, q, r), g = 2*py + px.
    """
    N, H, W, Cin = x.shape
    xp = jnp.pad(x, ((0, 0), (1, 1), (1, 1), (0, 0)))
    a_list, b_list = [], []
    for py in range(2):
        for px in range(2):
            taps, rows = [], []
            for dy in range(2):
                for dx in range(2):
                    taps.append(xp[:, py + dy:py + dy + H, px + dx:px + dx + W, :])
                    kh = (3 - 2 * dy) if py == 0 else (2 - 2 * dy)
                    kw = (3 - 2 * dx) if px == 0 else (2 - 2 * dx)
                    rows.append(w[:, :, kh, kw])            # (Cin, Cout)
            a_list.append(jnp.concatenate(taps, axis=-1).reshape(N * H * W, 4 * Cin))
            b_list.append(jnp.concatenate(rows, axis=0))    # (4*Cin, Cout)
    A = jnp.stack(a_list, axis=0).astype(jnp.bfloat16)
    B = jnp.stack(b_list, axis=0).astype(jnp.bfloat16)
    return A, B


def interleave_phases(y_flat, N, H, W, C):
    """y_flat: (4*N*H*W, C) rows ordered (py, px, n, q, r) -> (N, 2H, 2W, C)."""
    y = y_flat.reshape(2, 2, N, H, W, C)
    y = jnp.transpose(y, (2, 3, 0, 4, 1, 5))
    return y.reshape(N, 2 * H, 2 * W, C)


# --------------------------------- model ------------------------------------

CH = [(NZ, 512), (512, 256), (256, 128), (128, 64), (64, 3)]


def init_params(key):
    ks = jax.random.split(key, len(CH))
    return {
        "w": [jax.random.normal(ks[i], (cin, cout, 4, 4), jnp.float32) * 0.02
              for i, (cin, cout) in enumerate(CH)],
        # BatchNorm2d defaults: weight (gamma) = 1, bias (beta) = 0
        "gamma": [jnp.ones((c,), jnp.float32) for c in (512, 256, 128, 64)],
        "beta": [jnp.zeros((c,), jnp.float32) for c in (512, 256, 128, 64)],
    }


@jax.jit
def generator_forward(z_nchw, params):
    N = z_nchw.shape[0]
    z = z_nchw.reshape(N, NZ).astype(jnp.float32)

    # --- Layer 1: ConvT(nz, 512, 4, 1, 0): 1x1 -> 4x4, BN, ReLU ---
    A, B, Mp = convT_first_inputs(z, params["w"][0])
    y, ps, sq = gemm_grouped_stats(A, B, tm=Mp)              # (16*Mp, 512)
    scale, shift = bn_scale_shift(ps, sq, N * 16,
                                  params["gamma"][0], params["beta"][0])
    y = bn_relu(y, scale, shift)
    # rows ordered (oy*4+ox, n_padded) -> NHWC
    x = jnp.transpose(y.reshape(16, Mp, 512)[:, :N], (1, 0, 2)).reshape(N, 4, 4, 512)

    # --- Layers 2-4: stride-2 ConvT + BN + ReLU ---
    for li in range(1, 4):
        H, W, Cout = x.shape[1], x.shape[2], CH[li][1]
        A, B = convT_s2_inputs(x, params["w"][li])           # (4, N*H*W, 4*Cin)
        y, ps, sq = gemm_grouped_stats(A, B, tm=pick_tm(A.shape[1], 512))
        scale, shift = bn_scale_shift(ps, sq, y.shape[0],
                                      params["gamma"][li], params["beta"][li])
        y = bn_relu(y, scale, shift)                         # (N*2H*2W, Cout) bf16
        x = interleave_phases(y, N, H, W, Cout)              # (N, 2H, 2W, Cout)

    # --- Layer 5: stride-2 ConvT(64 -> 3) + tanh (Cout padded to 128 lanes) ---
    H, W = x.shape[1], x.shape[2]
    w5 = jnp.zeros((64, 128, 4, 4), jnp.float32).at[:, :3].set(params["w"][4])
    A, B = convT_s2_inputs(x, w5)
    y = gemm_grouped_tanh(A, B, tm=pick_tm(A.shape[1], 512)) # (N*4H*W, 128) f32
    out = interleave_phases(y[:, :3], N, H, W, 3)            # (N, 64, 64, 3)
    return jnp.transpose(out, (0, 3, 1, 2))                  # NCHW


if __name__ == "__main__":
    key = jax.random.PRNGKey(0)
    pkey, zkey = jax.random.split(key)
    params = init_params(pkey)
    z = jax.random.normal(zkey, (2, NZ, 1, 1), jnp.float32)   # (N, nz, 1, 1)

    out = generator_forward(z, params)
    out = jax.block_until_ready(out)

    assert out.shape == (2, 3, 64, 64), out.shape
    assert bool(jnp.all(jnp.isfinite(out)))
    assert bool(jnp.all(jnp.abs(out) <= 1.0 + 1e-6))          # tanh range
    print("KERNEL_OK")
</pallas_src>

<mosaic_0001>
module attributes {stable_mosaic.version = 11 : i64} {
  func.func @gemm_stats_kernel(%arg0: i32, %arg1: i32, %arg2: memref<1x8x128xbf16, #tpu.memory_space<vmem>>, %arg3: memref<1x128x512xbf16, #tpu.memory_space<vmem>>, %arg4: memref<8x512xbf16, #tpu.memory_space<vmem>>, %arg5: memref<8x512xf32, #tpu.memory_space<vmem>>, %arg6: memref<8x512xf32, #tpu.memory_space<vmem>>) attributes {dimension_semantics = [#tpu.dimension_semantics<parallel>, #tpu.dimension_semantics<parallel>], iteration_bounds = array<i64: 16, 1>, scalar_prefetch = 0 : i64, scratch_operands = 0 : i64, tpu.core_type = #tpu.core_type<tc>, window_params = [{transform_indices = @transform_0, window_bounds = array<i64: 1, 8, 128>}, {transform_indices = @transform_1, window_bounds = array<i64: 1, 128, 512>}, {transform_indices = @transform_2, window_bounds = array<i64: 8, 512>}, {transform_indices = @transform_3, window_bounds = array<i64: 8, 512>}, {transform_indices = @transform_4, window_bounds = array<i64: 8, 512>}]} {
    %c0 = arith.constant 0 : index
    %c0_0 = arith.constant 0 : index
    %c0_1 = arith.constant 0 : index
    %0 = vector.load %arg2[%c0, %c0_0, %c0_1] : memref<1x8x128xbf16, #tpu.memory_space<vmem>>, vector<1x8x128xbf16>
    %1 = vector.shape_cast %0 : vector<1x8x128xbf16> to vector<8x128xbf16>
    %c0_2 = arith.constant 0 : index
    %c0_3 = arith.constant 0 : index
    %c0_4 = arith.constant 0 : index
    %2 = vector.load %arg3[%c0_2, %c0_3, %c0_4] : memref<1x128x512xbf16, #tpu.memory_space<vmem>>, vector<1x128x512xbf16>
    %3 = vector.shape_cast %2 : vector<1x128x512xbf16> to vector<128x512xbf16>
    %cst = arith.constant dense<0.000000e+00> : vector<8x512xf32>
    %4 = tpu.matmul %1, %3, %cst {dimension_numbers = #tpu.dot_dimension_numbers<[1], [0], [0], [1], [0, 0, 1, 1], [], []>} : vector<8x128xbf16>, vector<128x512xbf16>, vector<8x512xf32> -> vector<8x512xf32>
    %5 = arith.truncf %4 : vector<8x512xf32> to vector<8x512xbf16>
    %c0_5 = arith.constant 0 : index
    %c0_6 = arith.constant 0 : index
    %6 = vector.load %arg4[%c0_5, %c0_6] : memref<8x512xbf16, #tpu.memory_space<vmem>>, vector<8x512xbf16>
    tpu.vector_store %arg4[%c0_5, %c0_6], %5 {strides = array<i32>} : memref<8x512xbf16, #tpu.memory_space<vmem>>, vector<8x512xbf16>,
    %cst_7 = arith.constant dense<0.000000e+00> : vector<512xf32>
    %7 = vector.multi_reduction <add>, %4, %cst_7 [0] : vector<8x512xf32> to vector<512xf32>
    %8 = vector.shape_cast %7 : vector<512xf32> to vector<1x512xf32>
    %9 = arith.mulf %4, %4 : vector<8x512xf32>
    %cst_8 = arith.constant dense<0.000000e+00> : vector<512xf32>
    %10 = vector.multi_reduction <add>, %9, %cst_8 [0] : vector<8x512xf32> to vector<512xf32>
    %11 = vector.shape_cast %10 : vector<512xf32> to vector<1x512xf32>
    %12 = vector.shape_cast %8 : vector<1x512xf32> to vector<1x512xf32>
    %13 = vector.broadcast %12 : vector<1x512xf32> to vector<8x512xf32>
    %c0_9 = arith.constant 0 : index
    %c0_10 = arith.constant 0 : index
    %14 = vector.load %arg5[%c0_9, %c0_10] : memref<8x512xf32, #tpu.memory_space<vmem>>, vector<8x512xf32>
    tpu.vector_store %arg5[%c0_9, %c0_10], %13 {strides = array<i32>} : memref<8x512xf32, #tpu.memory_space<vmem>>, vector<8x512xf32>,
    %15 = vector.shape_cast %11 : vector<1x512xf32> to vector<1x512xf32>
    %16 = vector.broadcast %15 : vector<1x512xf32> to vector<8x512xf32>
    %c0_11 = arith.constant 0 : index
    %c0_12 = arith.constant 0 : index
    %17 = vector.load %arg6[%c0_11, %c0_12] : memref<8x512xf32, #tpu.memory_space<vmem>>, vector<8x512xf32>
    tpu.vector_store %arg6[%c0_11, %c0_12], %16 {strides = array<i32>} : memref<8x512xf32, #tpu.memory_space<vmem>>, vector<8x512xf32>,
    return
  }
  func.func @transform_0(%arg0: i32, %arg1: i32) -> (i32, i32, i32) {
    %c0_i32 = arith.constant 0 : i32
    %c0_i32_0 = arith.constant 0 : i32
    return %arg0, %arg1, %c0_i32 : i32, i32, i32
  }
  func.func @transform_1(%arg0: i32, %arg1: i32) -> (i32, i32, i32) {
    %c0_i32 = arith.constant 0 : i32
    %c0_i32_0 = arith.constant 0 : i32
    %c0_i32_1 = arith.constant 0 : i32
    return %arg0, %c0_i32, %c0_i32_0 : i32, i32, i32
  }
  func.func @transform_2(%arg0: i32, %arg1: i32) -> (i32, i32) {
    %c1_i32 = arith.constant 1 : i32
    %0 = arith.muli %arg0, %c1_i32 : i32
    %1 = arith.addi %0, %arg1 : i32
    %c0_i32 = arith.constant 0 : i32
    %c0_i32_0 = arith.constant 0 : i32
    return %1, %c0_i32 : i32, i32
  }
  func.func @transform_3(%arg0: i32, %arg1: i32) -> (i32, i32) {
    %c1_i32 = arith.constant 1 : i32
    %0 = arith.muli %arg0, %c1_i32 : i32
    %1 = arith.addi %0, %arg1 : i32
    %c0_i32 = arith.constant 0 : i32
    %c0_i32_0 = arith.constant 0 : i32
    return %1, %c0_i32 : i32, i32
  }
  func.func @transform_4(%arg0: i32, %arg1: i32) -> (i32, i32) {
    %c1_i32 = arith.constant 1 : i32
    %0 = arith.muli %arg0, %c1_i32 : i32
    %1 = arith.addi %0, %arg1 : i32
    %c0_i32 = arith.constant 0 : i32
    %c0_i32_0 = arith.constant 0 : i32
    return %1, %c0_i32 : i32, i32
  }
}

module attributes {stable_mosaic.version = 11 : i64} {
  func.func @bn_relu_kernel(%arg0: i32, %arg1: memref<128x512xbf16, #tpu.memory_space<vmem>>, %arg2: memref<1x512xf32, #tpu.memory_space<vmem>>, %arg3: memref<1x512xf32, #tpu.memory_space<vmem>>, %arg4: memref<128x512xbf16, #tpu.memory_space<vmem>>) attributes {dimension_semantics = [#tpu.dimension_semantics<parallel>], iteration_bounds = array<i64: 1>, scalar_prefetch = 0 : i64, scratch_operands = 0 : i64, tpu.core_type = #tpu.core_type<tc>, window_params = [{transform_indices = @transform_0, window_bounds = array<i64: 128, 512>}, {pipeline_mode = #tpu.pipeline_mode<synchronous>, transform_indices = @transform_1, window_bounds = array<i64: 1, 512>}, {pipeline_mode = #tpu.pipeline_mode<synchronous>, transform_indices = @transform_2, window_bounds = array<i64: 1, 512>}, {transform_indices = @transform_3, window_bounds = array<i64: 128, 512>}]} {
    %c0 = arith.constant 0 : index
    %c0_0 = arith.constant 0 : index
    %0 = vector.load %arg1[%c0, %c0_0] : memref<128x512xbf16, #tpu.memory_space<vmem>>, vector<128x512xbf16>
    %1 = arith.extf %0 : vector<128x512xbf16> to vector<128x512xf32>
    %c0_1 = arith.constant 0 : index
    %c0_2 = arith.constant 0 : index
    %2 = vector.load %arg2[%c0_1, %c0_2] : memref<1x512xf32, #tpu.memory_space<vmem>>, vector<1x512xf32>
    %3 = vector.broadcast %2 : vector<1x512xf32> to vector<128x512xf32>
    %4 = arith.mulf %1, %3 : vector<128x512xf32>
    %c0_3 = arith.constant 0 : index
    %c0_4 = arith.constant 0 : index
    %5 = vector.load %arg3[%c0_3, %c0_4] : memref<1x512xf32, #tpu.memory_space<vmem>>, vector<1x512xf32>
    %6 = vector.broadcast %5 : vector<1x512xf32> to vector<128x512xf32>
    %7 = arith.addf %4, %6 : vector<128x512xf32>
    %cst = arith.constant 0.000000e+00 : f32
    %8 = vector.broadcast %cst : f32 to vector<128x512xf32>
    %9 = arith.maximumf %7, %8 : vector<128x512xf32>
    %10 = arith.truncf %9 : vector<128x512xf32> to vector<128x512xbf16>
    %c0_5 = arith.constant 0 : index
    %c0_6 = arith.constant 0 : index
    %11 = vector.load %arg4[%c0_5, %c0_6] : memref<128x512xbf16, #tpu.memory_space<vmem>>, vector<128x512xbf16>
    tpu.vector_store %arg4[%c0_5, %c0_6], %10 {strides = array<i32>} : memref<128x512xbf16, #tpu.memory_space<vmem>>, vector<128x512xbf16>,
    return
  }
  func.func @transform_0(%arg0: i32) -> (i32, i32) {
    %c0_i32 = arith.constant 0 : i32
    %c0_i32_0 = arith.constant 0 : i32
    return %arg0, %c0_i32 : i32, i32
  }
  func.func @transform_1(%arg0: i32) -> (i32, i32) {
    %c0_i32 = arith.constant 0 : i32
    %c0_i32_0 = arith.constant 0 : i32
    %c0_i32_1 = arith.constant 0 : i32
    return %c0_i32, %c0_i32_0 : i32, i32
  }
  func.func @transform_2(%arg0: i32) -> (i32, i32) {
    %c0_i32 = arith.constant 0 : i32
    %c0_i32_0 = arith.constant 0 : i32
    %c0_i32_1 = arith.constant 0 : i32
    return %c0_i32, %c0_i32_0 : i32, i32
  }
  func.func @transform_3(%arg0: i32) -> (i32, i32) {
    %c0_i32 = arith.constant 0 : i32
    %c0_i32_0 = arith.constant 0 : i32
    return %arg0, %c0_i32 : i32, i32
  }
}

module attributes {stable_mosaic.version = 11 : i64} {
  func.func @gemm_stats_kernel(%arg0: i32, %arg1: i32, %arg2: memref<1x32x2048xbf16, #tpu.memory_space<vmem>>, %arg3: memref<1x2048x256xbf16, #tpu.memory_space<vmem>>, %arg4: memref<32x256xbf16, #tpu.memory_space<vmem>>, %arg5: memref<8x256xf32, #tpu.memory_space<vmem>>, %arg6: memref<8x256xf32, #tpu.memory_space<vmem>>) attributes {dimension_semantics = [#tpu.dimension_semantics<parallel>, #tpu.dimension_semantics<parallel>], iteration_bounds = array<i64: 4, 1>, scalar_prefetch = 0 : i64, scratch_operands = 0 : i64, tpu.core_type = #tpu.core_type<tc>, window_params = [{transform_indices = @transform_0, window_bounds = array<i64: 1, 32, 2048>}, {transform_indices = @transform_1, window_bounds = array<i64: 1, 2048, 256>}, {transform_indices = @transform_2, window_bounds = array<i64: 32, 256>}, {transform_indices = @transform_3, window_bounds = array<i64: 8, 256>}, {transform_indices = @transform_4, window_bounds = array<i64: 8, 256>}]} {
    %c0 = arith.constant 0 : index
    %c0_0 = arith.constant 0 : index
    %c0_1 = arith.constant 0 : index
    %0 = vector.load %arg2[%c0, %c0_0, %c0_1] : memref<1x32x2048xbf16, #tpu.memory_space<vmem>>, vector<1x32x2048xbf16>
    %1 = vector.shape_cast %0 : vector<1x32x2048xbf16> to vector<32x2048xbf16>
    %c0_2 = arith.constant 0 : index
    %c0_3 = arith.constant 0 : index
    %c0_4 = arith.constant 0 : index
    %2 = vector.load %arg3[%c0_2, %c0_3, %c0_4] : memref<1x2048x256xbf16, #tpu.memory_space<vmem>>, vector<1x2048x256xbf16>
    %3 = vector.shape_cast %2 : vector<1x2048x256xbf16> to vector<2048x256xbf16>
    %cst = arith.constant dense<0.000000e+00> : vector<32x256xf32>
    %4 = tpu.matmul %1, %3, %cst {dimension_numbers = #tpu.dot_dimension_numbers<[1], [0], [0], [1], [0, 0, 1, 1], [], []>} : vector<32x2048xbf16>, vector<2048x256xbf16>, vector<32x256xf32> -> vector<32x256xf32>
    %5 = arith.truncf %4 : vector<32x256xf32> to vector<32x256xbf16>
    %c0_5 = arith.constant 0 : index
    %c0_6 = arith.constant 0 : index
    %6 = vector.load %arg4[%c0_5, %c0_6] : memref<32x256xbf16, #tpu.memory_space<vmem>>, vector<32x256xbf16>
    tpu.vector_store %arg4[%c0_5, %c0_6], %5 {strides = array<i32>} : memref<32x256xbf16, #tpu.memory_space<vmem>>, vector<32x256xbf16>,
    %cst_7 = arith.constant dense<0.000000e+00> : vector<256xf32>
    %7 = vector.multi_reduction <add>, %4, %cst_7 [0] : vector<32x256xf32> to vector<256xf32>
    %8 = vector.shape_cast %7 : vector<256xf32> to vector<1x256xf32>
    %9 = arith.mulf %4, %4 : vector<32x256xf32>
    %cst_8 = arith.constant dense<0.000000e+00> : vector<256xf32>
    %10 = vector.multi_reduction <add>, %9, %cst_8 [0] : vector<32x256xf32> to vector<256xf32>
    %11 = vector.shape_cast %10 : vector<256xf32> to vector<1x256xf32>
    %12 = vector.shape_cast %8 : vector<1x256xf32> to vector<1x256xf32>
    %13 = vector.broadcast %12 : vector<1x256xf32> to vector<8x256xf32>
    %c0_9 = arith.constant 0 : index
    %c0_10 = arith.constant 0 : index
    %14 = vector.load %arg5[%c0_9, %c0_10] : memref<8x256xf32, #tpu.memory_space<vmem>>, vector<8x256xf32>
    tpu.vector_store %arg5[%c0_9, %c0_10], %13 {strides = array<i32>} : memref<8x256xf32, #tpu.memory_space<vmem>>, vector<8x256xf32>,
    %15 = vector.shape_cast %11 : vector<1x256xf32> to vector<1x256xf32>
    %16 = vector.broadcast %15 : vector<1x256xf32> to vector<8x256xf32>
    %c0_11 = arith.constant 0 : index
    %c0_12 = arith.constant 0 : index
    %17 = vector.load %arg6[%c0_11, %c0_12] : memref<8x256xf32, #tpu.memory_space<vmem>>, vector<8x256xf32>
    tpu.vector_store %arg6[%c0_11, %c0_12], %16 {strides = array<i32>} : memref<8x256xf32, #tpu.memory_space<vmem>>, vector<8x256xf32>,
    return
  }
  func.func @transform_0(%arg0: i32, %arg1: i32) -> (i32, i32, i32) {
    %c0_i32 = arith.constant 0 : i32
    %c0_i32_0 = arith.constant 0 : i32
    return %arg0, %arg1, %c0_i32 : i32, i32, i32
  }
  func.func @transform_1(%arg0: i32, %arg1: i32) -> (i32, i32, i32) {
    %c0_i32 = arith.constant 0 : i32
    %c0_i32_0 = arith.constant 0 : i32
    %c0_i32_1 = arith.constant 0 : i32
    return %arg0, %c0_i32, %c0_i32_0 : i32, i32, i32
  }
  func.func @transform_2(%arg0: i32, %arg1: i32) -> (i32, i32) {
    %c1_i32 = arith.constant 1 : i32
    %0 = arith.muli %arg0, %c1_i32 : i32
    %1 = arith.addi %0, %arg1 : i32
    %c0_i32 = arith.constant 0 : i32
    %c0_i32_0 = arith.constant 0 : i32
    return %1, %c0_i32 : i32, i32
  }
  func.func @transform_3(%arg0: i32, %arg1: i32) -> (i32, i32) {
    %c1_i32 = arith.constant 1 : i32
    %0 = arith.muli %arg0, %c1_i32 : i32
    %1 = arith.addi %0, %arg1 : i32
    %c0_i32 = arith.constant 0 : i32
    %c0_i32_0 = arith.constant 0 : i32
    return %1, %c0_i32 : i32, i32
  }
  func.func @transform_4(%arg0: i32, %arg1: i32) -> (i32, i32) {
    %c1_i32 = arith.constant 1 : i32
    %0 = arith.muli %arg0, %c1_i32 : i32
    %1 = arith.addi %0, %arg1 : i32
    %c0_i32 = arith.constant 0 : i32
    %c0_i32_0 = arith.constant 0 : i32
    return %1, %c0_i32 : i32, i32
  }
}

module attributes {stable_mosaic.version = 11 : i64} {
  func.func @bn_relu_kernel(%arg0: i32, %arg1: memref<128x256xbf16, #tpu.memory_space<vmem>>, %arg2: memref<1x256xf32, #tpu.memory_space<vmem>>, %arg3: memref<1x256xf32, #tpu.memory_space<vmem>>, %arg4: memref<128x256xbf16, #tpu.memory_space<vmem>>) attributes {dimension_semantics = [#tpu.dimension_semantics<parallel>], iteration_bounds = array<i64: 1>, scalar_prefetch = 0 : i64, scratch_operands = 0 : i64, tpu.core_type = #tpu.core_type<tc>, window_params = [{transform_indices = @transform_0, window_bounds = array<i64: 128, 256>}, {pipeline_mode = #tpu.pipeline_mode<synchronous>, transform_indices = @transform_1, window_bounds = array<i64: 1, 256>}, {pipeline_mode = #tpu.pipeline_mode<synchronous>, transform_indices = @transform_2, window_bounds = array<i64: 1, 256>}, {transform_indices = @transform_3, window_bounds = array<i64: 128, 256>}]} {
    %c0 = arith.constant 0 : index
    %c0_0 = arith.constant 0 : index
    %0 = vector.load %arg1[%c0, %c0_0] : memref<128x256xbf16, #tpu.memory_space<vmem>>, vector<128x256xbf16>
    %1 = arith.extf %0 : vector<128x256xbf16> to vector<128x256xf32>
    %c0_1 = arith.constant 0 : index
    %c0_2 = arith.constant 0 : index
    %2 = vector.load %arg2[%c0_1, %c0_2] : memref<1x256xf32, #tpu.memory_space<vmem>>, vector<1x256xf32>
    %3 = vector.broadcast %2 : vector<1x256xf32> to vector<128x256xf32>
    %4 = arith.mulf %1, %3 : vector<128x256xf32>
    %c0_3 = arith.constant 0 : index
    %c0_4 = arith.constant 0 : index
    %5 = vector.load %arg3[%c0_3, %c0_4] : memref<1x256xf32, #tpu.memory_space<vmem>>, vector<1x256xf32>
    %6 = vector.broadcast %5 : vector<1x256xf32> to vector<128x256xf32>
    %7 = arith.addf %4, %6 : vector<128x256xf32>
    %cst = arith.constant 0.000000e+00 : f32
    %8 = vector.broadcast %cst : f32 to vector<128x256xf32>
    %9 = arith.maximumf %7, %8 : vector<128x256xf32>
    %10 = arith.truncf %9 : vector<128x256xf32> to vector<128x256xbf16>
    %c0_5 = arith.constant 0 : index
    %c0_6 = arith.constant 0 : index
    %11 = vector.load %arg4[%c0_5, %c0_6] : memref<128x256xbf16, #tpu.memory_space<vmem>>, vector<128x256xbf16>
    tpu.vector_store %arg4[%c0_5, %c0_6], %10 {strides = array<i32>} : memref<128x256xbf16, #tpu.memory_space<vmem>>, vector<128x256xbf16>,
    return
  }
  func.func @transform_0(%arg0: i32) -> (i32, i32) {
    %c0_i32 = arith.constant 0 : i32
    %c0_i32_0 = arith.constant 0 : i32
    return %arg0, %c0_i32 : i32, i32
  }
  func.func @transform_1(%arg0: i32) -> (i32, i32) {
    %c0_i32 = arith.constant 0 : i32
    %c0_i32_0 = arith.constant 0 : i32
    %c0_i32_1 = arith.constant 0 : i32
    return %c0_i32, %c0_i32_0 : i32, i32
  }
  func.func @transform_2(%arg0: i32) -> (i32, i32) {
    %c0_i32 = arith.constant 0 : i32
    %c0_i32_0 = arith.constant 0 : i32
    %c0_i32_1 = arith.constant 0 : i32
    return %c0_i32, %c0_i32_0 : i32, i32
  }
  func.func @transform_3(%arg0: i32) -> (i32, i32) {
    %c0_i32 = arith.constant 0 : i32
    %c0_i32_0 = arith.constant 0 : i32
    return %arg0, %c0_i32 : i32, i32
  }
}

module attributes {stable_mosaic.version = 11 : i64} {
  func.func @gemm_stats_kernel(%arg0: i32, %arg1: i32, %arg2: memref<1x128x1024xbf16, #tpu.memory_space<vmem>>, %arg3: memref<1x1024x128xbf16, #tpu.memory_space<vmem>>, %arg4: memref<128x128xbf16, #tpu.memory_space<vmem>>, %arg5: memref<8x128xf32, #tpu.memory_space<vmem>>, %arg6: memref<8x128xf32, #tpu.memory_space<vmem>>) attributes {dimension_semantics = [#tpu.dimension_semantics<parallel>, #tpu.dimension_semantics<parallel>], iteration_bounds = array<i64: 4, 1>, scalar_prefetch = 0 : i64, scratch_operands = 0 : i64, tpu.core_type = #tpu.core_type<tc>, window_params = [{transform_indices = @transform_0, window_bounds = array<i64: 1, 128, 1024>}, {transform_indices = @transform_1, window_bounds = array<i64: 1, 1024, 128>}, {transform_indices = @transform_2, window_bounds = array<i64: 128, 128>}, {transform_indices = @transform_3, window_bounds = array<i64: 8, 128>}, {transform_indices = @transform_4, window_bounds = array<i64: 8, 128>}]} {
    %c0 = arith.constant 0 : index
    %c0_0 = arith.constant 0 : index
    %c0_1 = arith.constant 0 : index
    %0 = vector.load %arg2[%c0, %c0_0, %c0_1] : memref<1x128x1024xbf16, #tpu.memory_space<vmem>>, vector<1x128x1024xbf16>
    %1 = vector.shape_cast %0 : vector<1x128x1024xbf16> to vector<128x1024xbf16>
    %c0_2 = arith.constant 0 : index
    %c0_3 = arith.constant 0 : index
    %c0_4 = arith.constant 0 : index
    %2 = vector.load %arg3[%c0_2, %c0_3, %c0_4] : memref<1x1024x128xbf16, #tpu.memory_space<vmem>>, vector<1x1024x128xbf16>
    %3 = vector.shape_cast %2 : vector<1x1024x128xbf16> to vector<1024x128xbf16>
    %cst = arith.constant dense<0.000000e+00> : vector<128x128xf32>
    %4 = tpu.matmul %1, %3, %cst {dimension_numbers = #tpu.dot_dimension_numbers<[1], [0], [0], [1], [0, 0, 1, 1], [], []>} : vector<128x1024xbf16>, vector<1024x128xbf16>, vector<128x128xf32> -> vector<128x128xf32>
    %5 = arith.truncf %4 : vector<128x128xf32> to vector<128x128xbf16>
    %c0_5 = arith.constant 0 : index
    %c0_6 = arith.constant 0 : index
    %6 = vector.load %arg4[%c0_5, %c0_6] : memref<128x128xbf16, #tpu.memory_space<vmem>>, vector<128x128xbf16>
    tpu.vector_store %arg4[%c0_5, %c0_6], %5 {strides = array<i32>} : memref<128x128xbf16, #tpu.memory_space<vmem>>, vector<128x128xbf16>,
    %cst_7 = arith.constant dense<0.000000e+00> : vector<128xf32>
    %7 = vector.multi_reduction <add>, %4, %cst_7 [0] : vector<128x128xf32> to vector<128xf32>
    %8 = vector.shape_cast %7 : vector<128xf32> to vector<1x128xf32>
    %9 = arith.mulf %4, %4 : vector<128x128xf32>
    %cst_8 = arith.constant dense<0.000000e+00> : vector<128xf32>
    %10 = vector.multi_reduction <add>, %9, %cst_8 [0] : vector<128x128xf32> to vector<128xf32>
    %11 = vector.shape_cast %10 : vector<128xf32> to vector<1x128xf32>
    %12 = vector.shape_cast %8 : vector<1x128xf32> to vector<1x128xf32>
    %13 = vector.broadcast %12 : vector<1x128xf32> to vector<8x128xf32>
    %c0_9 = arith.constant 0 : index
    %c0_10 = arith.constant 0 : index
    %14 = vector.load %arg5[%c0_9, %c0_10] : memref<8x128xf32, #tpu.memory_space<vmem>>, vector<8x128xf32>
    tpu.vector_store %arg5[%c0_9, %c0_10], %13 {strides = array<i32>} : memref<8x128xf32, #tpu.memory_space<vmem>>, vector<8x128xf32>,
    %15 = vector.shape_cast %11 : vector<1x128xf32> to vector<1x128xf32>
    %16 = vector.broadcast %15 : vector<1x128xf32> to vector<8x128xf32>
    %c0_11 = arith.constant 0 : index
    %c0_12 = arith.constant 0 : index
    %17 = vector.load %arg6[%c0_11, %c0_12] : memref<8x128xf32, #tpu.memory_space<vmem>>, vector<8x128xf32>
    tpu.vector_store %arg6[%c0_11, %c0_12], %16 {strides = array<i32>} : memref<8x128xf32, #tpu.memory_space<vmem>>, vector<8x128xf32>,
    return
  }
  func.func @transform_0(%arg0: i32, %arg1: i32) -> (i32, i32, i32) {
    %c0_i32 = arith.constant 0 : i32
    %c0_i32_0 = arith.constant 0 : i32
    return %arg0, %arg1, %c0_i32 : i32, i32, i32
  }
  func.func @transform_1(%arg0: i32, %arg1: i32) -> (i32, i32, i32) {
    %c0_i32 = arith.constant 0 : i32
    %c0_i32_0 = arith.constant 0 : i32
    %c0_i32_1 = arith.constant 0 : i32
    return %arg0, %c0_i32, %c0_i32_0 : i32, i32, i32
  }
  func.func @transform_2(%arg0: i32, %arg1: i32) -> (i32, i32) {
    %c1_i32 = arith.constant 1 : i32
    %0 = arith.muli %arg0, %c1_i32 : i32
    %1 = arith.addi %0, %arg1 : i32
    %c0_i32 = arith.constant 0 : i32
    %c0_i32_0 = arith.constant 0 : i32
    return %1, %c0_i32 : i32, i32
  }
  func.func @transform_3(%arg0: i32, %arg1: i32) -> (i32, i32) {
    %c1_i32 = arith.constant 1 : i32
    %0 = arith.muli %arg0, %c1_i32 : i32
    %1 = arith.addi %0, %arg1 : i32
    %c0_i32 = arith.constant 0 : i32
    %c0_i32_0 = arith.constant 0 : i32
    return %1, %c0_i32 : i32, i32
  }
  func.func @transform_4(%arg0: i32, %arg1: i32) -> (i32, i32) {
    %c1_i32 = arith.constant 1 : i32
    %0 = arith.muli %arg0, %c1_i32 : i32
    %1 = arith.addi %0, %arg1 : i32
    %c0_i32 = arith.constant 0 : i32
    %c0_i32_0 = arith.constant 0 : i32
    return %1, %c0_i32 : i32, i32
  }
}

module attributes {stable_mosaic.version = 11 : i64} {
  func.func @bn_relu_kernel(%arg0: i32, %arg1: memref<512x128xbf16, #tpu.memory_space<vmem>>, %arg2: memref<1x128xf32, #tpu.memory_space<vmem>>, %arg3: memref<1x128xf32, #tpu.memory_space<vmem>>, %arg4: memref<512x128xbf16, #tpu.memory_space<vmem>>) attributes {dimension_semantics = [#tpu.dimension_semantics<parallel>], iteration_bounds = array<i64: 1>, scalar_prefetch = 0 : i64, scratch_operands = 0 : i64, tpu.core_type = #tpu.core_type<tc>, window_params = [{transform_indices = @transform_0, window_bounds = array<i64: 512, 128>}, {pipeline_mode = #tpu.pipeline_mode<synchronous>, transform_indices = @transform_1, window_bounds = array<i64: 1, 128>}, {pipeline_mode = #tpu.pipeline_mode<synchronous>, transform_indices = @transform_2, window_bounds = array<i64: 1, 128>}, {transform_indices = @transform_3, window_bounds = array<i64: 512, 128>}]} {
    %c0 = arith.constant 0 : index
    %c0_0 = arith.constant 0 : index
    %0 = vector.load %arg1[%c0, %c0_0] : memref<512x128xbf16, #tpu.memory_space<vmem>>, vector<512x128xbf16>
    %1 = arith.extf %0 : vector<512x128xbf16> to vector<512x128xf32>
    %c0_1 = arith.constant 0 : index
    %c0_2 = arith.constant 0 : index
    %2 = vector.load %arg2[%c0_1, %c0_2] : memref<1x128xf32, #tpu.memory_space<vmem>>, vector<1x128xf32>
    %3 = vector.broadcast %2 : vector<1x128xf32> to vector<512x128xf32>
    %4 = arith.mulf %1, %3 : vector<512x128xf32>
    %c0_3 = arith.constant 0 : index
    %c0_4 = arith.constant 0 : index
    %5 = vector.load %arg3[%c0_3, %c0_4] : memref<1x128xf32, #tpu.memory_space<vmem>>, vector<1x128xf32>
    %6 = vector.broadcast %5 : vector<1x128xf32> to vector<512x128xf32>
    %7 = arith.addf %4, %6 : vector<512x128xf32>
    %cst = arith.constant 0.000000e+00 : f32
    %8 = vector.broadcast %cst : f32 to vector<512x128xf32>
    %9 = arith.maximumf %7, %8 : vector<512x128xf32>
    %10 = arith.truncf %9 : vector<512x128xf32> to vector<512x128xbf16>
    %c0_5 = arith.constant 0 : index
    %c0_6 = arith.constant 0 : index
    %11 = vector.load %arg4[%c0_5, %c0_6] : memref<512x128xbf16, #tpu.memory_space<vmem>>, vector<512x128xbf16>
    tpu.vector_store %arg4[%c0_5, %c0_6], %10 {strides = array<i32>} : memref<512x128xbf16, #tpu.memory_space<vmem>>, vector<512x128xbf16>,
    return
  }
  func.func @transform_0(%arg0: i32) -> (i32, i32) {
    %c0_i32 = arith.constant 0 : i32
    %c0_i32_0 = arith.constant 0 : i32
    return %arg0, %c0_i32 : i32, i32
  }
  func.func @transform_1(%arg0: i32) -> (i32, i32) {
    %c0_i32 = arith.constant 0 : i32
    %c0_i32_0 = arith.constant 0 : i32
    %c0_i32_1 = arith.constant 0 : i32
    return %c0_i32, %c0_i32_0 : i32, i32
  }
  func.func @transform_2(%arg0: i32) -> (i32, i32) {
    %c0_i32 = arith.constant 0 : i32
    %c0_i32_0 = arith.constant 0 : i32
    %c0_i32_1 = arith.constant 0 : i32
    return %c0_i32, %c0_i32_0 : i32, i32
  }
  func.func @transform_3(%arg0: i32) -> (i32, i32) {
    %c0_i32 = arith.constant 0 : i32
    %c0_i32_0 = arith.constant 0 : i32
    return %arg0, %c0_i32 : i32, i32
  }
}

module attributes {stable_mosaic.version = 11 : i64} {
  func.func @gemm_stats_kernel(%arg0: i32, %arg1: i32, %arg2: memref<1x512x512xbf16, #tpu.memory_space<vmem>>, %arg3: memref<1x512x64xbf16, #tpu.memory_space<vmem>>, %arg4: memref<512x64xbf16, #tpu.memory_space<vmem>>, %arg5: memref<8x64xf32, #tpu.memory_space<vmem>>, %arg6: memref<8x64xf32, #tpu.memory_space<vmem>>) attributes {dimension_semantics = [#tpu.dimension_semantics<parallel>, #tpu.dimension_semantics<parallel>], iteration_bounds = array<i64: 4, 1>, scalar_prefetch = 0 : i64, scratch_operands = 0 : i64, tpu.core_type = #tpu.core_type<tc>, window_params = [{transform_indices = @transform_0, window_bounds = array<i64: 1, 512, 512>}, {transform_indices = @transform_1, window_bounds = array<i64: 1, 512, 64>}, {transform_indices = @transform_2, window_bounds = array<i64: 512, 64>}, {transform_indices = @transform_3, window_bounds = array<i64: 8, 64>}, {transform_indices = @transform_4, window_bounds = array<i64: 8, 64>}]} {
    %c0 = arith.constant 0 : index
    %c0_0 = arith.constant 0 : index
    %c0_1 = arith.constant 0 : index
    %0 = vector.load %arg2[%c0, %c0_0, %c0_1] : memref<1x512x512xbf16, #tpu.memory_space<vmem>>, vector<1x512x512xbf16>
    %1 = vector.shape_cast %0 : vector<1x512x512xbf16> to vector<512x512xbf16>
    %c0_2 = arith.constant 0 : index
    %c0_3 = arith.constant 0 : index
    %c0_4 = arith.constant 0 : index
    %2 = vector.load %arg3[%c0_2, %c0_3, %c0_4] : memref<1x512x64xbf16, #tpu.memory_space<vmem>>, vector<1x512x64xbf16>
    %3 = vector.shape_cast %2 : vector<1x512x64xbf16> to vector<512x64xbf16>
    %cst = arith.constant dense<0.000000e+00> : vector<512x64xf32>
    %4 = tpu.matmul %1, %3, %cst {dimension_numbers = #tpu.dot_dimension_numbers<[1], [0], [0], [1], [0, 0, 1, 1], [], []>} : vector<512x512xbf16>, vector<512x64xbf16>, vector<512x64xf32> -> vector<512x64xf32>
    %5 = arith.truncf %4 : vector<512x64xf32> to vector<512x64xbf16>
    %c0_5 = arith.constant 0 : index
    %c0_6 = arith.constant 0 : index
    %6 = vector.load %arg4[%c0_5, %c0_6] : memref<512x64xbf16, #tpu.memory_space<vmem>>, vector<512x64xbf16>
    tpu.vector_store %arg4[%c0_5, %c0_6], %5 {strides = array<i32>} : memref<512x64xbf16, #tpu.memory_space<vmem>>, vector<512x64xbf16>,
    %cst_7 = arith.constant dense<0.000000e+00> : vector<64xf32>
    %7 = vector.multi_reduction <add>, %4, %cst_7 [0] : vector<512x64xf32> to vector<64xf32>
    %8 = vector.shape_cast %7 : vector<64xf32> to vector<1x64xf32>
    %9 = arith.mulf %4, %4 : vector<512x64xf32>
    %cst_8 = arith.constant dense<0.000000e+00> : vector<64xf32>
    %10 = vector.multi_reduction <add>, %9, %cst_8 [0] : vector<512x64xf32> to vector<64xf32>
    %11 = vector.shape_cast %10 : vector<64xf32> to vector<1x64xf32>
    %12 = vector.shape_cast %8 : vector<1x64xf32> to vector<1x64xf32>
    %13 = vector.broadcast %12 : vector<1x64xf32> to vector<8x64xf32>
    %c0_9 = arith.constant 0 : index
    %c0_10 = arith.constant 0 : index
    %14 = vector.load %arg5[%c0_9, %c0_10] : memref<8x64xf32, #tpu.memory_space<vmem>>, vector<8x64xf32>
    tpu.vector_store %arg5[%c0_9, %c0_10], %13 {strides = array<i32>} : memref<8x64xf32, #tpu.memory_space<vmem>>, vector<8x64xf32>,
    %15 = vector.shape_cast %11 : vector<1x64xf32> to vector<1x64xf32>
    %16 = vector.broadcast %15 : vector<1x64xf32> to vector<8x64xf32>
    %c0_11 = arith.constant 0 : index
    %c0_12 = arith.constant 0 : index
    %17 = vector.load %arg6[%c0_11, %c0_12] : memref<8x64xf32, #tpu.memory_space<vmem>>, vector<8x64xf32>
    tpu.vector_store %arg6[%c0_11, %c0_12], %16 {strides = array<i32>} : memref<8x64xf32, #tpu.memory_space<vmem>>, vector<8x64xf32>,
    return
  }
  func.func @transform_0(%arg0: i32, %arg1: i32) -> (i32, i32, i32) {
    %c0_i32 = arith.constant 0 : i32
    %c0_i32_0 = arith.constant 0 : i32
    return %arg0, %arg1, %c0_i32 : i32, i32, i32
  }
  func.func @transform_1(%arg0: i32, %arg1: i32) -> (i32, i32, i32) {
    %c0_i32 = arith.constant 0 : i32
    %c0_i32_0 = arith.constant 0 : i32
    %c0_i32_1 = arith.constant 0 : i32
    return %arg0, %c0_i32, %c0_i32_0 : i32, i32, i32
  }
  func.func @transform_2(%arg0: i32, %arg1: i32) -> (i32, i32) {
    %c1_i32 = arith.constant 1 : i32
    %0 = arith.muli %arg0, %c1_i32 : i32
    %1 = arith.addi %0, %arg1 : i32
    %c0_i32 = arith.constant 0 : i32
    %c0_i32_0 = arith.constant 0 : i32
    return %1, %c0_i32 : i32, i32
  }
  func.func @transform_3(%arg0: i32, %arg1: i32) -> (i32, i32) {
    %c1_i32 = arith.constant 1 : i32
    %0 = arith.muli %arg0, %c1_i32 : i32
    %1 = arith.addi %0, %arg1 : i32
    %c0_i32 = arith.constant 0 : i32
    %c0_i32_0 = arith.constant 0 : i32
    return %1, %c0_i32 : i32, i32
  }
  func.func @transform_4(%arg0: i32, %arg1: i32) -> (i32, i32) {
    %c1_i32 = arith.constant 1 : i32
    %0 = arith.muli %arg0, %c1_i32 : i32
    %1 = arith.addi %0, %arg1 : i32
    %c0_i32 = arith.constant 0 : i32
    %c0_i32_0 = arith.constant 0 : i32
    return %1, %c0_i32 : i32, i32
  }
}

module attributes {stable_mosaic.version = 11 : i64} {
  func.func @bn_relu_kernel(%arg0: i32, %arg1: memref<1024x64xbf16, #tpu.memory_space<vmem>>, %arg2: memref<1x64xf32, #tpu.memory_space<vmem>>, %arg3: memref<1x64xf32, #tpu.memory_space<vmem>>, %arg4: memref<1024x64xbf16, #tpu.memory_space<vmem>>) attributes {dimension_semantics = [#tpu.dimension_semantics<parallel>], iteration_bounds = array<i64: 2>, scalar_prefetch = 0 : i64, scratch_operands = 0 : i64, tpu.core_type = #tpu.core_type<tc>, window_params = [{transform_indices = @transform_0, window_bounds = array<i64: 1024, 64>}, {pipeline_mode = #tpu.pipeline_mode<synchronous>, transform_indices = @transform_1, window_bounds = array<i64: 1, 64>}, {pipeline_mode = #tpu.pipeline_mode<synchronous>, transform_indices = @transform_2, window_bounds = array<i64: 1, 64>}, {transform_indices = @transform_3, window_bounds = array<i64: 1024, 64>}]} {
    %c0 = arith.constant 0 : index
    %c0_0 = arith.constant 0 : index
    %0 = vector.load %arg1[%c0, %c0_0] : memref<1024x64xbf16, #tpu.memory_space<vmem>>, vector<1024x64xbf16>
    %1 = arith.extf %0 : vector<1024x64xbf16> to vector<1024x64xf32>
    %c0_1 = arith.constant 0 : index
    %c0_2 = arith.constant 0 : index
    %2 = vector.load %arg2[%c0_1, %c0_2] : memref<1x64xf32, #tpu.memory_space<vmem>>, vector<1x64xf32>
    %3 = vector.broadcast %2 : vector<1x64xf32> to vector<1024x64xf32>
    %4 = arith.mulf %1, %3 : vector<1024x64xf32>
    %c0_3 = arith.constant 0 : index
    %c0_4 = arith.constant 0 : index
    %5 = vector.load %arg3[%c0_3, %c0_4] : memref<1x64xf32, #tpu.memory_space<vmem>>, vector<1x64xf32>
    %6 = vector.broadcast %5 : vector<1x64xf32> to vector<1024x64xf32>
    %7 = arith.addf %4, %6 : vector<1024x64xf32>
    %cst = arith.constant 0.000000e+00 : f32
    %8 = vector.broadcast %cst : f32 to vector<1024x64xf32>
    %9 = arith.maximumf %7, %8 : vector<1024x64xf32>
    %10 = arith.truncf %9 : vector<1024x64xf32> to vector<1024x64xbf16>
    %c0_5 = arith.constant 0 : index
    %c0_6 = arith.constant 0 : index
    %11 = vector.load %arg4[%c0_5, %c0_6] : memref<1024x64xbf16, #tpu.memory_space<vmem>>, vector<1024x64xbf16>
    tpu.vector_store %arg4[%c0_5, %c0_6], %10 {strides = array<i32>} : memref<1024x64xbf16, #tpu.memory_space<vmem>>, vector<1024x64xbf16>,
    return
  }
  func.func @transform_0(%arg0: i32) -> (i32, i32) {
    %c0_i32 = arith.constant 0 : i32
    %c0_i32_0 = arith.constant 0 : i32
    return %arg0, %c0_i32 : i32, i32
  }
  func.func @transform_1(%arg0: i32) -> (i32, i32) {
    %c0_i32 = arith.constant 0 : i32
    %c0_i32_0 = arith.constant 0 : i32
    %c0_i32_1 = arith.constant 0 : i32
    return %c0_i32, %c0_i32_0 : i32, i32
  }
  func.func @transform_2(%arg0: i32) -> (i32, i32) {
    %c0_i32 = arith.constant 0 : i32
    %c0_i32_0 = arith.constant 0 : i32
    %c0_i32_1 = arith.constant 0 : i32
    return %c0_i32, %c0_i32_0 : i32, i32
  }
  func.func @transform_3(%arg0: i32) -> (i32, i32) {
    %c0_i32 = arith.constant 0 : i32
    %c0_i32_0 = arith.constant 0 : i32
    return %arg0, %c0_i32 : i32, i32
  }
}

module attributes {stable_mosaic.version = 11 : i64} {
  func.func @gemm_tanh_kernel(%arg0: i32, %arg1: i32, %arg2: memref<1x512x256xbf16, #tpu.memory_space<vmem>>, %arg3: memref<1x256x128xbf16, #tpu.memory_space<vmem>>, %arg4: memref<512x128xf32, #tpu.memory_space<vmem>>) attributes {dimension_semantics = [#tpu.dimension_semantics<parallel>, #tpu.dimension_semantics<parallel>], iteration_bounds = array<i64: 4, 4>, scalar_prefetch = 0 : i64, scratch_operands = 0 : i64, tpu.core_type = #tpu.core_type<tc>, window_params = [{transform_indices = @transform_0, window_bounds = array<i64: 1, 512, 256>}, {transform_indices = @transform_1, window_bounds = array<i64: 1, 256, 128>}, {transform_indices = @transform_2, window_bounds = array<i64: 512, 128>}]} {
    %c0 = arith.constant 0 : index
    %c0_0 = arith.constant 0 : index
    %c0_1 = arith.constant 0 : index
    %0 = vector.load %arg2[%c0, %c0_0, %c0_1] : memref<1x512x256xbf16, #tpu.memory_space<vmem>>, vector<1x512x256xbf16>
    %1 = vector.shape_cast %0 : vector<1x512x256xbf16> to vector<512x256xbf16>
    %c0_2 = arith.constant 0 : index
    %c0_3 = arith.constant 0 : index
    %c0_4 = arith.constant 0 : index
    %2 = vector.load %arg3[%c0_2, %c0_3, %c0_4] : memref<1x256x128xbf16, #tpu.memory_space<vmem>>, vector<1x256x128xbf16>
    %3 = vector.shape_cast %2 : vector<1x256x128xbf16> to vector<256x128xbf16>
    %cst = arith.constant dense<0.000000e+00> : vector<512x128xf32>
    %4 = tpu.matmul %1, %3, %cst {dimension_numbers = #tpu.dot_dimension_numbers<[1], [0], [0], [1], [0, 0, 1, 1], [], []>} : vector<512x256xbf16>, vector<256x128xbf16>, vector<512x128xf32> -> vector<512x128xf32>
    %5 = math.tanh %4 : vector<512x128xf32>
    %c0_5 = arith.constant 0 : index
    %c0_6 = arith.constant 0 : index
    %6 = vector.load %arg4[%c0_5, %c0_6] : memref<512x128xf32, #tpu.memory_space<vmem>>, vector<512x128xf32>
    tpu.vector_store %arg4[%c0_5, %c0_6], %5 {strides = array<i32>} : memref<512x128xf32, #tpu.memory_space<vmem>>, vector<512x128xf32>,
    return
  }
  func.func @transform_0(%arg0: i32, %arg1: i32) -> (i32, i32, i32) {
    %c0_i32 = arith.constant 0 : i32
    %c0_i32_0 = arith.constant 0 : i32
    return %arg0, %arg1, %c0_i32 : i32, i32, i32
  }
  func.func @transform_1(%arg0: i32, %arg1: i32) -> (i32, i32, i32) {
    %c0_i32 = arith.constant 0 : i32
    %c0_i32_0 = arith.constant 0 : i32
    %c0_i32_1 = arith.constant 0 : i32
    return %arg0, %c0_i32, %c0_i32_0 : i32, i32, i32
  }
  func.func @transform_2(%arg0: i32, %arg1: i32) -> (i32, i32) {
    %c4_i32 = arith.constant 4 : i32
    %0 = arith.muli %arg0, %c4_i32 : i32
    %1 = arith.addi %0, %arg1 : i32
    %c0_i32 = arith.constant 0 : i32
    %c0_i32_0 = arith.constant 0 : i32
    return %1, %c0_i32 : i32, i32
  }
}

</mosaic_0001>

<llo_original>
// kernel: generator_forward.9
$region0: #{generator_forward.9}
  #allocation0 [shape = 'u32[]', space=smem, size = 0x4, offset = 0x4, fixed_abs, tag = 'smem constant byte address 0x4 - core index']
  #allocation1 [shape = 'u32[144,128]{1,0:T(1,128)}', space=vmem, size = 0x12000, scoped, tag = 'internal scratch']
  %s0 = inlined_call_operand.vmem [shape: bf16[16,8,128], index: 0, kind: input, shape index: {}]
  %s1 = inlined_call_operand.vmem [shape: bf16[16,128,512], index: 1, kind: input, shape index: {}]
  %s2 = inlined_call_operand.vmem [shape: bf16[128,512], index: 2, kind: output, shape index: {0}]
  %s3 = inlined_call_operand.vmem [shape: f32[128,512], index: 3, kind: output, shape index: {1}]
  %s4 = inlined_call_operand.vmem [shape: f32[128,512], index: 4, kind: output, shape index: {2}]
  %5 = xla_tuple %s2, %s3, %s4
  %s6 = sld [smem:[#allocation0]]
  $region57: #{generator_forward.9} parent=0
    _
  %s8 = ssub.s32 1, %s6
  %s9 = scalar_select 0, %s8, %s6
  loop: start=0, step=1, limit=18
  $region2: #{generator_forward.9} parent=0 // loop_pre_header
    _
  $region3: #{generator_forward.9} parent=0 // loop_header
    %s11 = sphi 0, %s15
    %p12 = scmp.ge.s32.totalorder %s11, 18
    %s18 = sphi 0, %s30
    %s19 = sphi 0, %s26
    %s20 = sphi 0, %s18
    %s21 = sphi 0, %s19
    %s22 = sphi 0, %s20
    %s23 = sphi 0, %s21
    %s35 = sphi 0, %s37
    %s38 = sphi 0, %s35
    %s39 = sphi 0, %s38
    %s55 = sphi 0, %s39
    %s61 = sphi 0, %s63
    %s64 = sphi 0, %s61
    %s65 = sphi 0, %s64
    %s81 = sphi 0, %s65
    %s89 = sphi 0, %s91
    %s92 = sphi 0, %s89
    %s93 = sphi 0, %s92
    %s109 = sphi 0, %s93
    %s117 = sphi 0, %s119
    %s120 = sphi 0, %s117
    %s121 = sphi 0, %s120
    %s137 = sphi 0, %s121
    %s145 = sphi 0, %s147
    %s148 = sphi 0, %s145
    %s149 = sphi 0, %s148
    %s165 = sphi 0, %s149
  $region4: #{generator_forward.9} parent=0 // loop_header_branch
    %14 = sbr.rel (%p12) target = $region8
  $region5: #{generator_forward.9} parent=0 // loop_body
    %s16 = ssub.s32 %s11, 1
    %s17 = ssub.s32 %s11, 2
    %s24 = sadd.s32 1, %s19
    %p25 = scmp.ge.s32.totalorder %s24, 1
    %s26 = scalar_select %p25, 0, %s24
    %s27 = sadd.s32 1, %s18
    %s28 = scalar_select %p25, %s27, %s18
    %p29 = scmp.ge.s32.totalorder %s28, 16
    %s30 = scalar_select %p29, 0, %s28
    %s31 = ssub.s32 %s18, %s30
    %s32 = ssub.s32 %s19, %s26
    %s33 = sor.u32 %s31, %s32
    %p34 = scmp.eq.s32.totalorder %s33, 0
    %s36 = sadd.s32 %s35, 1
    %s37 = scalar_select %p34, %s35, %s36
    %p40 = pneg %p34
    %p41 = scmp.eq.s32.totalorder %s11, 15
    %p42 = por %p40, %p41
    %p43 = scmp.ne.s32.totalorder %s35, %s38
    %p44 = scmp.eq.s32.totalorder %s11, 0
    %p45 = por %p43, %p44
    %p46 = scmp.ne.s32.totalorder %s35, %s38
    %p47 = scmp.eq.s32.totalorder %s16, 15
    %p48 = por %p46, %p47
    %p49 = scmp.ne.s32.totalorder %s38, %s39
    %p50 = scmp.eq.s32.totalorder %s16, 0
    %p51 = por %p49, %p50
    %p52 = scmp.ne.s32.totalorder %s38, %s39
    %p53 = scmp.eq.s32.totalorder %s17, 15
    %p54 = por %p52, %p53
    %p56 = scmp.ne.s32.totalorder %s39, %s55
    %p57 = scmp.eq.s32.totalorder %s17, 0
    %p58 = por %p56, %p57
    %s59 = ssub.s32 %s18, %s30
    %p60 = scmp.eq.s32.totalorder %s59, 0
    %s62 = sadd.s32 %s61, 1
    %s63 = scalar_select %p60, %s61, %s62
    %p66 = pneg %p60
    %p67 = scmp.eq.s32.totalorder %s11, 15
    %p68 = por %p66, %p67
    %p69 = scmp.ne.s32.totalorder %s61, %s64
    %p70 = scmp.eq.s32.totalorder %s11, 0
    %p71 = por %p69, %p70
    %p72 = scmp.ne.s32.totalorder %s61, %s64
    %p73 = scmp.eq.s32.totalorder %s16, 15
    %p74 = por %p72, %p73
    %p75 = scmp.ne.s32.totalorder %s64, %s65
    %p76 = scmp.eq.s32.totalorder %s16, 0
    %p77 = por %p75, %p76
    %p78 = scmp.ne.s32.totalorder %s64, %s65
    %p79 = scmp.eq.s32.totalorder %s17, 15
    %p80 = por %p78, %p79
    %p82 = scmp.ne.s32.totalorder %s65, %s81
    %p83 = scmp.eq.s32.totalorder %s17, 0
    %p84 = por %p82, %p83
    %s85 = sadd.s32 %s18, %s19
    %s86 = sadd.s32 %s30, %s26
    %s87 = ssub.s32 %s85, %s86
    %p88 = scmp.eq.s32.totalorder %s87, 0
    %s90 = sadd.s32 %s89, 1
    %s91 = scalar_select %p88, %s89, %s90
    %p94 = pneg %p88
    %p95 = scmp.eq.s32.totalorder %s11, 15
    %p96 = por %p94, %p95
    %p97 = scmp.ne.s32.totalorder %s89, %s92
    %p98 = scmp.eq.s32.totalorder %s11, 0
    %p99 = por %p97, %p98
    %p100 = scmp.ne.s32.totalorder %s89, %s92
    %p101 = scmp.eq.s32.totalorder %s16, 15
    %p102 = por %p100, %p101
    %p103 = scmp.ne.s32.totalorder %s92, %s93
    %p104 = scmp.eq.s32.totalorder %s16, 0
    %p105 = por %p103, %p104
    %p106 = scmp.ne.s32.totalorder %s92, %s93
    %p107 = scmp.eq.s32.totalorder %s17, 15
    %p108 = por %p106, %p107
    %p110 = scmp.ne.s32.totalorder %s93, %s109
    %p111 = scmp.eq.s32.totalorder %s17, 0
    %p112 = por %p110, %p111
    %s113 = sadd.s32 %s18, %s19
    %s114 = sadd.s32 %s30, %s26
    %s115 = ssub.s32 %s113, %s114
    %p116 = scmp.eq.s32.totalorder %s115, 0
    %s118 = sadd.s32 %s117, 1
    %s119 = scalar_select %p116, %s117, %s118
    %p122 = pneg %p116
    %p123 = scmp.eq.s32.totalorder %s11, 15
    %p124 = por %p122, %p123
    %p125 = scmp.ne.s32.totalorder %s117, %s120
    %p126 = scmp.eq.s32.totalorder %s11, 0
    %p127 = por %p125, %p126
    %p128 = scmp.ne.s32.totalorder %s117, %s120
    %p129 = scmp.eq.s32.totalorder %s16, 15
    %p130 = por %p128, %p129
    %p131 = scmp.ne.s32.totalorder %s120, %s121
    %p132 = scmp.eq.s32.totalorder %s16, 0
    %p133 = por %p131, %p132
    %p134 = scmp.ne.s32.totalorder %s120, %s121
    %p135 = scmp.eq.s32.totalorder %s17, 15
    %p136 = por %p134, %p135
    %p138 = scmp.ne.s32.totalorder %s121, %s137
    %p139 = scmp.eq.s32.totalorder %s17, 0
    %p140 = por %p138, %p139
    %s141 = sadd.s32 %s18, %s19
    %s142 = sadd.s32 %s30, %s26
    %s143 = ssub.s32 %s141, %s142
    %p144 = scmp.eq.s32.totalorder %s143, 0
    %s146 = sadd.s32 %s145, 1
    %s147 = scalar_select %p144, %s145, %s146
    %p150 = pneg %p144
    %p151 = scmp.eq.s32.totalorder %s11, 15
    %p152 = por %p150, %p151
    %p153 = scmp.ne.s32.totalorder %s145, %s148
    %p154 = scmp.eq.s32.totalorder %s11, 0
    %p155 = por %p153, %p154
    %p156 = scmp.ne.s32.totalorder %s145, %s148
    %p157 = scmp.eq.s32.totalorder %s16, 15
    %p158 = por %p156, %p157
    %p159 = scmp.ne.s32.totalorder %s148, %s149
    %p160 = scmp.eq.s32.totalorder %s16, 0
    %p161 = por %p159, %p160
    %p162 = scmp.ne.s32.totalorder %s148, %s149
    %p163 = scmp.eq.s32.totalorder %s17, 15
    %p164 = por %p162, %p163
    %p166 = scmp.ne.s32.totalorder %s149, %s165
    %p167 = scmp.eq.s32.totalorder %s17, 0
    %p168 = por %p166, %p167
    %p169 = scmp.le.s32.totalorder 1, %s11
    %p170 = scmp.lt.s32.totalorder %s11, 17
    %p171 = pnand %p169, %p170
    %p172 = pneg %p171
    // Predicated region
    $region9: #{generator_forward.9} parent=5 // pred_check
      _
    $region10: #{generator_forward.9} parent=5 // pred_check_branch
      %174 = sbr.rel (%p171) target = $region12
    $region11: #{generator_forward.9} parent=5 // pred_region
      %s175 = ssub.s32 %s11, 1
    $region12: #{generator_forward.9} parent=5 // pred_fallthru
      _
    %p176 = scmp.lt.s32.totalorder %s11, 16
    // Predicated region
    $region13: #{generator_forward.9} parent=5 // pred_check
      %p177 = pneg %p176
    $region14: #{generator_forward.9} parent=5 // pred_check_branch
      %179 = sbr.rel (%p177) target = $region16
    $region15: #{generator_forward.9} parent=5 // pred_region
      // Predicated region
      $region17: #{generator_forward.9} parent=15 // pred_check
        %p180 = pneg %p45
      $region18: #{generator_forward.9} parent=15 // pred_check_branch
        %182 = sbr.rel (%p180) target = $region20
      $region19: #{generator_forward.9} parent=15 // pred_region
        %p183 = scmp.lt.s32.totalorder %s18, 15
        %s184 = scalar_select %p183, %s18, 15
        %p185 = scmp.lt.s32.totalorder %s19, 0
        %s186 = scalar_select %p185, %s19, 0
        %s187 = sadd.s32 %s186, %s184
        %s188 = smul.addr %s187, 4
        %s189 = scalar_lea.vmem %s0, %s188
      $region20: #{generator_forward.9} parent=15 // pred_fallthru
        _
      // Predicated region
      $region21: #{generator_forward.9} parent=15 // pred_check
        %p190 = pneg %p71
      $region22: #{generator_forward.9} parent=15 // pred_check_branch
        %192 = sbr.rel (%p190) target = $region24
      $region23: #{generator_forward.9} parent=15 // pred_region
        %p193 = scmp.lt.s32.totalorder %s18, 15
        %s194 = scalar_select %p193, %s18, 15
        %s195 = smul.addr %s194, 64
        %s196 = smul.addr %s195, 4
        %s197 = scalar_lea.vmem %s1, %s196
      $region24: #{generator_forward.9} parent=15 // pred_fallthru
        _
    $region16: #{generator_forward.9} parent=5 // pred_fallthru
      _
    %p198 = scmp.le.s32.totalorder 1, %s11
    %p199 = scmp.lt.s32.totalorder %s11, 17
    %p200 = pnand %p198, %p199
    %p201 = pneg %p200
    // Predicated region
    $region25: #{generator_forward.9} parent=5 // pred_check
      _
    $region26: #{generator_forward.9} parent=5 // pred_check_branch
      %203 = sbr.rel (%p200) target = $region28
    $region27: #{generator_forward.9} parent=5 // pred_region
      %s204 = ssub.s32 %s11, 1
      %p205 = scmp.lt.s32.totalorder %s20, 15
      %s206 = scalar_select %p205, %s20, 15
      %p207 = scmp.lt.s32.totalorder %s21, 0
      %s208 = scalar_select %p207, %s21, 0
      %s209 = sadd.s32 %s208, %s206
      %s210 = smul.addr %s209, 4
      %s211 = scalar_lea.vmem %s0, %s210
      %p212 = pneg %p51
      %p213 = pneg %p48
      %p214 = scmp.lt.s32.totalorder %s20, 15
      %s215 = scalar_select %p214, %s20, 15
      %s216 = smul.addr %s215, 64
      %s217 = smul.addr %s216, 4
      %s218 = scalar_lea.vmem %s1, %s217
      %p219 = pneg %p77
      %p220 = pneg %p74
      %p221 = pneg %p105
      %p222 = pneg %p102
      %s223 = sadd.s32 %s20, %s21
      %p224 = scmp.lt.s32.totalorder %s223, 15
      %s225 = scalar_select %p224, %s223, 15
      %s226 = smul.addr %s225, 4
      %s227 = smul.addr %s226, 4
      %s228 = scalar_lea.vmem %s2, %s227
      %p229 = pneg %p133
      %p230 = pneg %p130
      %s231 = sadd.s32 %s20, %s21
      %p232 = scmp.lt.s32.totalorder %s231, 15
      %s233 = scalar_select %p232, %s231, 15
      %s234 = smul.addr %s233, 4
      %s235 = smul.addr %s234, 8
      %s236 = scalar_lea.vmem %s3, %s235
      %p237 = pneg %p161
      %p238 = pneg %p158
      %s239 = sadd.s32 %s20, %s21
      %p240 = scmp.lt.s32.totalorder %s239, 15
      %s241 = scalar_select %p240, %s239, 15
      %s242 = smul.addr %s241, 4
      %s243 = smul.addr %s242, 8
      %s244 = scalar_lea.vmem %s4, %s243
      %p245 = scmp.lt.s32.totalorder %s20, 15
      %s246 = scalar_select %p245, %s20, 15
      %p247 = scmp.lt.s32.totalorder %s21, 0
      %s248 = scalar_select %p247, %s21, 0
      %s249 = sadd.s32 %s248, %s246
      %s250 = smul.addr %s249, 4
      %s251 = scalar_lea.vmem %s0, %s250
      %p252 = scmp.lt.s32.totalorder %s20, 15
      %s253 = scalar_select %p252, %s20, 15
      %s254 = smul.addr %s253, 64
      %s255 = smul.addr %s254, 4
      %s256 = scalar_lea.vmem %s1, %s255
      %s257 = sadd.s32 %s20, %s21
      %p258 = scmp.lt.s32.totalorder %s257, 15
      %s259 = scalar_select %p258, %s257, 15
      %s260 = smul.addr %s259, 4
      %s261 = smul.addr %s260, 4
      %s262 = scalar_lea.vmem %s2, %s261
      %s263 = sadd.s32 %s20, %s21
      %s264 = sadd.s32 %s20, %s21
      %p265 = scmp.lt.s32.totalorder %s264, 15
      %s266 = scalar_select %p265, %s264, 15
      %s267 = smul.addr %s266, 4
      %s268 = smul.addr %s267, 8
      %s269 = scalar_lea.vmem %s3, %s268
      %s270 = sadd.s32 %s20, %s21
      %s271 = sadd.s32 %s20, %s21
      %p272 = scmp.lt.s32.totalorder %s271, 15
      %s273 = scalar_select %p272, %s271, 15
      %s274 = smul.addr %s273, 4
      %s275 = smul.addr %s274, 8
      %s276 = scalar_lea.vmem %s4, %s275
      %s277 = sadd.s32 %s20, %s21
      %v279 = vld [vmem:[%s251] sm:$0xf]
      %v280 = vld [vmem:[%s256] sm:$0xff]
      %v281 = vld [vmem:[%s256 + $0x8] sm:$0xff]
      %v282 = vld [vmem:[%s256 + $0x10] sm:$0xff]
      %v283 = vld [vmem:[%s256 + $0x18] sm:$0xff]
      %v284 = vld [vmem:[%s256 + $0x20] sm:$0xff]
      %v285 = vld [vmem:[%s256 + $0x28] sm:$0xff]
      %v286 = vld [vmem:[%s256 + $0x30] sm:$0xff]
      %v287 = vld [vmem:[%s256 + $0x38] sm:$0xff]
      %v288 = vld [vmem:[%s256 + $0x40] sm:$0xff]
      %v289 = vld [vmem:[%s256 + $0x48] sm:$0xff]
      %v290 = vld [vmem:[%s256 + $0x50] sm:$0xff]
      %v291 = vld [vmem:[%s256 + $0x58] sm:$0xff]
      %v292 = vld [vmem:[%s256 + $0x60] sm:$0xff]
      %v293 = vld [vmem:[%s256 + $0x68] sm:$0xff]
      %v294 = vld [vmem:[%s256 + $0x70] sm:$0xff]
      %v295 = vld [vmem:[%s256 + $0x78] sm:$0xff]
      %v296 = vld [vmem:[%s256 + $0x80] sm:$0xff]
      %v297 = vld [vmem:[%s256 + $0x88] sm:$0xff]
      %v298 = vld [vmem:[%s256 + $0x90] sm:$0xff]
      %v299 = vld [vmem:[%s256 + $0x98] sm:$0xff]
      %v300 = vld [vmem:[%s256 + $0xa0] sm:$0xff]
      %v301 = vld [vmem:[%s256 + $0xa8] sm:$0xff]
      %v302 = vld [vmem:[%s256 + $0xb0] sm:$0xff]
      %v303 = vld [vmem:[%s256 + $0xb8] sm:$0xff]
      %v304 = vld [vmem:[%s256 + $0xc0] sm:$0xff]
      %v305 = vld [vmem:[%s256 + $0xc8] sm:$0xff]
      %v306 = vld [vmem:[%s256 + $0xd0] sm:$0xff]
      %v307 = vld [vmem:[%s256 + $0xd8] sm:$0xff]
      %v308 = vld [vmem:[%s256 + $0xe0] sm:$0xff]
      %v309 = vld [vmem:[%s256 + $0xe8] sm:$0xff]
      %v310 = vld [vmem:[%s256 + $0xf0] sm:$0xff]
      %v311 = vld [vmem:[%s256 + $0xf8] sm:$0xff]
      %v344 = vunpack.c.l.b16 %v280
      %v345 = vunpack.c.h.b16 %v280
      %v346 = vunpack.c.l.b16 %v281
      %v347 = vunpack.c.h.b16 %v281
      %v348 = vunpack.c.l.b16 %v282
      %v349 = vunpack.c.h.b16 %v282
      %v350 = vunpack.c.l.b16 %v283
      %v351 = vunpack.c.h.b16 %v283
      %v352 = vunpack.c.l.b16 %v284
      %v353 = vunpack.c.h.b16 %v284
      %v354 = vunpack.c.l.b16 %v285
      %v355 = vunpack.c.h.b16 %v285
      %v356 = vunpack.c.l.b16 %v286
      %v357 = vunpack.c.h.b16 %v286
      %v358 = vunpack.c.l.b16 %v287
      %v359 = vunpack.c.h.b16 %v287
      %v360 = vunpack.c.l.b16 %v288
      %v361 = vunpack.c.h.b16 %v288
      %v362 = vunpack.c.l.b16 %v289
      %v363 = vunpack.c.h.b16 %v289
      %v364 = vunpack.c.l.b16 %v290
      %v365 = vunpack.c.h.b16 %v290
      %v366 = vunpack.c.l.b16 %v291
      %v367 = vunpack.c.h.b16 %v291
      %v368 = vunpack.c.l.b16 %v292
      %v369 = vunpack.c.h.b16 %v292
      %v370 = vunpack.c.l.b16 %v293
      %v371 = vunpack.c.h.b16 %v293
      %v372 = vunpack.c.l.b16 %v294
      %v373 = vunpack.c.h.b16 %v294
      %v374 = vunpack.c.l.b16 %v295
      %v375 = vunpack.c.h.b16 %v295
      %v376 = vunpack.c.l.b16 %v296
      %v377 = vunpack.c.h.b16 %v296
      %v378 = vunpack.c.l.b16 %v297
      %v379 = vunpack.c.h.b16 %v297
      %v380 = vunpack.c.l.b16 %v298
      %v381 = vunpack.c.h.b16 %v298
      %v382 = vunpack.c.l.b16 %v299
      %v383 = vunpack.c.h.b16 %v299
      %v384 = vunpack.c.l.b16 %v300
      %v385 = vunpack.c.h.b16 %v300
      %v386 = vunpack.c.l.b16 %v301
      %v387 = vunpack.c.h.b16 %v301
      %v388 = vunpack.c.l.b16 %v302
      %v389 = vunpack.c.h.b16 %v302
      %v390 = vunpack.c.l.b16 %v303
      %v391 = vunpack.c.h.b16 %v303
      %v392 = vunpack.c.l.b16 %v304
      %v393 = vunpack.c.h.b16 %v304
      %v394 = vunpack.c.l.b16 %v305
      %v395 = vunpack.c.h.b16 %v305
      %v396 = vunpack.c.l.b16 %v306
      %v397 = vunpack.c.h.b16 %v306
      %v398 = vunpack.c.l.b16 %v307
      %v399 = vunpack.c.h.b16 %v307
      %v400 = vunpack.c.l.b16 %v308
      %v401 = vunpack.c.h.b16 %v308
      %v402 = vunpack.c.l.b16 %v309
      %v403 = vunpack.c.h.b16 %v309
      %v404 = vunpack.c.l.b16 %v310
      %v405 = vunpack.c.h.b16 %v310
      %v406 = vunpack.c.l.b16 %v311
      %v407 = vunpack.c.h.b16 %v311
      %v408 = vpack.c.b16 %v348, %v344
      %v409 = vpack.c.b16 %v349, %v345
      %v410 = vpack.c.b16 %v350, %v346
      %v411 = vpack.c.b16 %v351, %v347
      %v412 = vpack.c.b16 %v356, %v352
      %v413 = vpack.c.b16 %v357, %v353
      %v414 = vpack.c.b16 %v358, %v354
      %v415 = vpack.c.b16 %v359, %v355
      %v416 = vpack.c.b16 %v364, %v360
      %v417 = vpack.c.b16 %v365, %v361
      %v418 = vpack.c.b16 %v366, %v362
      %v419 = vpack.c.b16 %v367, %v363
      %v420 = vpack.c.b16 %v372, %v368
      %v421 = vpack.c.b16 %v373, %v369
      %v422 = vpack.c.b16 %v374, %v370
      %v423 = vpack.c.b16 %v375, %v371
      %v424 = vpack.c.b16 %v380, %v376
      %v425 = vpack.c.b16 %v381, %v377
      %v426 = vpack.c.b16 %v382, %v378
      %v427 = vpack.c.b16 %v383, %v379
      %v428 = vpack.c.b16 %v388, %v384
      %v429 = vpack.c.b16 %v389, %v385
      %v430 = vpack.c.b16 %v390, %v386
      %v431 = vpack.c.b16 %v391, %v387
      %v432 = vpack.c.b16 %v396, %v392
      %v433 = vpack.c.b16 %v397, %v393
      %v434 = vpack.c.b16 %v398, %v394
      %v435 = vpack.c.b16 %v399, %v395
      %v436 = vpack.c.b16 %v404, %v400
      %v437 = vpack.c.b16 %v405, %v401
      %v438 = vpack.c.b16 %v406, %v402
      %v439 = vpack.c.b16 %v407, %v403
      %472 = vmatprep.subr.bf16.mxu0 %v409
      %473 = vmatpush1.bf16.msra.mxu0 %v408
      %474 = vmatprep.subr.bf16.mxu0 %v413
      %475 = vmatpush1.bf16.msra.mxu0 %v412
      %476 = vmatprep.subr.bf16.mxu0 %v417
      %477 = vmatpush1.bf16.msra.mxu0 %v416
      %478 = vmatprep.subr.bf16.mxu0 %v421
      %479 = vmatpush1.bf16.msra.mxu0 %v420
      %480 = vmatprep.subr.bf16.mxu0 %v425
      %481 = vmatpush1.bf16.msra.mxu0 %v424
      %482 = vmatprep.subr.bf16.mxu0 %v429
      %483 = vmatpush1.bf16.msra.mxu0 %v428
      %484 = vmatprep.subr.bf16.mxu0 %v433
      %485 = vmatpush1.bf16.msra.mxu0 %v432
      %486 = vmatprep.subr.bf16.mxu0 %v437
      %487 = vmatpush1.bf16.msra.mxu0 %v436
      %488 = vmatprep.subr.bf16.mxu0 0
      %489 = vmatpush1.bf16.msra.mxu0 0
      %490 = vmatprep.subr.bf16.mxu0 0
      %491 = vmatpush1.bf16.msra.mxu0 0
      %492 = vmatprep.subr.bf16.mxu0 0
      %493 = vmatpush1.bf16.msra.mxu0 0
      %494 = vmatprep.subr.bf16.mxu0 0
      %495 = vmatpush1.bf16.msra.mxu0 0
      %496 = vmatprep.subr.bf16.mxu0 0
      %497 = vmatpush1.bf16.msra.mxu0 0
      %498 = vmatprep.subr.bf16.mxu0 0
      %499 = vmatpush1.bf16.msra.mxu0 0
      %500 = vmatprep.subr.bf16.mxu0 0
      %501 = vmatpush1.bf16.msra.mxu0 0
      %502 = vmatprep.subr.bf16.mxu0 0
      %503 = vmatpush1.bf16.msra.mxu0 0
      %504 = vmatprep.mubr.bf16.mxu0 0
      %505 = vmatmul.mubr.bf16.gmra.mrb[0].mxu0 %v279
      %v506 = vpop.f32.mrb[0].mxu0
      %v507 = vadd.f32 0.0, %v506
      %v508 = vpop.f32.mrb[0].mxu0
      %v509 = vadd.f32 0.0, %v508
      %v510 = vpop.f32.mrb[0].mxu0
      %v511 = vpop.f32.mrb[0].mxu0
      %512 = vdwg.mxu0
      %513 = vmatprep.subr.bf16.mxu0 %v411
      %514 = vmatpush1.bf16.msra.mxu0 %v410
      %515 = vmatprep.subr.bf16.mxu0 %v415
      %516 = vmatpush1.bf16.msra.mxu0 %v414
      %517 = vmatprep.subr.bf16.mxu0 %v419
      %518 = vmatpush1.bf16.msra.mxu0 %v418
      %519 = vmatprep.subr.bf16.mxu0 %v423
      %520 = vmatpush1.bf16.msra.mxu0 %v422
      %521 = vmatprep.subr.bf16.mxu0 %v427
      %522 = vmatpush1.bf16.msra.mxu0 %v426
      %523 = vmatprep.subr.bf16.mxu0 %v431
      %524 = vmatpush1.bf16.msra.mxu0 %v430
      %525 = vmatprep.subr.bf16.mxu0 %v435
      %526 = vmatpush1.bf16.msra.mxu0 %v434
      %527 = vmatprep.subr.bf16.mxu0 %v439
      %528 = vmatpush1.bf16.msra.mxu0 %v438
      %529 = vmatprep.subr.bf16.mxu0 0
      %530 = vmatpush1.bf16.msra.mxu0 0
      %531 = vmatprep.subr.bf16.mxu0 0
      %532 = vmatpush1.bf16.msra.mxu0 0
      %533 = vmatprep.subr.bf16.mxu0 0
      %534 = vmatpush1.bf16.msra.mxu0 0
      %535 = vmatprep.subr.bf16.mxu0 0
      %536 = vmatpush1.bf16.msra.mxu0 0
      %537 = vmatprep.subr.bf16.mxu0 0
      %538 = vmatpush1.bf16.msra.mxu0 0
      %539 = vmatprep.subr.bf16.mxu0 0
      %540 = vmatpush1.bf16.msra.mxu0 0
      %541 = vmatprep.subr.bf16.mxu0 0
      %542 = vmatpush1.bf16.msra.mxu0 0
      %543 = vmatprep.subr.bf16.mxu0 0
      %544 = vmatpush1.bf16.msra.mxu0 0
      %545 = vmatprep.mubr.bf16.mxu0 0
      %546 = vmatmul.mubr.bf16.gmra.mrb[0].mxu0 %v279
      %v547 = vpop.f32.mrb[0].mxu0
      %v548 = vadd.f32 0.0, %v547
      %v549 = vpop.f32.mrb[0].mxu0
      %v550 = vadd.f32 0.0, %v549
      %v551 = vpop.f32.mrb[0].mxu0
      %v552 = vpop.f32.mrb[0].mxu0
      %553 = vdwg.mxu0
      %v554 = vpack.c.bf16 %v507, %v507
      %v555 = vpack.c.bf16 %v509, %v509
      %v556 = vpack.c.bf16 %v548, %v548
      %v557 = vpack.c.bf16 %v550, %v550
      %v562 = vunpack.c.l.b16 %v554
      %v563 = vunpack.c.l.b16 %v555
      %v564 = vunpack.c.l.b16 %v556
      %v565 = vunpack.c.l.b16 %v557
      %v566 = vpack.c.b16 %v563, %v562
      %v567 = vpack.c.b16 %v565, %v564
      %570 = vst [vmem:[%s262] sm:$0xff] %v566
      %571 = vst [vmem:[%s262 + $0x8] sm:$0xff] %v567
      %v572 = vrot.slane %v507, 4
      %v573 = vadd.f32 %v507, %v572
      %v574 = vrot.slane %v573, 2
      %v575 = vadd.f32 %v573, %v574
      %v576 = vrot.slane %v575, 1
      %v577 = vadd.f32 %v575, %v576
      %v578 = vrot.slane %v509, 4
      %v579 = vadd.f32 %v509, %v578
      %v580 = vrot.slane %v579, 2
      %v581 = vadd.f32 %v579, %v580
      %v582 = vrot.slane %v581, 1
      %v583 = vadd.f32 %v581, %v582
      %v584 = vrot.slane %v548, 4
      %v585 = vadd.f32 %v548, %v584
      %v586 = vrot.slane %v585, 2
      %v587 = vadd.f32 %v585, %v586
      %v588 = vrot.slane %v587, 1
      %v589 = vadd.f32 %v587, %v588
      %v590 = vrot.slane %v550, 4
      %v591 = vadd.f32 %v550, %v590
      %v592 = vrot.slane %v591, 2
      %v593 = vadd.f32 %v591, %v592
      %v594 = vrot.slane %v593, 1
      %v595 = vadd.f32 %v593, %v594
      %v596 = vmul.f32 %v507, %v507
      %v597 = vmul.f32 %v509, %v509
      %v598 = vmul.f32 %v548, %v548
      %v599 = vmul.f32 %v550, %v550
      %v600 = vrot.slane %v596, 4
      %v601 = vadd.f32 %v596, %v600
      %v602 = vrot.slane %v601, 2
      %v603 = vadd.f32 %v601, %v602
      %v604 = vrot.slane %v603, 1
      %v605 = vadd.f32 %v603, %v604
      %v606 = vrot.slane %v597, 4
      %v607 = vadd.f32 %v597, %v606
      %v608 = vrot.slane %v607, 2
      %v609 = vadd.f32 %v607, %v608
      %v610 = vrot.slane %v609, 1
      %v611 = vadd.f32 %v609, %v610
      %v612 = vrot.slane %v598, 4
      %v613 = vadd.f32 %v598, %v612
      %v614 = vrot.slane %v613, 2
      %v615 = vadd.f32 %v613, %v614
      %v616 = vrot.slane %v615, 1
      %v617 = vadd.f32 %v615, %v616
      %v618 = vrot.slane %v599, 4
      %v619 = vadd.f32 %v599, %v618
      %v620 = vrot.slane %v619, 2
      %v621 = vadd.f32 %v619, %v620
      %v622 = vrot.slane %v621, 1
      %v623 = vadd.f32 %v621, %v622
      %624 = vst [vmem:[%s269] sm:$0xff] %v577
      %625 = vst [vmem:[%s269 + $0x8] sm:$0xff] %v583
      %626 = vst [vmem:[%s269 + $0x10] sm:$0xff] %v589
      %627 = vst [vmem:[%s269 + $0x18] sm:$0xff] %v595
      %628 = vst [vmem:[%s276] sm:$0xff] %v605
      %629 = vst [vmem:[%s276 + $0x8] sm:$0xff] %v611
      %630 = vst [vmem:[%s276 + $0x10] sm:$0xff] %v617
      %631 = vst [vmem:[%s276 + $0x18] sm:$0xff] %v623
      %s632 = sadd.s32 %s20, %s21
      %p633 = scmp.lt.s32.totalorder %s632, 15
      %s634 = scalar_select %p633, %s632, 15
      %s635 = smul.addr %s634, 4
      %s636 = smul.addr %s635, 4
      %s637 = scalar_lea.vmem %s2, %s636
      %s638 = sadd.s32 %s20, %s21
      %p639 = scmp.lt.s32.totalorder %s638, 15
      %s640 = scalar_select %p639, %s638, 15
      %s641 = smul.addr %s640, 4
      %s642 = smul.addr %s641, 8
      %s643 = scalar_lea.vmem %s3, %s642
      %s644 = sadd.s32 %s20, %s21
      %p645 = scmp.lt.s32.totalorder %s644, 15
      %s646 = scalar_select %p645, %s644, 15
      %s647 = smul.addr %s646, 4
      %s648 = smul.addr %s647, 8
      %s649 = scalar_lea.vmem %s4, %s648
      // Predicated region
      $region29: #{generator_forward.9} parent=27 // pred_check
        %p650 = pneg %p102
      $region30: #{generator_forward.9} parent=27 // pred_check_branch
        %652 = sbr.rel (%p650) target = $region32
      $region31: #{generator_forward.9} parent=27 // pred_region
        %s653 = sadd.s32 %s20, %s21
      $region32: #{generator_forward.9} parent=27 // pred_fallthru
        _
      // Predicated region
      $region33: #{generator_forward.9} parent=27 // pred_check
        %p654 = pneg %p130
      $region34: #{generator_forward.9} parent=27 // pred_check_branch
        %656 = sbr.rel (%p654) target = $region36
      $region35: #{generator_forward.9} parent=27 // pred_region
        %s657 = sadd.s32 %s20, %s21
      $region36: #{generator_forward.9} parent=27 // pred_fallthru
        _
      // Predicated region
      $region37: #{generator_forward.9} parent=27 // pred_check
        %p658 = pneg %p158
      $region38: #{generator_forward.9} parent=27 // pred_check_branch
        %660 = sbr.rel (%p658) target = $region40
      $region39: #{generator_forward.9} parent=27 // pred_region
        %s661 = sadd.s32 %s20, %s21
      $region40: #{generator_forward.9} parent=27 // pred_fallthru
        _
    $region28: #{generator_forward.9} parent=5 // pred_fallthru
      _
    %p662 = scmp.le.s32.totalorder 2, %s11
    // Predicated region
    $region41: #{generator_forward.9} parent=5 // pred_check
      %p663 = pneg %p662
    $region42: #{generator_forward.9} parent=5 // pred_check_branch
      %665 = sbr.rel (%p663) target = $region44
    $region43: #{generator_forward.9} parent=5 // pred_region
      %s666 = ssub.s32 %s11, 2
      // Predicated region
      $region45: #{generator_forward.9} parent=43 // pred_check
        %p667 = pneg %p108
      $region46: #{generator_forward.9} parent=43 // pred_check_branch
        %669 = sbr.rel (%p667) target = $region48
      $region47: #{generator_forward.9} parent=43 // pred_region
        %s670 = sadd.s32 %s22, %s23
        %p671 = scmp.lt.s32.totalorder %s670, 15
        %s672 = scalar_select %p671, %s670, 15
        %s673 = smul.addr %s672, 4
        %s674 = smul.addr %s673, 4
        %s675 = scalar_lea.vmem %s2, %s674
      $region48: #{generator_forward.9} parent=43 // pred_fallthru
        _
      // Predicated region
      $region49: #{generator_forward.9} parent=43 // pred_check
        %p676 = pneg %p136
      $region50: #{generator_forward.9} parent=43 // pred_check_branch
        %678 = sbr.rel (%p676) target = $region52
      $region51: #{generator_forward.9} parent=43 // pred_region
        %s679 = sadd.s32 %s22, %s23
        %p680 = scmp.lt.s32.totalorder %s679, 15
        %s681 = scalar_select %p680, %s679, 15
        %s682 = smul.addr %s681, 4
        %s683 = smul.addr %s682, 8
        %s684 = scalar_lea.vmem %s3, %s683
      $region52: #{generator_forward.9} parent=43 // pred_fallthru
        _
      // Predicated region
      $region53: #{generator_forward.9} parent=43 // pred_check
        %p685 = pneg %p164
      $region54: #{generator_forward.9} parent=43 // pred_check_branch
        %687 = sbr.rel (%p685) target = $region56
      $region55: #{generator_forward.9} parent=43 // pred_region
        %s688 = sadd.s32 %s22, %s23
        %p689 = scmp.lt.s32.totalorder %s688, 15
        %s690 = scalar_select %p689, %s688, 15
        %s691 = smul.addr %s690, 4
        %s692 = smul.addr %s691, 8
        %s693 = scalar_lea.vmem %s4, %s692
      $region56: #{generator_forward.9} parent=43 // pred_fallthru
        _
    $region44: #{generator_forward.9} parent=5 // pred_fallthru
      _
  $region6: #{generator_forward.9} parent=0 // loop_footer
    %s15 = sadd.s32 1, %s11
  $region7: #{generator_forward.9} parent=0 // loop_footer_branch
    %10 = sbr.rel target = $region3
  $region8: #{generator_forward.9} parent=0 // loop_exit
    _

// kernel: generator_forward.10
$region0: #{generator_forward.10}
  #allocation0 [shape = 'u32[]', space=smem, size = 0x4, offset = 0x4, fixed_abs, tag = 'smem constant byte address 0x4 - core index']
  #allocation1 [shape = 'u32[144,128]{1,0:T(1,128)}', space=vmem, size = 0x12000, scoped, tag = 'internal scratch']
  %s0 = inlined_call_operand.vmem [shape: bf16[128,512], index: 0, kind: input, shape index: {}]
  %s1 = inlined_call_operand.vmem [shape: f32[1,512], index: 1, kind: input, shape index: {}]
  %s2 = inlined_call_operand.vmem [shape: f32[1,512], index: 2, kind: input, shape index: {}]
  %s3 = inlined_call_operand.vmem [shape: bf16[128,512], index: 3, kind: output, shape index: {}]
  %s4 = sld [smem:[#allocation0]]
  $region22: #{generator_forward.10} parent=0
    _
  %s6 = ssub.s32 1, %s4
  %s7 = scalar_select 0, %s6, %s4
  // Predicated region
  $region2: #{generator_forward.10} parent=0 // pred_check
    _
  $region3: #{generator_forward.10} parent=0 // pred_check_branch
    %9 = sbr.rel (0) target = $region5
  $region4: #{generator_forward.10} parent=0 // pred_region
    _
  $region5: #{generator_forward.10} parent=0 // pred_fallthru
    _
  // Predicated region
  $region6: #{generator_forward.10} parent=0 // pred_check
    _
  $region7: #{generator_forward.10} parent=0 // pred_check_branch
    %11 = sbr.rel (0) target = $region9
  $region8: #{generator_forward.10} parent=0 // pred_region
    _
  $region9: #{generator_forward.10} parent=0 // pred_fallthru
    _
  // Predicated region
  $region10: #{generator_forward.10} parent=0 // pred_check
    _
  $region11: #{generator_forward.10} parent=0 // pred_check_branch
    %13 = sbr.rel (0) target = $region13
  $region12: #{generator_forward.10} parent=0 // pred_region
    _
  $region13: #{generator_forward.10} parent=0 // pred_fallthru
    _
  %v14 = vld [vmem:[%s0] sm:$0xff]
  %v15 = vld [vmem:[%s0 + $0x8] sm:$0xff]
  %v16 = vld [vmem:[%s0 + $0x10] sm:$0xff]
  %v17 = vld [vmem:[%s0 + $0x18] sm:$0xff]
  %v18 = vld [vmem:[%s0 + $0x20] sm:$0xff]
  %v19 = vld [vmem:[%s0 + $0x28] sm:$0xff]
  %v20 = vld [vmem:[%s0 + $0x30] sm:$0xff]
  %v21 = vld [vmem:[%s0 + $0x38] sm:$0xff]
  %v22 = vld [vmem:[%s0 + $0x40] sm:$0xff]
  %v23 = vld [vmem:[%s0 + $0x48] sm:$0xff]
  %v24 = vld [vmem:[%s0 + $0x50] sm:$0xff]
  %v25 = vld [vmem:[%s0 + $0x58] sm:$0xff]
  %v26 = vld [vmem:[%s0 + $0x60] sm:$0xff]
  %v27 = vld [vmem:[%s0 + $0x68] sm:$0xff]
  %v28 = vld [vmem:[%s0 + $0x70] sm:$0xff]
  %v29 = vld [vmem:[%s0 + $0x78] sm:$0xff]
  %v30 = vld [vmem:[%s0 + $0x80] sm:$0xff]
  %v31 = vld [vmem:[%s0 + $0x88] sm:$0xff]
  %v32 = vld [vmem:[%s0 + $0x90] sm:$0xff]
  %v33 = vld [vmem:[%s0 + $0x98] sm:$0xff]
  %v34 = vld [vmem:[%s0 + $0xa0] sm:$0xff]
  %v35 = vld [vmem:[%s0 + $0xa8] sm:$0xff]
  %v36 = vld [vmem:[%s0 + $0xb0] sm:$0xff]
  %v37 = vld [vmem:[%s0 + $0xb8] sm:$0xff]
  %v38 = vld [vmem:[%s0 + $0xc0] sm:$0xff]
  %v39 = vld [vmem:[%s0 + $0xc8] sm:$0xff]
  %v40 = vld [vmem:[%s0 + $0xd0] sm:$0xff]
  %v41 = vld [vmem:[%s0 + $0xd8] sm:$0xff]
  %v42 = vld [vmem:[%s0 + $0xe0] sm:$0xff]
  %v43 = vld [vmem:[%s0 + $0xe8] sm:$0xff]
  %v44 = vld [vmem:[%s0 + $0xf0] sm:$0xff]
  %v45 = vld [vmem:[%s0 + $0xf8] sm:$0xff]
  %v46 = vunpack.c.l.bf16 %v14
  %v47 = vunpack.c.h.bf16 %v14
  %v48 = vunpack.c.l.bf16 %v15
  %v49 = vunpack.c.h.bf16 %v15
  %v50 = vunpack.c.l.bf16 %v16
  %v51 = vunpack.c.h.bf16 %v16
  %v52 = vunpack.c.l.bf16 %v17
  %v53 = vunpack.c.h.bf16 %v17
  %v54 = vunpack.c.l.bf16 %v18
  %v55 = vunpack.c.h.bf16 %v18
  %v56 = vunpack.c.l.bf16 %v19
  %v57 = vunpack.c.h.bf16 %v19
  %v58 = vunpack.c.l.bf16 %v20
  %v59 = vunpack.c.h.bf16 %v20
  %v60 = vunpack.c.l.bf16 %v21
  %v61 = vunpack.c.h.bf16 %v21
  %v62 = vunpack.c.l.bf16 %v22
  %v63 = vunpack.c.h.bf16 %v22
  %v64 = vunpack.c.l.bf16 %v23
  %v65 = vunpack.c.h.bf16 %v23
  %v66 = vunpack.c.l.bf16 %v24
  %v67 = vunpack.c.h.bf16 %v24
  %v68 = vunpack.c.l.bf16 %v25
  %v69 = vunpack.c.h.bf16 %v25
  %v70 = vunpack.c.l.bf16 %v26
  %v71 = vunpack.c.h.bf16 %v26
  %v72 = vunpack.c.l.bf16 %v27
  %v73 = vunpack.c.h.bf16 %v27
  %v74 = vunpack.c.l.bf16 %v28
  %v75 = vunpack.c.h.bf16 %v28
  %v76 = vunpack.c.l.bf16 %v29
  %v77 = vunpack.c.h.bf16 %v29
  %v78 = vunpack.c.l.bf16 %v30
  %v79 = vunpack.c.h.bf16 %v30
  %v80 = vunpack.c.l.bf16 %v31
  %v81 = vunpack.c.h.bf16 %v31
  %v82 = vunpack.c.l.bf16 %v32
  %v83 = vunpack.c.h.bf16 %v32
  %v84 = vunpack.c.l.bf16 %v33
  %v85 = vunpack.c.h.bf16 %v33
  %v86 = vunpack.c.l.bf16 %v34
  %v87 = vunpack.c.h.bf16 %v34
  %v88 = vunpack.c.l.bf16 %v35
  %v89 = vunpack.c.h.bf16 %v35
  %v90 = vunpack.c.l.bf16 %v36
  %v91 = vunpack.c.h.bf16 %v36
  %v92 = vunpack.c.l.bf16 %v37
  %v93 = vunpack.c.h.bf16 %v37
  %v94 = vunpack.c.l.bf16 %v38
  %v95 = vunpack.c.h.bf16 %v38
  %v96 = vunpack.c.l.bf16 %v39
  %v97 = vunpack.c.h.bf16 %v39
  %v98 = vunpack.c.l.bf16 %v40
  %v99 = vunpack.c.h.bf16 %v40
  %v100 = vunpack.c.l.bf16 %v41
  %v101 = vunpack.c.h.bf16 %v41
  %v102 = vunpack.c.l.bf16 %v42
  %v103 = vunpack.c.h.bf16 %v42
  %v104 = vunpack.c.l.bf16 %v43
  %v105 = vunpack.c.h.bf16 %v43
  %v106 = vunpack.c.l.bf16 %v44
  %v107 = vunpack.c.h.bf16 %v44
  %v108 = vunpack.c.l.bf16 %v45
  %v109 = vunpack.c.h.bf16 %v45
  %v110 = vld [vmem:[%s1] sm:$0xf]
  %v112 = vlaneseq
  %v113 = vshrl.u32 %v112, 7
  %v114 = vsub.s32 0, %v113
  %v115 = vrot.slane %v110, %v114
  %v116 = vlaneseq
  %v117 = vshrl.u32 %v116, 7
  %v118 = vsub.s32 1, %v117
  %v119 = vrot.slane %v110, %v118
  %v120 = vlaneseq
  %v121 = vshrl.u32 %v120, 7
  %v122 = vsub.s32 2, %v121
  %v123 = vrot.slane %v110, %v122
  %v124 = vlaneseq
  %v125 = vshrl.u32 %v124, 7
  %v126 = vsub.s32 3, %v125
  %v127 = vrot.slane %v110, %v126
  %v132 = vmul.f32 %v46, %v115
  %v133 = vmul.f32 %v47, %v119
  %v134 = vmul.f32 %v48, %v123
  %v135 = vmul.f32 %v49, %v127
  %v136 = vmul.f32 %v50, %v115
  %v137 = vmul.f32 %v51, %v119
  %v138 = vmul.f32 %v52, %v123
  %v139 = vmul.f32 %v53, %v127
  %v140 = vmul.f32 %v54, %v115
  %v141 = vmul.f32 %v55, %v119
  %v142 = vmul.f32 %v56, %v123
  %v143 = vmul.f32 %v57, %v127
  %v144 = vmul.f32 %v58, %v115
  %v145 = vmul.f32 %v59, %v119
  %v146 = vmul.f32 %v60, %v123
  %v147 = vmul.f32 %v61, %v127
  %v148 = vmul.f32 %v62, %v115
  %v149 = vmul.f32 %v63, %v119
  %v150 = vmul.f32 %v64, %v123
  %v151 = vmul.f32 %v65, %v127
  %v152 = vmul.f32 %v66, %v115
  %v153 = vmul.f32 %v67, %v119
  %v154 = vmul.f32 %v68, %v123
  %v155 = vmul.f32 %v69, %v127
  %v156 = vmul.f32 %v70, %v115
  %v157 = vmul.f32 %v71, %v119
  %v158 = vmul.f32 %v72, %v123
  %v159 = vmul.f32 %v73, %v127
  %v160 = vmul.f32 %v74, %v115
  %v161 = vmul.f32 %v75, %v119
  %v162 = vmul.f32 %v76, %v123
  %v163 = vmul.f32 %v77, %v127
  %v164 = vmul.f32 %v78, %v115
  %v165 = vmul.f32 %v79, %v119
  %v166 = vmul.f32 %v80, %v123
  %v167 = vmul.f32 %v81, %v127
  %v168 = vmul.f32 %v82, %v115
  %v169 = vmul.f32 %v83, %v119
  %v170 = vmul.f32 %v84, %v123
  %v171 = vmul.f32 %v85, %v127
  %v172 = vmul.f32 %v86, %v115
  %v173 = vmul.f32 %v87, %v119
  %v174 = vmul.f32 %v88, %v123
  %v175 = vmul.f32 %v89, %v127
  %v176 = vmul.f32 %v90, %v115
  %v177 = vmul.f32 %v91, %v119
  %v178 = vmul.f32 %v92, %v123
  %v179 = vmul.f32 %v93, %v127
  %v180 = vmul.f32 %v94, %v115
  %v181 = vmul.f32 %v95, %v119
  %v182 = vmul.f32 %v96, %v123
  %v183 = vmul.f32 %v97, %v127
  %v184 = vmul.f32 %v98, %v115
  %v185 = vmul.f32 %v99, %v119
  %v186 = vmul.f32 %v100, %v123
  %v187 = vmul.f32 %v101, %v127
  %v188 = vmul.f32 %v102, %v115
  %v189 = vmul.f32 %v103, %v119
  %v190 = vmul.f32 %v104, %v123
  %v191 = vmul.f32 %v105, %v127
  %v192 = vmul.f32 %v106, %v115
  %v193 = vmul.f32 %v107, %v119
  %v194 = vmul.f32 %v108, %v123
  %v195 = vmul.f32 %v109, %v127
  %v196 = vld [vmem:[%s2] sm:$0xf]
  %v198 = vlaneseq
  %v199 = vshrl.u32 %v198, 7
  %v200 = vsub.s32 0, %v199
  %v201 = vrot.slane %v196, %v200
  %v202 = vlaneseq
  %v203 = vshrl.u32 %v202, 7
  %v204 = vsub.s32 1, %v203
  %v205 = vrot.slane %v196, %v204
  %v206 = vlaneseq
  %v207 = vshrl.u32 %v206, 7
  %v208 = vsub.s32 2, %v207
  %v209 = vrot.slane %v196, %v208
  %v210 = vlaneseq
  %v211 = vshrl.u32 %v210, 7
  %v212 = vsub.s32 3, %v211
  %v213 = vrot.slane %v196, %v212
  %v218 = vadd.f32 %v132, %v201
  %v219 = vadd.f32 %v133, %v205
  %v220 = vadd.f32 %v134, %v209
  %v221 = vadd.f32 %v135, %v213
  %v222 = vadd.f32 %v136, %v201
  %v223 = vadd.f32 %v137, %v205
  %v224 = vadd.f32 %v138, %v209
  %v225 = vadd.f32 %v139, %v213
  %v226 = vadd.f32 %v140, %v201
  %v227 = vadd.f32 %v141, %v205
  %v228 = vadd.f32 %v142, %v209
  %v229 = vadd.f32 %v143, %v213
  %v230 = vadd.f32 %v144, %v201
  %v231 = vadd.f32 %v145, %v205
  %v232 = vadd.f32 %v146, %v209
  %v233 = vadd.f32 %v147, %v213
  %v234 = vadd.f32 %v148, %v201
  %v235 = vadd.f32 %v149, %v205
  %v236 = vadd.f32 %v150, %v209
  %v237 = vadd.f32 %v151, %v213
  %v238 = vadd.f32 %v152, %v201
  %v239 = vadd.f32 %v153, %v205
  %v240 = vadd.f32 %v154, %v209
  %v241 = vadd.f32 %v155, %v213
  %v242 = vadd.f32 %v156, %v201
  %v243 = vadd.f32 %v157, %v205
  %v244 = vadd.f32 %v158, %v209
  %v245 = vadd.f32 %v159, %v213
  %v246 = vadd.f32 %v160, %v201
  %v247 = vadd.f32 %v161, %v205
  %v248 = vadd.f32 %v162, %v209
  %v249 = vadd.f32 %v163, %v213
  %v250 = vadd.f32 %v164, %v201
  %v251 = vadd.f32 %v165, %v205
  %v252 = vadd.f32 %v166, %v209
  %v253 = vadd.f32 %v167, %v213
  %v254 = vadd.f32 %v168, %v201
  %v255 = vadd.f32 %v169, %v205
  %v256 = vadd.f32 %v170, %v209
  %v257 = vadd.f32 %v171, %v213
  %v258 = vadd.f32 %v172, %v201
  %v259 = vadd.f32 %v173, %v205
  %v260 = vadd.f32 %v174, %v209
  %v261 = vadd.f32 %v175, %v213
  %v262 = vadd.f32 %v176, %v201
  %v263 = vadd.f32 %v177, %v205
  %v264 = vadd.f32 %v178, %v209
  %v265 = vadd.f32 %v179, %v213
  %v266 = vadd.f32 %v180, %v201
  %v267 = vadd.f32 %v181, %v205
  %v268 = vadd.f32 %v182, %v209
  %v269 = vadd.f32 %v183, %v213
  %v270 = vadd.f32 %v184, %v201
  %v271 = vadd.f32 %v185, %v205
  %v272 = vadd.f32 %v186, %v209
  %v273 = vadd.f32 %v187, %v213
  %v274 = vadd.f32 %v188, %v201
  %v275 = vadd.f32 %v189, %v205
  %v276 = vadd.f32 %v190, %v209
  %v277 = vadd.f32 %v191, %v213
  %v278 = vadd.f32 %v192, %v201
  %v279 = vadd.f32 %v193, %v205
  %v280 = vadd.f32 %v194, %v209
  %v281 = vadd.f32 %v195, %v213
  %v282 = vmax.f32 %v218, 0.0
  %v283 = vmax.f32 %v219, 0.0
  %v284 = vmax.f32 %v220, 0.0
  %v285 = vmax.f32 %v221, 0.0
  %v286 = vmax.f32 %v222, 0.0
  %v287 = vmax.f32 %v223, 0.0
  %v288 = vmax.f32 %v224, 0.0
  %v289 = vmax.f32 %v225, 0.0
  %v290 = vmax.f32 %v226, 0.0
  %v291 = vmax.f32 %v227, 0.0
  %v292 = vmax.f32 %v228, 0.0
  %v293 = vmax.f32 %v229, 0.0
  %v294 = vmax.f32 %v230, 0.0
  %v295 = vmax.f32 %v231, 0.0
  %v296 = vmax.f32 %v232, 0.0
  %v297 = vmax.f32 %v233, 0.0
  %v298 = vmax.f32 %v234, 0.0
  %v299 = vmax.f32 %v235, 0.0
  %v300 = vmax.f32 %v236, 0.0
  %v301 = vmax.f32 %v237, 0.0
  %v302 = vmax.f32 %v238, 0.0
  %v303 = vmax.f32 %v239, 0.0
  %v304 = vmax.f32 %v240, 0.0
  %v305 = vmax.f32 %v241, 0.0
  %v306 = vmax.f32 %v242, 0.0
  %v307 = vmax.f32 %v243, 0.0
  %v308 = vmax.f32 %v244, 0.0
  %v309 = vmax.f32 %v245, 0.0
  %v310 = vmax.f32 %v246, 0.0
  %v311 = vmax.f32 %v247, 0.0
  %v312 = vmax.f32 %v248, 0.0
  %v313 = vmax.f32 %v249, 0.0
  %v314 = vmax.f32 %v250, 0.0
  %v315 = vmax.f32 %v251, 0.0
  %v316 = vmax.f32 %v252, 0.0
  %v317 = vmax.f32 %v253, 0.0
  %v318 = vmax.f32 %v254, 0.0
  %v319 = vmax.f32 %v255, 0.0
  %v320 = vmax.f32 %v256, 0.0
  %v321 = vmax.f32 %v257, 0.0
  %v322 = vmax.f32 %v258, 0.0
  %v323 = vmax.f32 %v259, 0.0
  %v324 = vmax.f32 %v260, 0.0
  %v325 = vmax.f32 %v261, 0.0
  %v326 = vmax.f32 %v262, 0.0
  %v327 = vmax.f32 %v263, 0.0
  %v328 = vmax.f32 %v264, 0.0
  %v329 = vmax.f32 %v265, 0.0
  %v330 = vmax.f32 %v266, 0.0
  %v331 = vmax.f32 %v267, 0.0
  %v332 = vmax.f32 %v268, 0.0
  %v333 = vmax.f32 %v269, 0.0
  %v334 = vmax.f32 %v270, 0.0
  %v335 = vmax.f32 %v271, 0.0
  %v336 = vmax.f32 %v272, 0.0
  %v337 = vmax.f32 %v273, 0.0
  %v338 = vmax.f32 %v274, 0.0
  %v339 = vmax.f32 %v275, 0.0
  %v340 = vmax.f32 %v276, 0.0
  %v341 = vmax.f32 %v277, 0.0
  %v342 = vmax.f32 %v278, 0.0
  %v343 = vmax.f32 %v279, 0.0
  %v344 = vmax.f32 %v280, 0.0
  %v345 = vmax.f32 %v281, 0.0
  %v346 = vpack.c.bf16 %v286, %v282
  %v347 = vpack.c.bf16 %v287, %v283
  %v348 = vpack.c.bf16 %v288, %v284
  %v349 = vpack.c.bf16 %v289, %v285
  %v350 = vpack.c.bf16 %v294, %v290
  %v351 = vpack.c.bf16 %v295, %v291
  %v352 = vpack.c.bf16 %v296, %v292
  %v353 = vpack.c.bf16 %v297, %v293
  %v354 = vpack.c.bf16 %v302, %v298
  %v355 = vpack.c.bf16 %v303, %v299
  %v356 = vpack.c.bf16 %v304, %v300
  %v357 = vpack.c.bf16 %v305, %v301
  %v358 = vpack.c.bf16 %v310, %v306
  %v359 = vpack.c.bf16 %v311, %v307
  %v360 = vpack.c.bf16 %v312, %v308
  %v361 = vpack.c.bf16 %v313, %v309
  %v362 = vpack.c.bf16 %v318, %v314
  %v363 = vpack.c.bf16 %v319, %v315
  %v364 = vpack.c.bf16 %v320, %v316
  %v365 = vpack.c.bf16 %v321, %v317
  %v366 = vpack.c.bf16 %v326, %v322
  %v367 = vpack.c.bf16 %v327, %v323
  %v368 = vpack.c.bf16 %v328, %v324
  %v369 = vpack.c.bf16 %v329, %v325
  %v370 = vpack.c.bf16 %v334, %v330
  %v371 = vpack.c.bf16 %v335, %v331
  %v372 = vpack.c.bf16 %v336, %v332
  %v373 = vpack.c.bf16 %v337, %v333
  %v374 = vpack.c.bf16 %v342, %v338
  %v375 = vpack.c.bf16 %v343, %v339
  %v376 = vpack.c.bf16 %v344, %v340
  %v377 = vpack.c.bf16 %v345, %v341
  %v410 = vunpack.c.l.b16 %v346
  %v411 = vunpack.c.l.b16 %v347
  %v412 = vunpack.c.l.b16 %v348
  %v413 = vunpack.c.l.b16 %v349
  %v414 = vunpack.c.h.b16 %v346
  %v415 = vunpack.c.h.b16 %v347
  %v416 = vunpack.c.h.b16 %v348
  %v417 = vunpack.c.h.b16 %v349
  %v418 = vunpack.c.l.b16 %v350
  %v419 = vunpack.c.l.b16 %v351
  %v420 = vunpack.c.l.b16 %v352
  %v421 = vunpack.c.l.b16 %v353
  %v422 = vunpack.c.h.b16 %v350
  %v423 = vunpack.c.h.b16 %v351
  %v424 = vunpack.c.h.b16 %v352
  %v425 = vunpack.c.h.b16 %v353
  %v426 = vunpack.c.l.b16 %v354
  %v427 = vunpack.c.l.b16 %v355
  %v428 = vunpack.c.l.b16 %v356
  %v429 = vunpack.c.l.b16 %v357
  %v430 = vunpack.c.h.b16 %v354
  %v431 = vunpack.c.h.b16 %v355
  %v432 = vunpack.c.h.b16 %v356
  %v433 = vunpack.c.h.b16 %v357
  %v434 = vunpack.c.l.b16 %v358
  %v435 = vunpack.c.l.b16 %v359
  %v436 = vunpack.c.l.b16 %v360
  %v437 = vunpack.c.l.b16 %v361
  %v438 = vunpack.c.h.b16 %v358
  %v439 = vunpack.c.h.b16 %v359
  %v440 = vunpack.c.h.b16 %v360
  %v441 = vunpack.c.h.b16 %v361
  %v442 = vunpack.c.l.b16 %v362
  %v443 = vunpack.c.l.b16 %v363
  %v444 = vunpack.c.l.b16 %v364
  %v445 = vunpack.c.l.b16 %v365
  %v446 = vunpack.c.h.b16 %v362
  %v447 = vunpack.c.h.b16 %v363
  %v448 = vunpack.c.h.b16 %v364
  %v449 = vunpack.c.h.b16 %v365
  %v450 = vunpack.c.l.b16 %v366
  %v451 = vunpack.c.l.b16 %v367
  %v452 = vunpack.c.l.b16 %v368
  %v453 = vunpack.c.l.b16 %v369
  %v454 = vunpack.c.h.b16 %v366
  %v455 = vunpack.c.h.b16 %v367
  %v456 = vunpack.c.h.b16 %v368
  %v457 = vunpack.c.h.b16 %v369
  %v458 = vunpack.c.l.b16 %v370
  %v459 = vunpack.c.l.b16 %v371
  %v460 = vunpack.c.l.b16 %v372
  %v461 = vunpack.c.l.b16 %v373
  %v462 = vunpack.c.h.b16 %v370
  %v463 = vunpack.c.h.b16 %v371
  %v464 = vunpack.c.h.b16 %v372
  %v465 = vunpack.c.h.b16 %v373
  %v466 = vunpack.c.l.b16 %v374
  %v467 = vunpack.c.l.b16 %v375
  %v468 = vunpack.c.l.b16 %v376
  %v469 = vunpack.c.l.b16 %v377
  %v470 = vunpack.c.h.b16 %v374
  %v471 = vunpack.c.h.b16 %v375
  %v472 = vunpack.c.h.b16 %v376
  %v473 = vunpack.c.h.b16 %v377
  %v474 = vpack.c.b16 %v411, %v410
  %v475 = vpack.c.b16 %v413, %v412
  %v476 = vpack.c.b16 %v415, %v414
  %v477 = vpack.c.b16 %v417, %v416
  %v478 = vpack.c.b16 %v419, %v418
  %v479 = vpack.c.b16 %v421, %v420
  %v480 = vpack.c.b16 %v423, %v422
  %v481 = vpack.c.b16 %v425, %v424
  %v482 = vpack.c.b16 %v427, %v426
  %v483 = vpack.c.b16 %v429, %v428
  %v484 = vpack.c.b16 %v431, %v430
  %v485 = vpack.c.b16 %v433, %v432
  %v486 = vpack.c.b16 %v435, %v434
  %v487 = vpack.c.b16 %v437, %v436
  %v488 = vpack.c.b16 %v439, %v438
  %v489 = vpack.c.b16 %v441, %v440
  %v490 = vpack.c.b16 %v443, %v442
  %v491 = vpack.c.b16 %v445, %v444
  %v492 = vpack.c.b16 %v447, %v446
  %v493 = vpack.c.b16 %v449, %v448
  %v494 = vpack.c.b16 %v451, %v450
  %v495 = vpack.c.b16 %v453, %v452
  %v496 = vpack.c.b16 %v455, %v454
  %v497 = vpack.c.b16 %v457, %v456
  %v498 = vpack.c.b16 %v459, %v458
  %v499 = vpack.c.b16 %v461, %v460
  %v500 = vpack.c.b16 %v463, %v462
  %v501 = vpack.c.b16 %v465, %v464
  %v502 = vpack.c.b16 %v467, %v466
  %v503 = vpack.c.b16 %v469, %v468
  %v504 = vpack.c.b16 %v471, %v470
  %v505 = vpack.c.b16 %v473, %v472
  %538 = vst [vmem:[%s3] sm:$0xff] %v474
  %539 = vst [vmem:[%s3 + $0x8] sm:$0xff] %v475
  %540 = vst [vmem:[%s3 + $0x10] sm:$0xff] %v476
  %541 = vst [vmem:[%s3 + $0x18] sm:$0xff] %v477
  %542 = vst [vmem:[%s3 + $0x20] sm:$0xff] %v478
  %543 = vst [vmem:[%s3 + $0x28] sm:$0xff] %v479
  %544 = vst [vmem:[%s3 + $0x30] sm:$0xff] %v480
  %545 = vst [vmem:[%s3 + $0x38] sm:$0xff] %v481
  %546 = vst [vmem:[%s3 + $0x40] sm:$0xff] %v482
  %547 = vst [vmem:[%s3 + $0x48] sm:$0xff] %v483
  %548 = vst [vmem:[%s3 + $0x50] sm:$0xff] %v484
  %549 = vst [vmem:[%s3 + $0x58] sm:$0xff] %v485
  %550 = vst [vmem:[%s3 + $0x60] sm:$0xff] %v486
  %551 = vst [vmem:[%s3 + $0x68] sm:$0xff] %v487
  %552 = vst [vmem:[%s3 + $0x70] sm:$0xff] %v488
  %553 = vst [vmem:[%s3 + $0x78] sm:$0xff] %v489
  %554 = vst [vmem:[%s3 + $0x80] sm:$0xff] %v490
  %555 = vst [vmem:[%s3 + $0x88] sm:$0xff] %v491
  %556 = vst [vmem:[%s3 + $0x90] sm:$0xff] %v492
  %557 = vst [vmem:[%s3 + $0x98] sm:$0xff] %v493
  %558 = vst [vmem:[%s3 + $0xa0] sm:$0xff] %v494
  %559 = vst [vmem:[%s3 + $0xa8] sm:$0xff] %v495
  %560 = vst [vmem:[%s3 + $0xb0] sm:$0xff] %v496
  %561 = vst [vmem:[%s3 + $0xb8] sm:$0xff] %v497
  %562 = vst [vmem:[%s3 + $0xc0] sm:$0xff] %v498
  %563 = vst [vmem:[%s3 + $0xc8] sm:$0xff] %v499
  %564 = vst [vmem:[%s3 + $0xd0] sm:$0xff] %v500
  %565 = vst [vmem:[%s3 + $0xd8] sm:$0xff] %v501
  %566 = vst [vmem:[%s3 + $0xe0] sm:$0xff] %v502
  %567 = vst [vmem:[%s3 + $0xe8] sm:$0xff] %v503
  %568 = vst [vmem:[%s3 + $0xf0] sm:$0xff] %v504
  %569 = vst [vmem:[%s3 + $0xf8] sm:$0xff] %v505
  // Predicated region
  $region14: #{generator_forward.10} parent=0 // pred_check
    _
  $region15: #{generator_forward.10} parent=0 // pred_check_branch
    %571 = sbr.rel (0) target = $region17
  $region16: #{generator_forward.10} parent=0 // pred_region
    _
  $region17: #{generator_forward.10} parent=0 // pred_fallthru
    _
  // Predicated region
  $region18: #{generator_forward.10} parent=0 // pred_check
    _
  $region19: #{generator_forward.10} parent=0 // pred_check_branch
    %573 = sbr.rel (0) target = $region21
  $region20: #{generator_forward.10} parent=0 // pred_region
    _
  $region21: #{generator_forward.10} parent=0 // pred_fallthru
    _

// kernel: generator_forward.12
$region0: #{generator_forward.12}
  #allocation0 [shape = 'u32[]', space=smem, size = 0x4, offset = 0x4, fixed_abs, tag = 'smem constant byte address 0x4 - core index']
  #allocation1 [shape = 'u32[144,128]{1,0:T(1,128)}', space=vmem, size = 0x12000, scoped, tag = 'internal scratch']
  %s0 = inlined_call_operand.vmem [shape: bf16[128,256], index: 0, kind: input, shape index: {}]
  %s1 = inlined_call_operand.vmem [shape: f32[1,256], index: 1, kind: input, shape index: {}]
  %s2 = inlined_call_operand.vmem [shape: f32[1,256], index: 2, kind: input, shape index: {}]
  %s3 = inlined_call_operand.vmem [shape: bf16[128,256], index: 3, kind: output, shape index: {}]
  %s4 = sld [smem:[#allocation0]]
  $region22: #{generator_forward.12} parent=0
    _
  %s6 = ssub.s32 1, %s4
  %s7 = scalar_select 0, %s6, %s4
  // Predicated region
  $region2: #{generator_forward.12} parent=0 // pred_check
    _
  $region3: #{generator_forward.12} parent=0 // pred_check_branch
    %9 = sbr.rel (0) target = $region5
  $region4: #{generator_forward.12} parent=0 // pred_region
    _
  $region5: #{generator_forward.12} parent=0 // pred_fallthru
    _
  // Predicated region
  $region6: #{generator_forward.12} parent=0 // pred_check
    _
  $region7: #{generator_forward.12} parent=0 // pred_check_branch
    %11 = sbr.rel (0) target = $region9
  $region8: #{generator_forward.12} parent=0 // pred_region
    _
  $region9: #{generator_forward.12} parent=0 // pred_fallthru
    _
  // Predicated region
  $region10: #{generator_forward.12} parent=0 // pred_check
    _
  $region11: #{generator_forward.12} parent=0 // pred_check_branch
    %13 = sbr.rel (0) target = $region13
  $region12: #{generator_forward.12} parent=0 // pred_region
    _
  $region13: #{generator_forward.12} parent=0 // pred_fallthru
    _
  %v14 = vld [vmem:[%s0] sm:$0xff]
  %v15 = vld [vmem:[%s0 + $0x8] sm:$0xff]
  %v16 = vld [vmem:[%s0 + $0x10] sm:$0xff]
  %v17 = vld [vmem:[%s0 + $0x18] sm:$0xff]
  %v18 = vld [vmem:[%s0 + $0x20] sm:$0xff]
  %v19 = vld [vmem:[%s0 + $0x28] sm:$0xff]
  %v20 = vld [vmem:[%s0 + $0x30] sm:$0xff]
  %v21 = vld [vmem:[%s0 + $0x38] sm:$0xff]
  %v22 = vld [vmem:[%s0 + $0x40] sm:$0xff]
  %v23 = vld [vmem:[%s0 + $0x48] sm:$0xff]
  %v24 = vld [vmem:[%s0 + $0x50] sm:$0xff]
  %v25 = vld [vmem:[%s0 + $0x58] sm:$0xff]
  %v26 = vld [vmem:[%s0 + $0x60] sm:$0xff]
  %v27 = vld [vmem:[%s0 + $0x68] sm:$0xff]
  %v28 = vld [vmem:[%s0 + $0x70] sm:$0xff]
  %v29 = vld [vmem:[%s0 + $0x78] sm:$0xff]
  %v30 = vunpack.c.l.bf16 %v14
  %v31 = vunpack.c.h.bf16 %v14
  %v32 = vunpack.c.l.bf16 %v15
  %v33 = vunpack.c.h.bf16 %v15
  %v34 = vunpack.c.l.bf16 %v16
  %v35 = vunpack.c.h.bf16 %v16
  %v36 = vunpack.c.l.bf16 %v17
  %v37 = vunpack.c.h.bf16 %v17
  %v38 = vunpack.c.l.bf16 %v18
  %v39 = vunpack.c.h.bf16 %v18
  %v40 = vunpack.c.l.bf16 %v19
  %v41 = vunpack.c.h.bf16 %v19
  %v42 = vunpack.c.l.bf16 %v20
  %v43 = vunpack.c.h.bf16 %v20
  %v44 = vunpack.c.l.bf16 %v21
  %v45 = vunpack.c.h.bf16 %v21
  %v46 = vunpack.c.l.bf16 %v22
  %v47 = vunpack.c.h.bf16 %v22
  %v48 = vunpack.c.l.bf16 %v23
  %v49 = vunpack.c.h.bf16 %v23
  %v50 = vunpack.c.l.bf16 %v24
  %v51 = vunpack.c.h.bf16 %v24
  %v52 = vunpack.c.l.bf16 %v25
  %v53 = vunpack.c.h.bf16 %v25
  %v54 = vunpack.c.l.bf16 %v26
  %v55 = vunpack.c.h.bf16 %v26
  %v56 = vunpack.c.l.bf16 %v27
  %v57 = vunpack.c.h.bf16 %v27
  %v58 = vunpack.c.l.bf16 %v28
  %v59 = vunpack.c.h.bf16 %v28
  %v60 = vunpack.c.l.bf16 %v29
  %v61 = vunpack.c.h.bf16 %v29
  %v62 = vld [vmem:[%s1] sm:$0x3]
  %v64 = vlaneseq
  %v65 = vshrl.u32 %v64, 7
  %v66 = vsub.s32 0, %v65
  %v67 = vrot.slane %v62, %v66
  %v68 = vlaneseq
  %v69 = vshrl.u32 %v68, 7
  %v70 = vsub.s32 1, %v69
  %v71 = vrot.slane %v62, %v70
  %v74 = vmul.f32 %v30, %v67
  %v75 = vmul.f32 %v31, %v71
  %v76 = vmul.f32 %v32, %v67
  %v77 = vmul.f32 %v33, %v71
  %v78 = vmul.f32 %v34, %v67
  %v79 = vmul.f32 %v35, %v71
  %v80 = vmul.f32 %v36, %v67
  %v81 = vmul.f32 %v37, %v71
  %v82 = vmul.f32 %v38, %v67
  %v83 = vmul.f32 %v39, %v71
  %v84 = vmul.f32 %v40, %v67
  %v85 = vmul.f32 %v41, %v71
  %v86 = vmul.f32 %v42, %v67
  %v87 = vmul.f32 %v43, %v71
  %v88 = vmul.f32 %v44, %v67
  %v89 = vmul.f32 %v45, %v71
  %v90 = vmul.f32 %v46, %v67
  %v91 = vmul.f32 %v47, %v71
  %v92 = vmul.f32 %v48, %v67
  %v93 = vmul.f32 %v49, %v71
  %v94 = vmul.f32 %v50, %v67
  %v95 = vmul.f32 %v51, %v71
  %v96 = vmul.f32 %v52, %v67
  %v97 = vmul.f32 %v53, %v71
  %v98 = vmul.f32 %v54, %v67
  %v99 = vmul.f32 %v55, %v71
  %v100 = vmul.f32 %v56, %v67
  %v101 = vmul.f32 %v57, %v71
  %v102 = vmul.f32 %v58, %v67
  %v103 = vmul.f32 %v59, %v71
  %v104 = vmul.f32 %v60, %v67
  %v105 = vmul.f32 %v61, %v71
  %v106 = vld [vmem:[%s2] sm:$0x3]
  %v108 = vlaneseq
  %v109 = vshrl.u32 %v108, 7
  %v110 = vsub.s32 0, %v109
  %v111 = vrot.slane %v106, %v110
  %v112 = vlaneseq
  %v113 = vshrl.u32 %v112, 7
  %v114 = vsub.s32 1, %v113
  %v115 = vrot.slane %v106, %v114
  %v118 = vadd.f32 %v74, %v111
  %v119 = vadd.f32 %v75, %v115
  %v120 = vadd.f32 %v76, %v111
  %v121 = vadd.f32 %v77, %v115
  %v122 = vadd.f32 %v78, %v111
  %v123 = vadd.f32 %v79, %v115
  %v124 = vadd.f32 %v80, %v111
  %v125 = vadd.f32 %v81, %v115
  %v126 = vadd.f32 %v82, %v111
  %v127 = vadd.f32 %v83, %v115
  %v128 = vadd.f32 %v84, %v111
  %v129 = vadd.f32 %v85, %v115
  %v130 = vadd.f32 %v86, %v111
  %v131 = vadd.f32 %v87, %v115
  %v132 = vadd.f32 %v88, %v111
  %v133 = vadd.f32 %v89, %v115
  %v134 = vadd.f32 %v90, %v111
  %v135 = vadd.f32 %v91, %v115
  %v136 = vadd.f32 %v92, %v111
  %v137 = vadd.f32 %v93, %v115
  %v138 = vadd.f32 %v94, %v111
  %v139 = vadd.f32 %v95, %v115
  %v140 = vadd.f32 %v96, %v111
  %v141 = vadd.f32 %v97, %v115
  %v142 = vadd.f32 %v98, %v111
  %v143 = vadd.f32 %v99, %v115
  %v144 = vadd.f32 %v100, %v111
  %v145 = vadd.f32 %v101, %v115
  %v146 = vadd.f32 %v102, %v111
  %v147 = vadd.f32 %v103, %v115
  %v148 = vadd.f32 %v104, %v111
  %v149 = vadd.f32 %v105, %v115
  %v150 = vmax.f32 %v118, 0.0
  %v151 = vmax.f32 %v119, 0.0
  %v152 = vmax.f32 %v120, 0.0
  %v153 = vmax.f32 %v121, 0.0
  %v154 = vmax.f32 %v122, 0.0
  %v155 = vmax.f32 %v123, 0.0
  %v156 = vmax.f32 %v124, 0.0
  %v157 = vmax.f32 %v125, 0.0
  %v158 = vmax.f32 %v126, 0.0
  %v159 = vmax.f32 %v127, 0.0
  %v160 = vmax.f32 %v128, 0.0
  %v161 = vmax.f32 %v129, 0.0
  %v162 = vmax.f32 %v130, 0.0
  %v163 = vmax.f32 %v131, 0.0
  %v164 = vmax.f32 %v132, 0.0
  %v165 = vmax.f32 %v133, 0.0
  %v166 = vmax.f32 %v134, 0.0
  %v167 = vmax.f32 %v135, 0.0
  %v168 = vmax.f32 %v136, 0.0
  %v169 = vmax.f32 %v137, 0.0
  %v170 = vmax.f32 %v138, 0.0
  %v171 = vmax.f32 %v139, 0.0
  %v172 = vmax.f32 %v140, 0.0
  %v173 = vmax.f32 %v141, 0.0
  %v174 = vmax.f32 %v142, 0.0
  %v175 = vmax.f32 %v143, 0.0
  %v176 = vmax.f32 %v144, 0.0
  %v177 = vmax.f32 %v145, 0.0
  %v178 = vmax.f32 %v146, 0.0
  %v179 = vmax.f32 %v147, 0.0
  %v180 = vmax.f32 %v148, 0.0
  %v181 = vmax.f32 %v149, 0.0
  %v182 = vpack.c.bf16 %v152, %v150
  %v183 = vpack.c.bf16 %v153, %v151
  %v184 = vpack.c.bf16 %v156, %v154
  %v185 = vpack.c.bf16 %v157, %v155
  %v186 = vpack.c.bf16 %v160, %v158
  %v187 = vpack.c.bf16 %v161, %v159
  %v188 = vpack.c.bf16 %v164, %v162
  %v189 = vpack.c.bf16 %v165, %v163
  %v190 = vpack.c.bf16 %v168, %v166
  %v191 = vpack.c.bf16 %v169, %v167
  %v192 = vpack.c.bf16 %v172, %v170
  %v193 = vpack.c.bf16 %v173, %v171
  %v194 = vpack.c.bf16 %v176, %v174
  %v195 = vpack.c.bf16 %v177, %v175
  %v196 = vpack.c.bf16 %v180, %v178
  %v197 = vpack.c.bf16 %v181, %v179
  %v214 = vunpack.c.l.b16 %v182
  %v215 = vunpack.c.l.b16 %v183
  %v216 = vunpack.c.h.b16 %v182
  %v217 = vunpack.c.h.b16 %v183
  %v218 = vunpack.c.l.b16 %v184
  %v219 = vunpack.c.l.b16 %v185
  %v220 = vunpack.c.h.b16 %v184
  %v221 = vunpack.c.h.b16 %v185
  %v222 = vunpack.c.l.b16 %v186
  %v223 = vunpack.c.l.b16 %v187
  %v224 = vunpack.c.h.b16 %v186
  %v225 = vunpack.c.h.b16 %v187
  %v226 = vunpack.c.l.b16 %v188
  %v227 = vunpack.c.l.b16 %v189
  %v228 = vunpack.c.h.b16 %v188
  %v229 = vunpack.c.h.b16 %v189
  %v230 = vunpack.c.l.b16 %v190
  %v231 = vunpack.c.l.b16 %v191
  %v232 = vunpack.c.h.b16 %v190
  %v233 = vunpack.c.h.b16 %v191
  %v234 = vunpack.c.l.b16 %v192
  %v235 = vunpack.c.l.b16 %v193
  %v236 = vunpack.c.h.b16 %v192
  %v237 = vunpack.c.h.b16 %v193
  %v238 = vunpack.c.l.b16 %v194
  %v239 = vunpack.c.l.b16 %v195
  %v240 = vunpack.c.h.b16 %v194
  %v241 = vunpack.c.h.b16 %v195
  %v242 = vunpack.c.l.b16 %v196
  %v243 = vunpack.c.l.b16 %v197
  %v244 = vunpack.c.h.b16 %v196
  %v245 = vunpack.c.h.b16 %v197
  %v246 = vpack.c.b16 %v215, %v214
  %v247 = vpack.c.b16 %v217, %v216
  %v248 = vpack.c.b16 %v219, %v218
  %v249 = vpack.c.b16 %v221, %v220
  %v250 = vpack.c.b16 %v223, %v222
  %v251 = vpack.c.b16 %v225, %v224
  %v252 = vpack.c.b16 %v227, %v226
  %v253 = vpack.c.b16 %v229, %v228
  %v254 = vpack.c.b16 %v231, %v230
  %v255 = vpack.c.b16 %v233, %v232
  %v256 = vpack.c.b16 %v235, %v234
  %v257 = vpack.c.b16 %v237, %v236
  %v258 = vpack.c.b16 %v239, %v238
  %v259 = vpack.c.b16 %v241, %v240
  %v260 = vpack.c.b16 %v243, %v242
  %v261 = vpack.c.b16 %v245, %v244
  %278 = vst [vmem:[%s3] sm:$0xff] %v246
  %279 = vst [vmem:[%s3 + $0x8] sm:$0xff] %v247
  %280 = vst [vmem:[%s3 + $0x10] sm:$0xff] %v248
  %281 = vst [vmem:[%s3 + $0x18] sm:$0xff] %v249
  %282 = vst [vmem:[%s3 + $0x20] sm:$0xff] %v250
  %283 = vst [vmem:[%s3 + $0x28] sm:$0xff] %v251
  %284 = vst [vmem:[%s3 + $0x30] sm:$0xff] %v252
  %285 = vst [vmem:[%s3 + $0x38] sm:$0xff] %v253
  %286 = vst [vmem:[%s3 + $0x40] sm:$0xff] %v254
  %287 = vst [vmem:[%s3 + $0x48] sm:$0xff] %v255
  %288 = vst [vmem:[%s3 + $0x50] sm:$0xff] %v256
  %289 = vst [vmem:[%s3 + $0x58] sm:$0xff] %v257
  %290 = vst [vmem:[%s3 + $0x60] sm:$0xff] %v258
  %291 = vst [vmem:[%s3 + $0x68] sm:$0xff] %v259
  %292 = vst [vmem:[%s3 + $0x70] sm:$0xff] %v260
  %293 = vst [vmem:[%s3 + $0x78] sm:$0xff] %v261
  // Predicated region
  $region14: #{generator_forward.12} parent=0 // pred_check
    _
  $region15: #{generator_forward.12} parent=0 // pred_check_branch
    %295 = sbr.rel (0) target = $region17
  $region16: #{generator_forward.12} parent=0 // pred_region
    _
  $region17: #{generator_forward.12} parent=0 // pred_fallthru
    _
  // Predicated region
  $region18: #{generator_forward.12} parent=0 // pred_check
    _
  $region19: #{generator_forward.12} parent=0 // pred_check_branch
    %297 = sbr.rel (0) target = $region21
  $region20: #{generator_forward.12} parent=0 // pred_region
    _
  $region21: #{generator_forward.12} parent=0 // pred_fallthru
    _

// kernel: generator_forward.11
$region0: #{generator_forward.11}
  #allocation0 [shape = 'u32[]', space=smem, size = 0x4, offset = 0x4, fixed_abs, tag = 'smem constant byte address 0x4 - core index']
  #allocation1 [shape = 'u32[144,128]{1,0:T(1,128)}', space=vmem, size = 0x12000, scoped, tag = 'internal scratch']
  %s0 = inlined_call_operand.vmem [shape: bf16[4,32,2048], index: 0, kind: input, shape index: {}]
  %s1 = inlined_call_operand.vmem [shape: bf16[4,2048,256], index: 1, kind: input, shape index: {}]
  %s2 = inlined_call_operand.vmem [shape: bf16[128,256], index: 2, kind: output, shape index: {0}]
  %s3 = inlined_call_operand.vmem [shape: f32[32,256], index: 3, kind: output, shape index: {1}]
  %s4 = inlined_call_operand.vmem [shape: f32[32,256], index: 4, kind: output, shape index: {2}]
  %5 = xla_tuple %s2, %s3, %s4
  %s6 = sld [smem:[#allocation0]]
  $region57: #{generator_forward.11} parent=0
    _
  %s8 = ssub.s32 1, %s6
  %s9 = scalar_select 0, %s8, %s6
  loop: start=0, step=1, limit=6
  $region2: #{generator_forward.11} parent=0 // loop_pre_header
    _
  $region3: #{generator_forward.11} parent=0 // loop_header
    %s11 = sphi 0, %s15
    %p12 = scmp.ge.s32.totalorder %s11, 6
    %s18 = sphi 0, %s30
    %s19 = sphi 0, %s26
    %s20 = sphi 0, %s18
    %s21 = sphi 0, %s19
    %s22 = sphi 0, %s20
    %s23 = sphi 0, %s21
    %s35 = sphi 0, %s37
    %s38 = sphi 0, %s35
    %s39 = sphi 0, %s38
    %s55 = sphi 0, %s39
    %s61 = sphi 0, %s63
    %s64 = sphi 0, %s61
    %s65 = sphi 0, %s64
    %s81 = sphi 0, %s65
    %s89 = sphi 0, %s91
    %s92 = sphi 0, %s89
    %s93 = sphi 0, %s92
    %s109 = sphi 0, %s93
    %s117 = sphi 0, %s119
    %s120 = sphi 0, %s117
    %s121 = sphi 0, %s120
    %s137 = sphi 0, %s121
    %s145 = sphi 0, %s147
    %s148 = sphi 0, %s145
    %s149 = sphi 0, %s148
    %s165 = sphi 0, %s149
  $region4: #{generator_forward.11} parent=0 // loop_header_branch
    %14 = sbr.rel (%p12) target = $region8
  $region5: #{generator_forward.11} parent=0 // loop_body
    %s16 = ssub.s32 %s11, 1
    %s17 = ssub.s32 %s11, 2
    %s24 = sadd.s32 1, %s19
    %p25 = scmp.ge.s32.totalorder %s24, 1
    %s26 = scalar_select %p25, 0, %s24
    %s27 = sadd.s32 1, %s18
    %s28 = scalar_select %p25, %s27, %s18
    %p29 = scmp.ge.s32.totalorder %s28, 4
    %s30 = scalar_select %p29, 0, %s28
    %s31 = ssub.s32 %s18, %s30
    %s32 = ssub.s32 %s19, %s26
    %s33 = sor.u32 %s31, %s32
    %p34 = scmp.eq.s32.totalorder %s33, 0
    %s36 = sadd.s32 %s35, 1
    %s37 = scalar_select %p34, %s35, %s36
    %p40 = pneg %p34
    %p41 = scmp.eq.s32.totalorder %s11, 3
    %p42 = por %p40, %p41
    %p43 = scmp.ne.s32.totalorder %s35, %s38
    %p44 = scmp.eq.s32.totalorder %s11, 0
    %p45 = por %p43, %p44
    %p46 = scmp.ne.s32.totalorder %s35, %s38
    %p47 = scmp.eq.s32.totalorder %s16, 3
    %p48 = por %p46, %p47
    %p49 = scmp.ne.s32.totalorder %s38, %s39
    %p50 = scmp.eq.s32.totalorder %s16, 0
    %p51 = por %p49, %p50
    %p52 = scmp.ne.s32.totalorder %s38, %s39
    %p53 = scmp.eq.s32.totalorder %s17, 3
    %p54 = por %p52, %p53
    %p56 = scmp.ne.s32.totalorder %s39, %s55
    %p57 = scmp.eq.s32.totalorder %s17, 0
    %p58 = por %p56, %p57
    %s59 = ssub.s32 %s18, %s30
    %p60 = scmp.eq.s32.totalorder %s59, 0
    %s62 = sadd.s32 %s61, 1
    %s63 = scalar_select %p60, %s61, %s62
    %p66 = pneg %p60
    %p67 = scmp.eq.s32.totalorder %s11, 3
    %p68 = por %p66, %p67
    %p69 = scmp.ne.s32.totalorder %s61, %s64
    %p70 = scmp.eq.s32.totalorder %s11, 0
    %p71 = por %p69, %p70
    %p72 = scmp.ne.s32.totalorder %s61, %s64
    %p73 = scmp.eq.s32.totalorder %s16, 3
    %p74 = por %p72, %p73
    %p75 = scmp.ne.s32.totalorder %s64, %s65
    %p76 = scmp.eq.s32.totalorder %s16, 0
    %p77 = por %p75, %p76
    %p78 = scmp.ne.s32.totalorder %s64, %s65
    %p79 = scmp.eq.s32.totalorder %s17, 3
    %p80 = por %p78, %p79
    %p82 = scmp.ne.s32.totalorder %s65, %s81
    %p83 = scmp.eq.s32.totalorder %s17, 0
    %p84 = por %p82, %p83
    %s85 = sadd.s32 %s18, %s19
    %s86 = sadd.s32 %s30, %s26
    %s87 = ssub.s32 %s85, %s86
    %p88 = scmp.eq.s32.totalorder %s87, 0
    %s90 = sadd.s32 %s89, 1
    %s91 = scalar_select %p88, %s89, %s90
    %p94 = pneg %p88
    %p95 = scmp.eq.s32.totalorder %s11, 3
    %p96 = por %p94, %p95
    %p97 = scmp.ne.s32.totalorder %s89, %s92
    %p98 = scmp.eq.s32.totalorder %s11, 0
    %p99 = por %p97, %p98
    %p100 = scmp.ne.s32.totalorder %s89, %s92
    %p101 = scmp.eq.s32.totalorder %s16, 3
    %p102 = por %p100, %p101
    %p103 = scmp.ne.s32.totalorder %s92, %s93
    %p104 = scmp.eq.s32.totalorder %s16, 0
    %p105 = por %p103, %p104
    %p106 = scmp.ne.s32.totalorder %s92, %s93
    %p107 = scmp.eq.s32.totalorder %s17, 3
    %p108 = por %p106, %p107
    %p110 = scmp.ne.s32.totalorder %s93, %s109
    %p111 = scmp.eq.s32.totalorder %s17, 0
    %p112 = por %p110, %p111
    %s113 = sadd.s32 %s18, %s19
    %s114 = sadd.s32 %s30, %s26
    %s115 = ssub.s32 %s113, %s114
    %p116 = scmp.eq.s32.totalorder %s115, 0
    %s118 = sadd.s32 %s117, 1
    %s119 = scalar_select %p116, %s117, %s118
    %p122 = pneg %p116
    %p123 = scmp.eq.s32.totalorder %s11, 3
    %p124 = por %p122, %p123
    %p125 = scmp.ne.s32.totalorder %s117, %s120
    %p126 = scmp.eq.s32.totalorder %s11, 0
    %p127 = por %p125, %p126
    %p128 = scmp.ne.s32.totalorder %s117, %s120
    %p129 = scmp.eq.s32.totalorder %s16, 3
    %p130 = por %p128, %p129
    %p131 = scmp.ne.s32.totalorder %s120, %s121
    %p132 = scmp.eq.s32.totalorder %s16, 0
    %p133 = por %p131, %p132
    %p134 = scmp.ne.s32.totalorder %s120, %s121
    %p135 = scmp.eq.s32.totalorder %s17, 3
    %p136 = por %p134, %p135
    %p138 = scmp.ne.s32.totalorder %s121, %s137
    %p139 = scmp.eq.s32.totalorder %s17, 0
    %p140 = por %p138, %p139
    %s141 = sadd.s32 %s18, %s19
    %s142 = sadd.s32 %s30, %s26
    %s143 = ssub.s32 %s141, %s142
    %p144 = scmp.eq.s32.totalorder %s143, 0
    %s146 = sadd.s32 %s145, 1
    %s147 = scalar_select %p144, %s145, %s146
    %p150 = pneg %p144
    %p151 = scmp.eq.s32.totalorder %s11, 3
    %p152 = por %p150, %p151
    %p153 = scmp.ne.s32.totalorder %s145, %s148
    %p154 = scmp.eq.s32.totalorder %s11, 0
    %p155 = por %p153, %p154
    %p156 = scmp.ne.s32.totalorder %s145, %s148
    %p157 = scmp.eq.s32.totalorder %s16, 3
    %p158 = por %p156, %p157
    %p159 = scmp.ne.s32.totalorder %s148, %s149
    %p160 = scmp.eq.s32.totalorder %s16, 0
    %p161 = por %p159, %p160
    %p162 = scmp.ne.s32.totalorder %s148, %s149
    %p163 = scmp.eq.s32.totalorder %s17, 3
    %p164 = por %p162, %p163
    %p166 = scmp.ne.s32.totalorder %s149, %s165
    %p167 = scmp.eq.s32.totalorder %s17, 0
    %p168 = por %p166, %p167
    %p169 = scmp.le.s32.totalorder 1, %s11
    %p170 = scmp.lt.s32.totalorder %s11, 5
    %p171 = pnand %p169, %p170
    %p172 = pneg %p171
    // Predicated region
    $region9: #{generator_forward.11} parent=5 // pred_check
      _
    $region10: #{generator_forward.11} parent=5 // pred_check_branch
      %174 = sbr.rel (%p171) target = $region12
    $region11: #{generator_forward.11} parent=5 // pred_region
      %s175 = ssub.s32 %s11, 1
    $region12: #{generator_forward.11} parent=5 // pred_fallthru
      _
    %p176 = scmp.lt.s32.totalorder %s11, 4
    // Predicated region
    $region13: #{generator_forward.11} parent=5 // pred_check
      %p177 = pneg %p176
    $region14: #{generator_forward.11} parent=5 // pred_check_branch
      %179 = sbr.rel (%p177) target = $region16
    $region15: #{generator_forward.11} parent=5 // pred_region
      // Predicated region
      $region17: #{generator_forward.11} parent=15 // pred_check
        %p180 = pneg %p45
      $region18: #{generator_forward.11} parent=15 // pred_check_branch
        %182 = sbr.rel (%p180) target = $region20
      $region19: #{generator_forward.11} parent=15 // pred_region
        %s183 = smul.u32 4, %s19
        %p184 = scmp.lt.s32.totalorder %s18, 3
        %s185 = scalar_select %p184, %s18, 3
        %p186 = scmp.lt.s32.totalorder %s183, 3
        %s187 = scalar_select %p186, %s183, 3
        %s188 = smul.addr %s187, 16
        %s189 = smul.addr %s185, 64
        %s190 = sadd.s32 %s188, %s189
        %s191 = smul.addr %s190, 4
        %s192 = scalar_lea.vmem %s0, %s191
        %s193 = smul.u32 4, %s19
      $region20: #{generator_forward.11} parent=15 // pred_fallthru
        _
      // Predicated region
      $region21: #{generator_forward.11} parent=15 // pred_check
        %p194 = pneg %p71
      $region22: #{generator_forward.11} parent=15 // pred_check_branch
        %196 = sbr.rel (%p194) target = $region24
      $region23: #{generator_forward.11} parent=15 // pred_region
        %p197 = scmp.lt.s32.totalorder %s18, 3
        %s198 = scalar_select %p197, %s18, 3
        %s199 = smul.addr %s198, 512
        %s200 = smul.addr %s199, 4
        %s201 = scalar_lea.vmem %s1, %s200
      $region24: #{generator_forward.11} parent=15 // pred_fallthru
        _
    $region16: #{generator_forward.11} parent=5 // pred_fallthru
      _
    %p202 = scmp.le.s32.totalorder 1, %s11
    %p203 = scmp.lt.s32.totalorder %s11, 5
    %p204 = pnand %p202, %p203
    %p205 = pneg %p204
    // Predicated region
    $region25: #{generator_forward.11} parent=5 // pred_check
      _
    $region26: #{generator_forward.11} parent=5 // pred_check_branch
      %207 = sbr.rel (%p204) target = $region28
    $region27: #{generator_forward.11} parent=5 // pred_region
      %s208 = ssub.s32 %s11, 1
      %s209 = smul.u32 4, %s21
      %p210 = scmp.lt.s32.totalorder %s20, 3
      %s211 = scalar_select %p210, %s20, 3
      %p212 = scmp.lt.s32.totalorder %s209, 3
      %s213 = scalar_select %p212, %s209, 3
      %s214 = smul.addr %s213, 16
      %s215 = smul.addr %s211, 64
      %s216 = sadd.s32 %s214, %s215
      %s217 = smul.addr %s216, 4
      %s218 = scalar_lea.vmem %s0, %s217
      %p219 = pneg %p51
      %p220 = pneg %p48
      %p221 = scmp.lt.s32.totalorder %s20, 3
      %s222 = scalar_select %p221, %s20, 3
      %s223 = smul.addr %s222, 512
      %s224 = smul.addr %s223, 4
      %s225 = scalar_lea.vmem %s1, %s224
      %p226 = pneg %p77
      %p227 = pneg %p74
      %p228 = pneg %p105
      %p229 = pneg %p102
      %s230 = sadd.s32 %s20, %s21
      %s231 = smul.u32 4, %s230
      %p232 = scmp.lt.s32.totalorder %s231, 15
      %s233 = scalar_select %p232, %s231, 15
      %s234 = smul.addr %s233, 2
      %s235 = smul.addr %s234, 4
      %s236 = scalar_lea.vmem %s2, %s235
      %p237 = pneg %p133
      %p238 = pneg %p130
      %s239 = sadd.s32 %s20, %s21
      %p240 = scmp.lt.s32.totalorder %s239, 3
      %s241 = scalar_select %p240, %s239, 3
      %s242 = smul.addr %s241, 2
      %s243 = smul.addr %s242, 8
      %s244 = scalar_lea.vmem %s3, %s243
      %p245 = pneg %p161
      %p246 = pneg %p158
      %s247 = sadd.s32 %s20, %s21
      %p248 = scmp.lt.s32.totalorder %s247, 3
      %s249 = scalar_select %p248, %s247, 3
      %s250 = smul.addr %s249, 2
      %s251 = smul.addr %s250, 8
      %s252 = scalar_lea.vmem %s4, %s251
      %s253 = smul.u32 4, %s21
      %p254 = scmp.lt.s32.totalorder %s20, 3
      %s255 = scalar_select %p254, %s20, 3
      %p256 = scmp.lt.s32.totalorder %s253, 3
      %s257 = scalar_select %p256, %s253, 3
      %s258 = smul.addr %s257, 16
      %s259 = smul.addr %s255, 64
      %s260 = sadd.s32 %s258, %s259
      %s261 = smul.addr %s260, 4
      %s262 = scalar_lea.vmem %s0, %s261
      %s263 = smul.u32 4, %s21
      %p264 = scmp.lt.s32.totalorder %s20, 3
      %s265 = scalar_select %p264, %s20, 3
      %s266 = smul.addr %s265, 512
      %s267 = smul.addr %s266, 4
      %s268 = scalar_lea.vmem %s1, %s267
      %s269 = sadd.s32 %s20, %s21
      %s270 = smul.u32 4, %s269
      %p271 = scmp.lt.s32.totalorder %s270, 15
      %s272 = scalar_select %p271, %s270, 15
      %s273 = smul.addr %s272, 2
      %s274 = smul.addr %s273, 4
      %s275 = scalar_lea.vmem %s2, %s274
      %s276 = sadd.s32 %s20, %s21
      %s277 = smul.u32 4, %s276
      %s278 = sadd.s32 %s20, %s21
      %p279 = scmp.lt.s32.totalorder %s278, 3
      %s280 = scalar_select %p279, %s278, 3
      %s281 = smul.addr %s280, 2
      %s282 = smul.addr %s281, 8
      %s283 = scalar_lea.vmem %s3, %s282
      %s284 = sadd.s32 %s20, %s21
      %s285 = sadd.s32 %s20, %s21
      %p286 = scmp.lt.s32.totalorder %s285, 3
      %s287 = scalar_select %p286, %s285, 3
      %s288 = smul.addr %s287, 2
      %s289 = smul.addr %s288, 8
      %s290 = scalar_lea.vmem %s4, %s289
      %s291 = sadd.s32 %s20, %s21
      %v292 = vld [vmem:[%s262] sm:$0xff]
      %v293 = vld [vmem:[%s262 + $0x8] sm:$0xff]
      %v294 = vld [vmem:[%s262 + $0x10] sm:$0xff]
      %v295 = vld [vmem:[%s262 + $0x18] sm:$0xff]
      %v296 = vld [vmem:[%s262 + $0x20] sm:$0xff]
      %v297 = vld [vmem:[%s262 + $0x28] sm:$0xff]
      %v298 = vld [vmem:[%s262 + $0x30] sm:$0xff]
      %v299 = vld [vmem:[%s262 + $0x38] sm:$0xff]
      %v300 = vld [vmem:[%s262 + $0x40] sm:$0xff]
      %v301 = vld [vmem:[%s262 + $0x48] sm:$0xff]
      %v302 = vld [vmem:[%s262 + $0x50] sm:$0xff]
      %v303 = vld [vmem:[%s262 + $0x58] sm:$0xff]
      %v304 = vld [vmem:[%s262 + $0x60] sm:$0xff]
      %v305 = vld [vmem:[%s262 + $0x68] sm:$0xff]
      %v306 = vld [vmem:[%s262 + $0x70] sm:$0xff]
      %v307 = vld [vmem:[%s262 + $0x78] sm:$0xff]
      %v308 = vld [vmem:[%s262 + $0x80] sm:$0xff]
      %v309 = vld [vmem:[%s262 + $0x88] sm:$0xff]
      %v310 = vld [vmem:[%s262 + $0x90] sm:$0xff]
      %v311 = vld [vmem:[%s262 + $0x98] sm:$0xff]
      %v312 = vld [vmem:[%s262 + $0xa0] sm:$0xff]
      %v313 = vld [vmem:[%s262 + $0xa8] sm:$0xff]
      %v314 = vld [vmem:[%s262 + $0xb0] sm:$0xff]
      %v315 = vld [vmem:[%s262 + $0xb8] sm:$0xff]
      %v316 = vld [vmem:[%s262 + $0xc0] sm:$0xff]
      %v317 = vld [vmem:[%s262 + $0xc8] sm:$0xff]
      %v318 = vld [vmem:[%s262 + $0xd0] sm:$0xff]
      %v319 = vld [vmem:[%s262 + $0xd8] sm:$0xff]
      %v320 = vld [vmem:[%s262 + $0xe0] sm:$0xff]
      %v321 = vld [vmem:[%s262 + $0xe8] sm:$0xff]
      %v322 = vld [vmem:[%s262 + $0xf0] sm:$0xff]
      %v323 = vld [vmem:[%s262 + $0xf8] sm:$0xff]
      %v324 = vld [vmem:[%s268] sm:$0xff]
      %v325 = vld [vmem:[%s268 + $0x8] sm:$0xff]
      %v326 = vld [vmem:[%s268 + $0x10] sm:$0xff]
      %v327 = vld [vmem:[%s268 + $0x18] sm:$0xff]
      %v328 = vld [vmem:[%s268 + $0x20] sm:$0xff]
      %v329 = vld [vmem:[%s268 + $0x28] sm:$0xff]
      %v330 = vld [vmem:[%s268 + $0x30] sm:$0xff]
      %v331 = vld [vmem:[%s268 + $0x38] sm:$0xff]
      %v332 = vld [vmem:[%s268 + $0x40] sm:$0xff]
      %v333 = vld [vmem:[%s268 + $0x48] sm:$0xff]
      %v334 = vld [vmem:[%s268 + $0x50] sm:$0xff]
      %v335 = vld [vmem:[%s268 + $0x58] sm:$0xff]
      %v336 = vld [vmem:[%s268 + $0x60] sm:$0xff]
      %v337 = vld [vmem:[%s268 + $0x68] sm:$0xff]
      %v338 = vld [vmem:[%s268 + $0x70] sm:$0xff]
      %v339 = vld [vmem:[%s268 + $0x78] sm:$0xff]
      %v340 = vld [vmem:[%s268 + $0x80] sm:$0xff]
      %v341 = vld [vmem:[%s268 + $0x88] sm:$0xff]
      %v342 = vld [vmem:[%s268 + $0x90] sm:$0xff]
      %v343 = vld [vmem:[%s268 + $0x98] sm:$0xff]
      %v344 = vld [vmem:[%s268 + $0xa0] sm:$0xff]
      %v345 = vld [vmem:[%s268 + $0xa8] sm:$0xff]
      %v346 = vld [vmem:[%s268 + $0xb0] sm:$0xff]
      %v347 = vld [vmem:[%s268 + $0xb8] sm:$0xff]
      %v348 = vld [vmem:[%s268 + $0xc0] sm:$0xff]
      %v349 = vld [vmem:[%s268 + $0xc8] sm:$0xff]
      %v350 = vld [vmem:[%s268 + $0xd0] sm:$0xff]
      %v351 = vld [vmem:[%s268 + $0xd8] sm:$0xff]
      %v352 = vld [vmem:[%s268 + $0xe0] sm:$0xff]
      %v353 = vld [vmem:[%s268 + $0xe8] sm:$0xff]
      %v354 = vld [vmem:[%s268 + $0xf0] sm:$0xff]
      %v355 = vld [vmem:[%s268 + $0xf8] sm:$0xff]
      %v356 = vld [vmem:[%s268 + $0x100] sm:$0xff]
      %v357 = vld [vmem:[%s268 + $0x108] sm:$0xff]
      %v358 = vld [vmem:[%s268 + $0x110] sm:$0xff]
      %v359 = vld [vmem:[%s268 + $0x118] sm:$0xff]
      %v360 = vld [vmem:[%s268 + $0x120] sm:$0xff]
      %v361 = vld [vmem:[%s268 + $0x128] sm:$0xff]
      %v362 = vld [vmem:[%s268 + $0x130] sm:$0xff]
      %v363 = vld [vmem:[%s268 + $0x138] sm:$0xff]
      %v364 = vld [vmem:[%s268 + $0x140] sm:$0xff]
      %v365 = vld [vmem:[%s268 + $0x148] sm:$0xff]
      %v366 = vld [vmem:[%s268 + $0x150] sm:$0xff]
      %v367 = vld [vmem:[%s268 + $0x158] sm:$0xff]
      %v368 = vld [vmem:[%s268 + $0x160] sm:$0xff]
      %v369 = vld [vmem:[%s268 + $0x168] sm:$0xff]
      %v370 = vld [vmem:[%s268 + $0x170] sm:$0xff]
      %v371 = vld [vmem:[%s268 + $0x178] sm:$0xff]
      %v372 = vld [vmem:[%s268 + $0x180] sm:$0xff]
      %v373 = vld [vmem:[%s268 + $0x188] sm:$0xff]
      %v374 = vld [vmem:[%s268 + $0x190] sm:$0xff]
      %v375 = vld [vmem:[%s268 + $0x198] sm:$0xff]
      %v376 = vld [vmem:[%s268 + $0x1a0] sm:$0xff]
      %v377 = vld [vmem:[%s268 + $0x1a8] sm:$0xff]
      %v378 = vld [vmem:[%s268 + $0x1b0] sm:$0xff]
      %v379 = vld [vmem:[%s268 + $0x1b8] sm:$0xff]
      %v380 = vld [vmem:[%s268 + $0x1c0] sm:$0xff]
      %v381 = vld [vmem:[%s268 + $0x1c8] sm:$0xff]
      %v382 = vld [vmem:[%s268 + $0x1d0] sm:$0xff]
      %v383 = vld [vmem:[%s268 + $0x1d8] sm:$0xff]
      %v384 = vld [vmem:[%s268 + $0x1e0] sm:$0xff]
      %v385 = vld [vmem:[%s268 + $0x1e8] sm:$0xff]
      %v386 = vld [vmem:[%s268 + $0x1f0] sm:$0xff]
      %v387 = vld [vmem:[%s268 + $0x1f8] sm:$0xff]
      %v388 = vld [vmem:[%s268 + $0x200] sm:$0xff]
      %v389 = vld [vmem:[%s268 + $0x208] sm:$0xff]
      %v390 = vld [vmem:[%s268 + $0x210] sm:$0xff]
      %v391 = vld [vmem:[%s268 + $0x218] sm:$0xff]
      %v392 = vld [vmem:[%s268 + $0x220] sm:$0xff]
      %v393 = vld [vmem:[%s268 + $0x228] sm:$0xff]
      %v394 = vld [vmem:[%s268 + $0x230] sm:$0xff]
      %v395 = vld [vmem:[%s268 + $0x238] sm:$0xff]
      %v396 = vld [vmem:[%s268 + $0x240] sm:$0xff]
      %v397 = vld [vmem:[%s268 + $0x248] sm:$0xff]
      %v398 = vld [vmem:[%s268 + $0x250] sm:$0xff]
      %v399 = vld [vmem:[%s268 + $0x258] sm:$0xff]
      %v400 = vld [vmem:[%s268 + $0x260] sm:$0xff]
      %v401 = vld [vmem:[%s268 + $0x268] sm:$0xff]
      %v402 = vld [vmem:[%s268 + $0x270] sm:$0xff]
      %v403 = vld [vmem:[%s268 + $0x278] sm:$0xff]
      %v404 = vld [vmem:[%s268 + $0x280] sm:$0xff]
      %v405 = vld [vmem:[%s268 + $0x288] sm:$0xff]
      %v406 = vld [vmem:[%s268 + $0x290] sm:$0xff]
      %v407 = vld [vmem:[%s268 + $0x298] sm:$0xff]
      %v408 = vld [vmem:[%s268 + $0x2a0] sm:$0xff]
      %v409 = vld [vmem:[%s268 + $0x2a8] sm:$0xff]
      %v410 = vld [vmem:[%s268 + $0x2b0] sm:$0xff]
      %v411 = vld [vmem:[%s268 + $0x2b8] sm:$0xff]
      %v412 = vld [vmem:[%s268 + $0x2c0] sm:$0xff]
      %v413 = vld [vmem:[%s268 + $0x2c8] sm:$0xff]
      %v414 = vld [vmem:[%s268 + $0x2d0] sm:$0xff]
      %v415 = vld [vmem:[%s268 + $0x2d8] sm:$0xff]
      %v416 = vld [vmem:[%s268 + $0x2e0] sm:$0xff]
      %v417 = vld [vmem:[%s268 + $0x2e8] sm:$0xff]
      %v418 = vld [vmem:[%s268 + $0x2f0] sm:$0xff]
      %v419 = vld [vmem:[%s268 + $0x2f8] sm:$0xff]
      %v420 = vld [vmem:[%s268 + $0x300] sm:$0xff]
      %v421 = vld [vmem:[%s268 + $0x308] sm:$0xff]
      %v422 = vld [vmem:[%s268 + $0x310] sm:$0xff]
      %v423 = vld [vmem:[%s268 + $0x318] sm:$0xff]
      %v424 = vld [vmem:[%s268 + $0x320] sm:$0xff]
      %v425 = vld [vmem:[%s268 + $0x328] sm:$0xff]
      %v426 = vld [vmem:[%s268 + $0x330] sm:$0xff]
      %v427 = vld [vmem:[%s268 + $0x338] sm:$0xff]
      %v428 = vld [vmem:[%s268 + $0x340] sm:$0xff]
      %v429 = vld [vmem:[%s268 + $0x348] sm:$0xff]
      %v430 = vld [vmem:[%s268 + $0x350] sm:$0xff]
      %v431 = vld [vmem:[%s268 + $0x358] sm:$0xff]
      %v432 = vld [vmem:[%s268 + $0x360] sm:$0xff]
      %v433 = vld [vmem:[%s268 + $0x368] sm:$0xff]
      %v434 = vld [vmem:[%s268 + $0x370] sm:$0xff]
      %v435 = vld [vmem:[%s268 + $0x378] sm:$0xff]
      %v436 = vld [vmem:[%s268 + $0x380] sm:$0xff]
      %v437 = vld [vmem:[%s268 + $0x388] sm:$0xff]
      %v438 = vld [vmem:[%s268 + $0x390] sm:$0xff]
      %v439 = vld [vmem:[%s268 + $0x398] sm:$0xff]
      %v440 = vld [vmem:[%s268 + $0x3a0] sm:$0xff]
      %v441 = vld [vmem:[%s268 + $0x3a8] sm:$0xff]
      %v442 = vld [vmem:[%s268 + $0x3b0] sm:$0xff]
      %v443 = vld [vmem:[%s268 + $0x3b8] sm:$0xff]
      %v444 = vld [vmem:[%s268 + $0x3c0] sm:$0xff]
      %v445 = vld [vmem:[%s268 + $0x3c8] sm:$0xff]
      %v446 = vld [vmem:[%s268 + $0x3d0] sm:$0xff]
      %v447 = vld [vmem:[%s268 + $0x3d8] sm:$0xff]
      %v448 = vld [vmem:[%s268 + $0x3e0] sm:$0xff]
      %v449 = vld [vmem:[%s268 + $0x3e8] sm:$0xff]
      %v450 = vld [vmem:[%s268 + $0x3f0] sm:$0xff]
      %v451 = vld [vmem:[%s268 + $0x3f8] sm:$0xff]
      %v452 = vld [vmem:[%s268 + $0x400] sm:$0xff]
      %v453 = vld [vmem:[%s268 + $0x408] sm:$0xff]
      %v454 = vld [vmem:[%s268 + $0x410] sm:$0xff]
      %v455 = vld [vmem:[%s268 + $0x418] sm:$0xff]
      %v456 = vld [vmem:[%s268 + $0x420] sm:$0xff]
      %v457 = vld [vmem:[%s268 + $0x428] sm:$0xff]
      %v458 = vld [vmem:[%s268 + $0x430] sm:$0xff]
      %v459 = vld [vmem:[%s268 + $0x438] sm:$0xff]
      %v460 = vld [vmem:[%s268 + $0x440] sm:$0xff]
      %v461 = vld [vmem:[%s268 + $0x448] sm:$0xff]
      %v462 = vld [vmem:[%s268 + $0x450] sm:$0xff]
      %v463 = vld [vmem:[%s268 + $0x458] sm:$0xff]
      %v464 = vld [vmem:[%s268 + $0x460] sm:$0xff]
      %v465 = vld [vmem:[%s268 + $0x468] sm:$0xff]
      %v466 = vld [vmem:[%s268 + $0x470] sm:$0xff]
      %v467 = vld [vmem:[%s268 + $0x478] sm:$0xff]
      %v468 = vld [vmem:[%s268 + $0x480] sm:$0xff]
      %v469 = vld [vmem:[%s268 + $0x488] sm:$0xff]
      %v470 = vld [vmem:[%s268 + $0x490] sm:$0xff]
      %v471 = vld [vmem:[%s268 + $0x498] sm:$0xff]
      %v472 = vld [vmem:[%s268 + $0x4a0] sm:$0xff]
      %v473 = vld [vmem:[%s268 + $0x4a8] sm:$0xff]
      %v474 = vld [vmem:[%s268 + $0x4b0] sm:$0xff]
      %v475 = vld [vmem:[%s268 + $0x4b8] sm:$0xff]
      %v476 = vld [vmem:[%s268 + $0x4c0] sm:$0xff]
      %v477 = vld [vmem:[%s268 + $0x4c8] sm:$0xff]
      %v478 = vld [vmem:[%s268 + $0x4d0] sm:$0xff]
      %v479 = vld [vmem:[%s268 + $0x4d8] sm:$0xff]
      %v480 = vld [vmem:[%s268 + $0x4e0] sm:$0xff]
      %v481 = vld [vmem:[%s268 + $0x4e8] sm:$0xff]
      %v482 = vld [vmem:[%s268 + $0x4f0] sm:$0xff]
      %v483 = vld [vmem:[%s268 + $0x4f8] sm:$0xff]
      %v484 = vld [vmem:[%s268 + $0x500] sm:$0xff]
      %v485 = vld [vmem:[%s268 + $0x508] sm:$0xff]
      %v486 = vld [vmem:[%s268 + $0x510] sm:$0xff]
      %v487 = vld [vmem:[%s268 + $0x518] sm:$0xff]
      %v488 = vld [vmem:[%s268 + $0x520] sm:$0xff]
      %v489 = vld [vmem:[%s268 + $0x528] sm:$0xff]
      %v490 = vld [vmem:[%s268 + $0x530] sm:$0xff]
      %v491 = vld [vmem:[%s268 + $0x538] sm:$0xff]
      %v492 = vld [vmem:[%s268 + $0x540] sm:$0xff]
      %v493 = vld [vmem:[%s268 + $0x548] sm:$0xff]
      %v494 = vld [vmem:[%s268 + $0x550] sm:$0xff]
      %v495 = vld [vmem:[%s268 + $0x558] sm:$0xff]
      %v496 = vld [vmem:[%s268 + $0x560] sm:$0xff]
      %v497 = vld [vmem:[%s268 + $0x568] sm:$0xff]
      %v498 = vld [vmem:[%s268 + $0x570] sm:$0xff]
      %v499 = vld [vmem:[%s268 + $0x578] sm:$0xff]
      %v500 = vld [vmem:[%s268 + $0x580] sm:$0xff]
      %v501 = vld [vmem:[%s268 + $0x588] sm:$0xff]
      %v502 = vld [vmem:[%s268 + $0x590] sm:$0xff]
      %v503 = vld [vmem:[%s268 + $0x598] sm:$0xff]
      %v504 = vld [vmem:[%s268 + $0x5a0] sm:$0xff]
      %v505 = vld [vmem:[%s268 + $0x5a8] sm:$0xff]
      %v506 = vld [vmem:[%s268 + $0x5b0] sm:$0xff]
      %v507 = vld [vmem:[%s268 + $0x5b8] sm:$0xff]
      %v508 = vld [vmem:[%s268 + $0x5c0] sm:$0xff]
      %v509 = vld [vmem:[%s268 + $0x5c8] sm:$0xff]
      %v510 = vld [vmem:[%s268 + $0x5d0] sm:$0xff]
      %v511 = vld [vmem:[%s268 + $0x5d8] sm:$0xff]
      %v512 = vld [vmem:[%s268 + $0x5e0] sm:$0xff]
      %v513 = vld [vmem:[%s268 + $0x5e8] sm:$0xff]
      %v514 = vld [vmem:[%s268 + $0x5f0] sm:$0xff]
      %v515 = vld [vmem:[%s268 + $0x5f8] sm:$0xff]
      %v516 = vld [vmem:[%s268 + $0x600] sm:$0xff]
      %v517 = vld [vmem:[%s268 + $0x608] sm:$0xff]
      %v518 = vld [vmem:[%s268 + $0x610] sm:$0xff]
      %v519 = vld [vmem:[%s268 + $0x618] sm:$0xff]
      %v520 = vld [vmem:[%s268 + $0x620] sm:$0xff]
      %v521 = vld [vmem:[%s268 + $0x628] sm:$0xff]
      %v522 = vld [vmem:[%s268 + $0x630] sm:$0xff]
      %v523 = vld [vmem:[%s268 + $0x638] sm:$0xff]
      %v524 = vld [vmem:[%s268 + $0x640] sm:$0xff]
      %v525 = vld [vmem:[%s268 + $0x648] sm:$0xff]
      %v526 = vld [vmem:[%s268 + $0x650] sm:$0xff]
      %v527 = vld [vmem:[%s268 + $0x658] sm:$0xff]
      %v528 = vld [vmem:[%s268 + $0x660] sm:$0xff]
      %v529 = vld [vmem:[%s268 + $0x668] sm:$0xff]
      %v530 = vld [vmem:[%s268 + $0x670] sm:$0xff]
      %v531 = vld [vmem:[%s268 + $0x678] sm:$0xff]
      %v532 = vld [vmem:[%s268 + $0x680] sm:$0xff]
      %v533 = vld [vmem:[%s268 + $0x688] sm:$0xff]
      %v534 = vld [vmem:[%s268 + $0x690] sm:$0xff]
      %v535 = vld [vmem:[%s268 + $0x698] sm:$0xff]
      %v536 = vld [vmem:[%s268 + $0x6a0] sm:$0xff]
      %v537 = vld [vmem:[%s268 + $0x6a8] sm:$0xff]
      %v538 = vld [vmem:[%s268 + $0x6b0] sm:$0xff]
      %v539 = vld [vmem:[%s268 + $0x6b8] sm:$0xff]
      %v540 = vld [vmem:[%s268 + $0x6c0] sm:$0xff]
      %v541 = vld [vmem:[%s268 + $0x6c8] sm:$0xff]
      %v542 = vld [vmem:[%s268 + $0x6d0] sm:$0xff]
      %v543 = vld [vmem:[%s268 + $0x6d8] sm:$0xff]
      %v544 = vld [vmem:[%s268 + $0x6e0] sm:$0xff]
      %v545 = vld [vmem:[%s268 + $0x6e8] sm:$0xff]
      %v546 = vld [vmem:[%s268 + $0x6f0] sm:$0xff]
      %v547 = vld [vmem:[%s268 + $0x6f8] sm:$0xff]
      %v548 = vld [vmem:[%s268 + $0x700] sm:$0xff]
      %v549 = vld [vmem:[%s268 + $0x708] sm:$0xff]
      %v550 = vld [vmem:[%s268 + $0x710] sm:$0xff]
      %v551 = vld [vmem:[%s268 + $0x718] sm:$0xff]
      %v552 = vld [vmem:[%s268 + $0x720] sm:$0xff]
      %v553 = vld [vmem:[%s268 + $0x728] sm:$0xff]
      %v554 = vld [vmem:[%s268 + $0x730] sm:$0xff]
      %v555 = vld [vmem:[%s268 + $0x738] sm:$0xff]
      %v556 = vld [vmem:[%s268 + $0x740] sm:$0xff]
      %v557 = vld [vmem:[%s268 + $0x748] sm:$0xff]
      %v558 = vld [vmem:[%s268 + $0x750] sm:$0xff]
      %v559 = vld [vmem:[%s268 + $0x758] sm:$0xff]
      %v560 = vld [vmem:[%s268 + $0x760] sm:$0xff]
      %v561 = vld [vmem:[%s268 + $0x768] sm:$0xff]
      %v562 = vld [vmem:[%s268 + $0x770] sm:$0xff]
      %v563 = vld [vmem:[%s268 + $0x778] sm:$0xff]
      %v564 = vld [vmem:[%s268 + $0x780] sm:$0xff]
      %v565 = vld [vmem:[%s268 + $0x788] sm:$0xff]
      %v566 = vld [vmem:[%s268 + $0x790] sm:$0xff]
      %v567 = vld [vmem:[%s268 + $0x798] sm:$0xff]
      %v568 = vld [vmem:[%s268 + $0x7a0] sm:$0xff]
      %v569 = vld [vmem:[%s268 + $0x7a8] sm:$0xff]
      %v570 = vld [vmem:[%s268 + $0x7b0] sm:$0xff]
      %v571 = vld [vmem:[%s268 + $0x7b8] sm:$0xff]
      %v572 = vld [vmem:[%s268 + $0x7c0] sm:$0xff]
      %v573 = vld [vmem:[%s268 + $0x7c8] sm:$0xff]
      %v574 = vld [vmem:[%s268 + $0x7d0] sm:$0xff]
      %v575 = vld [vmem:[%s268 + $0x7d8] sm:$0xff]
      %v576 = vld [vmem:[%s268 + $0x7e0] sm:$0xff]
      %v577 = vld [vmem:[%s268 + $0x7e8] sm:$0xff]
      %v578 = vld [vmem:[%s268 + $0x7f0] sm:$0xff]
      %v579 = vld [vmem:[%s268 + $0x7f8] sm:$0xff]
      %v612 = vunpack.c.l.b16 %v292
      %v613 = vunpack.c.h.b16 %v292
      %v614 = vunpack.c.l.b16 %v293
      %v615 = vunpack.c.h.b16 %v293
      %v616 = vunpack.c.l.b16 %v294
      %v617 = vunpack.c.h.b16 %v294
      %v618 = vunpack.c.l.b16 %v295
      %v619 = vunpack.c.h.b16 %v295
      %v620 = vunpack.c.l.b16 %v296
      %v621 = vunpack.c.h.b16 %v296
      %v622 = vunpack.c.l.b16 %v297
      %v623 = vunpack.c.h.b16 %v297
      %v624 = vunpack.c.l.b16 %v298
      %v625 = vunpack.c.h.b16 %v298
      %v626 = vunpack.c.l.b16 %v299
      %v627 = vunpack.c.h.b16 %v299
      %v628 = vunpack.c.l.b16 %v300
      %v629 = vunpack.c.h.b16 %v300
      %v630 = vunpack.c.l.b16 %v301
      %v631 = vunpack.c.h.b16 %v301
      %v632 = vunpack.c.l.b16 %v302
      %v633 = vunpack.c.h.b16 %v302
      %v634 = vunpack.c.l.b16 %v303
      %v635 = vunpack.c.h.b16 %v303
      %v636 = vunpack.c.l.b16 %v304
      %v637 = vunpack.c.h.b16 %v304
      %v638 = vunpack.c.l.b16 %v305
      %v639 = vunpack.c.h.b16 %v305
      %v640 = vunpack.c.l.b16 %v306
      %v641 = vunpack.c.h.b16 %v306
      %v642 = vunpack.c.l.b16 %v307
      %v643 = vunpack.c.h.b16 %v307
      %v644 = vunpack.c.l.b16 %v308
      %v645 = vunpack.c.h.b16 %v308
      %v646 = vunpack.c.l.b16 %v309
      %v647 = vunpack.c.h.b16 %v309
      %v648 = vunpack.c.l.b16 %v310
      %v649 = vunpack.c.h.b16 %v310
      %v650 = vunpack.c.l.b16 %v311
      %v651 = vunpack.c.h.b16 %v311
      %v652 = vunpack.c.l.b16 %v312
      %v653 = vunpack.c.h.b16 %v312
      %v654 = vunpack.c.l.b16 %v313
      %v655 = vunpack.c.h.b16 %v313
      %v656 = vunpack.c.l.b16 %v314
      %v657 = vunpack.c.h.b16 %v314
      %v658 = vunpack.c.l.b16 %v315
      %v659 = vunpack.c.h.b16 %v315
      %v660 = vunpack.c.l.b16 %v316
      %v661 = vunpack.c.h.b16 %v316
      %v662 = vunpack.c.l.b16 %v317
      %v663 = vunpack.c.h.b16 %v317
      %v664 = vunpack.c.l.b16 %v318
      %v665 = vunpack.c.h.b16 %v318
      %v666 = vunpack.c.l.b16 %v319
      %v667 = vunpack.c.h.b16 %v319
      %v668 = vunpack.c.l.b16 %v320
      %v669 = vunpack.c.h.b16 %v320
      %v670 = vunpack.c.l.b16 %v321
      %v671 = vunpack.c.h.b16 %v321
      %v672 = vunpack.c.l.b16 %v322
      %v673 = vunpack.c.h.b16 %v322
      %v674 = vunpack.c.l.b16 %v323
      %v675 = vunpack.c.h.b16 %v323
      %v676 = vpack.c.b16 %v628, %v612
      %v677 = vpack.c.b16 %v629, %v613
      %v678 = vpack.c.b16 %v630, %v614
      %v679 = vpack.c.b16 %v631, %v615
      %v680 = vpack.c.b16 %v632, %v616
      %v681 = vpack.c.b16 %v633, %v617
      %v682 = vpack.c.b16 %v634, %v618
      %v683 = vpack.c.b16 %v635, %v619
      %v684 = vpack.c.b16 %v636, %v620
      %v685 = vpack.c.b16 %v637, %v621
      %v686 = vpack.c.b16 %v638, %v622
      %v687 = vpack.c.b16 %v639, %v623
      %v688 = vpack.c.b16 %v640, %v624
      %v689 = vpack.c.b16 %v641, %v625
      %v690 = vpack.c.b16 %v642, %v626
      %v691 = vpack.c.b16 %v643, %v627
      %v692 = vpack.c.b16 %v660, %v644
      %v693 = vpack.c.b16 %v661, %v645
      %v694 = vpack.c.b16 %v662, %v646
      %v695 = vpack.c.b16 %v663, %v647
      %v696 = vpack.c.b16 %v664, %v648
      %v697 = vpack.c.b16 %v665, %v649
      %v698 = vpack.c.b16 %v666, %v650
      %v699 = vpack.c.b16 %v667, %v651
      %v700 = vpack.c.b16 %v668, %v652
      %v701 = vpack.c.b16 %v669, %v653
      %v702 = vpack.c.b16 %v670, %v654
      %v703 = vpack.c.b16 %v671, %v655
      %v704 = vpack.c.b16 %v672, %v656
      %v705 = vpack.c.b16 %v673, %v657
      %v706 = vpack.c.b16 %v674, %v658
      %v707 = vpack.c.b16 %v675, %v659
      %v996 = vunpack.c.l.b16 %v324
      %v997 = vunpack.c.h.b16 %v324
      %v998 = vunpack.c.l.b16 %v325
      %v999 = vunpack.c.h.b16 %v325
      %v1000 = vunpack.c.l.b16 %v326
      %v1001 = vunpack.c.h.b16 %v326
      %v1002 = vunpack.c.l.b16 %v327
      %v1003 = vunpack.c.h.b16 %v327
      %v1004 = vunpack.c.l.b16 %v328
      %v1005 = vunpack.c.h.b16 %v328
      %v1006 = vunpack.c.l.b16 %v329
      %v1007 = vunpack.c.h.b16 %v329
      %v1008 = vunpack.c.l.b16 %v330
      %v1009 = vunpack.c.h.b16 %v330
      %v1010 = vunpack.c.l.b16 %v331
      %v1011 = vunpack.c.h.b16 %v331
      %v1012 = vunpack.c.l.b16 %v332
      %v1013 = vunpack.c.h.b16 %v332
      %v1014 = vunpack.c.l.b16 %v333
      %v1015 = vunpack.c.h.b16 %v333
      %v1016 = vunpack.c.l.b16 %v334
      %v1017 = vunpack.c.h.b16 %v334
      %v1018 = vunpack.c.l.b16 %v335
      %v1019 = vunpack.c.h.b16 %v335
      %v1020 = vunpack.c.l.b16 %v336
      %v1021 = vunpack.c.h.b16 %v336
      %v1022 = vunpack.c.l.b16 %v337
      %v1023 = vunpack.c.h.b16 %v337
      %v1024 = vunpack.c.l.b16 %v338
      %v1025 = vunpack.c.h.b16 %v338
      %v1026 = vunpack.c.l.b16 %v339
      %v1027 = vunpack.c.h.b16 %v339
      %v1028 = vunpack.c.l.b16 %v340
      %v1029 = vunpack.c.h.b16 %v340
      %v1030 = vunpack.c.l.b16 %v341
      %v1031 = vunpack.c.h.b16 %v341
      %v1032 = vunpack.c.l.b16 %v342
      %v1033 = vunpack.c.h.b16 %v342
      %v1034 = vunpack.c.l.b16 %v343
      %v1035 = vunpack.c.h.b16 %v343
      %v1036 = vunpack.c.l.b16 %v344
      %v1037 = vunpack.c.h.b16 %v344
      %v1038 = vunpack.c.l.b16 %v345
      %v1039 = vunpack.c.h.b16 %v345
      %v1040 = vunpack.c.l.b16 %v346
      %v1041 = vunpack.c.h.b16 %v346
      %v1042 = vunpack.c.l.b16 %v347
      %v1043 = vunpack.c.h.b16 %v347
      %v1044 = vunpack.c.l.b16 %v348
      %v1045 = vunpack.c.h.b16 %v348
      %v1046 = vunpack.c.l.b16 %v349
      %v1047 = vunpack.c.h.b16 %v349
      %v1048 = vunpack.c.l.b16 %v350
      %v1049 = vunpack.c.h.b16 %v350
      %v1050 = vunpack.c.l.b16 %v351
      %v1051 = vunpack.c.h.b16 %v351
      %v1052 = vunpack.c.l.b16 %v352
      %v1053 = vunpack.c.h.b16 %v352
      %v1054 = vunpack.c.l.b16 %v353
      %v1055 = vunpack.c.h.b16 %v353
      %v1056 = vunpack.c.l.b16 %v354
      %v1057 = vunpack.c.h.b16 %v354
      %v1058 = vunpack.c.l.b16 %v355
      %v1059 = vunpack.c.h.b16 %v355
      %v1060 = vunpack.c.l.b16 %v356
      %v1061 = vunpack.c.h.b16 %v356
      %v1062 = vunpack.c.l.b16 %v357
      %v1063 = vunpack.c.h.b16 %v357
      %v1064 = vunpack.c.l.b16 %v358
      %v1065 = vunpack.c.h.b16 %v358
      %v1066 = vunpack.c.l.b16 %v359
      %v1067 = vunpack.c.h.b16 %v359
      %v1068 = vunpack.c.l.b16 %v360
      %v1069 = vunpack.c.h.b16 %v360
      %v1070 = vunpack.c.l.b16 %v361
      %v1071 = vunpack.c.h.b16 %v361
      %v1072 = vunpack.c.l.b16 %v362
      %v1073 = vunpack.c.h.b16 %v362
      %v1074 = vunpack.c.l.b16 %v363
      %v1075 = vunpack.c.h.b16 %v363
      %v1076 = vunpack.c.l.b16 %v364
      %v1077 = vunpack.c.h.b16 %v364
      %v1078 = vunpack.c.l.b16 %v365
      %v1079 = vunpack.c.h.b16 %v365
      %v1080 = vunpack.c.l.b16 %v366
      %v1081 = vunpack.c.h.b16 %v366
      %v1082 = vunpack.c.l.b16 %v367
      %v1083 = vunpack.c.h.b16 %v367
      %v1084 = vunpack.c.l.b16 %v368
      %v1085 = vunpack.c.h.b16 %v368
      %v1086 = vunpack.c.l.b16 %v369
      %v1087 = vunpack.c.h.b16 %v369
      %v1088 = vunpack.c.l.b16 %v370
      %v1089 = vunpack.c.h.b16 %v370
      %v1090 = vunpack.c.l.b16 %v371
      %v1091 = vunpack.c.h.b16 %v371
      %v1092 = vunpack.c.l.b16 %v372
      %v1093 = vunpack.c.h.b16 %v372
      %v1094 = vunpack.c.l.b16 %v373
      %v1095 = vunpack.c.h.b16 %v373
      %v1096 = vunpack.c.l.b16 %v374
      %v1097 = vunpack.c.h.b16 %v374
      %v1098 = vunpack.c.l.b16 %v375
      %v1099 = vunpack.c.h.b16 %v375
      %v1100 = vunpack.c.l.b16 %v376
      %v1101 = vunpack.c.h.b16 %v376
      %v1102 = vunpack.c.l.b16 %v377
      %v1103 = vunpack.c.h.b16 %v377
      %v1104 = vunpack.c.l.b16 %v378
      %v1105 = vunpack.c.h.b16 %v378
      %v1106 = vunpack.c.l.b16 %v379
      %v1107 = vunpack.c.h.b16 %v379
      %v1108 = vunpack.c.l.b16 %v380
      %v1109 = vunpack.c.h.b16 %v380
      %v1110 = vunpack.c.l.b16 %v381
      %v1111 = vunpack.c.h.b16 %v381
      %v1112 = vunpack.c.l.b16 %v382
      %v1113 = vunpack.c.h.b16 %v382
      %v1114 = vunpack.c.l.b16 %v383
      %v1115 = vunpack.c.h.b16 %v383
      %v1116 = vunpack.c.l.b16 %v384
      %v1117 = vunpack.c.h.b16 %v384
      %v1118 = vunpack.c.l.b16 %v385
      %v1119 = vunpack.c.h.b16 %v385
      %v1120 = vunpack.c.l.b16 %v386
      %v1121 = vunpack.c.h.b16 %v386
      %v1122 = vunpack.c.l.b16 %v387
      %v1123 = vunpack.c.h.b16 %v387
      %v1124 = vunpack.c.l.b16 %v388
      %v1125 = vunpack.c.h.b16 %v388
      %v1126 = vunpack.c.l.b16 %v389
      %v1127 = vunpack.c.h.b16 %v389
      %v1128 = vunpack.c.l.b16 %v390
      %v1129 = vunpack.c.h.b16 %v390
      %v1130 = vunpack.c.l.b16 %v391
      %v1131 = vunpack.c.h.b16 %v391
      %v1132 = vunpack.c.l.b16 %v392
      %v1133 = vunpack.c.h.b16 %v392
      %v1134 = vunpack.c.l.b16 %v393
      %v1135 = vunpack.c.h.b16 %v393
      %v1136 = vunpack.c.l.b16 %v394
      %v1137 = vunpack.c.h.b16 %v394
      %v1138 = vunpack.c.l.b16 %v395
      %v1139 = vunpack.c.h.b16 %v395
      %v1140 = vunpack.c.l.b16 %v396
      %v1141 = vunpack.c.h.b16 %v396
      %v1142 = vunpack.c.l.b16 %v397
      %v1143 = vunpack.c.h.b16 %v397
      %v1144 = vunpack.c.l.b16 %v398
      %v1145 = vunpack.c.h.b16 %v398
      %v1146 = vunpack.c.l.b16 %v399
      %v1147 = vunpack.c.h.b16 %v399
      %v1148 = vunpack.c.l.b16 %v400
      %v1149 = vunpack.c.h.b16 %v400
      %v1150 = vunpack.c.l.b16 %v401
      %v1151 = vunpack.c.h.b16 %v401
      %v1152 = vunpack.c.l.b16 %v402
      %v1153 = vunpack.c.h.b16 %v402
      %v1154 = vunpack.c.l.b16 %v403
      %v1155 = vunpack.c.h.b16 %v403
      %v1156 = vunpack.c.l.b16 %v404
      %v1157 = vunpack.c.h.b16 %v404
      %v1158 = vunpack.c.l.b16 %v405
      %v1159 = vunpack.c.h.b16 %v405
      %v1160 = vunpack.c.l.b16 %v406
      %v1161 = vunpack.c.h.b16 %v406
      %v1162 = vunpack.c.l.b16 %v407
      %v1163 = vunpack.c.h.b16 %v407
      %v1164 = vunpack.c.l.b16 %v408
      %v1165 = vunpack.c.h.b16 %v408
      %v1166 = vunpack.c.l.b16 %v409
      %v1167 = vunpack.c.h.b16 %v409
      %v1168 = vunpack.c.l.b16 %v410
      %v1169 = vunpack.c.h.b16 %v410
      %v1170 = vunpack.c.l.b16 %v411
      %v1171 = vunpack.c.h.b16 %v411
      %v1172 = vunpack.c.l.b16 %v412
      %v1173 = vunpack.c.h.b16 %v412
      %v1174 = vunpack.c.l.b16 %v413
      %v1175 = vunpack.c.h.b16 %v413
      %v1176 = vunpack.c.l.b16 %v414
      %v1177 = vunpack.c.h.b16 %v414
      %v1178 = vunpack.c.l.b16 %v415
      %v1179 = vunpack.c.h.b16 %v415
      %v1180 = vunpack.c.l.b16 %v416
      %v1181 = vunpack.c.h.b16 %v416
      %v1182 = vunpack.c.l.b16 %v417
      %v1183 = vunpack.c.h.b16 %v417
      %v1184 = vunpack.c.l.b16 %v418
      %v1185 = vunpack.c.h.b16 %v418
      %v1186 = vunpack.c.l.b16 %v419
      %v1187 = vunpack.c.h.b16 %v419
      %v1188 = vunpack.c.l.b16 %v420
      %v1189 = vunpack.c.h.b16 %v420
      %v1190 = vunpack.c.l.b16 %v421
      %v1191 = vunpack.c.h.b16 %v421
      %v1192 = vunpack.c.l.b16 %v422
      %v1193 = vunpack.c.h.b16 %v422
      %v1194 = vunpack.c.l.b16 %v423
      %v1195 = vunpack.c.h.b16 %v423
      %v1196 = vunpack.c.l.b16 %v424
      %v1197 = vunpack.c.h.b16 %v424
      %v1198 = vunpack.c.l.b16 %v425
      %v1199 = vunpack.c.h.b16 %v425
      %v1200 = vunpack.c.l.b16 %v426
      %v1201 = vunpack.c.h.b16 %v426
      %v1202 = vunpack.c.l.b16 %v427
      %v1203 = vunpack.c.h.b16 %v427
      %v1204 = vunpack.c.l.b16 %v428
      %v1205 = vunpack.c.h.b16 %v428
      %v1206 = vunpack.c.l.b16 %v429
      %v1207 = vunpack.c.h.b16 %v429
      %v1208 = vunpack.c.l.b16 %v430
      %v1209 = vunpack.c.h.b16 %v430
      %v1210 = vunpack.c.l.b16 %v431
      %v1211 = vunpack.c.h.b16 %v431
      %v1212 = vunpack.c.l.b16 %v432
      %v1213 = vunpack.c.h.b16 %v432
      %v1214 = vunpack.c.l.b16 %v433
      %v1215 = vunpack.c.h.b16 %v433
      %v1216 = vunpack.c.l.b16 %v434
      %v1217 = vunpack.c.h.b16 %v434
      %v1218 = vunpack.c.l.b16 %v435
      %v1219 = vunpack.c.h.b16 %v435
      %v1220 = vunpack.c.l.b16 %v436
      %v1221 = vunpack.c.h.b16 %v436
      %v1222 = vunpack.c.l.b16 %v437
      %v1223 = vunpack.c.h.b16 %v437
      %v1224 = vunpack.c.l.b16 %v438
      %v1225 = vunpack.c.h.b16 %v438
      %v1226 = vunpack.c.l.b16 %v439
      %v1227 = vunpack.c.h.b16 %v439
      %v1228 = vunpack.c.l.b16 %v440
      %v1229 = vunpack.c.h.b16 %v440
      %v1230 = vunpack.c.l.b16 %v441
      %v1231 = vunpack.c.h.b16 %v441
      %v1232 = vunpack.c.l.b16 %v442
      %v1233 = vunpack.c.h.b16 %v442
      %v1234 = vunpack.c.l.b16 %v443
      %v1235 = vunpack.c.h.b16 %v443
      %v1236 = vunpack.c.l.b16 %v444
      %v1237 = vunpack.c.h.b16 %v444
      %v1238 = vunpack.c.l.b16 %v445
      %v1239 = vunpack.c.h.b16 %v445
      %v1240 = vunpack.c.l.b16 %v446
      %v1241 = vunpack.c.h.b16 %v446
      %v1242 = vunpack.c.l.b16 %v447
      %v1243 = vunpack.c.h.b16 %v447
      %v1244 = vunpack.c.l.b16 %v448
      %v1245 = vunpack.c.h.b16 %v448
      %v1246 = vunpack.c.l.b16 %v449
      %v1247 = vunpack.c.h.b16 %v449
      %v1248 = vunpack.c.l.b16 %v450
      %v1249 = vunpack.c.h.b16 %v450
      %v1250 = vunpack.c.l.b16 %v451
      %v1251 = vunpack.c.h.b16 %v451
      %v1252 = vunpack.c.l.b16 %v452
      %v1253 = vunpack.c.h.b16 %v452
      %v1254 = vunpack.c.l.b16 %v453
      %v1255 = vunpack.c.h.b16 %v453
      %v1256 = vunpack.c.l.b16 %v454
      %v1257 = vunpack.c.h.b16 %v454
      %v1258 = vunpack.c.l.b16 %v455
      %v1259 = vunpack.c.h.b16 %v455
      %v1260 = vunpack.c.l.b16 %v456
      %v1261 = vunpack.c.h.b16 %v456
      %v1262 = vunpack.c.l.b16 %v457
      %v1263 = vunpack.c.h.b16 %v457
      %v1264 = vunpack.c.l.b16 %v458
      %v1265 = vunpack.c.h.b16 %v458
      %v1266 = vunpack.c.l.b16 %v459
      %v1267 = vunpack.c.h.b16 %v459
      %v1268 = vunpack.c.l.b16 %v460
      %v1269 = vunpack.c.h.b16 %v460
      %v1270 = vunpack.c.l.b16 %v461
      %v1271 = vunpack.c.h.b16 %v461
      %v1272 = vunpack.c.l.b16 %v462
      %v1273 = vunpack.c.h.b16 %v462
      %v1274 = vunpack.c.l.b16 %v463
      %v1275 = vunpack.c.h.b16 %v463
      %v1276 = vunpack.c.l.b16 %v464
      %v1277 = vunpack.c.h.b16 %v464
      %v1278 = vunpack.c.l.b16 %v465
      %v1279 = vunpack.c.h.b16 %v465
      %v1280 = vunpack.c.l.b16 %v466
      %v1281 = vunpack.c.h.b16 %v466
      %v1282 = vunpack.c.l.b16 %v467
      %v1283 = vunpack.c.h.b16 %v467
      %v1284 = vunpack.c.l.b16 %v468
      %v1285 = vunpack.c.h.b16 %v468
      %v1286 = vunpack.c.l.b16 %v469
      %v1287 = vunpack.c.h.b16 %v469
      %v1288 = vunpack.c.l.b16 %v470
      %v1289 = vunpack.c.h.b16 %v470
      %v1290 = vunpack.c.l.b16 %v471
      %v1291 = vunpack.c.h.b16 %v471
      %v1292 = vunpack.c.l.b16 %v472
      %v1293 = vunpack.c.h.b16 %v472
      %v1294 = vunpack.c.l.b16 %v473
      %v1295 = vunpack.c.h.b16 %v473
      %v1296 = vunpack.c.l.b16 %v474
      %v1297 = vunpack.c.h.b16 %v474
      %v1298 = vunpack.c.l.b16 %v475
      %v1299 = vunpack.c.h.b16 %v475
      %v1300 = vunpack.c.l.b16 %v476
      %v1301 = vunpack.c.h.b16 %v476
      %v1302 = vunpack.c.l.b16 %v477
      %v1303 = vunpack.c.h.b16 %v477
      %v1304 = vunpack.c.l.b16 %v478
      %v1305 = vunpack.c.h.b16 %v478
      %v1306 = vunpack.c.l.b16 %v479
      %v1307 = vunpack.c.h.b16 %v479
      %v1308 = vunpack.c.l.b16 %v480
      %v1309 = vunpack.c.h.b16 %v480
      %v1310 = vunpack.c.l.b16 %v481
      %v1311 = vunpack.c.h.b16 %v481
      %v1312 = vunpack.c.l.b16 %v482
      %v1313 = vunpack.c.h.b16 %v482
      %v1314 = vunpack.c.l.b16 %v483
      %v1315 = vunpack.c.h.b16 %v483
      %v1316 = vunpack.c.l.b16 %v484
      %v1317 = vunpack.c.h.b16 %v484
      %v1318 = vunpack.c.l.b16 %v485
      %v1319 = vunpack.c.h.b16 %v485
      %v1320 = vunpack.c.l.b16 %v486
      %v1321 = vunpack.c.h.b16 %v486
      %v1322 = vunpack.c.l.b16 %v487
      %v1323 = vunpack.c.h.b16 %v487
      %v1324 = vunpack.c.l.b16 %v488
      %v1325 = vunpack.c.h.b16 %v488
      %v1326 = vunpack.c.l.b16 %v489
      %v1327 = vunpack.c.h.b16 %v489
      %v1328 = vunpack.c.l.b16 %v490
      %v1329 = vunpack.c.h.b16 %v490
      %v1330 = vunpack.c.l.b16 %v491
      %v1331 = vunpack.c.h.b16 %v491
      %v1332 = vunpack.c.l.b16 %v492
      %v1333 = vunpack.c.h.b16 %v492
      %v1334 = vunpack.c.l.b16 %v493
      %v1335 = vunpack.c.h.b16 %v493
      %v1336 = vunpack.c.l.b16 %v494
      %v1337 = vunpack.c.h.b16 %v494
      %v1338 = vunpack.c.l.b16 %v495
      %v1339 = vunpack.c.h.b16 %v495
      %v1340 = vunpack.c.l.b16 %v496
      %v1341 = vunpack.c.h.b16 %v496
      %v1342 = vunpack.c.l.b16 %v497
      %v1343 = vunpack.c.h.b16 %v497
      %v1344 = vunpack.c.l.b16 %v498
      %v1345 = vunpack.c.h.b16 %v498
      %v1346 = vunpack.c.l.b16 %v499
      %v1347 = vunpack.c.h.b16 %v499
      %v1348 = vunpack.c.l.b16 %v500
      %v1349 = vunpack.c.h.b16 %v500
      %v1350 = vunpack.c.l.b16 %v501
      %v1351 = vunpack.c.h.b16 %v501
      %v1352 = vunpack.c.l.b16 %v502
      %v1353 = vunpack.c.h.b16 %v502
      %v1354 = vunpack.c.l.b16 %v503
      %v1355 = vunpack.c.h.b16 %v503
      %v1356 = vunpack.c.l.b16 %v504
      %v1357 = vunpack.c.h.b16 %v504
      %v1358 = vunpack.c.l.b16 %v505
      %v1359 = vunpack.c.h.b16 %v505
      %v1360 = vunpack.c.l.b16 %v506
      %v1361 = vunpack.c.h.b16 %v506
      %v1362 = vunpack.c.l.b16 %v507
      %v1363 = vunpack.c.h.b16 %v507
      %v1364 = vunpack.c.l.b16 %v508
      %v1365 = vunpack.c.h.b16 %v508
      %v1366 = vunpack.c.l.b16 %v509
      %v1367 = vunpack.c.h.b16 %v509
      %v1368 = vunpack.c.l.b16 %v510
      %v1369 = vunpack.c.h.b16 %v510
      %v1370 = vunpack.c.l.b16 %v511
      %v1371 = vunpack.c.h.b16 %v511
      %v1372 = vunpack.c.l.b16 %v512
      %v1373 = vunpack.c.h.b16 %v512
      %v1374 = vunpack.c.l.b16 %v513
      %v1375 = vunpack.c.h.b16 %v513
      %v1376 = vunpack.c.l.b16 %v514
      %v1377 = vunpack.c.h.b16 %v514
      %v1378 = vunpack.c.l.b16 %v515
      %v1379 = vunpack.c.h.b16 %v515
      %v1380 = vunpack.c.l.b16 %v516
      %v1381 = vunpack.c.h.b16 %v516
      %v1382 = vunpack.c.l.b16 %v517
      %v1383 = vunpack.c.h.b16 %v517
      %v1384 = vunpack.c.l.b16 %v518
      %v1385 = vunpack.c.h.b16 %v518
      %v1386 = vunpack.c.l.b16 %v519
      %v1387 = vunpack.c.h.b16 %v519
      %v1388 = vunpack.c.l.b16 %v520
      %v1389 = vunpack.c.h.b16 %v520
      %v1390 = vunpack.c.l.b16 %v521
      %v1391 = vunpack.c.h.b16 %v521
      %v1392 = vunpack.c.l.b16 %v522
      %v1393 = vunpack.c.h.b16 %v522
      %v1394 = vunpack.c.l.b16 %v523
      %v1395 = vunpack.c.h.b16 %v523
      %v1396 = vunpack.c.l.b16 %v524
      %v1397 = vunpack.c.h.b16 %v524
      %v1398 = vunpack.c.l.b16 %v525
      %v1399 = vunpack.c.h.b16 %v525
      %v1400 = vunpack.c.l.b16 %v526
      %v1401 = vunpack.c.h.b16 %v526
      %v1402 = vunpack.c.l.b16 %v527
      %v1403 = vunpack.c.h.b16 %v527
      %v1404 = vunpack.c.l.b16 %v528
      %v1405 = vunpack.c.h.b16 %v528
      %v1406 = vunpack.c.l.b16 %v529
      %v1407 = vunpack.c.h.b16 %v529
      %v1408 = vunpack.c.l.b16 %v530
      %v1409 = vunpack.c.h.b16 %v530
      %v1410 = vunpack.c.l.b16 %v531
      %v1411 = vunpack.c.h.b16 %v531
      %v1412 = vunpack.c.l.b16 %v532
      %v1413 = vunpack.c.h.b16 %v532
      %v1414 = vunpack.c.l.b16 %v533
      %v1415 = vunpack.c.h.b16 %v533
      %v1416 = vunpack.c.l.b16 %v534
      %v1417 = vunpack.c.h.b16 %v534
      %v1418 = vunpack.c.l.b16 %v535
      %v1419 = vunpack.c.h.b16 %v535
      %v1420 = vunpack.c.l.b16 %v536
      %v1421 = vunpack.c.h.b16 %v536
      %v1422 = vunpack.c.l.b16 %v537
      %v1423 = vunpack.c.h.b16 %v537
      %v1424 = vunpack.c.l.b16 %v538
      %v1425 = vunpack.c.h.b16 %v538
      %v1426 = vunpack.c.l.b16 %v539
      %v1427 = vunpack.c.h.b16 %v539
      %v1428 = vunpack.c.l.b16 %v540
      %v1429 = vunpack.c.h.b16 %v540
      %v1430 = vunpack.c.l.b16 %v541
      %v1431 = vunpack.c.h.b16 %v541
      %v1432 = vunpack.c.l.b16 %v542
      %v1433 = vunpack.c.h.b16 %v542
      %v1434 = vunpack.c.l.b16 %v543
      %v1435 = vunpack.c.h.b16 %v543
      %v1436 = vunpack.c.l.b16 %v544
      %v1437 = vunpack.c.h.b16 %v544
      %v1438 = vunpack.c.l.b16 %v545
      %v1439 = vunpack.c.h.b16 %v545
      %v1440 = vunpack.c.l.b16 %v546
      %v1441 = vunpack.c.h.b16 %v546
      %v1442 = vunpack.c.l.b16 %v547
      %v1443 = vunpack.c.h.b16 %v547
      %v1444 = vunpack.c.l.b16 %v548
      %v1445 = vunpack.c.h.b16 %v548
      %v1446 = vunpack.c.l.b16 %v549
      %v1447 = vunpack.c.h.b16 %v549
      %v1448 = vunpack.c.l.b16 %v550
      %v1449 = vunpack.c.h.b16 %v550
      %v1450 = vunpack.c.l.b16 %v551
      %v1451 = vunpack.c.h.b16 %v551
      %v1452 = vunpack.c.l.b16 %v552
      %v1453 = vunpack.c.h.b16 %v552
      %v1454 = vunpack.c.l.b16 %v553
      %v1455 = vunpack.c.h.b16 %v553
      %v1456 = vunpack.c.l.b16 %v554
      %v1457 = vunpack.c.h.b16 %v554
      %v1458 = vunpack.c.l.b16 %v555
      %v1459 = vunpack.c.h.b16 %v555
      %v1460 = vunpack.c.l.b16 %v556
      %v1461 = vunpack.c.h.b16 %v556
      %v1462 = vunpack.c.l.b16 %v557
      %v1463 = vunpack.c.h.b16 %v557
      %v1464 = vunpack.c.l.b16 %v558
      %v1465 = vunpack.c.h.b16 %v558
      %v1466 = vunpack.c.l.b16 %v559
      %v1467 = vunpack.c.h.b16 %v559
      %v1468 = vunpack.c.l.b16 %v560
      %v1469 = vunpack.c.h.b16 %v560
      %v1470 = vunpack.c.l.b16 %v561
      %v1471 = vunpack.c.h.b16 %v561
      %v1472 = vunpack.c.l.b16 %v562
      %v1473 = vunpack.c.h.b16 %v562
      %v1474 = vunpack.c.l.b16 %v563
      %v1475 = vunpack.c.h.b16 %v563
      %v1476 = vunpack.c.l.b16 %v564
      %v1477 = vunpack.c.h.b16 %v564
      %v1478 = vunpack.c.l.b16 %v565
      %v1479 = vunpack.c.h.b16 %v565
      %v1480 = vunpack.c.l.b16 %v566
      %v1481 = vunpack.c.h.b16 %v566
      %v1482 = vunpack.c.l.b16 %v567
      %v1483 = vunpack.c.h.b16 %v567
      %v1484 = vunpack.c.l.b16 %v568
      %v1485 = vunpack.c.h.b16 %v568
      %v1486 = vunpack.c.l.b16 %v569
      %v1487 = vunpack.c.h.b16 %v569
      %v1488 = vunpack.c.l.b16 %v570
      %v1489 = vunpack.c.h.b16 %v570
      %v1490 = vunpack.c.l.b16 %v571
      %v1491 = vunpack.c.h.b16 %v571
      %v1492 = vunpack.c.l.b16 %v572
      %v1493 = vunpack.c.h.b16 %v572
      %v1494 = vunpack.c.l.b16 %v573
      %v1495 = vunpack.c.h.b16 %v573
      %v1496 = vunpack.c.l.b16 %v574
      %v1497 = vunpack.c.h.b16 %v574
      %v1498 = vunpack.c.l.b16 %v575
      %v1499 = vunpack.c.h.b16 %v575
      %v1500 = vunpack.c.l.b16 %v576
      %v1501 = vunpack.c.h.b16 %v576
      %v1502 = vunpack.c.l.b16 %v577
      %v1503 = vunpack.c.h.b16 %v577
      %v1504 = vunpack.c.l.b16 %v578
      %v1505 = vunpack.c.h.b16 %v578
      %v1506 = vunpack.c.l.b16 %v579
      %v1507 = vunpack.c.h.b16 %v579
      %v1508 = vpack.c.b16 %v998, %v996
      %v1509 = vpack.c.b16 %v999, %v997
      %v1510 = vpack.c.b16 %v1002, %v1000
      %v1511 = vpack.c.b16 %v1003, %v1001
      %v1512 = vpack.c.b16 %v1006, %v1004
      %v1513 = vpack.c.b16 %v1007, %v1005
      %v1514 = vpack.c.b16 %v1010, %v1008
      %v1515 = vpack.c.b16 %v1011, %v1009
      %v1516 = vpack.c.b16 %v1014, %v1012
      %v1517 = vpack.c.b16 %v1015, %v1013
      %v1518 = vpack.c.b16 %v1018, %v1016
      %v1519 = vpack.c.b16 %v1019, %v1017
      %v1520 = vpack.c.b16 %v1022, %v1020
      %v1521 = vpack.c.b16 %v1023, %v1021
      %v1522 = vpack.c.b16 %v1026, %v1024
      %v1523 = vpack.c.b16 %v1027, %v1025
      %v1524 = vpack.c.b16 %v1030, %v1028
      %v1525 = vpack.c.b16 %v1031, %v1029
      %v1526 = vpack.c.b16 %v1034, %v1032
      %v1527 = vpack.c.b16 %v1035, %v1033
      %v1528 = vpack.c.b16 %v1038, %v1036
      %v1529 = vpack.c.b16 %v1039, %v1037
      %v1530 = vpack.c.b16 %v1042, %v1040
      %v1531 = vpack.c.b16 %v1043, %v1041
      %v1532 = vpack.c.b16 %v1046, %v1044
      %v1533 = vpack.c.b16 %v1047, %v1045
      %v1534 = vpack.c.b16 %v1050, %v1048
      %v1535 = vpack.c.b16 %v1051, %v1049
      %v1536 = vpack.c.b16 %v1054, %v1052
      %v1537 = vpack.c.b16 %v1055, %v1053
      %v1538 = vpack.c.b16 %v1058, %v1056
      %v1539 = vpack.c.b16 %v1059, %v1057
      %v1540 = vpack.c.b16 %v1062, %v1060
      %v1541 = vpack.c.b16 %v1063, %v1061
      %v1542 = vpack.c.b16 %v1066, %v1064
      %v1543 = vpack.c.b16 %v1067, %v1065
      %v1544 = vpack.c.b16 %v1070, %v1068
      %v1545 = vpack.c.b16 %v1071, %v1069
      %v1546 = vpack.c.b16 %v1074, %v1072
      %v1547 = vpack.c.b16 %v1075, %v1073
      %v1548 = vpack.c.b16 %v1078, %v1076
      %v1549 = vpack.c.b16 %v1079, %v1077
      %v1550 = vpack.c.b16 %v1082, %v1080
      %v1551 = vpack.c.b16 %v1083, %v1081
      %v1552 = vpack.c.b16 %v1086, %v1084
      %v1553 = vpack.c.b16 %v1087, %v1085
      %v1554 = vpack.c.b16 %v1090, %v1088
      %v1555 = vpack.c.b16 %v1091, %v1089
      %v1556 = vpack.c.b16 %v1094, %v1092
      %v1557 = vpack.c.b16 %v1095, %v1093
      %v1558 = vpack.c.b16 %v1098, %v1096
      %v1559 = vpack.c.b16 %v1099, %v1097
      %v1560 = vpack.c.b16 %v1102, %v1100
      %v1561 = vpack.c.b16 %v1103, %v1101
      %v1562 = vpack.c.b16 %v1106, %v1104
      %v1563 = vpack.c.b16 %v1107, %v1105
      %v1564 = vpack.c.b16 %v1110, %v1108
      %v1565 = vpack.c.b16 %v1111, %v1109
      %v1566 = vpack.c.b16 %v1114, %v1112
      %v1567 = vpack.c.b16 %v1115, %v1113
      %v1568 = vpack.c.b16 %v1118, %v1116
      %v1569 = vpack.c.b16 %v1119, %v1117
      %v1570 = vpack.c.b16 %v1122, %v1120
      %v1571 = vpack.c.b16 %v1123, %v1121
      %v1572 = vpack.c.b16 %v1126, %v1124
      %v1573 = vpack.c.b16 %v1127, %v1125
      %v1574 = vpack.c.b16 %v1130, %v1128
      %v1575 = vpack.c.b16 %v1131, %v1129
      %v1576 = vpack.c.b16 %v1134, %v1132
      %v1577 = vpack.c.b16 %v1135, %v1133
      %v1578 = vpack.c.b16 %v1138, %v1136
      %v1579 = vpack.c.b16 %v1139, %v1137
      %v1580 = vpack.c.b16 %v1142, %v1140
      %v1581 = vpack.c.b16 %v1143, %v1141
      %v1582 = vpack.c.b16 %v1146, %v1144
      %v1583 = vpack.c.b16 %v1147, %v1145
      %v1584 = vpack.c.b16 %v1150, %v1148
      %v1585 = vpack.c.b16 %v1151, %v1149
      %v1586 = vpack.c.b16 %v1154, %v1152
      %v1587 = vpack.c.b16 %v1155, %v1153
      %v1588 = vpack.c.b16 %v1158, %v1156
      %v1589 = vpack.c.b16 %v1159, %v1157
      %v1590 = vpack.c.b16 %v1162, %v1160
      %v1591 = vpack.c.b16 %v1163, %v1161
      %v1592 = vpack.c.b16 %v1166, %v1164
      %v1593 = vpack.c.b16 %v1167, %v1165
      %v1594 = vpack.c.b16 %v1170, %v1168
      %v1595 = vpack.c.b16 %v1171, %v1169
      %v1596 = vpack.c.b16 %v1174, %v1172
      %v1597 = vpack.c.b16 %v1175, %v1173
      %v1598 = vpack.c.b16 %v1178, %v1176
      %v1599 = vpack.c.b16 %v1179, %v1177
      %v1600 = vpack.c.b16 %v1182, %v1180
      %v1601 = vpack.c.b16 %v1183, %v1181
      %v1602 = vpack.c.b16 %v1186, %v1184
      %v1603 = vpack.c.b16 %v1187, %v1185
      %v1604 = vpack.c.b16 %v1190, %v1188
      %v1605 = vpack.c.b16 %v1191, %v1189
      %v1606 = vpack.c.b16 %v1194, %v1192
      %v1607 = vpack.c.b16 %v1195, %v1193
      %v1608 = vpack.c.b16 %v1198, %v1196
      %v1609 = vpack.c.b16 %v1199, %v1197
      %v1610 = vpack.c.b16 %v1202, %v1200
      %v1611 = vpack.c.b16 %v1203, %v1201
      %v1612 = vpack.c.b16 %v1206, %v1204
      %v1613 = vpack.c.b16 %v1207, %v1205
      %v1614 = vpack.c.b16 %v1210, %v1208
      %v1615 = vpack.c.b16 %v1211, %v1209
      %v1616 = vpack.c.b16 %v1214, %v1212
      %v1617 = vpack.c.b16 %v1215, %v1213
      %v1618 = vpack.c.b16 %v1218, %v1216
      %v1619 = vpack.c.b16 %v1219, %v1217
      %v1620 = vpack.c.b16 %v1222, %v1220
      %v1621 = vpack.c.b16 %v1223, %v1221
      %v1622 = vpack.c.b16 %v1226, %v1224
      %v1623 = vpack.c.b16 %v1227, %v1225
      %v1624 = vpack.c.b16 %v1230, %v1228
      %v1625 = vpack.c.b16 %v1231, %v1229
      %v1626 = vpack.c.b16 %v1234, %v1232
      %v1627 = vpack.c.b16 %v1235, %v1233
      %v1628 = vpack.c.b16 %v1238, %v1236
      %v1629 = vpack.c.b16 %v1239, %v1237
      %v1630 = vpack.c.b16 %v1242, %v1240
      %v1631 = vpack.c.b16 %v1243, %v1241
      %v1632 = vpack.c.b16 %v1246, %v1244
      %v1633 = vpack.c.b16 %v1247, %v1245
      %v1634 = vpack.c.b16 %v1250, %v1248
      %v1635 = vpack.c.b16 %v1251, %v1249
      %v1636 = vpack.c.b16 %v1254, %v1252
      %v1637 = vpack.c.b16 %v1255, %v1253
      %v1638 = vpack.c.b16 %v1258, %v1256
      %v1639 = vpack.c.b16 %v1259, %v1257
      %v1640 = vpack.c.b16 %v1262, %v1260
      %v1641 = vpack.c.b16 %v1263, %v1261
      %v1642 = vpack.c.b16 %v1266, %v1264
      %v1643 = vpack.c.b16 %v1267, %v1265
      %v1644 = vpack.c.b16 %v1270, %v1268
      %v1645 = vpack.c.b16 %v1271, %v1269
      %v1646 = vpack.c.b16 %v1274, %v1272
      %v1647 = vpack.c.b16 %v1275, %v1273
      %v1648 = vpack.c.b16 %v1278, %v1276
      %v1649 = vpack.c.b16 %v1279, %v1277
      %v1650 = vpack.c.b16 %v1282, %v1280
      %v1651 = vpack.c.b16 %v1283, %v1281
      %v1652 = vpack.c.b16 %v1286, %v1284
      %v1653 = vpack.c.b16 %v1287, %v1285
      %v1654 = vpack.c.b16 %v1290, %v1288
      %v1655 = vpack.c.b16 %v1291, %v1289
      %v1656 = vpack.c.b16 %v1294, %v1292
      %v1657 = vpack.c.b16 %v1295, %v1293
      %v1658 = vpack.c.b16 %v1298, %v1296
      %v1659 = vpack.c.b16 %v1299, %v1297
      %v1660 = vpack.c.b16 %v1302, %v1300
      %v1661 = vpack.c.b16 %v1303, %v1301
      %v1662 = vpack.c.b16 %v1306, %v1304
      %v1663 = vpack.c.b16 %v1307, %v1305
      %v1664 = vpack.c.b16 %v1310, %v1308
      %v1665 = vpack.c.b16 %v1311, %v1309
      %v1666 = vpack.c.b16 %v1314, %v1312
      %v1667 = vpack.c.b16 %v1315, %v1313
      %v1668 = vpack.c.b16 %v1318, %v1316
      %v1669 = vpack.c.b16 %v1319, %v1317
      %v1670 = vpack.c.b16 %v1322, %v1320
      %v1671 = vpack.c.b16 %v1323, %v1321
      %v1672 = vpack.c.b16 %v1326, %v1324
      %v1673 = vpack.c.b16 %v1327, %v1325
      %v1674 = vpack.c.b16 %v1330, %v1328
      %v1675 = vpack.c.b16 %v1331, %v1329
      %v1676 = vpack.c.b16 %v1334, %v1332
      %v1677 = vpack.c.b16 %v1335, %v1333
      %v1678 = vpack.c.b16 %v1338, %v1336
      %v1679 = vpack.c.b16 %v1339, %v1337
      %v1680 = vpack.c.b16 %v1342, %v1340
      %v1681 = vpack.c.b16 %v1343, %v1341
      %v1682 = vpack.c.b16 %v1346, %v1344
      %v1683 = vpack.c.b16 %v1347, %v1345
      %v1684 = vpack.c.b16 %v1350, %v1348
      %v1685 = vpack.c.b16 %v1351, %v1349
      %v1686 = vpack.c.b16 %v1354, %v1352
      %v1687 = vpack.c.b16 %v1355, %v1353
      %v1688 = vpack.c.b16 %v1358, %v1356
      %v1689 = vpack.c.b16 %v1359, %v1357
      %v1690 = vpack.c.b16 %v1362, %v1360
      %v1691 = vpack.c.b16 %v1363, %v1361
      %v1692 = vpack.c.b16 %v1366, %v1364
      %v1693 = vpack.c.b16 %v1367, %v1365
      %v1694 = vpack.c.b16 %v1370, %v1368
      %v1695 = vpack.c.b16 %v1371, %v1369
      %v1696 = vpack.c.b16 %v1374, %v1372
      %v1697 = vpack.c.b16 %v1375, %v1373
      %v1698 = vpack.c.b16 %v1378, %v1376
      %v1699 = vpack.c.b16 %v1379, %v1377
      %v1700 = vpack.c.b16 %v1382, %v1380
      %v1701 = vpack.c.b16 %v1383, %v1381
      %v1702 = vpack.c.b16 %v1386, %v1384
      %v1703 = vpack.c.b16 %v1387, %v1385
      %v1704 = vpack.c.b16 %v1390, %v1388
      %v1705 = vpack.c.b16 %v1391, %v1389
      %v1706 = vpack.c.b16 %v1394, %v1392
      %v1707 = vpack.c.b16 %v1395, %v1393
      %v1708 = vpack.c.b16 %v1398, %v1396
      %v1709 = vpack.c.b16 %v1399, %v1397
      %v1710 = vpack.c.b16 %v1402, %v1400
      %v1711 = vpack.c.b16 %v1403, %v1401
      %v1712 = vpack.c.b16 %v1406, %v1404
      %v1713 = vpack.c.b16 %v1407, %v1405
      %v1714 = vpack.c.b16 %v1410, %v1408
      %v1715 = vpack.c.b16 %v1411, %v1409
      %v1716 = vpack.c.b16 %v1414, %v1412
      %v1717 = vpack.c.b16 %v1415, %v1413
      %v1718 = vpack.c.b16 %v1418, %v1416
      %v1719 = vpack.c.b16 %v1419, %v1417
      %v1720 = vpack.c.b16 %v1422, %v1420
      %v1721 = vpack.c.b16 %v1423, %v1421
      %v1722 = vpack.c.b16 %v1426, %v1424
      %v1723 = vpack.c.b16 %v1427, %v1425
      %v1724 = vpack.c.b16 %v1430, %v1428
      %v1725 = vpack.c.b16 %v1431, %v1429
      %v1726 = vpack.c.b16 %v1434, %v1432
      %v1727 = vpack.c.b16 %v1435, %v1433
      %v1728 = vpack.c.b16 %v1438, %v1436
      %v1729 = vpack.c.b16 %v1439, %v1437
      %v1730 = vpack.c.b16 %v1442, %v1440
      %v1731 = vpack.c.b16 %v1443, %v1441
      %v1732 = vpack.c.b16 %v1446, %v1444
      %v1733 = vpack.c.b16 %v1447, %v1445
      %v1734 = vpack.c.b16 %v1450, %v1448
      %v1735 = vpack.c.b16 %v1451, %v1449
      %v1736 = vpack.c.b16 %v1454, %v1452
      %v1737 = vpack.c.b16 %v1455, %v1453
      %v1738 = vpack.c.b16 %v1458, %v1456
      %v1739 = vpack.c.b16 %v1459, %v1457
      %v1740 = vpack.c.b16 %v1462, %v1460
      %v1741 = vpack.c.b16 %v1463, %v1461
      %v1742 = vpack.c.b16 %v1466, %v1464
      %v1743 = vpack.c.b16 %v1467, %v1465
      %v1744 = vpack.c.b16 %v1470, %v1468
      %v1745 = vpack.c.b16 %v1471, %v1469
      %v1746 = vpack.c.b16 %v1474, %v1472
      %v1747 = vpack.c.b16 %v1475, %v1473
      %v1748 = vpack.c.b16 %v1478, %v1476
      %v1749 = vpack.c.b16 %v1479, %v1477
      %v1750 = vpack.c.b16 %v1482, %v1480
      %v1751 = vpack.c.b16 %v1483, %v1481
      %v1752 = vpack.c.b16 %v1486, %v1484
      %v1753 = vpack.c.b16 %v1487, %v1485
      %v1754 = vpack.c.b16 %v1490, %v1488
      %v1755 = vpack.c.b16 %v1491, %v1489
      %v1756 = vpack.c.b16 %v1494, %v1492
      %v1757 = vpack.c.b16 %v1495, %v1493
      %v1758 = vpack.c.b16 %v1498, %v1496
      %v1759 = vpack.c.b16 %v1499, %v1497
      %v1760 = vpack.c.b16 %v1502, %v1500
      %v1761 = vpack.c.b16 %v1503, %v1501
      %v1762 = vpack.c.b16 %v1506, %v1504
      %v1763 = vpack.c.b16 %v1507, %v1505
      %2020 = vmatprep.subr.bf16.mxu0 %v1509
      %2021 = vmatpush1.bf16.msra.mxu0 %v1508
      %2022 = vmatprep.subr.bf16.mxu0 %v1511
      %2023 = vmatpush1.bf16.msra.mxu0 %v1510
      %2024 = vmatprep.subr.bf16.mxu0 %v1513
      %2025 = vmatpush1.bf16.msra.mxu0 %v1512
      %2026 = vmatprep.subr.bf16.mxu0 %v1515
      %2027 = vmatpush1.bf16.msra.mxu0 %v1514
      %2028 = vmatprep.subr.bf16.mxu0 %v1517
      %2029 = vmatpush1.bf16.msra.mxu0 %v1516
      %2030 = vmatprep.subr.bf16.mxu0 %v1519
      %2031 = vmatpush1.bf16.msra.mxu0 %v1518
      %2032 = vmatprep.subr.bf16.mxu0 %v1521
      %2033 = vmatpush1.bf16.msra.mxu0 %v1520
      %2034 = vmatprep.subr.bf16.mxu0 %v1523
      %2035 = vmatpush1.bf16.msra.mxu0 %v1522
      %2036 = vmatprep.subr.bf16.mxu0 %v1525
      %2037 = vmatpush1.bf16.msra.mxu0 %v1524
      %2038 = vmatprep.subr.bf16.mxu0 %v1527
      %2039 = vmatpush1.bf16.msra.mxu0 %v1526
      %2040 = vmatprep.subr.bf16.mxu0 %v1529
      %2041 = vmatpush1.bf16.msra.mxu0 %v1528
      %2042 = vmatprep.subr.bf16.mxu0 %v1531
      %2043 = vmatpush1.bf16.msra.mxu0 %v1530
      %2044 = vmatprep.subr.bf16.mxu0 %v1533
      %2045 = vmatpush1.bf16.msra.mxu0 %v1532
      %2046 = vmatprep.subr.bf16.mxu0 %v1535
      %2047 = vmatpush1.bf16.msra.mxu0 %v1534
      %2048 = vmatprep.subr.bf16.mxu0 %v1537
      %2049 = vmatpush1.bf16.msra.mxu0 %v1536
      %2050 = vmatprep.subr.bf16.mxu0 %v1539
      %2051 = vmatpush1.bf16.msra.mxu0 %v1538
      %2052 = vmatprep.mubr.bf16.mxu0 %v677
      %2053 = vmatmul.mubr.bf16.gmra.mrb[0].mxu0 %v676
      %v2054 = vpop.f32.mrb[0].mxu0
      %v2055 = vadd.f32 0.0, %v2054
      %v2056 = vpop.f32.mrb[0].mxu0
      %v2057 = vadd.f32 0.0, %v2056
      %v2058 = vpop.f32.mrb[0].mxu0
      %v2059 = vadd.f32 0.0, %v2058
      %v2060 = vpop.f32.mrb[0].mxu0
      %v2061 = vadd.f32 0.0, %v2060
      %2062 = vmatprep.mubr.bf16.mxu0 %v693
      %2063 = vmatmul.mubr.bf16.gmra.mrb[0].mxu0 %v692
      %v2064 = vpop.f32.mrb[0].mxu0
      %v2065 = vadd.f32 0.0, %v2064
      %v2066 = vpop.f32.mrb[0].mxu0
      %v2067 = vadd.f32 0.0, %v2066
      %v2068 = vpop.f32.mrb[0].mxu0
      %v2069 = vadd.f32 0.0, %v2068
      %v2070 = vpop.f32.mrb[0].mxu0
      %v2071 = vadd.f32 0.0, %v2070
      %2072 = vdwg.mxu0
      %2073 = vmatprep.subr.bf16.mxu0 %v1541
      %2074 = vmatpush1.bf16.msra.mxu0 %v1540
      %2075 = vmatprep.subr.bf16.mxu0 %v1543
      %2076 = vmatpush1.bf16.msra.mxu0 %v1542
      %2077 = vmatprep.subr.bf16.mxu0 %v1545
      %2078 = vmatpush1.bf16.msra.mxu0 %v1544
      %2079 = vmatprep.subr.bf16.mxu0 %v1547
      %2080 = vmatpush1.bf16.msra.mxu0 %v1546
      %2081 = vmatprep.subr.bf16.mxu0 %v1549
      %2082 = vmatpush1.bf16.msra.mxu0 %v1548
      %2083 = vmatprep.subr.bf16.mxu0 %v1551
      %2084 = vmatpush1.bf16.msra.mxu0 %v1550
      %2085 = vmatprep.subr.bf16.mxu0 %v1553
      %2086 = vmatpush1.bf16.msra.mxu0 %v1552
      %2087 = vmatprep.subr.bf16.mxu0 %v1555
      %2088 = vmatpush1.bf16.msra.mxu0 %v1554
      %2089 = vmatprep.subr.bf16.mxu0 %v1557
      %2090 = vmatpush1.bf16.msra.mxu0 %v1556
      %2091 = vmatprep.subr.bf16.mxu0 %v1559
      %2092 = vmatpush1.bf16.msra.mxu0 %v1558
      %2093 = vmatprep.subr.bf16.mxu0 %v1561
      %2094 = vmatpush1.bf16.msra.mxu0 %v1560
      %2095 = vmatprep.subr.bf16.mxu0 %v1563
      %2096 = vmatpush1.bf16.msra.mxu0 %v1562
      %2097 = vmatprep.subr.bf16.mxu0 %v1565
      %2098 = vmatpush1.bf16.msra.mxu0 %v1564
      %2099 = vmatprep.subr.bf16.mxu0 %v1567
      %2100 = vmatpush1.bf16.msra.mxu0 %v1566
      %2101 = vmatprep.subr.bf16.mxu0 %v1569
      %2102 = vmatpush1.bf16.msra.mxu0 %v1568
      %2103 = vmatprep.subr.bf16.mxu0 %v1571
      %2104 = vmatpush1.bf16.msra.mxu0 %v1570
      %2105 = vmatprep.mubr.bf16.mxu0 %v679
      %2106 = vmatmul.mubr.bf16.gmra.mrb[0].mxu0 %v678
      %v2107 = vpop.f32.mrb[0].mxu0
      %v2108 = vadd.f32 %v2055, %v2107
      %v2109 = vpop.f32.mrb[0].mxu0
      %v2110 = vadd.f32 %v2057, %v2109
      %v2111 = vpop.f32.mrb[0].mxu0
      %v2112 = vadd.f32 %v2059, %v2111
      %v2113 = vpop.f32.mrb[0].mxu0
      %v2114 = vadd.f32 %v2061, %v2113
      %2115 = vmatprep.mubr.bf16.mxu0 %v695
      %2116 = vmatmul.mubr.bf16.gmra.mrb[0].mxu0 %v694
      %v2117 = vpop.f32.mrb[0].mxu0
      %v2118 = vadd.f32 %v2065, %v2117
      %v2119 = vpop.f32.mrb[0].mxu0
      %v2120 = vadd.f32 %v2067, %v2119
      %v2121 = vpop.f32.mrb[0].mxu0
      %v2122 = vadd.f32 %v2069, %v2121
      %v2123 = vpop.f32.mrb[0].mxu0
      %v2124 = vadd.f32 %v2071, %v2123
      %2125 = vdwg.mxu0
      %2126 = vmatprep.subr.bf16.mxu0 %v1573
      %2127 = vmatpush1.bf16.msra.mxu0 %v1572
      %2128 = vmatprep.subr.bf16.mxu0 %v1575
      %2129 = vmatpush1.bf16.msra.mxu0 %v1574
      %2130 = vmatprep.subr.bf16.mxu0 %v1577
      %2131 = vmatpush1.bf16.msra.mxu0 %v1576
      %2132 = vmatprep.subr.bf16.mxu0 %v1579
      %2133 = vmatpush1.bf16.msra.mxu0 %v1578
      %2134 = vmatprep.subr.bf16.mxu0 %v1581
      %2135 = vmatpush1.bf16.msra.mxu0 %v1580
      %2136 = vmatprep.subr.bf16.mxu0 %v1583
      %2137 = vmatpush1.bf16.msra.mxu0 %v1582
      %2138 = vmatprep.subr.bf16.mxu0 %v1585
      %2139 = vmatpush1.bf16.msra.mxu0 %v1584
      %2140 = vmatprep.subr.bf16.mxu0 %v1587
      %2141 = vmatpush1.bf16.msra.mxu0 %v1586
      %2142 = vmatprep.subr.bf16.mxu0 %v1589
      %2143 = vmatpush1.bf16.msra.mxu0 %v1588
      %2144 = vmatprep.subr.bf16.mxu0 %v1591
      %2145 = vmatpush1.bf16.msra.mxu0 %v1590
      %2146 = vmatprep.subr.bf16.mxu0 %v1593
      %2147 = vmatpush1.bf16.msra.mxu0 %v1592
      %2148 = vmatprep.subr.bf16.mxu0 %v1595
      %2149 = vmatpush1.bf16.msra.mxu0 %v1594
      %2150 = vmatprep.subr.bf16.mxu0 %v1597
      %2151 = vmatpush1.bf16.msra.mxu0 %v1596
      %2152 = vmatprep.subr.bf16.mxu0 %v1599
      %2153 = vmatpush1.bf16.msra.mxu0 %v1598
      %2154 = vmatprep.subr.bf16.mxu0 %v1601
      %2155 = vmatpush1.bf16.msra.mxu0 %v1600
      %2156 = vmatprep.subr.bf16.mxu0 %v1603
      %2157 = vmatpush1.bf16.msra.mxu0 %v1602
      %2158 = vmatprep.mubr.bf16.mxu0 %v681
      %2159 = vmatmul.mubr.bf16.gmra.mrb[0].mxu0 %v680
      %v2160 = vpop.f32.mrb[0].mxu0
      %v2161 = vadd.f32 %v2108, %v2160
      %v2162 = vpop.f32.mrb[0].mxu0
      %v2163 = vadd.f32 %v2110, %v2162
      %v2164 = vpop.f32.mrb[0].mxu0
      %v2165 = vadd.f32 %v2112, %v2164
      %v2166 = vpop.f32.mrb[0].mxu0
      %v2167 = vadd.f32 %v2114, %v2166
      %2168 = vmatprep.mubr.bf16.mxu0 %v697
      %2169 = vmatmul.mubr.bf16.gmra.mrb[0].mxu0 %v696
      %v2170 = vpop.f32.mrb[0].mxu0
      %v2171 = vadd.f32 %v2118, %v2170
      %v2172 = vpop.f32.mrb[0].mxu0
      %v2173 = vadd.f32 %v2120, %v2172
      %v2174 = vpop.f32.mrb[0].mxu0
      %v2175 = vadd.f32 %v2122, %v2174
      %v2176 = vpop.f32.mrb[0].mxu0
      %v2177 = vadd.f32 %v2124, %v2176
      %2178 = vdwg.mxu0
      %2179 = vmatprep.subr.bf16.mxu0 %v1605
      %2180 = vmatpush1.bf16.msra.mxu0 %v1604
      %2181 = vmatprep.subr.bf16.mxu0 %v1607
      %2182 = vmatpush1.bf16.msra.mxu0 %v1606
      %2183 = vmatprep.subr.bf16.mxu0 %v1609
      %2184 = vmatpush1.bf16.msra.mxu0 %v1608
      %2185 = vmatprep.subr.bf16.mxu0 %v1611
      %2186 = vmatpush1.bf16.msra.mxu0 %v1610
      %2187 = vmatprep.subr.bf16.mxu0 %v1613
      %2188 = vmatpush1.bf16.msra.mxu0 %v1612
      %2189 = vmatprep.subr.bf16.mxu0 %v1615
      %2190 = vmatpush1.bf16.msra.mxu0 %v1614
      %2191 = vmatprep.subr.bf16.mxu0 %v1617
      %2192 = vmatpush1.bf16.msra.mxu0 %v1616
      %2193 = vmatprep.subr.bf16.mxu0 %v1619
      %2194 = vmatpush1.bf16.msra.mxu0 %v1618
      %2195 = vmatprep.subr.bf16.mxu0 %v1621
      %2196 = vmatpush1.bf16.msra.mxu0 %v1620
      %2197 = vmatprep.subr.bf16.mxu0 %v1623
      %2198 = vmatpush1.bf16.msra.mxu0 %v1622
      %2199 = vmatprep.subr.bf16.mxu0 %v1625
      %2200 = vmatpush1.bf16.msra.mxu0 %v1624
      %2201 = vmatprep.subr.bf16.mxu0 %v1627
      %2202 = vmatpush1.bf16.msra.mxu0 %v1626
      %2203 = vmatprep.subr.bf16.mxu0 %v1629
      %2204 = vmatpush1.bf16.msra.mxu0 %v1628
      %2205 = vmatprep.subr.bf16.mxu0 %v1631
      %2206 = vmatpush1.bf16.msra.mxu0 %v1630
      %2207 = vmatprep.subr.bf16.mxu0 %v1633
      %2208 = vmatpush1.bf16.msra.mxu0 %v1632
      %2209 = vmatprep.subr.bf16.mxu0 %v1635
      %2210 = vmatpush1.bf16.msra.mxu0 %v1634
      %2211 = vmatprep.mubr.bf16.mxu0 %v683
      %2212 = vmatmul.mubr.bf16.gmra.mrb[0].mxu0 %v682
      %v2213 = vpop.f32.mrb[0].mxu0
      %v2214 = vadd.f32 %v2161, %v2213
      %v2215 = vpop.f32.mrb[0].mxu0
      %v2216 = vadd.f32 %v2163, %v2215
      %v2217 = vpop.f32.mrb[0].mxu0
      %v2218 = vadd.f32 %v2165, %v2217
      %v2219 = vpop.f32.mrb[0].mxu0
      %v2220 = vadd.f32 %v2167, %v2219
      %2221 = vmatprep.mubr.bf16.mxu0 %v699
      %2222 = vmatmul.mubr.bf16.gmra.mrb[0].mxu0 %v698
      %v2223 = vpop.f32.mrb[0].mxu0
      %v2224 = vadd.f32 %v2171, %v2223
      %v2225 = vpop.f32.mrb[0].mxu0
      %v2226 = vadd.f32 %v2173, %v2225
      %v2227 = vpop.f32.mrb[0].mxu0
      %v2228 = vadd.f32 %v2175, %v2227
      %v2229 = vpop.f32.mrb[0].mxu0
      %v2230 = vadd.f32 %v2177, %v2229
      %2231 = vdwg.mxu0
      %2232 = vmatprep.subr.bf16.mxu0 %v1637
      %2233 = vmatpush1.bf16.msra.mxu0 %v1636
      %2234 = vmatprep.subr.bf16.mxu0 %v1639
      %2235 = vmatpush1.bf16.msra.mxu0 %v1638
      %2236 = vmatprep.subr.bf16.mxu0 %v1641
      %2237 = vmatpush1.bf16.msra.mxu0 %v1640
      %2238 = vmatprep.subr.bf16.mxu0 %v1643
      %2239 = vmatpush1.bf16.msra.mxu0 %v1642
      %2240 = vmatprep.subr.bf16.mxu0 %v1645
      %2241 = vmatpush1.bf16.msra.mxu0 %v1644
      %2242 = vmatprep.subr.bf16.mxu0 %v1647
      %2243 = vmatpush1.bf16.msra.mxu0 %v1646
      %2244 = vmatprep.subr.bf16.mxu0 %v1649
      %2245 = vmatpush1.bf16.msra.mxu0 %v1648
      %2246 = vmatprep.subr.bf16.mxu0 %v1651
      %2247 = vmatpush1.bf16.msra.mxu0 %v1650
      %2248 = vmatprep.subr.bf16.mxu0 %v1653
      %2249 = vmatpush1.bf16.msra.mxu0 %v1652
      %2250 = vmatprep.subr.bf16.mxu0 %v1655
      %2251 = vmatpush1.bf16.msra.mxu0 %v1654
      %2252 = vmatprep.subr.bf16.mxu0 %v1657
      %2253 = vmatpush1.bf16.msra.mxu0 %v1656
      %2254 = vmatprep.subr.bf16.mxu0 %v1659
      %2255 = vmatpush1.bf16.msra.mxu0 %v1658
      %2256 = vmatprep.subr.bf16.mxu0 %v1661
      %2257 = vmatpush1.bf16.msra.mxu0 %v1660
      %2258 = vmatprep.subr.bf16.mxu0 %v1663
      %2259 = vmatpush1.bf16.msra.mxu0 %v1662
      %2260 = vmatprep.subr.bf16.mxu0 %v1665
      %2261 = vmatpush1.bf16.msra.mxu0 %v1664
      %2262 = vmatprep.subr.bf16.mxu0 %v1667
      %2263 = vmatpush1.bf16.msra.mxu0 %v1666
      %2264 = vmatprep.mubr.bf16.mxu0 %v685
      %2265 = vmatmul.mubr.bf16.gmra.mrb[0].mxu0 %v684
      %v2266 = vpop.f32.mrb[0].mxu0
      %v2267 = vadd.f32 %v2214, %v2266
      %v2268 = vpop.f32.mrb[0].mxu0
      %v2269 = vadd.f32 %v2216, %v2268
      %v2270 = vpop.f32.mrb[0].mxu0
      %v2271 = vadd.f32 %v2218, %v2270
      %v2272 = vpop.f32.mrb[0].mxu0
      %v2273 = vadd.f32 %v2220, %v2272
      %2274 = vmatprep.mubr.bf16.mxu0 %v701
      %2275 = vmatmul.mubr.bf16.gmra.mrb[0].mxu0 %v700
      %v2276 = vpop.f32.mrb[0].mxu0
      %v2277 = vadd.f32 %v2224, %v2276
      %v2278 = vpop.f32.mrb[0].mxu0
      %v2279 = vadd.f32 %v2226, %v2278
      %v2280 = vpop.f32.mrb[0].mxu0
      %v2281 = vadd.f32 %v2228, %v2280
      %v2282 = vpop.f32.mrb[0].mxu0
      %v2283 = vadd.f32 %v2230, %v2282
      %2284 = vdwg.mxu0
      %2285 = vmatprep.subr.bf16.mxu0 %v1669
      %2286 = vmatpush1.bf16.msra.mxu0 %v1668
      %2287 = vmatprep.subr.bf16.mxu0 %v1671
      %2288 = vmatpush1.bf16.msra.mxu0 %v1670
      %2289 = vmatprep.subr.bf16.mxu0 %v1673
      %2290 = vmatpush1.bf16.msra.mxu0 %v1672
      %2291 = vmatprep.subr.bf16.mxu0 %v1675
      %2292 = vmatpush1.bf16.msra.mxu0 %v1674
      %2293 = vmatprep.subr.bf16.mxu0 %v1677
      %2294 = vmatpush1.bf16.msra.mxu0 %v1676
      %2295 = vmatprep.subr.bf16.mxu0 %v1679
      %2296 = vmatpush1.bf16.msra.mxu0 %v1678
      %2297 = vmatprep.subr.bf16.mxu0 %v1681
      %2298 = vmatpush1.bf16.msra.mxu0 %v1680
      %2299 = vmatprep.subr.bf16.mxu0 %v1683
      %2300 = vmatpush1.bf16.msra.mxu0 %v1682
      %2301 = vmatprep.subr.bf16.mxu0 %v1685
      %2302 = vmatpush1.bf16.msra.mxu0 %v1684
      %2303 = vmatprep.subr.bf16.mxu0 %v1687
      %2304 = vmatpush1.bf16.msra.mxu0 %v1686
      %2305 = vmatprep.subr.bf16.mxu0 %v1689
      %2306 = vmatpush1.bf16.msra.mxu0 %v1688
      %2307 = vmatprep.subr.bf16.mxu0 %v1691
      %2308 = vmatpush1.bf16.msra.mxu0 %v1690
      %2309 = vmatprep.subr.bf16.mxu0 %v1693
      %2310 = vmatpush1.bf16.msra.mxu0 %v1692
      %2311 = vmatprep.subr.bf16.mxu0 %v1695
      %2312 = vmatpush1.bf16.msra.mxu0 %v1694
      %2313 = vmatprep.subr.bf16.mxu0 %v1697
      %2314 = vmatpush1.bf16.msra.mxu0 %v1696
      %2315 = vmatprep.subr.bf16.mxu0 %v1699
      %2316 = vmatpush1.bf16.msra.mxu0 %v1698
      %2317 = vmatprep.mubr.bf16.mxu0 %v687
      %2318 = vmatmul.mubr.bf16.gmra.mrb[0].mxu0 %v686
      %v2319 = vpop.f32.mrb[0].mxu0
      %v2320 = vadd.f32 %v2267, %v2319
      %v2321 = vpop.f32.mrb[0].mxu0
      %v2322 = vadd.f32 %v2269, %v2321
      %v2323 = vpop.f32.mrb[0].mxu0
      %v2324 = vadd.f32 %v2271, %v2323
      %v2325 = vpop.f32.mrb[0].mxu0
      %v2326 = vadd.f32 %v2273, %v2325
      %2327 = vmatprep.mubr.bf16.mxu0 %v703
      %2328 = vmatmul.mubr.bf16.gmra.mrb[0].mxu0 %v702
      %v2329 = vpop.f32.mrb[0].mxu0
      %v2330 = vadd.f32 %v2277, %v2329
      %v2331 = vpop.f32.mrb[0].mxu0
      %v2332 = vadd.f32 %v2279, %v2331
      %v2333 = vpop.f32.mrb[0].mxu0
      %v2334 = vadd.f32 %v2281, %v2333
      %v2335 = vpop.f32.mrb[0].mxu0
      %v2336 = vadd.f32 %v2283, %v2335
      %2337 = vdwg.mxu0
      %2338 = vmatprep.subr.bf16.mxu0 %v1701
      %2339 = vmatpush1.bf16.msra.mxu0 %v1700
      %2340 = vmatprep.subr.bf16.mxu0 %v1703
      %2341 = vmatpush1.bf16.msra.mxu0 %v1702
      %2342 = vmatprep.subr.bf16.mxu0 %v1705
      %2343 = vmatpush1.bf16.msra.mxu0 %v1704
      %2344 = vmatprep.subr.bf16.mxu0 %v1707
      %2345 = vmatpush1.bf16.msra.mxu0 %v1706
      %2346 = vmatprep.subr.bf16.mxu0 %v1709
      %2347 = vmatpush1.bf16.msra.mxu0 %v1708
      %2348 = vmatprep.subr.bf16.mxu0 %v1711
      %2349 = vmatpush1.bf16.msra.mxu0 %v1710
      %2350 = vmatprep.subr.bf16.mxu0 %v1713
      %2351 = vmatpush1.bf16.msra.mxu0 %v1712
      %2352 = vmatprep.subr.bf16.mxu0 %v1715
      %2353 = vmatpush1.bf16.msra.mxu0 %v1714
      %2354 = vmatprep.subr.bf16.mxu0 %v1717
      %2355 = vmatpush1.bf16.msra.mxu0 %v1716
      %2356 = vmatprep.subr.bf16.mxu0 %v1719
      %2357 = vmatpush1.bf16.msra.mxu0 %v1718
      %2358 = vmatprep.subr.bf16.mxu0 %v1721
      %2359 = vmatpush1.bf16.msra.mxu0 %v1720
      %2360 = vmatprep.subr.bf16.mxu0 %v1723
      %2361 = vmatpush1.bf16.msra.mxu0 %v1722
      %2362 = vmatprep.subr.bf16.mxu0 %v1725
      %2363 = vmatpush1.bf16.msra.mxu0 %v1724
      %2364 = vmatprep.subr.bf16.mxu0 %v1727
      %2365 = vmatpush1.bf16.msra.mxu0 %v1726
      %2366 = vmatprep.subr.bf16.mxu0 %v1729
      %2367 = vmatpush1.bf16.msra.mxu0 %v1728
      %2368 = vmatprep.subr.bf16.mxu0 %v1731
      %2369 = vmatpush1.bf16.msra.mxu0 %v1730
      %2370 = vmatprep.mubr.bf16.mxu0 %v689
      %2371 = vmatmul.mubr.bf16.gmra.mrb[0].mxu0 %v688
      %v2372 = vpop.f32.mrb[0].mxu0
      %v2373 = vadd.f32 %v2320, %v2372
      %v2374 = vpop.f32.mrb[0].mxu0
      %v2375 = vadd.f32 %v2322, %v2374
      %v2376 = vpop.f32.mrb[0].mxu0
      %v2377 = vadd.f32 %v2324, %v2376
      %v2378 = vpop.f32.mrb[0].mxu0
      %v2379 = vadd.f32 %v2326, %v2378
      %2380 = vmatprep.mubr.bf16.mxu0 %v705
      %2381 = vmatmul.mubr.bf16.gmra.mrb[0].mxu0 %v704
      %v2382 = vpop.f32.mrb[0].mxu0
      %v2383 = vadd.f32 %v2330, %v2382
      %v2384 = vpop.f32.mrb[0].mxu0
      %v2385 = vadd.f32 %v2332, %v2384
      %v2386 = vpop.f32.mrb[0].mxu0
      %v2387 = vadd.f32 %v2334, %v2386
      %v2388 = vpop.f32.mrb[0].mxu0
      %v2389 = vadd.f32 %v2336, %v2388
      %2390 = vdwg.mxu0
      %2391 = vmatprep.subr.bf16.mxu0 %v1733
      %2392 = vmatpush1.bf16.msra.mxu0 %v1732
      %2393 = vmatprep.subr.bf16.mxu0 %v1735
      %2394 = vmatpush1.bf16.msra.mxu0 %v1734
      %2395 = vmatprep.subr.bf16.mxu0 %v1737
      %2396 = vmatpush1.bf16.msra.mxu0 %v1736
      %2397 = vmatprep.subr.bf16.mxu0 %v1739
      %2398 = vmatpush1.bf16.msra.mxu0 %v1738
      %2399 = vmatprep.subr.bf16.mxu0 %v1741
      %2400 = vmatpush1.bf16.msra.mxu0 %v1740
      %2401 = vmatprep.subr.bf16.mxu0 %v1743
      %2402 = vmatpush1.bf16.msra.mxu0 %v1742
      %2403 = vmatprep.subr.bf16.mxu0 %v1745
      %2404 = vmatpush1.bf16.msra.mxu0 %v1744
      %2405 = vmatprep.subr.bf16.mxu0 %v1747
      %2406 = vmatpush1.bf16.msra.mxu0 %v1746
      %2407 = vmatprep.subr.bf16.mxu0 %v1749
      %2408 = vmatpush1.bf16.msra.mxu0 %v1748
      %2409 = vmatprep.subr.bf16.mxu0 %v1751
      %2410 = vmatpush1.bf16.msra.mxu0 %v1750
      %2411 = vmatprep.subr.bf16.mxu0 %v1753
      %2412 = vmatpush1.bf16.msra.mxu0 %v1752
      %2413 = vmatprep.subr.bf16.mxu0 %v1755
      %2414 = vmatpush1.bf16.msra.mxu0 %v1754
      %2415 = vmatprep.subr.bf16.mxu0 %v1757
      %2416 = vmatpush1.bf16.msra.mxu0 %v1756
      %2417 = vmatprep.subr.bf16.mxu0 %v1759
      %2418 = vmatpush1.bf16.msra.mxu0 %v1758
      %2419 = vmatprep.subr.bf16.mxu0 %v1761
      %2420 = vmatpush1.bf16.msra.mxu0 %v1760
      %2421 = vmatprep.subr.bf16.mxu0 %v1763
      %2422 = vmatpush1.bf16.msra.mxu0 %v1762
      %2423 = vmatprep.mubr.bf16.mxu0 %v691
      %2424 = vmatmul.mubr.bf16.gmra.mrb[0].mxu0 %v690
      %v2425 = vpop.f32.mrb[0].mxu0
      %v2426 = vadd.f32 %v2373, %v2425
      %v2427 = vpop.f32.mrb[0].mxu0
      %v2428 = vadd.f32 %v2375, %v2427
      %v2429 = vpop.f32.mrb[0].mxu0
      %v2430 = vadd.f32 %v2377, %v2429
      %v2431 = vpop.f32.mrb[0].mxu0
      %v2432 = vadd.f32 %v2379, %v2431
      %2433 = vmatprep.mubr.bf16.mxu0 %v707
      %2434 = vmatmul.mubr.bf16.gmra.mrb[0].mxu0 %v706
      %v2435 = vpop.f32.mrb[0].mxu0
      %v2436 = vadd.f32 %v2383, %v2435
      %v2437 = vpop.f32.mrb[0].mxu0
      %v2438 = vadd.f32 %v2385, %v2437
      %v2439 = vpop.f32.mrb[0].mxu0
      %v2440 = vadd.f32 %v2387, %v2439
      %v2441 = vpop.f32.mrb[0].mxu0
      %v2442 = vadd.f32 %v2389, %v2441
      %2443 = vdwg.mxu0
      %v2444 = vpack.c.bf16 %v2430, %v2426
      %v2445 = vpack.c.bf16 %v2432, %v2428
      %v2446 = vpack.c.bf16 %v2440, %v2436
      %v2447 = vpack.c.bf16 %v2442, %v2438
      %v2452 = vunpack.c.l.b16 %v2444
      %v2453 = vunpack.c.l.b16 %v2445
      %v2454 = vunpack.c.h.b16 %v2444
      %v2455 = vunpack.c.h.b16 %v2445
      %v2456 = vunpack.c.l.b16 %v2446
      %v2457 = vunpack.c.l.b16 %v2447
      %v2458 = vunpack.c.h.b16 %v2446
      %v2459 = vunpack.c.h.b16 %v2447
      %v2460 = vpack.c.b16 %v2453, %v2452
      %v2461 = vpack.c.b16 %v2455, %v2454
      %v2462 = vpack.c.b16 %v2457, %v2456
      %v2463 = vpack.c.b16 %v2459, %v2458
      %2468 = vst [vmem:[%s275] sm:$0xff] %v2460
      %2469 = vst [vmem:[%s275 + $0x8] sm:$0xff] %v2461
      %2470 = vst [vmem:[%s275 + $0x10] sm:$0xff] %v2462
      %2471 = vst [vmem:[%s275 + $0x18] sm:$0xff] %v2463
      %v2472 = vadd.f32 %v2426, %v2430
      %v2473 = vadd.f32 %v2472, %v2436
      %v2474 = vadd.f32 %v2473, %v2440
      %v2475 = vrot.slane %v2474, 4
      %v2476 = vadd.f32 %v2474, %v2475
      %v2477 = vrot.slane %v2476, 2
      %v2478 = vadd.f32 %v2476, %v2477
      %v2479 = vrot.slane %v2478, 1
      %v2480 = vadd.f32 %v2478, %v2479
      %v2481 = vadd.f32 %v2428, %v2432
      %v2482 = vadd.f32 %v2481, %v2438
      %v2483 = vadd.f32 %v2482, %v2442
      %v2484 = vrot.slane %v2483, 4
      %v2485 = vadd.f32 %v2483, %v2484
      %v2486 = vrot.slane %v2485, 2
      %v2487 = vadd.f32 %v2485, %v2486
      %v2488 = vrot.slane %v2487, 1
      %v2489 = vadd.f32 %v2487, %v2488
      %v2490 = vmul.f32 %v2426, %v2426
      %v2491 = vmul.f32 %v2428, %v2428
      %v2492 = vmul.f32 %v2430, %v2430
      %v2493 = vmul.f32 %v2432, %v2432
      %v2494 = vmul.f32 %v2436, %v2436
      %v2495 = vmul.f32 %v2438, %v2438
      %v2496 = vmul.f32 %v2440, %v2440
      %v2497 = vmul.f32 %v2442, %v2442
      %v2498 = vadd.f32 %v2490, %v2492
      %v2499 = vadd.f32 %v2498, %v2494
      %v2500 = vadd.f32 %v2499, %v2496
      %v2501 = vrot.slane %v2500, 4
      %v2502 = vadd.f32 %v2500, %v2501
      %v2503 = vrot.slane %v2502, 2
      %v2504 = vadd.f32 %v2502, %v2503
      %v2505 = vrot.slane %v2504, 1
      %v2506 = vadd.f32 %v2504, %v2505
      %v2507 = vadd.f32 %v2491, %v2493
      %v2508 = vadd.f32 %v2507, %v2495
      %v2509 = vadd.f32 %v2508, %v2497
      %v2510 = vrot.slane %v2509, 4
      %v2511 = vadd.f32 %v2509, %v2510
      %v2512 = vrot.slane %v2511, 2
      %v2513 = vadd.f32 %v2511, %v2512
      %v2514 = vrot.slane %v2513, 1
      %v2515 = vadd.f32 %v2513, %v2514
      %2516 = vst [vmem:[%s283] sm:$0xff] %v2480
      %2517 = vst [vmem:[%s283 + $0x8] sm:$0xff] %v2489
      %2518 = vst [vmem:[%s290] sm:$0xff] %v2506
      %2519 = vst [vmem:[%s290 + $0x8] sm:$0xff] %v2515
      %s2520 = sadd.s32 %s20, %s21
      %s2521 = smul.u32 4, %s2520
      %p2522 = scmp.lt.s32.totalorder %s2521, 15
      %s2523 = scalar_select %p2522, %s2521, 15
      %s2524 = smul.addr %s2523, 2
      %s2525 = smul.addr %s2524, 4
      %s2526 = scalar_lea.vmem %s2, %s2525
      %s2527 = sadd.s32 %s20, %s21
      %p2528 = scmp.lt.s32.totalorder %s2527, 3
      %s2529 = scalar_select %p2528, %s2527, 3
      %s2530 = smul.addr %s2529, 2
      %s2531 = smul.addr %s2530, 8
      %s2532 = scalar_lea.vmem %s3, %s2531
      %s2533 = sadd.s32 %s20, %s21
      %p2534 = scmp.lt.s32.totalorder %s2533, 3
      %s2535 = scalar_select %p2534, %s2533, 3
      %s2536 = smul.addr %s2535, 2
      %s2537 = smul.addr %s2536, 8
      %s2538 = scalar_lea.vmem %s4, %s2537
      // Predicated region
      $region29: #{generator_forward.11} parent=27 // pred_check
        %p2539 = pneg %p102
      $region30: #{generator_forward.11} parent=27 // pred_check_branch
        %2541 = sbr.rel (%p2539) target = $region32
      $region31: #{generator_forward.11} parent=27 // pred_region
        %s2542 = sadd.s32 %s20, %s21
        %s2543 = smul.u32 4, %s2542
      $region32: #{generator_forward.11} parent=27 // pred_fallthru
        _
      // Predicated region
      $region33: #{generator_forward.11} parent=27 // pred_check
        %p2544 = pneg %p130
      $region34: #{generator_forward.11} parent=27 // pred_check_branch
        %2546 = sbr.rel (%p2544) target = $region36
      $region35: #{generator_forward.11} parent=27 // pred_region
        %s2547 = sadd.s32 %s20, %s21
      $region36: #{generator_forward.11} parent=27 // pred_fallthru
        _
      // Predicated region
      $region37: #{generator_forward.11} parent=27 // pred_check
        %p2548 = pneg %p158
      $region38: #{generator_forward.11} parent=27 // pred_check_branch
        %2550 = sbr.rel (%p2548) target = $region40
      $region39: #{generator_forward.11} parent=27 // pred_region
        %s2551 = sadd.s32 %s20, %s21
      $region40: #{generator_forward.11} parent=27 // pred_fallthru
        _
    $region28: #{generator_forward.11} parent=5 // pred_fallthru
      _
    %p2552 = scmp.le.s32.totalorder 2, %s11
    // Predicated region
    $region41: #{generator_forward.11} parent=5 // pred_check
      %p2553 = pneg %p2552
    $region42: #{generator_forward.11} parent=5 // pred_check_branch
      %2555 = sbr.rel (%p2553) target = $region44
    $region43: #{generator_forward.11} parent=5 // pred_region
      %s2556 = ssub.s32 %s11, 2
      // Predicated region
      $region45: #{generator_forward.11} parent=43 // pred_check
        %p2557 = pneg %p108
      $region46: #{generator_forward.11} parent=43 // pred_check_branch
        %2559 = sbr.rel (%p2557) target = $region48
      $region47: #{generator_forward.11} parent=43 // pred_region
        %s2560 = sadd.s32 %s22, %s23
        %s2561 = smul.u32 4, %s2560
        %p2562 = scmp.lt.s32.totalorder %s2561, 15
        %s2563 = scalar_select %p2562, %s2561, 15
        %s2564 = smul.addr %s2563, 2
        %s2565 = smul.addr %s2564, 4
        %s2566 = scalar_lea.vmem %s2, %s2565
      $region48: #{generator_forward.11} parent=43 // pred_fallthru
        _
      // Predicated region
      $region49: #{generator_forward.11} parent=43 // pred_check
        %p2567 = pneg %p136
      $region50: #{generator_forward.11} parent=43 // pred_check_branch
        %2569 = sbr.rel (%p2567) target = $region52
      $region51: #{generator_forward.11} parent=43 // pred_region
        %s2570 = sadd.s32 %s22, %s23
        %p2571 = scmp.lt.s32.totalorder %s2570, 3
        %s2572 = scalar_select %p2571, %s2570, 3
        %s2573 = smul.addr %s2572, 2
        %s2574 = smul.addr %s2573, 8
        %s2575 = scalar_lea.vmem %s3, %s2574
      $region52: #{generator_forward.11} parent=43 // pred_fallthru
        _
      // Predicated region
      $region53: #{generator_forward.11} parent=43 // pred_check
        %p2576 = pneg %p164
      $region54: #{generator_forward.11} parent=43 // pred_check_branch
        %2578 = sbr.rel (%p2576) target = $region56
      $region55: #{generator_forward.11} parent=43 // pred_region
        %s2579 = sadd.s32 %s22, %s23
        %p2580 = scmp.lt.s32.totalorder %s2579, 3
        %s2581 = scalar_select %p2580, %s2579, 3
        %s2582 = smul.addr %s2581, 2
        %s2583 = smul.addr %s2582, 8
        %s2584 = scalar_lea.vmem %s4, %s2583
      $region56: #{generator_forward.11} parent=43 // pred_fallthru
        _
    $region44: #{generator_forward.11} parent=5 // pred_fallthru
      _
  $region6: #{generator_forward.11} parent=0 // loop_footer
    %s15 = sadd.s32 1, %s11
  $region7: #{generator_forward.11} parent=0 // loop_footer_branch
    %10 = sbr.rel target = $region3
  $region8: #{generator_forward.11} parent=0 // loop_exit
    _

// kernel: generator_forward.13
$region0: #{generator_forward.13}
  #allocation0 [shape = 'u32[]', space=smem, size = 0x4, offset = 0x4, fixed_abs, tag = 'smem constant byte address 0x4 - core index']
  #allocation1 [shape = 'u32[144,128]{1,0:T(1,128)}', space=vmem, size = 0x12000, scoped, tag = 'internal scratch']
  %s0 = inlined_call_operand.vmem [shape: bf16[4,128,1024], index: 0, kind: input, shape index: {}]
  %s1 = inlined_call_operand.vmem [shape: bf16[4,1024,128], index: 1, kind: input, shape index: {}]
  %s2 = inlined_call_operand.vmem [shape: bf16[512,128], index: 2, kind: output, shape index: {0}]
  %s3 = inlined_call_operand.vmem [shape: f32[32,128], index: 3, kind: output, shape index: {1}]
  %s4 = inlined_call_operand.vmem [shape: f32[32,128], index: 4, kind: output, shape index: {2}]
  %5 = xla_tuple %s2, %s3, %s4
  %s6 = sld [smem:[#allocation0]]
  $region57: #{generator_forward.13} parent=0
    _
  %s8 = ssub.s32 1, %s6
  %s9 = scalar_select 0, %s8, %s6
  loop: start=0, step=1, limit=6
  $region2: #{generator_forward.13} parent=0 // loop_pre_header
    _
  $region3: #{generator_forward.13} parent=0 // loop_header
    %s11 = sphi 0, %s15
    %p12 = scmp.ge.s32.totalorder %s11, 6
    %s18 = sphi 0, %s30
    %s19 = sphi 0, %s26
    %s20 = sphi 0, %s18
    %s21 = sphi 0, %s19
    %s22 = sphi 0, %s20
    %s23 = sphi 0, %s21
    %s35 = sphi 0, %s37
    %s38 = sphi 0, %s35
    %s39 = sphi 0, %s38
    %s55 = sphi 0, %s39
    %s61 = sphi 0, %s63
    %s64 = sphi 0, %s61
    %s65 = sphi 0, %s64
    %s81 = sphi 0, %s65
    %s89 = sphi 0, %s91
    %s92 = sphi 0, %s89
    %s93 = sphi 0, %s92
    %s109 = sphi 0, %s93
    %s117 = sphi 0, %s119
    %s120 = sphi 0, %s117
    %s121 = sphi 0, %s120
    %s137 = sphi 0, %s121
    %s145 = sphi 0, %s147
    %s148 = sphi 0, %s145
    %s149 = sphi 0, %s148
    %s165 = sphi 0, %s149
  $region4: #{generator_forward.13} parent=0 // loop_header_branch
    %14 = sbr.rel (%p12) target = $region8
  $region5: #{generator_forward.13} parent=0 // loop_body
    %s16 = ssub.s32 %s11, 1
    %s17 = ssub.s32 %s11, 2
    %s24 = sadd.s32 1, %s19
    %p25 = scmp.ge.s32.totalorder %s24, 1
    %s26 = scalar_select %p25, 0, %s24
    %s27 = sadd.s32 1, %s18
    %s28 = scalar_select %p25, %s27, %s18
    %p29 = scmp.ge.s32.totalorder %s28, 4
    %s30 = scalar_select %p29, 0, %s28
    %s31 = ssub.s32 %s18, %s30
    %s32 = ssub.s32 %s19, %s26
    %s33 = sor.u32 %s31, %s32
    %p34 = scmp.eq.s32.totalorder %s33, 0
    %s36 = sadd.s32 %s35, 1
    %s37 = scalar_select %p34, %s35, %s36
    %p40 = pneg %p34
    %p41 = scmp.eq.s32.totalorder %s11, 3
    %p42 = por %p40, %p41
    %p43 = scmp.ne.s32.totalorder %s35, %s38
    %p44 = scmp.eq.s32.totalorder %s11, 0
    %p45 = por %p43, %p44
    %p46 = scmp.ne.s32.totalorder %s35, %s38
    %p47 = scmp.eq.s32.totalorder %s16, 3
    %p48 = por %p46, %p47
    %p49 = scmp.ne.s32.totalorder %s38, %s39
    %p50 = scmp.eq.s32.totalorder %s16, 0
    %p51 = por %p49, %p50
    %p52 = scmp.ne.s32.totalorder %s38, %s39
    %p53 = scmp.eq.s32.totalorder %s17, 3
    %p54 = por %p52, %p53
    %p56 = scmp.ne.s32.totalorder %s39, %s55
    %p57 = scmp.eq.s32.totalorder %s17, 0
    %p58 = por %p56, %p57
    %s59 = ssub.s32 %s18, %s30
    %p60 = scmp.eq.s32.totalorder %s59, 0
    %s62 = sadd.s32 %s61, 1
    %s63 = scalar_select %p60, %s61, %s62
    %p66 = pneg %p60
    %p67 = scmp.eq.s32.totalorder %s11, 3
    %p68 = por %p66, %p67
    %p69 = scmp.ne.s32.totalorder %s61, %s64
    %p70 = scmp.eq.s32.totalorder %s11, 0
    %p71 = por %p69, %p70
    %p72 = scmp.ne.s32.totalorder %s61, %s64
    %p73 = scmp.eq.s32.totalorder %s16, 3
    %p74 = por %p72, %p73
    %p75 = scmp.ne.s32.totalorder %s64, %s65
    %p76 = scmp.eq.s32.totalorder %s16, 0
    %p77 = por %p75, %p76
    %p78 = scmp.ne.s32.totalorder %s64, %s65
    %p79 = scmp.eq.s32.totalorder %s17, 3
    %p80 = por %p78, %p79
    %p82 = scmp.ne.s32.totalorder %s65, %s81
    %p83 = scmp.eq.s32.totalorder %s17, 0
    %p84 = por %p82, %p83
    %s85 = sadd.s32 %s18, %s19
    %s86 = sadd.s32 %s30, %s26
    %s87 = ssub.s32 %s85, %s86
    %p88 = scmp.eq.s32.totalorder %s87, 0
    %s90 = sadd.s32 %s89, 1
    %s91 = scalar_select %p88, %s89, %s90
    %p94 = pneg %p88
    %p95 = scmp.eq.s32.totalorder %s11, 3
    %p96 = por %p94, %p95
    %p97 = scmp.ne.s32.totalorder %s89, %s92
    %p98 = scmp.eq.s32.totalorder %s11, 0
    %p99 = por %p97, %p98
    %p100 = scmp.ne.s32.totalorder %s89, %s92
    %p101 = scmp.eq.s32.totalorder %s16, 3
    %p102 = por %p100, %p101
    %p103 = scmp.ne.s32.totalorder %s92, %s93
    %p104 = scmp.eq.s32.totalorder %s16, 0
    %p105 = por %p103, %p104
    %p106 = scmp.ne.s32.totalorder %s92, %s93
    %p107 = scmp.eq.s32.totalorder %s17, 3
    %p108 = por %p106, %p107
    %p110 = scmp.ne.s32.totalorder %s93, %s109
    %p111 = scmp.eq.s32.totalorder %s17, 0
    %p112 = por %p110, %p111
    %s113 = sadd.s32 %s18, %s19
    %s114 = sadd.s32 %s30, %s26
    %s115 = ssub.s32 %s113, %s114
    %p116 = scmp.eq.s32.totalorder %s115, 0
    %s118 = sadd.s32 %s117, 1
    %s119 = scalar_select %p116, %s117, %s118
    %p122 = pneg %p116
    %p123 = scmp.eq.s32.totalorder %s11, 3
    %p124 = por %p122, %p123
    %p125 = scmp.ne.s32.totalorder %s117, %s120
    %p126 = scmp.eq.s32.totalorder %s11, 0
    %p127 = por %p125, %p126
    %p128 = scmp.ne.s32.totalorder %s117, %s120
    %p129 = scmp.eq.s32.totalorder %s16, 3
    %p130 = por %p128, %p129
    %p131 = scmp.ne.s32.totalorder %s120, %s121
    %p132 = scmp.eq.s32.totalorder %s16, 0
    %p133 = por %p131, %p132
    %p134 = scmp.ne.s32.totalorder %s120, %s121
    %p135 = scmp.eq.s32.totalorder %s17, 3
    %p136 = por %p134, %p135
    %p138 = scmp.ne.s32.totalorder %s121, %s137
    %p139 = scmp.eq.s32.totalorder %s17, 0
    %p140 = por %p138, %p139
    %s141 = sadd.s32 %s18, %s19
    %s142 = sadd.s32 %s30, %s26
    %s143 = ssub.s32 %s141, %s142
    %p144 = scmp.eq.s32.totalorder %s143, 0
    %s146 = sadd.s32 %s145, 1
    %s147 = scalar_select %p144, %s145, %s146
    %p150 = pneg %p144
    %p151 = scmp.eq.s32.totalorder %s11, 3
    %p152 = por %p150, %p151
    %p153 = scmp.ne.s32.totalorder %s145, %s148
    %p154 = scmp.eq.s32.totalorder %s11, 0
    %p155 = por %p153, %p154
    %p156 = scmp.ne.s32.totalorder %s145, %s148
    %p157 = scmp.eq.s32.totalorder %s16, 3
    %p158 = por %p156, %p157
    %p159 = scmp.ne.s32.totalorder %s148, %s149
    %p160 = scmp.eq.s32.totalorder %s16, 0
    %p161 = por %p159, %p160
    %p162 = scmp.ne.s32.totalorder %s148, %s149
    %p163 = scmp.eq.s32.totalorder %s17, 3
    %p164 = por %p162, %p163
    %p166 = scmp.ne.s32.totalorder %s149, %s165
    %p167 = scmp.eq.s32.totalorder %s17, 0
    %p168 = por %p166, %p167
    %p169 = scmp.le.s32.totalorder 1, %s11
    %p170 = scmp.lt.s32.totalorder %s11, 5
    %p171 = pnand %p169, %p170
    %p172 = pneg %p171
    // Predicated region
    $region9: #{generator_forward.13} parent=5 // pred_check
      _
    $region10: #{generator_forward.13} parent=5 // pred_check_branch
      %174 = sbr.rel (%p171) target = $region12
    $region11: #{generator_forward.13} parent=5 // pred_region
      %s175 = ssub.s32 %s11, 1
    $region12: #{generator_forward.13} parent=5 // pred_fallthru
      _
    %p176 = scmp.lt.s32.totalorder %s11, 4
    // Predicated region
    $region13: #{generator_forward.13} parent=5 // pred_check
      %p177 = pneg %p176
    $region14: #{generator_forward.13} parent=5 // pred_check_branch
      %179 = sbr.rel (%p177) target = $region16
    $region15: #{generator_forward.13} parent=5 // pred_region
      // Predicated region
      $region17: #{generator_forward.13} parent=15 // pred_check
        %p180 = pneg %p45
      $region18: #{generator_forward.13} parent=15 // pred_check_branch
        %182 = sbr.rel (%p180) target = $region20
      $region19: #{generator_forward.13} parent=15 // pred_region
        %s183 = smul.u32 16, %s19
        %p184 = scmp.lt.s32.totalorder %s18, 3
        %s185 = scalar_select %p184, %s18, 3
        %p186 = scmp.lt.s32.totalorder %s183, 15
        %s187 = scalar_select %p186, %s183, 15
        %s188 = smul.addr %s187, 8
        %s189 = smul.addr %s185, 128
        %s190 = sadd.s32 %s188, %s189
        %s191 = smul.addr %s190, 4
        %s192 = scalar_lea.vmem %s0, %s191
        %s193 = smul.u32 16, %s19
      $region20: #{generator_forward.13} parent=15 // pred_fallthru
        _
      // Predicated region
      $region21: #{generator_forward.13} parent=15 // pred_check
        %p194 = pneg %p71
      $region22: #{generator_forward.13} parent=15 // pred_check_branch
        %196 = sbr.rel (%p194) target = $region24
      $region23: #{generator_forward.13} parent=15 // pred_region
        %p197 = scmp.lt.s32.totalorder %s18, 3
        %s198 = scalar_select %p197, %s18, 3
        %s199 = smul.addr %s198, 128
        %s200 = smul.addr %s199, 4
        %s201 = scalar_lea.vmem %s1, %s200
      $region24: #{generator_forward.13} parent=15 // pred_fallthru
        _
    $region16: #{generator_forward.13} parent=5 // pred_fallthru
      _
    %p202 = scmp.le.s32.totalorder 1, %s11
    %p203 = scmp.lt.s32.totalorder %s11, 5
    %p204 = pnand %p202, %p203
    %p205 = pneg %p204
    // Predicated region
    $region25: #{generator_forward.13} parent=5 // pred_check
      _
    $region26: #{generator_forward.13} parent=5 // pred_check_branch
      %207 = sbr.rel (%p204) target = $region28
    $region27: #{generator_forward.13} parent=5 // pred_region
      %s208 = ssub.s32 %s11, 1
      %s209 = smul.u32 16, %s21
      %p210 = scmp.lt.s32.totalorder %s20, 3
      %s211 = scalar_select %p210, %s20, 3
      %p212 = scmp.lt.s32.totalorder %s209, 15
      %s213 = scalar_select %p212, %s209, 15
      %s214 = smul.addr %s213, 8
      %s215 = smul.addr %s211, 128
      %s216 = sadd.s32 %s214, %s215
      %s217 = smul.addr %s216, 4
      %s218 = scalar_lea.vmem %s0, %s217
      %p219 = pneg %p51
      %p220 = pneg %p48
      %p221 = scmp.lt.s32.totalorder %s20, 3
      %s222 = scalar_select %p221, %s20, 3
      %s223 = smul.addr %s222, 128
      %s224 = smul.addr %s223, 4
      %s225 = scalar_lea.vmem %s1, %s224
      %p226 = pneg %p77
      %p227 = pneg %p74
      %p228 = pneg %p105
      %p229 = pneg %p102
      %s230 = sadd.s32 %s20, %s21
      %s231 = smul.u32 16, %s230
      %p232 = scmp.lt.s32.totalorder %s231, 63
      %s233 = scalar_select %p232, %s231, 63
      %s234 = smul.addr %s233, 4
      %s235 = scalar_lea.vmem %s2, %s234
      %p236 = pneg %p133
      %p237 = pneg %p130
      %s238 = sadd.s32 %s20, %s21
      %p239 = scmp.lt.s32.totalorder %s238, 3
      %s240 = scalar_select %p239, %s238, 3
      %s241 = smul.addr %s240, 8
      %s242 = scalar_lea.vmem %s3, %s241
      %p243 = pneg %p161
      %p244 = pneg %p158
      %s245 = sadd.s32 %s20, %s21
      %p246 = scmp.lt.s32.totalorder %s245, 3
      %s247 = scalar_select %p246, %s245, 3
      %s248 = smul.addr %s247, 8
      %s249 = scalar_lea.vmem %s4, %s248
      %s250 = smul.u32 16, %s21
      %p251 = scmp.lt.s32.totalorder %s20, 3
      %s252 = scalar_select %p251, %s20, 3
      %p253 = scmp.lt.s32.totalorder %s250, 15
      %s254 = scalar_select %p253, %s250, 15
      %s255 = smul.addr %s254, 8
      %s256 = smul.addr %s252, 128
      %s257 = sadd.s32 %s255, %s256
      %s258 = smul.addr %s257, 4
      %s259 = scalar_lea.vmem %s0, %s258
      %s260 = smul.u32 16, %s21
      %p261 = scmp.lt.s32.totalorder %s20, 3
      %s262 = scalar_select %p261, %s20, 3
      %s263 = smul.addr %s262, 128
      %s264 = smul.addr %s263, 4
      %s265 = scalar_lea.vmem %s1, %s264
      %s266 = sadd.s32 %s20, %s21
      %s267 = smul.u32 16, %s266
      %p268 = scmp.lt.s32.totalorder %s267, 63
      %s269 = scalar_select %p268, %s267, 63
      %s270 = smul.addr %s269, 4
      %s271 = scalar_lea.vmem %s2, %s270
      %s272 = sadd.s32 %s20, %s21
      %s273 = smul.u32 16, %s272
      %s274 = sadd.s32 %s20, %s21
      %p275 = scmp.lt.s32.totalorder %s274, 3
      %s276 = scalar_select %p275, %s274, 3
      %s277 = smul.addr %s276, 8
      %s278 = scalar_lea.vmem %s3, %s277
      %s279 = sadd.s32 %s20, %s21
      %s280 = sadd.s32 %s20, %s21
      %p281 = scmp.lt.s32.totalorder %s280, 3
      %s282 = scalar_select %p281, %s280, 3
      %s283 = smul.addr %s282, 8
      %s284 = scalar_lea.vmem %s4, %s283
      %s285 = sadd.s32 %s20, %s21
      %v287 = vld [vmem:[%s259] sm:$0xff]
      %v288 = vld [vmem:[%s259 + $0x8] sm:$0xff]
      %v289 = vld [vmem:[%s259 + $0x10] sm:$0xff]
      %v290 = vld [vmem:[%s259 + $0x18] sm:$0xff]
      %v291 = vld [vmem:[%s259 + $0x20] sm:$0xff]
      %v292 = vld [vmem:[%s259 + $0x28] sm:$0xff]
      %v293 = vld [vmem:[%s259 + $0x30] sm:$0xff]
      %v294 = vld [vmem:[%s259 + $0x38] sm:$0xff]
      %v295 = vld [vmem:[%s259 + $0x40] sm:$0xff]
      %v296 = vld [vmem:[%s259 + $0x48] sm:$0xff]
      %v297 = vld [vmem:[%s259 + $0x50] sm:$0xff]
      %v298 = vld [vmem:[%s259 + $0x58] sm:$0xff]
      %v299 = vld [vmem:[%s259 + $0x60] sm:$0xff]
      %v300 = vld [vmem:[%s259 + $0x68] sm:$0xff]
      %v301 = vld [vmem:[%s259 + $0x70] sm:$0xff]
      %v302 = vld [vmem:[%s259 + $0x78] sm:$0xff]
      %v303 = vld [vmem:[%s259 + $0x80] sm:$0xff]
      %v304 = vld [vmem:[%s259 + $0x88] sm:$0xff]
      %v305 = vld [vmem:[%s259 + $0x90] sm:$0xff]
      %v306 = vld [vmem:[%s259 + $0x98] sm:$0xff]
      %v307 = vld [vmem:[%s259 + $0xa0] sm:$0xff]
      %v308 = vld [vmem:[%s259 + $0xa8] sm:$0xff]
      %v309 = vld [vmem:[%s259 + $0xb0] sm:$0xff]
      %v310 = vld [vmem:[%s259 + $0xb8] sm:$0xff]
      %v311 = vld [vmem:[%s259 + $0xc0] sm:$0xff]
      %v312 = vld [vmem:[%s259 + $0xc8] sm:$0xff]
      %v313 = vld [vmem:[%s259 + $0xd0] sm:$0xff]
      %v314 = vld [vmem:[%s259 + $0xd8] sm:$0xff]
      %v315 = vld [vmem:[%s259 + $0xe0] sm:$0xff]
      %v316 = vld [vmem:[%s259 + $0xe8] sm:$0xff]
      %v317 = vld [vmem:[%s259 + $0xf0] sm:$0xff]
      %v318 = vld [vmem:[%s259 + $0xf8] sm:$0xff]
      %v319 = vld [vmem:[%s259 + $0x100] sm:$0xff]
      %v320 = vld [vmem:[%s259 + $0x108] sm:$0xff]
      %v321 = vld [vmem:[%s259 + $0x110] sm:$0xff]
      %v322 = vld [vmem:[%s259 + $0x118] sm:$0xff]
      %v323 = vld [vmem:[%s259 + $0x120] sm:$0xff]
      %v324 = vld [vmem:[%s259 + $0x128] sm:$0xff]
      %v325 = vld [vmem:[%s259 + $0x130] sm:$0xff]
      %v326 = vld [vmem:[%s259 + $0x138] sm:$0xff]
      %v327 = vld [vmem:[%s259 + $0x140] sm:$0xff]
      %v328 = vld [vmem:[%s259 + $0x148] sm:$0xff]
      %v329 = vld [vmem:[%s259 + $0x150] sm:$0xff]
      %v330 = vld [vmem:[%s259 + $0x158] sm:$0xff]
      %v331 = vld [vmem:[%s259 + $0x160] sm:$0xff]
      %v332 = vld [vmem:[%s259 + $0x168] sm:$0xff]
      %v333 = vld [vmem:[%s259 + $0x170] sm:$0xff]
      %v334 = vld [vmem:[%s259 + $0x178] sm:$0xff]
      %v335 = vld [vmem:[%s259 + $0x180] sm:$0xff]
      %v336 = vld [vmem:[%s259 + $0x188] sm:$0xff]
      %v337 = vld [vmem:[%s259 + $0x190] sm:$0xff]
      %v338 = vld [vmem:[%s259 + $0x198] sm:$0xff]
      %v339 = vld [vmem:[%s259 + $0x1a0] sm:$0xff]
      %v340 = vld [vmem:[%s259 + $0x1a8] sm:$0xff]
      %v341 = vld [vmem:[%s259 + $0x1b0] sm:$0xff]
      %v342 = vld [vmem:[%s259 + $0x1b8] sm:$0xff]
      %v343 = vld [vmem:[%s259 + $0x1c0] sm:$0xff]
      %v344 = vld [vmem:[%s259 + $0x1c8] sm:$0xff]
      %v345 = vld [vmem:[%s259 + $0x1d0] sm:$0xff]
      %v346 = vld [vmem:[%s259 + $0x1d8] sm:$0xff]
      %v347 = vld [vmem:[%s259 + $0x1e0] sm:$0xff]
      %v348 = vld [vmem:[%s259 + $0x1e8] sm:$0xff]
      %v349 = vld [vmem:[%s259 + $0x1f0] sm:$0xff]
      %v350 = vld [vmem:[%s259 + $0x1f8] sm:$0xff]
      %v351 = vld [vmem:[%s265] sm:$0xf]
      %v352 = vld [vmem:[%s265 + $0x4] sm:$0xf]
      %v353 = vld [vmem:[%s265 + $0x8] sm:$0xf]
      %v354 = vld [vmem:[%s265 + $0xc] sm:$0xf]
      %v355 = vld [vmem:[%s265 + $0x10] sm:$0xf]
      %v356 = vld [vmem:[%s265 + $0x14] sm:$0xf]
      %v357 = vld [vmem:[%s265 + $0x18] sm:$0xf]
      %v358 = vld [vmem:[%s265 + $0x1c] sm:$0xf]
      %v359 = vld [vmem:[%s265 + $0x20] sm:$0xf]
      %v360 = vld [vmem:[%s265 + $0x24] sm:$0xf]
      %v361 = vld [vmem:[%s265 + $0x28] sm:$0xf]
      %v362 = vld [vmem:[%s265 + $0x2c] sm:$0xf]
      %v363 = vld [vmem:[%s265 + $0x30] sm:$0xf]
      %v364 = vld [vmem:[%s265 + $0x34] sm:$0xf]
      %v365 = vld [vmem:[%s265 + $0x38] sm:$0xf]
      %v366 = vld [vmem:[%s265 + $0x3c] sm:$0xf]
      %v367 = vld [vmem:[%s265 + $0x40] sm:$0xf]
      %v368 = vld [vmem:[%s265 + $0x44] sm:$0xf]
      %v369 = vld [vmem:[%s265 + $0x48] sm:$0xf]
      %v370 = vld [vmem:[%s265 + $0x4c] sm:$0xf]
      %v371 = vld [vmem:[%s265 + $0x50] sm:$0xf]
      %v372 = vld [vmem:[%s265 + $0x54] sm:$0xf]
      %v373 = vld [vmem:[%s265 + $0x58] sm:$0xf]
      %v374 = vld [vmem:[%s265 + $0x5c] sm:$0xf]
      %v375 = vld [vmem:[%s265 + $0x60] sm:$0xf]
      %v376 = vld [vmem:[%s265 + $0x64] sm:$0xf]
      %v377 = vld [vmem:[%s265 + $0x68] sm:$0xf]
      %v378 = vld [vmem:[%s265 + $0x6c] sm:$0xf]
      %v379 = vld [vmem:[%s265 + $0x70] sm:$0xf]
      %v380 = vld [vmem:[%s265 + $0x74] sm:$0xf]
      %v381 = vld [vmem:[%s265 + $0x78] sm:$0xf]
      %v382 = vld [vmem:[%s265 + $0x7c] sm:$0xf]
      %v383 = vld [vmem:[%s265 + $0x80] sm:$0xf]
      %v384 = vld [vmem:[%s265 + $0x84] sm:$0xf]
      %v385 = vld [vmem:[%s265 + $0x88] sm:$0xf]
      %v386 = vld [vmem:[%s265 + $0x8c] sm:$0xf]
      %v387 = vld [vmem:[%s265 + $0x90] sm:$0xf]
      %v388 = vld [vmem:[%s265 + $0x94] sm:$0xf]
      %v389 = vld [vmem:[%s265 + $0x98] sm:$0xf]
      %v390 = vld [vmem:[%s265 + $0x9c] sm:$0xf]
      %v391 = vld [vmem:[%s265 + $0xa0] sm:$0xf]
      %v392 = vld [vmem:[%s265 + $0xa4] sm:$0xf]
      %v393 = vld [vmem:[%s265 + $0xa8] sm:$0xf]
      %v394 = vld [vmem:[%s265 + $0xac] sm:$0xf]
      %v395 = vld [vmem:[%s265 + $0xb0] sm:$0xf]
      %v396 = vld [vmem:[%s265 + $0xb4] sm:$0xf]
      %v397 = vld [vmem:[%s265 + $0xb8] sm:$0xf]
      %v398 = vld [vmem:[%s265 + $0xbc] sm:$0xf]
      %v399 = vld [vmem:[%s265 + $0xc0] sm:$0xf]
      %v400 = vld [vmem:[%s265 + $0xc4] sm:$0xf]
      %v401 = vld [vmem:[%s265 + $0xc8] sm:$0xf]
      %v402 = vld [vmem:[%s265 + $0xcc] sm:$0xf]
      %v403 = vld [vmem:[%s265 + $0xd0] sm:$0xf]
      %v404 = vld [vmem:[%s265 + $0xd4] sm:$0xf]
      %v405 = vld [vmem:[%s265 + $0xd8] sm:$0xf]
      %v406 = vld [vmem:[%s265 + $0xdc] sm:$0xf]
      %v407 = vld [vmem:[%s265 + $0xe0] sm:$0xf]
      %v408 = vld [vmem:[%s265 + $0xe4] sm:$0xf]
      %v409 = vld [vmem:[%s265 + $0xe8] sm:$0xf]
      %v410 = vld [vmem:[%s265 + $0xec] sm:$0xf]
      %v411 = vld [vmem:[%s265 + $0xf0] sm:$0xf]
      %v412 = vld [vmem:[%s265 + $0xf4] sm:$0xf]
      %v413 = vld [vmem:[%s265 + $0xf8] sm:$0xf]
      %v414 = vld [vmem:[%s265 + $0xfc] sm:$0xf]
      %v415 = vld [vmem:[%s265 + $0x100] sm:$0xf]
      %v416 = vld [vmem:[%s265 + $0x104] sm:$0xf]
      %v417 = vld [vmem:[%s265 + $0x108] sm:$0xf]
      %v418 = vld [vmem:[%s265 + $0x10c] sm:$0xf]
      %v419 = vld [vmem:[%s265 + $0x110] sm:$0xf]
      %v420 = vld [vmem:[%s265 + $0x114] sm:$0xf]
      %v421 = vld [vmem:[%s265 + $0x118] sm:$0xf]
      %v422 = vld [vmem:[%s265 + $0x11c] sm:$0xf]
      %v423 = vld [vmem:[%s265 + $0x120] sm:$0xf]
      %v424 = vld [vmem:[%s265 + $0x124] sm:$0xf]
      %v425 = vld [vmem:[%s265 + $0x128] sm:$0xf]
      %v426 = vld [vmem:[%s265 + $0x12c] sm:$0xf]
      %v427 = vld [vmem:[%s265 + $0x130] sm:$0xf]
      %v428 = vld [vmem:[%s265 + $0x134] sm:$0xf]
      %v429 = vld [vmem:[%s265 + $0x138] sm:$0xf]
      %v430 = vld [vmem:[%s265 + $0x13c] sm:$0xf]
      %v431 = vld [vmem:[%s265 + $0x140] sm:$0xf]
      %v432 = vld [vmem:[%s265 + $0x144] sm:$0xf]
      %v433 = vld [vmem:[%s265 + $0x148] sm:$0xf]
      %v434 = vld [vmem:[%s265 + $0x14c] sm:$0xf]
      %v435 = vld [vmem:[%s265 + $0x150] sm:$0xf]
      %v436 = vld [vmem:[%s265 + $0x154] sm:$0xf]
      %v437 = vld [vmem:[%s265 + $0x158] sm:$0xf]
      %v438 = vld [vmem:[%s265 + $0x15c] sm:$0xf]
      %v439 = vld [vmem:[%s265 + $0x160] sm:$0xf]
      %v440 = vld [vmem:[%s265 + $0x164] sm:$0xf]
      %v441 = vld [vmem:[%s265 + $0x168] sm:$0xf]
      %v442 = vld [vmem:[%s265 + $0x16c] sm:$0xf]
      %v443 = vld [vmem:[%s265 + $0x170] sm:$0xf]
      %v444 = vld [vmem:[%s265 + $0x174] sm:$0xf]
      %v445 = vld [vmem:[%s265 + $0x178] sm:$0xf]
      %v446 = vld [vmem:[%s265 + $0x17c] sm:$0xf]
      %v447 = vld [vmem:[%s265 + $0x180] sm:$0xf]
      %v448 = vld [vmem:[%s265 + $0x184] sm:$0xf]
      %v449 = vld [vmem:[%s265 + $0x188] sm:$0xf]
      %v450 = vld [vmem:[%s265 + $0x18c] sm:$0xf]
      %v451 = vld [vmem:[%s265 + $0x190] sm:$0xf]
      %v452 = vld [vmem:[%s265 + $0x194] sm:$0xf]
      %v453 = vld [vmem:[%s265 + $0x198] sm:$0xf]
      %v454 = vld [vmem:[%s265 + $0x19c] sm:$0xf]
      %v455 = vld [vmem:[%s265 + $0x1a0] sm:$0xf]
      %v456 = vld [vmem:[%s265 + $0x1a4] sm:$0xf]
      %v457 = vld [vmem:[%s265 + $0x1a8] sm:$0xf]
      %v458 = vld [vmem:[%s265 + $0x1ac] sm:$0xf]
      %v459 = vld [vmem:[%s265 + $0x1b0] sm:$0xf]
      %v460 = vld [vmem:[%s265 + $0x1b4] sm:$0xf]
      %v461 = vld [vmem:[%s265 + $0x1b8] sm:$0xf]
      %v462 = vld [vmem:[%s265 + $0x1bc] sm:$0xf]
      %v463 = vld [vmem:[%s265 + $0x1c0] sm:$0xf]
      %v464 = vld [vmem:[%s265 + $0x1c4] sm:$0xf]
      %v465 = vld [vmem:[%s265 + $0x1c8] sm:$0xf]
      %v466 = vld [vmem:[%s265 + $0x1cc] sm:$0xf]
      %v467 = vld [vmem:[%s265 + $0x1d0] sm:$0xf]
      %v468 = vld [vmem:[%s265 + $0x1d4] sm:$0xf]
      %v469 = vld [vmem:[%s265 + $0x1d8] sm:$0xf]
      %v470 = vld [vmem:[%s265 + $0x1dc] sm:$0xf]
      %v471 = vld [vmem:[%s265 + $0x1e0] sm:$0xf]
      %v472 = vld [vmem:[%s265 + $0x1e4] sm:$0xf]
      %v473 = vld [vmem:[%s265 + $0x1e8] sm:$0xf]
      %v474 = vld [vmem:[%s265 + $0x1ec] sm:$0xf]
      %v475 = vld [vmem:[%s265 + $0x1f0] sm:$0xf]
      %v476 = vld [vmem:[%s265 + $0x1f4] sm:$0xf]
      %v477 = vld [vmem:[%s265 + $0x1f8] sm:$0xf]
      %v478 = vld [vmem:[%s265 + $0x1fc] sm:$0xf]
      %v543 = vunpack.c.l.b16 %v287
      %v544 = vunpack.c.h.b16 %v287
      %v545 = vunpack.c.l.b16 %v288
      %v546 = vunpack.c.h.b16 %v288
      %v547 = vunpack.c.l.b16 %v289
      %v548 = vunpack.c.h.b16 %v289
      %v549 = vunpack.c.l.b16 %v290
      %v550 = vunpack.c.h.b16 %v290
      %v551 = vunpack.c.l.b16 %v291
      %v552 = vunpack.c.h.b16 %v291
      %v553 = vunpack.c.l.b16 %v292
      %v554 = vunpack.c.h.b16 %v292
      %v555 = vunpack.c.l.b16 %v293
      %v556 = vunpack.c.h.b16 %v293
      %v557 = vunpack.c.l.b16 %v294
      %v558 = vunpack.c.h.b16 %v294
      %v559 = vunpack.c.l.b16 %v295
      %v560 = vunpack.c.h.b16 %v295
      %v561 = vunpack.c.l.b16 %v296
      %v562 = vunpack.c.h.b16 %v296
      %v563 = vunpack.c.l.b16 %v297
      %v564 = vunpack.c.h.b16 %v297
      %v565 = vunpack.c.l.b16 %v298
      %v566 = vunpack.c.h.b16 %v298
      %v567 = vunpack.c.l.b16 %v299
      %v568 = vunpack.c.h.b16 %v299
      %v569 = vunpack.c.l.b16 %v300
      %v570 = vunpack.c.h.b16 %v300
      %v571 = vunpack.c.l.b16 %v301
      %v572 = vunpack.c.h.b16 %v301
      %v573 = vunpack.c.l.b16 %v302
      %v574 = vunpack.c.h.b16 %v302
      %v575 = vunpack.c.l.b16 %v303
      %v576 = vunpack.c.h.b16 %v303
      %v577 = vunpack.c.l.b16 %v304
      %v578 = vunpack.c.h.b16 %v304
      %v579 = vunpack.c.l.b16 %v305
      %v580 = vunpack.c.h.b16 %v305
      %v581 = vunpack.c.l.b16 %v306
      %v582 = vunpack.c.h.b16 %v306
      %v583 = vunpack.c.l.b16 %v307
      %v584 = vunpack.c.h.b16 %v307
      %v585 = vunpack.c.l.b16 %v308
      %v586 = vunpack.c.h.b16 %v308
      %v587 = vunpack.c.l.b16 %v309
      %v588 = vunpack.c.h.b16 %v309
      %v589 = vunpack.c.l.b16 %v310
      %v590 = vunpack.c.h.b16 %v310
      %v591 = vunpack.c.l.b16 %v311
      %v592 = vunpack.c.h.b16 %v311
      %v593 = vunpack.c.l.b16 %v312
      %v594 = vunpack.c.h.b16 %v312
      %v595 = vunpack.c.l.b16 %v313
      %v596 = vunpack.c.h.b16 %v313
      %v597 = vunpack.c.l.b16 %v314
      %v598 = vunpack.c.h.b16 %v314
      %v599 = vunpack.c.l.b16 %v315
      %v600 = vunpack.c.h.b16 %v315
      %v601 = vunpack.c.l.b16 %v316
      %v602 = vunpack.c.h.b16 %v316
      %v603 = vunpack.c.l.b16 %v317
      %v604 = vunpack.c.h.b16 %v317
      %v605 = vunpack.c.l.b16 %v318
      %v606 = vunpack.c.h.b16 %v318
      %v607 = vunpack.c.l.b16 %v319
      %v608 = vunpack.c.h.b16 %v319
      %v609 = vunpack.c.l.b16 %v320
      %v610 = vunpack.c.h.b16 %v320
      %v611 = vunpack.c.l.b16 %v321
      %v612 = vunpack.c.h.b16 %v321
      %v613 = vunpack.c.l.b16 %v322
      %v614 = vunpack.c.h.b16 %v322
      %v615 = vunpack.c.l.b16 %v323
      %v616 = vunpack.c.h.b16 %v323
      %v617 = vunpack.c.l.b16 %v324
      %v618 = vunpack.c.h.b16 %v324
      %v619 = vunpack.c.l.b16 %v325
      %v620 = vunpack.c.h.b16 %v325
      %v621 = vunpack.c.l.b16 %v326
      %v622 = vunpack.c.h.b16 %v326
      %v623 = vunpack.c.l.b16 %v327
      %v624 = vunpack.c.h.b16 %v327
      %v625 = vunpack.c.l.b16 %v328
      %v626 = vunpack.c.h.b16 %v328
      %v627 = vunpack.c.l.b16 %v329
      %v628 = vunpack.c.h.b16 %v329
      %v629 = vunpack.c.l.b16 %v330
      %v630 = vunpack.c.h.b16 %v330
      %v631 = vunpack.c.l.b16 %v331
      %v632 = vunpack.c.h.b16 %v331
      %v633 = vunpack.c.l.b16 %v332
      %v634 = vunpack.c.h.b16 %v332
      %v635 = vunpack.c.l.b16 %v333
      %v636 = vunpack.c.h.b16 %v333
      %v637 = vunpack.c.l.b16 %v334
      %v638 = vunpack.c.h.b16 %v334
      %v639 = vunpack.c.l.b16 %v335
      %v640 = vunpack.c.h.b16 %v335
      %v641 = vunpack.c.l.b16 %v336
      %v642 = vunpack.c.h.b16 %v336
      %v643 = vunpack.c.l.b16 %v337
      %v644 = vunpack.c.h.b16 %v337
      %v645 = vunpack.c.l.b16 %v338
      %v646 = vunpack.c.h.b16 %v338
      %v647 = vunpack.c.l.b16 %v339
      %v648 = vunpack.c.h.b16 %v339
      %v649 = vunpack.c.l.b16 %v340
      %v650 = vunpack.c.h.b16 %v340
      %v651 = vunpack.c.l.b16 %v341
      %v652 = vunpack.c.h.b16 %v341
      %v653 = vunpack.c.l.b16 %v342
      %v654 = vunpack.c.h.b16 %v342
      %v655 = vunpack.c.l.b16 %v343
      %v656 = vunpack.c.h.b16 %v343
      %v657 = vunpack.c.l.b16 %v344
      %v658 = vunpack.c.h.b16 %v344
      %v659 = vunpack.c.l.b16 %v345
      %v660 = vunpack.c.h.b16 %v345
      %v661 = vunpack.c.l.b16 %v346
      %v662 = vunpack.c.h.b16 %v346
      %v663 = vunpack.c.l.b16 %v347
      %v664 = vunpack.c.h.b16 %v347
      %v665 = vunpack.c.l.b16 %v348
      %v666 = vunpack.c.h.b16 %v348
      %v667 = vunpack.c.l.b16 %v349
      %v668 = vunpack.c.h.b16 %v349
      %v669 = vunpack.c.l.b16 %v350
      %v670 = vunpack.c.h.b16 %v350
      %v671 = vpack.c.b16 %v551, %v543
      %v672 = vpack.c.b16 %v552, %v544
      %v673 = vpack.c.b16 %v553, %v545
      %v674 = vpack.c.b16 %v554, %v546
      %v675 = vpack.c.b16 %v555, %v547
      %v676 = vpack.c.b16 %v556, %v548
      %v677 = vpack.c.b16 %v557, %v549
      %v678 = vpack.c.b16 %v558, %v550
      %v679 = vpack.c.b16 %v567, %v559
      %v680 = vpack.c.b16 %v568, %v560
      %v681 = vpack.c.b16 %v569, %v561
      %v682 = vpack.c.b16 %v570, %v562
      %v683 = vpack.c.b16 %v571, %v563
      %v684 = vpack.c.b16 %v572, %v564
      %v685 = vpack.c.b16 %v573, %v565
      %v686 = vpack.c.b16 %v574, %v566
      %v687 = vpack.c.b16 %v583, %v575
      %v688 = vpack.c.b16 %v584, %v576
      %v689 = vpack.c.b16 %v585, %v577
      %v690 = vpack.c.b16 %v586, %v578
      %v691 = vpack.c.b16 %v587, %v579
      %v692 = vpack.c.b16 %v588, %v580
      %v693 = vpack.c.b16 %v589, %v581
      %v694 = vpack.c.b16 %v590, %v582
      %v695 = vpack.c.b16 %v599, %v591
      %v696 = vpack.c.b16 %v600, %v592
      %v697 = vpack.c.b16 %v601, %v593
      %v698 = vpack.c.b16 %v602, %v594
      %v699 = vpack.c.b16 %v603, %v595
      %v700 = vpack.c.b16 %v604, %v596
      %v701 = vpack.c.b16 %v605, %v597
      %v702 = vpack.c.b16 %v606, %v598
      %v703 = vpack.c.b16 %v615, %v607
      %v704 = vpack.c.b16 %v616, %v608
      %v705 = vpack.c.b16 %v617, %v609
      %v706 = vpack.c.b16 %v618, %v610
      %v707 = vpack.c.b16 %v619, %v611
      %v708 = vpack.c.b16 %v620, %v612
      %v709 = vpack.c.b16 %v621, %v613
      %v710 = vpack.c.b16 %v622, %v614
      %v711 = vpack.c.b16 %v631, %v623
      %v712 = vpack.c.b16 %v632, %v624
      %v713 = vpack.c.b16 %v633, %v625
      %v714 = vpack.c.b16 %v634, %v626
      %v715 = vpack.c.b16 %v635, %v627
      %v716 = vpack.c.b16 %v636, %v628
      %v717 = vpack.c.b16 %v637, %v629
      %v718 = vpack.c.b16 %v638, %v630
      %v719 = vpack.c.b16 %v647, %v639
      %v720 = vpack.c.b16 %v648, %v640
      %v721 = vpack.c.b16 %v649, %v641
      %v722 = vpack.c.b16 %v650, %v642
      %v723 = vpack.c.b16 %v651, %v643
      %v724 = vpack.c.b16 %v652, %v644
      %v725 = vpack.c.b16 %v653, %v645
      %v726 = vpack.c.b16 %v654, %v646
      %v727 = vpack.c.b16 %v663, %v655
      %v728 = vpack.c.b16 %v664, %v656
      %v729 = vpack.c.b16 %v665, %v657
      %v730 = vpack.c.b16 %v666, %v658
      %v731 = vpack.c.b16 %v667, %v659
      %v732 = vpack.c.b16 %v668, %v660
      %v733 = vpack.c.b16 %v669, %v661
      %v734 = vpack.c.b16 %v670, %v662
      %v927 = vunpack.c.l.b16 %v351
      %v928 = vunpack.c.l.b16 %v352
      %v929 = vunpack.c.l.b16 %v353
      %v930 = vunpack.c.l.b16 %v354
      %v931 = vunpack.c.l.b16 %v355
      %v932 = vunpack.c.l.b16 %v356
      %v933 = vunpack.c.l.b16 %v357
      %v934 = vunpack.c.l.b16 %v358
      %v935 = vunpack.c.l.b16 %v359
      %v936 = vunpack.c.l.b16 %v360
      %v937 = vunpack.c.l.b16 %v361
      %v938 = vunpack.c.l.b16 %v362
      %v939 = vunpack.c.l.b16 %v363
      %v940 = vunpack.c.l.b16 %v364
      %v941 = vunpack.c.l.b16 %v365
      %v942 = vunpack.c.l.b16 %v366
      %v943 = vunpack.c.l.b16 %v367
      %v944 = vunpack.c.l.b16 %v368
      %v945 = vunpack.c.l.b16 %v369
      %v946 = vunpack.c.l.b16 %v370
      %v947 = vunpack.c.l.b16 %v371
      %v948 = vunpack.c.l.b16 %v372
      %v949 = vunpack.c.l.b16 %v373
      %v950 = vunpack.c.l.b16 %v374
      %v951 = vunpack.c.l.b16 %v375
      %v952 = vunpack.c.l.b16 %v376
      %v953 = vunpack.c.l.b16 %v377
      %v954 = vunpack.c.l.b16 %v378
      %v955 = vunpack.c.l.b16 %v379
      %v956 = vunpack.c.l.b16 %v380
      %v957 = vunpack.c.l.b16 %v381
      %v958 = vunpack.c.l.b16 %v382
      %v959 = vunpack.c.l.b16 %v383
      %v960 = vunpack.c.l.b16 %v384
      %v961 = vunpack.c.l.b16 %v385
      %v962 = vunpack.c.l.b16 %v386
      %v963 = vunpack.c.l.b16 %v387
      %v964 = vunpack.c.l.b16 %v388
      %v965 = vunpack.c.l.b16 %v389
      %v966 = vunpack.c.l.b16 %v390
      %v967 = vunpack.c.l.b16 %v391
      %v968 = vunpack.c.l.b16 %v392
      %v969 = vunpack.c.l.b16 %v393
      %v970 = vunpack.c.l.b16 %v394
      %v971 = vunpack.c.l.b16 %v395
      %v972 = vunpack.c.l.b16 %v396
      %v973 = vunpack.c.l.b16 %v397
      %v974 = vunpack.c.l.b16 %v398
      %v975 = vunpack.c.l.b16 %v399
      %v976 = vunpack.c.l.b16 %v400
      %v977 = vunpack.c.l.b16 %v401
      %v978 = vunpack.c.l.b16 %v402
      %v979 = vunpack.c.l.b16 %v403
      %v980 = vunpack.c.l.b16 %v404
      %v981 = vunpack.c.l.b16 %v405
      %v982 = vunpack.c.l.b16 %v406
      %v983 = vunpack.c.l.b16 %v407
      %v984 = vunpack.c.l.b16 %v408
      %v985 = vunpack.c.l.b16 %v409
      %v986 = vunpack.c.l.b16 %v410
      %v987 = vunpack.c.l.b16 %v411
      %v988 = vunpack.c.l.b16 %v412
      %v989 = vunpack.c.l.b16 %v413
      %v990 = vunpack.c.l.b16 %v414
      %v991 = vunpack.c.l.b16 %v415
      %v992 = vunpack.c.l.b16 %v416
      %v993 = vunpack.c.l.b16 %v417
      %v994 = vunpack.c.l.b16 %v418
      %v995 = vunpack.c.l.b16 %v419
      %v996 = vunpack.c.l.b16 %v420
      %v997 = vunpack.c.l.b16 %v421
      %v998 = vunpack.c.l.b16 %v422
      %v999 = vunpack.c.l.b16 %v423
      %v1000 = vunpack.c.l.b16 %v424
      %v1001 = vunpack.c.l.b16 %v425
      %v1002 = vunpack.c.l.b16 %v426
      %v1003 = vunpack.c.l.b16 %v427
      %v1004 = vunpack.c.l.b16 %v428
      %v1005 = vunpack.c.l.b16 %v429
      %v1006 = vunpack.c.l.b16 %v430
      %v1007 = vunpack.c.l.b16 %v431
      %v1008 = vunpack.c.l.b16 %v432
      %v1009 = vunpack.c.l.b16 %v433
      %v1010 = vunpack.c.l.b16 %v434
      %v1011 = vunpack.c.l.b16 %v435
      %v1012 = vunpack.c.l.b16 %v436
      %v1013 = vunpack.c.l.b16 %v437
      %v1014 = vunpack.c.l.b16 %v438
      %v1015 = vunpack.c.l.b16 %v439
      %v1016 = vunpack.c.l.b16 %v440
      %v1017 = vunpack.c.l.b16 %v441
      %v1018 = vunpack.c.l.b16 %v442
      %v1019 = vunpack.c.l.b16 %v443
      %v1020 = vunpack.c.l.b16 %v444
      %v1021 = vunpack.c.l.b16 %v445
      %v1022 = vunpack.c.l.b16 %v446
      %v1023 = vunpack.c.l.b16 %v447
      %v1024 = vunpack.c.l.b16 %v448
      %v1025 = vunpack.c.l.b16 %v449
      %v1026 = vunpack.c.l.b16 %v450
      %v1027 = vunpack.c.l.b16 %v451
      %v1028 = vunpack.c.l.b16 %v452
      %v1029 = vunpack.c.l.b16 %v453
      %v1030 = vunpack.c.l.b16 %v454
      %v1031 = vunpack.c.l.b16 %v455
      %v1032 = vunpack.c.l.b16 %v456
      %v1033 = vunpack.c.l.b16 %v457
      %v1034 = vunpack.c.l.b16 %v458
      %v1035 = vunpack.c.l.b16 %v459
      %v1036 = vunpack.c.l.b16 %v460
      %v1037 = vunpack.c.l.b16 %v461
      %v1038 = vunpack.c.l.b16 %v462
      %v1039 = vunpack.c.l.b16 %v463
      %v1040 = vunpack.c.l.b16 %v464
      %v1041 = vunpack.c.l.b16 %v465
      %v1042 = vunpack.c.l.b16 %v466
      %v1043 = vunpack.c.l.b16 %v467
      %v1044 = vunpack.c.l.b16 %v468
      %v1045 = vunpack.c.l.b16 %v469
      %v1046 = vunpack.c.l.b16 %v470
      %v1047 = vunpack.c.l.b16 %v471
      %v1048 = vunpack.c.l.b16 %v472
      %v1049 = vunpack.c.l.b16 %v473
      %v1050 = vunpack.c.l.b16 %v474
      %v1051 = vunpack.c.l.b16 %v475
      %v1052 = vunpack.c.l.b16 %v476
      %v1053 = vunpack.c.l.b16 %v477
      %v1054 = vunpack.c.l.b16 %v478
      %v1055 = vpack.c.b16 %v928, %v927
      %v1056 = vpack.c.b16 %v930, %v929
      %v1057 = vpack.c.b16 %v932, %v931
      %v1058 = vpack.c.b16 %v934, %v933
      %v1059 = vpack.c.b16 %v936, %v935
      %v1060 = vpack.c.b16 %v938, %v937
      %v1061 = vpack.c.b16 %v940, %v939
      %v1062 = vpack.c.b16 %v942, %v941
      %v1063 = vpack.c.b16 %v944, %v943
      %v1064 = vpack.c.b16 %v946, %v945
      %v1065 = vpack.c.b16 %v948, %v947
      %v1066 = vpack.c.b16 %v950, %v949
      %v1067 = vpack.c.b16 %v952, %v951
      %v1068 = vpack.c.b16 %v954, %v953
      %v1069 = vpack.c.b16 %v956, %v955
      %v1070 = vpack.c.b16 %v958, %v957
      %v1071 = vpack.c.b16 %v960, %v959
      %v1072 = vpack.c.b16 %v962, %v961
      %v1073 = vpack.c.b16 %v964, %v963
      %v1074 = vpack.c.b16 %v966, %v965
      %v1075 = vpack.c.b16 %v968, %v967
      %v1076 = vpack.c.b16 %v970, %v969
      %v1077 = vpack.c.b16 %v972, %v971
      %v1078 = vpack.c.b16 %v974, %v973
      %v1079 = vpack.c.b16 %v976, %v975
      %v1080 = vpack.c.b16 %v978, %v977
      %v1081 = vpack.c.b16 %v980, %v979
      %v1082 = vpack.c.b16 %v982, %v981
      %v1083 = vpack.c.b16 %v984, %v983
      %v1084 = vpack.c.b16 %v986, %v985
      %v1085 = vpack.c.b16 %v988, %v987
      %v1086 = vpack.c.b16 %v990, %v989
      %v1087 = vpack.c.b16 %v992, %v991
      %v1088 = vpack.c.b16 %v994, %v993
      %v1089 = vpack.c.b16 %v996, %v995
      %v1090 = vpack.c.b16 %v998, %v997
      %v1091 = vpack.c.b16 %v1000, %v999
      %v1092 = vpack.c.b16 %v1002, %v1001
      %v1093 = vpack.c.b16 %v1004, %v1003
      %v1094 = vpack.c.b16 %v1006, %v1005
      %v1095 = vpack.c.b16 %v1008, %v1007
      %v1096 = vpack.c.b16 %v1010, %v1009
      %v1097 = vpack.c.b16 %v1012, %v1011
      %v1098 = vpack.c.b16 %v1014, %v1013
      %v1099 = vpack.c.b16 %v1016, %v1015
      %v1100 = vpack.c.b16 %v1018, %v1017
      %v1101 = vpack.c.b16 %v1020, %v1019
      %v1102 = vpack.c.b16 %v1022, %v1021
      %v1103 = vpack.c.b16 %v1024, %v1023
      %v1104 = vpack.c.b16 %v1026, %v1025
      %v1105 = vpack.c.b16 %v1028, %v1027
      %v1106 = vpack.c.b16 %v1030, %v1029
      %v1107 = vpack.c.b16 %v1032, %v1031
      %v1108 = vpack.c.b16 %v1034, %v1033
      %v1109 = vpack.c.b16 %v1036, %v1035
      %v1110 = vpack.c.b16 %v1038, %v1037
      %v1111 = vpack.c.b16 %v1040, %v1039
      %v1112 = vpack.c.b16 %v1042, %v1041
      %v1113 = vpack.c.b16 %v1044, %v1043
      %v1114 = vpack.c.b16 %v1046, %v1045
      %v1115 = vpack.c.b16 %v1048, %v1047
      %v1116 = vpack.c.b16 %v1050, %v1049
      %v1117 = vpack.c.b16 %v1052, %v1051
      %v1118 = vpack.c.b16 %v1054, %v1053
      %1183 = vmatprep.subr.bf16.mxu0 0
      %1184 = vmatpush1.bf16.msra.mxu0 %v1055
      %1185 = vmatprep.subr.bf16.mxu0 0
      %1186 = vmatpush1.bf16.msra.mxu0 %v1056
      %1187 = vmatprep.subr.bf16.mxu0 0
      %1188 = vmatpush1.bf16.msra.mxu0 %v1057
      %1189 = vmatprep.subr.bf16.mxu0 0
      %1190 = vmatpush1.bf16.msra.mxu0 %v1058
      %1191 = vmatprep.subr.bf16.mxu0 0
      %1192 = vmatpush1.bf16.msra.mxu0 %v1059
      %1193 = vmatprep.subr.bf16.mxu0 0
      %1194 = vmatpush1.bf16.msra.mxu0 %v1060
      %1195 = vmatprep.subr.bf16.mxu0 0
      %1196 = vmatpush1.bf16.msra.mxu0 %v1061
      %1197 = vmatprep.subr.bf16.mxu0 0
      %1198 = vmatpush1.bf16.msra.mxu0 %v1062
      %1199 = vmatprep.subr.bf16.mxu0 0
      %1200 = vmatpush1.bf16.msra.mxu0 %v1063
      %1201 = vmatprep.subr.bf16.mxu0 0
      %1202 = vmatpush1.bf16.msra.mxu0 %v1064
      %1203 = vmatprep.subr.bf16.mxu0 0
      %1204 = vmatpush1.bf16.msra.mxu0 %v1065
      %1205 = vmatprep.subr.bf16.mxu0 0
      %1206 = vmatpush1.bf16.msra.mxu0 %v1066
      %1207 = vmatprep.subr.bf16.mxu0 0
      %1208 = vmatpush1.bf16.msra.mxu0 %v1067
      %1209 = vmatprep.subr.bf16.mxu0 0
      %1210 = vmatpush1.bf16.msra.mxu0 %v1068
      %1211 = vmatprep.subr.bf16.mxu0 0
      %1212 = vmatpush1.bf16.msra.mxu0 %v1069
      %1213 = vmatprep.subr.bf16.mxu0 0
      %1214 = vmatpush1.bf16.msra.mxu0 %v1070
      %1215 = vmatprep.mubr.bf16.mxu0 %v672
      %1216 = vmatmul.mubr.bf16.gmra.mrb[0].mxu0 %v671
      %v1217 = vpop.f32.mrb[0].mxu0
      %v1218 = vadd.f32 0.0, %v1217
      %v1219 = vpop.f32.mrb[0].mxu0
      %v1220 = vpop.f32.mrb[0].mxu0
      %v1221 = vadd.f32 0.0, %v1220
      %v1222 = vpop.f32.mrb[0].mxu0
      %1223 = vmatprep.mubr.bf16.mxu0 %v680
      %1224 = vmatmul.mubr.bf16.gmra.mrb[0].mxu0 %v679
      %v1225 = vpop.f32.mrb[0].mxu0
      %v1226 = vadd.f32 0.0, %v1225
      %v1227 = vpop.f32.mrb[0].mxu0
      %v1228 = vpop.f32.mrb[0].mxu0
      %v1229 = vadd.f32 0.0, %v1228
      %v1230 = vpop.f32.mrb[0].mxu0
      %1231 = vmatprep.mubr.bf16.mxu0 %v688
      %1232 = vmatmul.mubr.bf16.gmra.mrb[0].mxu0 %v687
      %v1233 = vpop.f32.mrb[0].mxu0
      %v1234 = vadd.f32 0.0, %v1233
      %v1235 = vpop.f32.mrb[0].mxu0
      %v1236 = vpop.f32.mrb[0].mxu0
      %v1237 = vadd.f32 0.0, %v1236
      %v1238 = vpop.f32.mrb[0].mxu0
      %1239 = vmatprep.mubr.bf16.mxu0 %v696
      %1240 = vmatmul.mubr.bf16.gmra.mrb[0].mxu0 %v695
      %v1241 = vpop.f32.mrb[0].mxu0
      %v1242 = vadd.f32 0.0, %v1241
      %v1243 = vpop.f32.mrb[0].mxu0
      %v1244 = vpop.f32.mrb[0].mxu0
      %v1245 = vadd.f32 0.0, %v1244
      %v1246 = vpop.f32.mrb[0].mxu0
      %1247 = vmatprep.mubr.bf16.mxu0 %v704
      %1248 = vmatmul.mubr.bf16.gmra.mrb[0].mxu0 %v703
      %v1249 = vpop.f32.mrb[0].mxu0
      %v1250 = vadd.f32 0.0, %v1249
      %v1251 = vpop.f32.mrb[0].mxu0
      %v1252 = vpop.f32.mrb[0].mxu0
      %v1253 = vadd.f32 0.0, %v1252
      %v1254 = vpop.f32.mrb[0].mxu0
      %1255 = vmatprep.mubr.bf16.mxu0 %v712
      %1256 = vmatmul.mubr.bf16.gmra.mrb[0].mxu0 %v711
      %v1257 = vpop.f32.mrb[0].mxu0
      %v1258 = vadd.f32 0.0, %v1257
      %v1259 = vpop.f32.mrb[0].mxu0
      %v1260 = vpop.f32.mrb[0].mxu0
      %v1261 = vadd.f32 0.0, %v1260
      %v1262 = vpop.f32.mrb[0].mxu0
      %1263 = vmatprep.mubr.bf16.mxu0 %v720
      %1264 = vmatmul.mubr.bf16.gmra.mrb[0].mxu0 %v719
      %v1265 = vpop.f32.mrb[0].mxu0
      %v1266 = vadd.f32 0.0, %v1265
      %v1267 = vpop.f32.mrb[0].mxu0
      %v1268 = vpop.f32.mrb[0].mxu0
      %v1269 = vadd.f32 0.0, %v1268
      %v1270 = vpop.f32.mrb[0].mxu0
      %1271 = vmatprep.mubr.bf16.mxu0 %v728
      %1272 = vmatmul.mubr.bf16.gmra.mrb[0].mxu0 %v727
      %v1273 = vpop.f32.mrb[0].mxu0
      %v1274 = vadd.f32 0.0, %v1273
      %v1275 = vpop.f32.mrb[0].mxu0
      %v1276 = vpop.f32.mrb[0].mxu0
      %v1277 = vadd.f32 0.0, %v1276
      %v1278 = vpop.f32.mrb[0].mxu0
      %1279 = vdwg.mxu0
      %1280 = vmatprep.subr.bf16.mxu0 0
      %1281 = vmatpush1.bf16.msra.mxu0 %v1071
      %1282 = vmatprep.subr.bf16.mxu0 0
      %1283 = vmatpush1.bf16.msra.mxu0 %v1072
      %1284 = vmatprep.subr.bf16.mxu0 0
      %1285 = vmatpush1.bf16.msra.mxu0 %v1073
      %1286 = vmatprep.subr.bf16.mxu0 0
      %1287 = vmatpush1.bf16.msra.mxu0 %v1074
      %1288 = vmatprep.subr.bf16.mxu0 0
      %1289 = vmatpush1.bf16.msra.mxu0 %v1075
      %1290 = vmatprep.subr.bf16.mxu0 0
      %1291 = vmatpush1.bf16.msra.mxu0 %v1076
      %1292 = vmatprep.subr.bf16.mxu0 0
      %1293 = vmatpush1.bf16.msra.mxu0 %v1077
      %1294 = vmatprep.subr.bf16.mxu0 0
      %1295 = vmatpush1.bf16.msra.mxu0 %v1078
      %1296 = vmatprep.subr.bf16.mxu0 0
      %1297 = vmatpush1.bf16.msra.mxu0 %v1079
      %1298 = vmatprep.subr.bf16.mxu0 0
      %1299 = vmatpush1.bf16.msra.mxu0 %v1080
      %1300 = vmatprep.subr.bf16.mxu0 0
      %1301 = vmatpush1.bf16.msra.mxu0 %v1081
      %1302 = vmatprep.subr.bf16.mxu0 0
      %1303 = vmatpush1.bf16.msra.mxu0 %v1082
      %1304 = vmatprep.subr.bf16.mxu0 0
      %1305 = vmatpush1.bf16.msra.mxu0 %v1083
      %1306 = vmatprep.subr.bf16.mxu0 0
      %1307 = vmatpush1.bf16.msra.mxu0 %v1084
      %1308 = vmatprep.subr.bf16.mxu0 0
      %1309 = vmatpush1.bf16.msra.mxu0 %v1085
      %1310 = vmatprep.subr.bf16.mxu0 0
      %1311 = vmatpush1.bf16.msra.mxu0 %v1086
      %1312 = vmatprep.mubr.bf16.mxu0 %v674
      %1313 = vmatmul.mubr.bf16.gmra.mrb[0].mxu0 %v673
      %v1314 = vpop.f32.mrb[0].mxu0
      %v1315 = vadd.f32 %v1218, %v1314
      %v1316 = vpop.f32.mrb[0].mxu0
      %v1317 = vpop.f32.mrb[0].mxu0
      %v1318 = vadd.f32 %v1221, %v1317
      %v1319 = vpop.f32.mrb[0].mxu0
      %1320 = vmatprep.mubr.bf16.mxu0 %v682
      %1321 = vmatmul.mubr.bf16.gmra.mrb[0].mxu0 %v681
      %v1322 = vpop.f32.mrb[0].mxu0
      %v1323 = vadd.f32 %v1226, %v1322
      %v1324 = vpop.f32.mrb[0].mxu0
      %v1325 = vpop.f32.mrb[0].mxu0
      %v1326 = vadd.f32 %v1229, %v1325
      %v1327 = vpop.f32.mrb[0].mxu0
      %1328 = vmatprep.mubr.bf16.mxu0 %v690
      %1329 = vmatmul.mubr.bf16.gmra.mrb[0].mxu0 %v689
      %v1330 = vpop.f32.mrb[0].mxu0
      %v1331 = vadd.f32 %v1234, %v1330
      %v1332 = vpop.f32.mrb[0].mxu0
      %v1333 = vpop.f32.mrb[0].mxu0
      %v1334 = vadd.f32 %v1237, %v1333
      %v1335 = vpop.f32.mrb[0].mxu0
      %1336 = vmatprep.mubr.bf16.mxu0 %v698
      %1337 = vmatmul.mubr.bf16.gmra.mrb[0].mxu0 %v697
      %v1338 = vpop.f32.mrb[0].mxu0
      %v1339 = vadd.f32 %v1242, %v1338
      %v1340 = vpop.f32.mrb[0].mxu0
      %v1341 = vpop.f32.mrb[0].mxu0
      %v1342 = vadd.f32 %v1245, %v1341
      %v1343 = vpop.f32.mrb[0].mxu0
      %1344 = vmatprep.mubr.bf16.mxu0 %v706
      %1345 = vmatmul.mubr.bf16.gmra.mrb[0].mxu0 %v705
      %v1346 = vpop.f32.mrb[0].mxu0
      %v1347 = vadd.f32 %v1250, %v1346
      %v1348 = vpop.f32.mrb[0].mxu0
      %v1349 = vpop.f32.mrb[0].mxu0
      %v1350 = vadd.f32 %v1253, %v1349
      %v1351 = vpop.f32.mrb[0].mxu0
      %1352 = vmatprep.mubr.bf16.mxu0 %v714
      %1353 = vmatmul.mubr.bf16.gmra.mrb[0].mxu0 %v713
      %v1354 = vpop.f32.mrb[0].mxu0
      %v1355 = vadd.f32 %v1258, %v1354
      %v1356 = vpop.f32.mrb[0].mxu0
      %v1357 = vpop.f32.mrb[0].mxu0
      %v1358 = vadd.f32 %v1261, %v1357
      %v1359 = vpop.f32.mrb[0].mxu0
      %1360 = vmatprep.mubr.bf16.mxu0 %v722
      %1361 = vmatmul.mubr.bf16.gmra.mrb[0].mxu0 %v721
      %v1362 = vpop.f32.mrb[0].mxu0
      %v1363 = vadd.f32 %v1266, %v1362
      %v1364 = vpop.f32.mrb[0].mxu0
      %v1365 = vpop.f32.mrb[0].mxu0
      %v1366 = vadd.f32 %v1269, %v1365
      %v1367 = vpop.f32.mrb[0].mxu0
      %1368 = vmatprep.mubr.bf16.mxu0 %v730
      %1369 = vmatmul.mubr.bf16.gmra.mrb[0].mxu0 %v729
      %v1370 = vpop.f32.mrb[0].mxu0
      %v1371 = vadd.f32 %v1274, %v1370
      %v1372 = vpop.f32.mrb[0].mxu0
      %v1373 = vpop.f32.mrb[0].mxu0
      %v1374 = vadd.f32 %v1277, %v1373
      %v1375 = vpop.f32.mrb[0].mxu0
      %1376 = vdwg.mxu0
      %1377 = vmatprep.subr.bf16.mxu0 0
      %1378 = vmatpush1.bf16.msra.mxu0 %v1087
      %1379 = vmatprep.subr.bf16.mxu0 0
      %1380 = vmatpush1.bf16.msra.mxu0 %v1088
      %1381 = vmatprep.subr.bf16.mxu0 0
      %1382 = vmatpush1.bf16.msra.mxu0 %v1089
      %1383 = vmatprep.subr.bf16.mxu0 0
      %1384 = vmatpush1.bf16.msra.mxu0 %v1090
      %1385 = vmatprep.subr.bf16.mxu0 0
      %1386 = vmatpush1.bf16.msra.mxu0 %v1091
      %1387 = vmatprep.subr.bf16.mxu0 0
      %1388 = vmatpush1.bf16.msra.mxu0 %v1092
      %1389 = vmatprep.subr.bf16.mxu0 0
      %1390 = vmatpush1.bf16.msra.mxu0 %v1093
      %1391 = vmatprep.subr.bf16.mxu0 0
      %1392 = vmatpush1.bf16.msra.mxu0 %v1094
      %1393 = vmatprep.subr.bf16.mxu0 0
      %1394 = vmatpush1.bf16.msra.mxu0 %v1095
      %1395 = vmatprep.subr.bf16.mxu0 0
      %1396 = vmatpush1.bf16.msra.mxu0 %v1096
      %1397 = vmatprep.subr.bf16.mxu0 0
      %1398 = vmatpush1.bf16.msra.mxu0 %v1097
      %1399 = vmatprep.subr.bf16.mxu0 0
      %1400 = vmatpush1.bf16.msra.mxu0 %v1098
      %1401 = vmatprep.subr.bf16.mxu0 0
      %1402 = vmatpush1.bf16.msra.mxu0 %v1099
      %1403 = vmatprep.subr.bf16.mxu0 0
      %1404 = vmatpush1.bf16.msra.mxu0 %v1100
      %1405 = vmatprep.subr.bf16.mxu0 0
      %1406 = vmatpush1.bf16.msra.mxu0 %v1101
      %1407 = vmatprep.subr.bf16.mxu0 0
      %1408 = vmatpush1.bf16.msra.mxu0 %v1102
      %1409 = vmatprep.mubr.bf16.mxu0 %v676
      %1410 = vmatmul.mubr.bf16.gmra.mrb[0].mxu0 %v675
      %v1411 = vpop.f32.mrb[0].mxu0
      %v1412 = vadd.f32 %v1315, %v1411
      %v1413 = vpop.f32.mrb[0].mxu0
      %v1414 = vpop.f32.mrb[0].mxu0
      %v1415 = vadd.f32 %v1318, %v1414
      %v1416 = vpop.f32.mrb[0].mxu0
      %1417 = vmatprep.mubr.bf16.mxu0 %v684
      %1418 = vmatmul.mubr.bf16.gmra.mrb[0].mxu0 %v683
      %v1419 = vpop.f32.mrb[0].mxu0
      %v1420 = vadd.f32 %v1323, %v1419
      %v1421 = vpop.f32.mrb[0].mxu0
      %v1422 = vpop.f32.mrb[0].mxu0
      %v1423 = vadd.f32 %v1326, %v1422
      %v1424 = vpop.f32.mrb[0].mxu0
      %1425 = vmatprep.mubr.bf16.mxu0 %v692
      %1426 = vmatmul.mubr.bf16.gmra.mrb[0].mxu0 %v691
      %v1427 = vpop.f32.mrb[0].mxu0
      %v1428 = vadd.f32 %v1331, %v1427
      %v1429 = vpop.f32.mrb[0].mxu0
      %v1430 = vpop.f32.mrb[0].mxu0
      %v1431 = vadd.f32 %v1334, %v1430
      %v1432 = vpop.f32.mrb[0].mxu0
      %1433 = vmatprep.mubr.bf16.mxu0 %v700
      %1434 = vmatmul.mubr.bf16.gmra.mrb[0].mxu0 %v699
      %v1435 = vpop.f32.mrb[0].mxu0
      %v1436 = vadd.f32 %v1339, %v1435
      %v1437 = vpop.f32.mrb[0].mxu0
      %v1438 = vpop.f32.mrb[0].mxu0
      %v1439 = vadd.f32 %v1342, %v1438
      %v1440 = vpop.f32.mrb[0].mxu0
      %1441 = vmatprep.mubr.bf16.mxu0 %v708
      %1442 = vmatmul.mubr.bf16.gmra.mrb[0].mxu0 %v707
      %v1443 = vpop.f32.mrb[0].mxu0
      %v1444 = vadd.f32 %v1347, %v1443
      %v1445 = vpop.f32.mrb[0].mxu0
      %v1446 = vpop.f32.mrb[0].mxu0
      %v1447 = vadd.f32 %v1350, %v1446
      %v1448 = vpop.f32.mrb[0].mxu0
      %1449 = vmatprep.mubr.bf16.mxu0 %v716
      %1450 = vmatmul.mubr.bf16.gmra.mrb[0].mxu0 %v715
      %v1451 = vpop.f32.mrb[0].mxu0
      %v1452 = vadd.f32 %v1355, %v1451
      %v1453 = vpop.f32.mrb[0].mxu0
      %v1454 = vpop.f32.mrb[0].mxu0
      %v1455 = vadd.f32 %v1358, %v1454
      %v1456 = vpop.f32.mrb[0].mxu0
      %1457 = vmatprep.mubr.bf16.mxu0 %v724
      %1458 = vmatmul.mubr.bf16.gmra.mrb[0].mxu0 %v723
      %v1459 = vpop.f32.mrb[0].mxu0
      %v1460 = vadd.f32 %v1363, %v1459
      %v1461 = vpop.f32.mrb[0].mxu0
      %v1462 = vpop.f32.mrb[0].mxu0
      %v1463 = vadd.f32 %v1366, %v1462
      %v1464 = vpop.f32.mrb[0].mxu0
      %1465 = vmatprep.mubr.bf16.mxu0 %v732
      %1466 = vmatmul.mubr.bf16.gmra.mrb[0].mxu0 %v731
      %v1467 = vpop.f32.mrb[0].mxu0
      %v1468 = vadd.f32 %v1371, %v1467
      %v1469 = vpop.f32.mrb[0].mxu0
      %v1470 = vpop.f32.mrb[0].mxu0
      %v1471 = vadd.f32 %v1374, %v1470
      %v1472 = vpop.f32.mrb[0].mxu0
      %1473 = vdwg.mxu0
      %1474 = vmatprep.subr.bf16.mxu0 0
      %1475 = vmatpush1.bf16.msra.mxu0 %v1103
      %1476 = vmatprep.subr.bf16.mxu0 0
      %1477 = vmatpush1.bf16.msra.mxu0 %v1104
      %1478 = vmatprep.subr.bf16.mxu0 0
      %1479 = vmatpush1.bf16.msra.mxu0 %v1105
      %1480 = vmatprep.subr.bf16.mxu0 0
      %1481 = vmatpush1.bf16.msra.mxu0 %v1106
      %1482 = vmatprep.subr.bf16.mxu0 0
      %1483 = vmatpush1.bf16.msra.mxu0 %v1107
      %1484 = vmatprep.subr.bf16.mxu0 0
      %1485 = vmatpush1.bf16.msra.mxu0 %v1108
      %1486 = vmatprep.subr.bf16.mxu0 0
      %1487 = vmatpush1.bf16.msra.mxu0 %v1109
      %1488 = vmatprep.subr.bf16.mxu0 0
      %1489 = vmatpush1.bf16.msra.mxu0 %v1110
      %1490 = vmatprep.subr.bf16.mxu0 0
      %1491 = vmatpush1.bf16.msra.mxu0 %v1111
      %1492 = vmatprep.subr.bf16.mxu0 0
      %1493 = vmatpush1.bf16.msra.mxu0 %v1112
      %1494 = vmatprep.subr.bf16.mxu0 0
      %1495 = vmatpush1.bf16.msra.mxu0 %v1113
      %1496 = vmatprep.subr.bf16.mxu0 0
      %1497 = vmatpush1.bf16.msra.mxu0 %v1114
      %1498 = vmatprep.subr.bf16.mxu0 0
      %1499 = vmatpush1.bf16.msra.mxu0 %v1115
      %1500 = vmatprep.subr.bf16.mxu0 0
      %1501 = vmatpush1.bf16.msra.mxu0 %v1116
      %1502 = vmatprep.subr.bf16.mxu0 0
      %1503 = vmatpush1.bf16.msra.mxu0 %v1117
      %1504 = vmatprep.subr.bf16.mxu0 0
      %1505 = vmatpush1.bf16.msra.mxu0 %v1118
      %1506 = vmatprep.mubr.bf16.mxu0 %v678
      %1507 = vmatmul.mubr.bf16.gmra.mrb[0].mxu0 %v677
      %v1508 = vpop.f32.mrb[0].mxu0
      %v1509 = vadd.f32 %v1412, %v1508
      %v1510 = vpop.f32.mrb[0].mxu0
      %v1511 = vpop.f32.mrb[0].mxu0
      %v1512 = vadd.f32 %v1415, %v1511
      %v1513 = vpop.f32.mrb[0].mxu0
      %1514 = vmatprep.mubr.bf16.mxu0 %v686
      %1515 = vmatmul.mubr.bf16.gmra.mrb[0].mxu0 %v685
      %v1516 = vpop.f32.mrb[0].mxu0
      %v1517 = vadd.f32 %v1420, %v1516
      %v1518 = vpop.f32.mrb[0].mxu0
      %v1519 = vpop.f32.mrb[0].mxu0
      %v1520 = vadd.f32 %v1423, %v1519
      %v1521 = vpop.f32.mrb[0].mxu0
      %1522 = vmatprep.mubr.bf16.mxu0 %v694
      %1523 = vmatmul.mubr.bf16.gmra.mrb[0].mxu0 %v693
      %v1524 = vpop.f32.mrb[0].mxu0
      %v1525 = vadd.f32 %v1428, %v1524
      %v1526 = vpop.f32.mrb[0].mxu0
      %v1527 = vpop.f32.mrb[0].mxu0
      %v1528 = vadd.f32 %v1431, %v1527
      %v1529 = vpop.f32.mrb[0].mxu0
      %1530 = vmatprep.mubr.bf16.mxu0 %v702
      %1531 = vmatmul.mubr.bf16.gmra.mrb[0].mxu0 %v701
      %v1532 = vpop.f32.mrb[0].mxu0
      %v1533 = vadd.f32 %v1436, %v1532
      %v1534 = vpop.f32.mrb[0].mxu0
      %v1535 = vpop.f32.mrb[0].mxu0
      %v1536 = vadd.f32 %v1439, %v1535
      %v1537 = vpop.f32.mrb[0].mxu0
      %1538 = vmatprep.mubr.bf16.mxu0 %v710
      %1539 = vmatmul.mubr.bf16.gmra.mrb[0].mxu0 %v709
      %v1540 = vpop.f32.mrb[0].mxu0
      %v1541 = vadd.f32 %v1444, %v1540
      %v1542 = vpop.f32.mrb[0].mxu0
      %v1543 = vpop.f32.mrb[0].mxu0
      %v1544 = vadd.f32 %v1447, %v1543
      %v1545 = vpop.f32.mrb[0].mxu0
      %1546 = vmatprep.mubr.bf16.mxu0 %v718
      %1547 = vmatmul.mubr.bf16.gmra.mrb[0].mxu0 %v717
      %v1548 = vpop.f32.mrb[0].mxu0
      %v1549 = vadd.f32 %v1452, %v1548
      %v1550 = vpop.f32.mrb[0].mxu0
      %v1551 = vpop.f32.mrb[0].mxu0
      %v1552 = vadd.f32 %v1455, %v1551
      %v1553 = vpop.f32.mrb[0].mxu0
      %1554 = vmatprep.mubr.bf16.mxu0 %v726
      %1555 = vmatmul.mubr.bf16.gmra.mrb[0].mxu0 %v725
      %v1556 = vpop.f32.mrb[0].mxu0
      %v1557 = vadd.f32 %v1460, %v1556
      %v1558 = vpop.f32.mrb[0].mxu0
      %v1559 = vpop.f32.mrb[0].mxu0
      %v1560 = vadd.f32 %v1463, %v1559
      %v1561 = vpop.f32.mrb[0].mxu0
      %1562 = vmatprep.mubr.bf16.mxu0 %v734
      %1563 = vmatmul.mubr.bf16.gmra.mrb[0].mxu0 %v733
      %v1564 = vpop.f32.mrb[0].mxu0
      %v1565 = vadd.f32 %v1468, %v1564
      %v1566 = vpop.f32.mrb[0].mxu0
      %v1567 = vpop.f32.mrb[0].mxu0
      %v1568 = vadd.f32 %v1471, %v1567
      %v1569 = vpop.f32.mrb[0].mxu0
      %1570 = vdwg.mxu0
      %v1571 = vpack.c.bf16 %v1512, %v1509
      %v1572 = vpack.c.bf16 %v1520, %v1517
      %v1573 = vpack.c.bf16 %v1528, %v1525
      %v1574 = vpack.c.bf16 %v1536, %v1533
      %v1575 = vpack.c.bf16 %v1544, %v1541
      %v1576 = vpack.c.bf16 %v1552, %v1549
      %v1577 = vpack.c.bf16 %v1560, %v1557
      %v1578 = vpack.c.bf16 %v1568, %v1565
      %v1587 = vunpack.c.l.b16 %v1571
      %v1588 = vunpack.c.h.b16 %v1571
      %v1589 = vunpack.c.l.b16 %v1572
      %v1590 = vunpack.c.h.b16 %v1572
      %v1591 = vunpack.c.l.b16 %v1573
      %v1592 = vunpack.c.h.b16 %v1573
      %v1593 = vunpack.c.l.b16 %v1574
      %v1594 = vunpack.c.h.b16 %v1574
      %v1595 = vunpack.c.l.b16 %v1575
      %v1596 = vunpack.c.h.b16 %v1575
      %v1597 = vunpack.c.l.b16 %v1576
      %v1598 = vunpack.c.h.b16 %v1576
      %v1599 = vunpack.c.l.b16 %v1577
      %v1600 = vunpack.c.h.b16 %v1577
      %v1601 = vunpack.c.l.b16 %v1578
      %v1602 = vunpack.c.h.b16 %v1578
      %v1603 = vpack.c.b16 %v1587, %v1587
      %v1604 = vpack.c.b16 %v1588, %v1588
      %v1605 = vpack.c.b16 %v1589, %v1589
      %v1606 = vpack.c.b16 %v1590, %v1590
      %v1607 = vpack.c.b16 %v1591, %v1591
      %v1608 = vpack.c.b16 %v1592, %v1592
      %v1609 = vpack.c.b16 %v1593, %v1593
      %v1610 = vpack.c.b16 %v1594, %v1594
      %v1611 = vpack.c.b16 %v1595, %v1595
      %v1612 = vpack.c.b16 %v1596, %v1596
      %v1613 = vpack.c.b16 %v1597, %v1597
      %v1614 = vpack.c.b16 %v1598, %v1598
      %v1615 = vpack.c.b16 %v1599, %v1599
      %v1616 = vpack.c.b16 %v1600, %v1600
      %v1617 = vpack.c.b16 %v1601, %v1601
      %v1618 = vpack.c.b16 %v1602, %v1602
      %1635 = vst [vmem:[%s271] sm:$0xf] %v1603
      %1636 = vst [vmem:[%s271 + $0x4] sm:$0xf] %v1604
      %1637 = vst [vmem:[%s271 + $0x8] sm:$0xf] %v1605
      %1638 = vst [vmem:[%s271 + $0xc] sm:$0xf] %v1606
      %1639 = vst [vmem:[%s271 + $0x10] sm:$0xf] %v1607
      %1640 = vst [vmem:[%s271 + $0x14] sm:$0xf] %v1608
      %1641 = vst [vmem:[%s271 + $0x18] sm:$0xf] %v1609
      %1642 = vst [vmem:[%s271 + $0x1c] sm:$0xf] %v1610
      %1643 = vst [vmem:[%s271 + $0x20] sm:$0xf] %v1611
      %1644 = vst [vmem:[%s271 + $0x24] sm:$0xf] %v1612
      %1645 = vst [vmem:[%s271 + $0x28] sm:$0xf] %v1613
      %1646 = vst [vmem:[%s271 + $0x2c] sm:$0xf] %v1614
      %1647 = vst [vmem:[%s271 + $0x30] sm:$0xf] %v1615
      %1648 = vst [vmem:[%s271 + $0x34] sm:$0xf] %v1616
      %1649 = vst [vmem:[%s271 + $0x38] sm:$0xf] %v1617
      %1650 = vst [vmem:[%s271 + $0x3c] sm:$0xf] %v1618
      %v1651 = vadd.f32 %v1509, %v1512
      %v1652 = vadd.f32 %v1651, %v1517
      %v1653 = vadd.f32 %v1652, %v1520
      %v1654 = vadd.f32 %v1653, %v1525
      %v1655 = vadd.f32 %v1654, %v1528
      %v1656 = vadd.f32 %v1655, %v1533
      %v1657 = vadd.f32 %v1656, %v1536
      %v1658 = vadd.f32 %v1657, %v1541
      %v1659 = vadd.f32 %v1658, %v1544
      %v1660 = vadd.f32 %v1659, %v1549
      %v1661 = vadd.f32 %v1660, %v1552
      %v1662 = vadd.f32 %v1661, %v1557
      %v1663 = vadd.f32 %v1662, %v1560
      %v1664 = vadd.f32 %v1663, %v1565
      %v1665 = vadd.f32 %v1664, %v1568
      %v1666 = vrot.slane %v1665, 4
      %v1667 = vadd.f32 %v1665, %v1666
      %v1668 = vrot.slane %v1667, 2
      %v1669 = vadd.f32 %v1667, %v1668
      %v1670 = vrot.slane %v1669, 1
      %v1671 = vadd.f32 %v1669, %v1670
      %v1672 = vmul.f32 %v1509, %v1509
      %v1673 = vmul.f32 %v1512, %v1512
      %v1674 = vmul.f32 %v1517, %v1517
      %v1675 = vmul.f32 %v1520, %v1520
      %v1676 = vmul.f32 %v1525, %v1525
      %v1677 = vmul.f32 %v1528, %v1528
      %v1678 = vmul.f32 %v1533, %v1533
      %v1679 = vmul.f32 %v1536, %v1536
      %v1680 = vmul.f32 %v1541, %v1541
      %v1681 = vmul.f32 %v1544, %v1544
      %v1682 = vmul.f32 %v1549, %v1549
      %v1683 = vmul.f32 %v1552, %v1552
      %v1684 = vmul.f32 %v1557, %v1557
      %v1685 = vmul.f32 %v1560, %v1560
      %v1686 = vmul.f32 %v1565, %v1565
      %v1687 = vmul.f32 %v1568, %v1568
      %v1688 = vadd.f32 %v1672, %v1673
      %v1689 = vadd.f32 %v1688, %v1674
      %v1690 = vadd.f32 %v1689, %v1675
      %v1691 = vadd.f32 %v1690, %v1676
      %v1692 = vadd.f32 %v1691, %v1677
      %v1693 = vadd.f32 %v1692, %v1678
      %v1694 = vadd.f32 %v1693, %v1679
      %v1695 = vadd.f32 %v1694, %v1680
      %v1696 = vadd.f32 %v1695, %v1681
      %v1697 = vadd.f32 %v1696, %v1682
      %v1698 = vadd.f32 %v1697, %v1683
      %v1699 = vadd.f32 %v1698, %v1684
      %v1700 = vadd.f32 %v1699, %v1685
      %v1701 = vadd.f32 %v1700, %v1686
      %v1702 = vadd.f32 %v1701, %v1687
      %v1703 = vrot.slane %v1702, 4
      %v1704 = vadd.f32 %v1702, %v1703
      %v1705 = vrot.slane %v1704, 2
      %v1706 = vadd.f32 %v1704, %v1705
      %v1707 = vrot.slane %v1706, 1
      %v1708 = vadd.f32 %v1706, %v1707
      %1709 = vst [vmem:[%s278] sm:$0xff] %v1671
      %1710 = vst [vmem:[%s284] sm:$0xff] %v1708
      %s1711 = sadd.s32 %s20, %s21
      %s1712 = smul.u32 16, %s1711
      %p1713 = scmp.lt.s32.totalorder %s1712, 63
      %s1714 = scalar_select %p1713, %s1712, 63
      %s1715 = smul.addr %s1714, 4
      %s1716 = scalar_lea.vmem %s2, %s1715
      %s1717 = sadd.s32 %s20, %s21
      %p1718 = scmp.lt.s32.totalorder %s1717, 3
      %s1719 = scalar_select %p1718, %s1717, 3
      %s1720 = smul.addr %s1719, 8
      %s1721 = scalar_lea.vmem %s3, %s1720
      %s1722 = sadd.s32 %s20, %s21
      %p1723 = scmp.lt.s32.totalorder %s1722, 3
      %s1724 = scalar_select %p1723, %s1722, 3
      %s1725 = smul.addr %s1724, 8
      %s1726 = scalar_lea.vmem %s4, %s1725
      // Predicated region
      $region29: #{generator_forward.13} parent=27 // pred_check
        %p1727 = pneg %p102
      $region30: #{generator_forward.13} parent=27 // pred_check_branch
        %1729 = sbr.rel (%p1727) target = $region32
      $region31: #{generator_forward.13} parent=27 // pred_region
        %s1730 = sadd.s32 %s20, %s21
        %s1731 = smul.u32 16, %s1730
      $region32: #{generator_forward.13} parent=27 // pred_fallthru
        _
      // Predicated region
      $region33: #{generator_forward.13} parent=27 // pred_check
        %p1732 = pneg %p130
      $region34: #{generator_forward.13} parent=27 // pred_check_branch
        %1734 = sbr.rel (%p1732) target = $region36
      $region35: #{generator_forward.13} parent=27 // pred_region
        %s1735 = sadd.s32 %s20, %s21
      $region36: #{generator_forward.13} parent=27 // pred_fallthru
        _
      // Predicated region
      $region37: #{generator_forward.13} parent=27 // pred_check
        %p1736 = pneg %p158
      $region38: #{generator_forward.13} parent=27 // pred_check_branch
        %1738 = sbr.rel (%p1736) target = $region40
      $region39: #{generator_forward.13} parent=27 // pred_region
        %s1739 = sadd.s32 %s20, %s21
      $region40: #{generator_forward.13} parent=27 // pred_fallthru
        _
    $region28: #{generator_forward.13} parent=5 // pred_fallthru
      _
    %p1740 = scmp.le.s32.totalorder 2, %s11
    // Predicated region
    $region41: #{generator_forward.13} parent=5 // pred_check
      %p1741 = pneg %p1740
    $region42: #{generator_forward.13} parent=5 // pred_check_branch
      %1743 = sbr.rel (%p1741) target = $region44
    $region43: #{generator_forward.13} parent=5 // pred_region
      %s1744 = ssub.s32 %s11, 2
      // Predicated region
      $region45: #{generator_forward.13} parent=43 // pred_check
        %p1745 = pneg %p108
      $region46: #{generator_forward.13} parent=43 // pred_check_branch
        %1747 = sbr.rel (%p1745) target = $region48
      $region47: #{generator_forward.13} parent=43 // pred_region
        %s1748 = sadd.s32 %s22, %s23
        %s1749 = smul.u32 16, %s1748
        %p1750 = scmp.lt.s32.totalorder %s1749, 63
        %s1751 = scalar_select %p1750, %s1749, 63
        %s1752 = smul.addr %s1751, 4
        %s1753 = scalar_lea.vmem %s2, %s1752
      $region48: #{generator_forward.13} parent=43 // pred_fallthru
        _
      // Predicated region
      $region49: #{generator_forward.13} parent=43 // pred_check
        %p1754 = pneg %p136
      $region50: #{generator_forward.13} parent=43 // pred_check_branch
        %1756 = sbr.rel (%p1754) target = $region52
      $region51: #{generator_forward.13} parent=43 // pred_region
        %s1757 = sadd.s32 %s22, %s23
        %p1758 = scmp.lt.s32.totalorder %s1757, 3
        %s1759 = scalar_select %p1758, %s1757, 3
        %s1760 = smul.addr %s1759, 8
        %s1761 = scalar_lea.vmem %s3, %s1760
      $region52: #{generator_forward.13} parent=43 // pred_fallthru
        _
      // Predicated region
      $region53: #{generator_forward.13} parent=43 // pred_check
        %p1762 = pneg %p164
      $region54: #{generator_forward.13} parent=43 // pred_check_branch
        %1764 = sbr.rel (%p1762) target = $region56
      $region55: #{generator_forward.13} parent=43 // pred_region
        %s1765 = sadd.s32 %s22, %s23
        %p1766 = scmp.lt.s32.totalorder %s1765, 3
        %s1767 = scalar_select %p1766, %s1765, 3
        %s1768 = smul.addr %s1767, 8
        %s1769 = scalar_lea.vmem %s4, %s1768
      $region56: #{generator_forward.13} parent=43 // pred_fallthru
        _
    $region44: #{generator_forward.13} parent=5 // pred_fallthru
      _
  $region6: #{generator_forward.13} parent=0 // loop_footer
    %s15 = sadd.s32 1, %s11
  $region7: #{generator_forward.13} parent=0 // loop_footer_branch
    %10 = sbr.rel target = $region3
  $region8: #{generator_forward.13} parent=0 // loop_exit
    _

// kernel: generator_forward.14
$region0: #{generator_forward.14}
  #allocation0 [shape = 'u32[]', space=smem, size = 0x4, offset = 0x4, fixed_abs, tag = 'smem constant byte address 0x4 - core index']
  #allocation1 [shape = 'u32[144,128]{1,0:T(1,128)}', space=vmem, size = 0x12000, scoped, tag = 'internal scratch']
  %s0 = inlined_call_operand.vmem [shape: bf16[512,128], index: 0, kind: input, shape index: {}]
  %s1 = inlined_call_operand.vmem [shape: f32[1,128], index: 1, kind: input, shape index: {}]
  %s2 = inlined_call_operand.vmem [shape: f32[1,128], index: 2, kind: input, shape index: {}]
  %s3 = inlined_call_operand.vmem [shape: bf16[512,128], index: 3, kind: output, shape index: {}]
  %s4 = sld [smem:[#allocation0]]
  $region22: #{generator_forward.14} parent=0
    _
  %s6 = ssub.s32 1, %s4
  %s7 = scalar_select 0, %s6, %s4
  // Predicated region
  $region2: #{generator_forward.14} parent=0 // pred_check
    _
  $region3: #{generator_forward.14} parent=0 // pred_check_branch
    %9 = sbr.rel (0) target = $region5
  $region4: #{generator_forward.14} parent=0 // pred_region
    _
  $region5: #{generator_forward.14} parent=0 // pred_fallthru
    _
  // Predicated region
  $region6: #{generator_forward.14} parent=0 // pred_check
    _
  $region7: #{generator_forward.14} parent=0 // pred_check_branch
    %11 = sbr.rel (0) target = $region9
  $region8: #{generator_forward.14} parent=0 // pred_region
    _
  $region9: #{generator_forward.14} parent=0 // pred_fallthru
    _
  // Predicated region
  $region10: #{generator_forward.14} parent=0 // pred_check
    _
  $region11: #{generator_forward.14} parent=0 // pred_check_branch
    %13 = sbr.rel (0) target = $region13
  $region12: #{generator_forward.14} parent=0 // pred_region
    _
  $region13: #{generator_forward.14} parent=0 // pred_fallthru
    _
  %v14 = vld [vmem:[%s0] sm:$0xf]
  %v15 = vld [vmem:[%s0 + $0x4] sm:$0xf]
  %v16 = vld [vmem:[%s0 + $0x8] sm:$0xf]
  %v17 = vld [vmem:[%s0 + $0xc] sm:$0xf]
  %v18 = vld [vmem:[%s0 + $0x10] sm:$0xf]
  %v19 = vld [vmem:[%s0 + $0x14] sm:$0xf]
  %v20 = vld [vmem:[%s0 + $0x18] sm:$0xf]
  %v21 = vld [vmem:[%s0 + $0x1c] sm:$0xf]
  %v22 = vld [vmem:[%s0 + $0x20] sm:$0xf]
  %v23 = vld [vmem:[%s0 + $0x24] sm:$0xf]
  %v24 = vld [vmem:[%s0 + $0x28] sm:$0xf]
  %v25 = vld [vmem:[%s0 + $0x2c] sm:$0xf]
  %v26 = vld [vmem:[%s0 + $0x30] sm:$0xf]
  %v27 = vld [vmem:[%s0 + $0x34] sm:$0xf]
  %v28 = vld [vmem:[%s0 + $0x38] sm:$0xf]
  %v29 = vld [vmem:[%s0 + $0x3c] sm:$0xf]
  %v30 = vld [vmem:[%s0 + $0x40] sm:$0xf]
  %v31 = vld [vmem:[%s0 + $0x44] sm:$0xf]
  %v32 = vld [vmem:[%s0 + $0x48] sm:$0xf]
  %v33 = vld [vmem:[%s0 + $0x4c] sm:$0xf]
  %v34 = vld [vmem:[%s0 + $0x50] sm:$0xf]
  %v35 = vld [vmem:[%s0 + $0x54] sm:$0xf]
  %v36 = vld [vmem:[%s0 + $0x58] sm:$0xf]
  %v37 = vld [vmem:[%s0 + $0x5c] sm:$0xf]
  %v38 = vld [vmem:[%s0 + $0x60] sm:$0xf]
  %v39 = vld [vmem:[%s0 + $0x64] sm:$0xf]
  %v40 = vld [vmem:[%s0 + $0x68] sm:$0xf]
  %v41 = vld [vmem:[%s0 + $0x6c] sm:$0xf]
  %v42 = vld [vmem:[%s0 + $0x70] sm:$0xf]
  %v43 = vld [vmem:[%s0 + $0x74] sm:$0xf]
  %v44 = vld [vmem:[%s0 + $0x78] sm:$0xf]
  %v45 = vld [vmem:[%s0 + $0x7c] sm:$0xf]
  %v46 = vld [vmem:[%s0 + $0x80] sm:$0xf]
  %v47 = vld [vmem:[%s0 + $0x84] sm:$0xf]
  %v48 = vld [vmem:[%s0 + $0x88] sm:$0xf]
  %v49 = vld [vmem:[%s0 + $0x8c] sm:$0xf]
  %v50 = vld [vmem:[%s0 + $0x90] sm:$0xf]
  %v51 = vld [vmem:[%s0 + $0x94] sm:$0xf]
  %v52 = vld [vmem:[%s0 + $0x98] sm:$0xf]
  %v53 = vld [vmem:[%s0 + $0x9c] sm:$0xf]
  %v54 = vld [vmem:[%s0 + $0xa0] sm:$0xf]
  %v55 = vld [vmem:[%s0 + $0xa4] sm:$0xf]
  %v56 = vld [vmem:[%s0 + $0xa8] sm:$0xf]
  %v57 = vld [vmem:[%s0 + $0xac] sm:$0xf]
  %v58 = vld [vmem:[%s0 + $0xb0] sm:$0xf]
  %v59 = vld [vmem:[%s0 + $0xb4] sm:$0xf]
  %v60 = vld [vmem:[%s0 + $0xb8] sm:$0xf]
  %v61 = vld [vmem:[%s0 + $0xbc] sm:$0xf]
  %v62 = vld [vmem:[%s0 + $0xc0] sm:$0xf]
  %v63 = vld [vmem:[%s0 + $0xc4] sm:$0xf]
  %v64 = vld [vmem:[%s0 + $0xc8] sm:$0xf]
  %v65 = vld [vmem:[%s0 + $0xcc] sm:$0xf]
  %v66 = vld [vmem:[%s0 + $0xd0] sm:$0xf]
  %v67 = vld [vmem:[%s0 + $0xd4] sm:$0xf]
  %v68 = vld [vmem:[%s0 + $0xd8] sm:$0xf]
  %v69 = vld [vmem:[%s0 + $0xdc] sm:$0xf]
  %v70 = vld [vmem:[%s0 + $0xe0] sm:$0xf]
  %v71 = vld [vmem:[%s0 + $0xe4] sm:$0xf]
  %v72 = vld [vmem:[%s0 + $0xe8] sm:$0xf]
  %v73 = vld [vmem:[%s0 + $0xec] sm:$0xf]
  %v74 = vld [vmem:[%s0 + $0xf0] sm:$0xf]
  %v75 = vld [vmem:[%s0 + $0xf4] sm:$0xf]
  %v76 = vld [vmem:[%s0 + $0xf8] sm:$0xf]
  %v77 = vld [vmem:[%s0 + $0xfc] sm:$0xf]
  %v78 = vunpack.c.l.bf16 %v14
  %v79 = vunpack.c.l.bf16 %v15
  %v80 = vunpack.c.l.bf16 %v16
  %v81 = vunpack.c.l.bf16 %v17
  %v82 = vunpack.c.l.bf16 %v18
  %v83 = vunpack.c.l.bf16 %v19
  %v84 = vunpack.c.l.bf16 %v20
  %v85 = vunpack.c.l.bf16 %v21
  %v86 = vunpack.c.l.bf16 %v22
  %v87 = vunpack.c.l.bf16 %v23
  %v88 = vunpack.c.l.bf16 %v24
  %v89 = vunpack.c.l.bf16 %v25
  %v90 = vunpack.c.l.bf16 %v26
  %v91 = vunpack.c.l.bf16 %v27
  %v92 = vunpack.c.l.bf16 %v28
  %v93 = vunpack.c.l.bf16 %v29
  %v94 = vunpack.c.l.bf16 %v30
  %v95 = vunpack.c.l.bf16 %v31
  %v96 = vunpack.c.l.bf16 %v32
  %v97 = vunpack.c.l.bf16 %v33
  %v98 = vunpack.c.l.bf16 %v34
  %v99 = vunpack.c.l.bf16 %v35
  %v100 = vunpack.c.l.bf16 %v36
  %v101 = vunpack.c.l.bf16 %v37
  %v102 = vunpack.c.l.bf16 %v38
  %v103 = vunpack.c.l.bf16 %v39
  %v104 = vunpack.c.l.bf16 %v40
  %v105 = vunpack.c.l.bf16 %v41
  %v106 = vunpack.c.l.bf16 %v42
  %v107 = vunpack.c.l.bf16 %v43
  %v108 = vunpack.c.l.bf16 %v44
  %v109 = vunpack.c.l.bf16 %v45
  %v110 = vunpack.c.l.bf16 %v46
  %v111 = vunpack.c.l.bf16 %v47
  %v112 = vunpack.c.l.bf16 %v48
  %v113 = vunpack.c.l.bf16 %v49
  %v114 = vunpack.c.l.bf16 %v50
  %v115 = vunpack.c.l.bf16 %v51
  %v116 = vunpack.c.l.bf16 %v52
  %v117 = vunpack.c.l.bf16 %v53
  %v118 = vunpack.c.l.bf16 %v54
  %v119 = vunpack.c.l.bf16 %v55
  %v120 = vunpack.c.l.bf16 %v56
  %v121 = vunpack.c.l.bf16 %v57
  %v122 = vunpack.c.l.bf16 %v58
  %v123 = vunpack.c.l.bf16 %v59
  %v124 = vunpack.c.l.bf16 %v60
  %v125 = vunpack.c.l.bf16 %v61
  %v126 = vunpack.c.l.bf16 %v62
  %v127 = vunpack.c.l.bf16 %v63
  %v128 = vunpack.c.l.bf16 %v64
  %v129 = vunpack.c.l.bf16 %v65
  %v130 = vunpack.c.l.bf16 %v66
  %v131 = vunpack.c.l.bf16 %v67
  %v132 = vunpack.c.l.bf16 %v68
  %v133 = vunpack.c.l.bf16 %v69
  %v134 = vunpack.c.l.bf16 %v70
  %v135 = vunpack.c.l.bf16 %v71
  %v136 = vunpack.c.l.bf16 %v72
  %v137 = vunpack.c.l.bf16 %v73
  %v138 = vunpack.c.l.bf16 %v74
  %v139 = vunpack.c.l.bf16 %v75
  %v140 = vunpack.c.l.bf16 %v76
  %v141 = vunpack.c.l.bf16 %v77
  %v142 = vld [vmem:[%s1] sm:$0x1]
  %v144 = vlaneseq
  %v145 = vshrl.u32 %v144, 7
  %v146 = vsub.s32 0, %v145
  %v147 = vrot.slane %v142, %v146
  %v149 = vmul.f32 %v78, %v147
  %v150 = vmul.f32 %v79, %v147
  %v151 = vmul.f32 %v80, %v147
  %v152 = vmul.f32 %v81, %v147
  %v153 = vmul.f32 %v82, %v147
  %v154 = vmul.f32 %v83, %v147
  %v155 = vmul.f32 %v84, %v147
  %v156 = vmul.f32 %v85, %v147
  %v157 = vmul.f32 %v86, %v147
  %v158 = vmul.f32 %v87, %v147
  %v159 = vmul.f32 %v88, %v147
  %v160 = vmul.f32 %v89, %v147
  %v161 = vmul.f32 %v90, %v147
  %v162 = vmul.f32 %v91, %v147
  %v163 = vmul.f32 %v92, %v147
  %v164 = vmul.f32 %v93, %v147
  %v165 = vmul.f32 %v94, %v147
  %v166 = vmul.f32 %v95, %v147
  %v167 = vmul.f32 %v96, %v147
  %v168 = vmul.f32 %v97, %v147
  %v169 = vmul.f32 %v98, %v147
  %v170 = vmul.f32 %v99, %v147
  %v171 = vmul.f32 %v100, %v147
  %v172 = vmul.f32 %v101, %v147
  %v173 = vmul.f32 %v102, %v147
  %v174 = vmul.f32 %v103, %v147
  %v175 = vmul.f32 %v104, %v147
  %v176 = vmul.f32 %v105, %v147
  %v177 = vmul.f32 %v106, %v147
  %v178 = vmul.f32 %v107, %v147
  %v179 = vmul.f32 %v108, %v147
  %v180 = vmul.f32 %v109, %v147
  %v181 = vmul.f32 %v110, %v147
  %v182 = vmul.f32 %v111, %v147
  %v183 = vmul.f32 %v112, %v147
  %v184 = vmul.f32 %v113, %v147
  %v185 = vmul.f32 %v114, %v147
  %v186 = vmul.f32 %v115, %v147
  %v187 = vmul.f32 %v116, %v147
  %v188 = vmul.f32 %v117, %v147
  %v189 = vmul.f32 %v118, %v147
  %v190 = vmul.f32 %v119, %v147
  %v191 = vmul.f32 %v120, %v147
  %v192 = vmul.f32 %v121, %v147
  %v193 = vmul.f32 %v122, %v147
  %v194 = vmul.f32 %v123, %v147
  %v195 = vmul.f32 %v124, %v147
  %v196 = vmul.f32 %v125, %v147
  %v197 = vmul.f32 %v126, %v147
  %v198 = vmul.f32 %v127, %v147
  %v199 = vmul.f32 %v128, %v147
  %v200 = vmul.f32 %v129, %v147
  %v201 = vmul.f32 %v130, %v147
  %v202 = vmul.f32 %v131, %v147
  %v203 = vmul.f32 %v132, %v147
  %v204 = vmul.f32 %v133, %v147
  %v205 = vmul.f32 %v134, %v147
  %v206 = vmul.f32 %v135, %v147
  %v207 = vmul.f32 %v136, %v147
  %v208 = vmul.f32 %v137, %v147
  %v209 = vmul.f32 %v138, %v147
  %v210 = vmul.f32 %v139, %v147
  %v211 = vmul.f32 %v140, %v147
  %v212 = vmul.f32 %v141, %v147
  %v213 = vld [vmem:[%s2] sm:$0x1]
  %v215 = vlaneseq
  %v216 = vshrl.u32 %v215, 7
  %v217 = vsub.s32 0, %v216
  %v218 = vrot.slane %v213, %v217
  %v220 = vadd.f32 %v149, %v218
  %v221 = vadd.f32 %v150, %v218
  %v222 = vadd.f32 %v151, %v218
  %v223 = vadd.f32 %v152, %v218
  %v224 = vadd.f32 %v153, %v218
  %v225 = vadd.f32 %v154, %v218
  %v226 = vadd.f32 %v155, %v218
  %v227 = vadd.f32 %v156, %v218
  %v228 = vadd.f32 %v157, %v218
  %v229 = vadd.f32 %v158, %v218
  %v230 = vadd.f32 %v159, %v218
  %v231 = vadd.f32 %v160, %v218
  %v232 = vadd.f32 %v161, %v218
  %v233 = vadd.f32 %v162, %v218
  %v234 = vadd.f32 %v163, %v218
  %v235 = vadd.f32 %v164, %v218
  %v236 = vadd.f32 %v165, %v218
  %v237 = vadd.f32 %v166, %v218
  %v238 = vadd.f32 %v167, %v218
  %v239 = vadd.f32 %v168, %v218
  %v240 = vadd.f32 %v169, %v218
  %v241 = vadd.f32 %v170, %v218
  %v242 = vadd.f32 %v171, %v218
  %v243 = vadd.f32 %v172, %v218
  %v244 = vadd.f32 %v173, %v218
  %v245 = vadd.f32 %v174, %v218
  %v246 = vadd.f32 %v175, %v218
  %v247 = vadd.f32 %v176, %v218
  %v248 = vadd.f32 %v177, %v218
  %v249 = vadd.f32 %v178, %v218
  %v250 = vadd.f32 %v179, %v218
  %v251 = vadd.f32 %v180, %v218
  %v252 = vadd.f32 %v181, %v218
  %v253 = vadd.f32 %v182, %v218
  %v254 = vadd.f32 %v183, %v218
  %v255 = vadd.f32 %v184, %v218
  %v256 = vadd.f32 %v185, %v218
  %v257 = vadd.f32 %v186, %v218
  %v258 = vadd.f32 %v187, %v218
  %v259 = vadd.f32 %v188, %v218
  %v260 = vadd.f32 %v189, %v218
  %v261 = vadd.f32 %v190, %v218
  %v262 = vadd.f32 %v191, %v218
  %v263 = vadd.f32 %v192, %v218
  %v264 = vadd.f32 %v193, %v218
  %v265 = vadd.f32 %v194, %v218
  %v266 = vadd.f32 %v195, %v218
  %v267 = vadd.f32 %v196, %v218
  %v268 = vadd.f32 %v197, %v218
  %v269 = vadd.f32 %v198, %v218
  %v270 = vadd.f32 %v199, %v218
  %v271 = vadd.f32 %v200, %v218
  %v272 = vadd.f32 %v201, %v218
  %v273 = vadd.f32 %v202, %v218
  %v274 = vadd.f32 %v203, %v218
  %v275 = vadd.f32 %v204, %v218
  %v276 = vadd.f32 %v205, %v218
  %v277 = vadd.f32 %v206, %v218
  %v278 = vadd.f32 %v207, %v218
  %v279 = vadd.f32 %v208, %v218
  %v280 = vadd.f32 %v209, %v218
  %v281 = vadd.f32 %v210, %v218
  %v282 = vadd.f32 %v211, %v218
  %v283 = vadd.f32 %v212, %v218
  %v284 = vmax.f32 %v220, 0.0
  %v285 = vmax.f32 %v221, 0.0
  %v286 = vmax.f32 %v222, 0.0
  %v287 = vmax.f32 %v223, 0.0
  %v288 = vmax.f32 %v224, 0.0
  %v289 = vmax.f32 %v225, 0.0
  %v290 = vmax.f32 %v226, 0.0
  %v291 = vmax.f32 %v227, 0.0
  %v292 = vmax.f32 %v228, 0.0
  %v293 = vmax.f32 %v229, 0.0
  %v294 = vmax.f32 %v230, 0.0
  %v295 = vmax.f32 %v231, 0.0
  %v296 = vmax.f32 %v232, 0.0
  %v297 = vmax.f32 %v233, 0.0
  %v298 = vmax.f32 %v234, 0.0
  %v299 = vmax.f32 %v235, 0.0
  %v300 = vmax.f32 %v236, 0.0
  %v301 = vmax.f32 %v237, 0.0
  %v302 = vmax.f32 %v238, 0.0
  %v303 = vmax.f32 %v239, 0.0
  %v304 = vmax.f32 %v240, 0.0
  %v305 = vmax.f32 %v241, 0.0
  %v306 = vmax.f32 %v242, 0.0
  %v307 = vmax.f32 %v243, 0.0
  %v308 = vmax.f32 %v244, 0.0
  %v309 = vmax.f32 %v245, 0.0
  %v310 = vmax.f32 %v246, 0.0
  %v311 = vmax.f32 %v247, 0.0
  %v312 = vmax.f32 %v248, 0.0
  %v313 = vmax.f32 %v249, 0.0
  %v314 = vmax.f32 %v250, 0.0
  %v315 = vmax.f32 %v251, 0.0
  %v316 = vmax.f32 %v252, 0.0
  %v317 = vmax.f32 %v253, 0.0
  %v318 = vmax.f32 %v254, 0.0
  %v319 = vmax.f32 %v255, 0.0
  %v320 = vmax.f32 %v256, 0.0
  %v321 = vmax.f32 %v257, 0.0
  %v322 = vmax.f32 %v258, 0.0
  %v323 = vmax.f32 %v259, 0.0
  %v324 = vmax.f32 %v260, 0.0
  %v325 = vmax.f32 %v261, 0.0
  %v326 = vmax.f32 %v262, 0.0
  %v327 = vmax.f32 %v263, 0.0
  %v328 = vmax.f32 %v264, 0.0
  %v329 = vmax.f32 %v265, 0.0
  %v330 = vmax.f32 %v266, 0.0
  %v331 = vmax.f32 %v267, 0.0
  %v332 = vmax.f32 %v268, 0.0
  %v333 = vmax.f32 %v269, 0.0
  %v334 = vmax.f32 %v270, 0.0
  %v335 = vmax.f32 %v271, 0.0
  %v336 = vmax.f32 %v272, 0.0
  %v337 = vmax.f32 %v273, 0.0
  %v338 = vmax.f32 %v274, 0.0
  %v339 = vmax.f32 %v275, 0.0
  %v340 = vmax.f32 %v276, 0.0
  %v341 = vmax.f32 %v277, 0.0
  %v342 = vmax.f32 %v278, 0.0
  %v343 = vmax.f32 %v279, 0.0
  %v344 = vmax.f32 %v280, 0.0
  %v345 = vmax.f32 %v281, 0.0
  %v346 = vmax.f32 %v282, 0.0
  %v347 = vmax.f32 %v283, 0.0
  %v348 = vpack.c.bf16 %v285, %v284
  %v349 = vpack.c.bf16 %v287, %v286
  %v350 = vpack.c.bf16 %v289, %v288
  %v351 = vpack.c.bf16 %v291, %v290
  %v352 = vpack.c.bf16 %v293, %v292
  %v353 = vpack.c.bf16 %v295, %v294
  %v354 = vpack.c.bf16 %v297, %v296
  %v355 = vpack.c.bf16 %v299, %v298
  %v356 = vpack.c.bf16 %v301, %v300
  %v357 = vpack.c.bf16 %v303, %v302
  %v358 = vpack.c.bf16 %v305, %v304
  %v359 = vpack.c.bf16 %v307, %v306
  %v360 = vpack.c.bf16 %v309, %v308
  %v361 = vpack.c.bf16 %v311, %v310
  %v362 = vpack.c.bf16 %v313, %v312
  %v363 = vpack.c.bf16 %v315, %v314
  %v364 = vpack.c.bf16 %v317, %v316
  %v365 = vpack.c.bf16 %v319, %v318
  %v366 = vpack.c.bf16 %v321, %v320
  %v367 = vpack.c.bf16 %v323, %v322
  %v368 = vpack.c.bf16 %v325, %v324
  %v369 = vpack.c.bf16 %v327, %v326
  %v370 = vpack.c.bf16 %v329, %v328
  %v371 = vpack.c.bf16 %v331, %v330
  %v372 = vpack.c.bf16 %v333, %v332
  %v373 = vpack.c.bf16 %v335, %v334
  %v374 = vpack.c.bf16 %v337, %v336
  %v375 = vpack.c.bf16 %v339, %v338
  %v376 = vpack.c.bf16 %v341, %v340
  %v377 = vpack.c.bf16 %v343, %v342
  %v378 = vpack.c.bf16 %v345, %v344
  %v379 = vpack.c.bf16 %v347, %v346
  %v412 = vunpack.c.l.b16 %v348
  %v413 = vunpack.c.h.b16 %v348
  %v414 = vunpack.c.l.b16 %v349
  %v415 = vunpack.c.h.b16 %v349
  %v416 = vunpack.c.l.b16 %v350
  %v417 = vunpack.c.h.b16 %v350
  %v418 = vunpack.c.l.b16 %v351
  %v419 = vunpack.c.h.b16 %v351
  %v420 = vunpack.c.l.b16 %v352
  %v421 = vunpack.c.h.b16 %v352
  %v422 = vunpack.c.l.b16 %v353
  %v423 = vunpack.c.h.b16 %v353
  %v424 = vunpack.c.l.b16 %v354
  %v425 = vunpack.c.h.b16 %v354
  %v426 = vunpack.c.l.b16 %v355
  %v427 = vunpack.c.h.b16 %v355
  %v428 = vunpack.c.l.b16 %v356
  %v429 = vunpack.c.h.b16 %v356
  %v430 = vunpack.c.l.b16 %v357
  %v431 = vunpack.c.h.b16 %v357
  %v432 = vunpack.c.l.b16 %v358
  %v433 = vunpack.c.h.b16 %v358
  %v434 = vunpack.c.l.b16 %v359
  %v435 = vunpack.c.h.b16 %v359
  %v436 = vunpack.c.l.b16 %v360
  %v437 = vunpack.c.h.b16 %v360
  %v438 = vunpack.c.l.b16 %v361
  %v439 = vunpack.c.h.b16 %v361
  %v440 = vunpack.c.l.b16 %v362
  %v441 = vunpack.c.h.b16 %v362
  %v442 = vunpack.c.l.b16 %v363
  %v443 = vunpack.c.h.b16 %v363
  %v444 = vunpack.c.l.b16 %v364
  %v445 = vunpack.c.h.b16 %v364
  %v446 = vunpack.c.l.b16 %v365
  %v447 = vunpack.c.h.b16 %v365
  %v448 = vunpack.c.l.b16 %v366
  %v449 = vunpack.c.h.b16 %v366
  %v450 = vunpack.c.l.b16 %v367
  %v451 = vunpack.c.h.b16 %v367
  %v452 = vunpack.c.l.b16 %v368
  %v453 = vunpack.c.h.b16 %v368
  %v454 = vunpack.c.l.b16 %v369
  %v455 = vunpack.c.h.b16 %v369
  %v456 = vunpack.c.l.b16 %v370
  %v457 = vunpack.c.h.b16 %v370
  %v458 = vunpack.c.l.b16 %v371
  %v459 = vunpack.c.h.b16 %v371
  %v460 = vunpack.c.l.b16 %v372
  %v461 = vunpack.c.h.b16 %v372
  %v462 = vunpack.c.l.b16 %v373
  %v463 = vunpack.c.h.b16 %v373
  %v464 = vunpack.c.l.b16 %v374
  %v465 = vunpack.c.h.b16 %v374
  %v466 = vunpack.c.l.b16 %v375
  %v467 = vunpack.c.h.b16 %v375
  %v468 = vunpack.c.l.b16 %v376
  %v469 = vunpack.c.h.b16 %v376
  %v470 = vunpack.c.l.b16 %v377
  %v471 = vunpack.c.h.b16 %v377
  %v472 = vunpack.c.l.b16 %v378
  %v473 = vunpack.c.h.b16 %v378
  %v474 = vunpack.c.l.b16 %v379
  %v475 = vunpack.c.h.b16 %v379
  %v476 = vpack.c.b16 %v412, %v412
  %v477 = vpack.c.b16 %v413, %v413
  %v478 = vpack.c.b16 %v414, %v414
  %v479 = vpack.c.b16 %v415, %v415
  %v480 = vpack.c.b16 %v416, %v416
  %v481 = vpack.c.b16 %v417, %v417
  %v482 = vpack.c.b16 %v418, %v418
  %v483 = vpack.c.b16 %v419, %v419
  %v484 = vpack.c.b16 %v420, %v420
  %v485 = vpack.c.b16 %v421, %v421
  %v486 = vpack.c.b16 %v422, %v422
  %v487 = vpack.c.b16 %v423, %v423
  %v488 = vpack.c.b16 %v424, %v424
  %v489 = vpack.c.b16 %v425, %v425
  %v490 = vpack.c.b16 %v426, %v426
  %v491 = vpack.c.b16 %v427, %v427
  %v492 = vpack.c.b16 %v428, %v428
  %v493 = vpack.c.b16 %v429, %v429
  %v494 = vpack.c.b16 %v430, %v430
  %v495 = vpack.c.b16 %v431, %v431
  %v496 = vpack.c.b16 %v432, %v432
  %v497 = vpack.c.b16 %v433, %v433
  %v498 = vpack.c.b16 %v434, %v434
  %v499 = vpack.c.b16 %v435, %v435
  %v500 = vpack.c.b16 %v436, %v436
  %v501 = vpack.c.b16 %v437, %v437
  %v502 = vpack.c.b16 %v438, %v438
  %v503 = vpack.c.b16 %v439, %v439
  %v504 = vpack.c.b16 %v440, %v440
  %v505 = vpack.c.b16 %v441, %v441
  %v506 = vpack.c.b16 %v442, %v442
  %v507 = vpack.c.b16 %v443, %v443
  %v508 = vpack.c.b16 %v444, %v444
  %v509 = vpack.c.b16 %v445, %v445
  %v510 = vpack.c.b16 %v446, %v446
  %v511 = vpack.c.b16 %v447, %v447
  %v512 = vpack.c.b16 %v448, %v448
  %v513 = vpack.c.b16 %v449, %v449
  %v514 = vpack.c.b16 %v450, %v450
  %v515 = vpack.c.b16 %v451, %v451
  %v516 = vpack.c.b16 %v452, %v452
  %v517 = vpack.c.b16 %v453, %v453
  %v518 = vpack.c.b16 %v454, %v454
  %v519 = vpack.c.b16 %v455, %v455
  %v520 = vpack.c.b16 %v456, %v456
  %v521 = vpack.c.b16 %v457, %v457
  %v522 = vpack.c.b16 %v458, %v458
  %v523 = vpack.c.b16 %v459, %v459
  %v524 = vpack.c.b16 %v460, %v460
  %v525 = vpack.c.b16 %v461, %v461
  %v526 = vpack.c.b16 %v462, %v462
  %v527 = vpack.c.b16 %v463, %v463
  %v528 = vpack.c.b16 %v464, %v464
  %v529 = vpack.c.b16 %v465, %v465
  %v530 = vpack.c.b16 %v466, %v466
  %v531 = vpack.c.b16 %v467, %v467
  %v532 = vpack.c.b16 %v468, %v468
  %v533 = vpack.c.b16 %v469, %v469
  %v534 = vpack.c.b16 %v470, %v470
  %v535 = vpack.c.b16 %v471, %v471
  %v536 = vpack.c.b16 %v472, %v472
  %v537 = vpack.c.b16 %v473, %v473
  %v538 = vpack.c.b16 %v474, %v474
  %v539 = vpack.c.b16 %v475, %v475
  %604 = vst [vmem:[%s3] sm:$0xf] %v476
  %605 = vst [vmem:[%s3 + $0x4] sm:$0xf] %v477
  %606 = vst [vmem:[%s3 + $0x8] sm:$0xf] %v478
  %607 = vst [vmem:[%s3 + $0xc] sm:$0xf] %v479
  %608 = vst [vmem:[%s3 + $0x10] sm:$0xf] %v480
  %609 = vst [vmem:[%s3 + $0x14] sm:$0xf] %v481
  %610 = vst [vmem:[%s3 + $0x18] sm:$0xf] %v482
  %611 = vst [vmem:[%s3 + $0x1c] sm:$0xf] %v483
  %612 = vst [vmem:[%s3 + $0x20] sm:$0xf] %v484
  %613 = vst [vmem:[%s3 + $0x24] sm:$0xf] %v485
  %614 = vst [vmem:[%s3 + $0x28] sm:$0xf] %v486
  %615 = vst [vmem:[%s3 + $0x2c] sm:$0xf] %v487
  %616 = vst [vmem:[%s3 + $0x30] sm:$0xf] %v488
  %617 = vst [vmem:[%s3 + $0x34] sm:$0xf] %v489
  %618 = vst [vmem:[%s3 + $0x38] sm:$0xf] %v490
  %619 = vst [vmem:[%s3 + $0x3c] sm:$0xf] %v491
  %620 = vst [vmem:[%s3 + $0x40] sm:$0xf] %v492
  %621 = vst [vmem:[%s3 + $0x44] sm:$0xf] %v493
  %622 = vst [vmem:[%s3 + $0x48] sm:$0xf] %v494
  %623 = vst [vmem:[%s3 + $0x4c] sm:$0xf] %v495
  %624 = vst [vmem:[%s3 + $0x50] sm:$0xf] %v496
  %625 = vst [vmem:[%s3 + $0x54] sm:$0xf] %v497
  %626 = vst [vmem:[%s3 + $0x58] sm:$0xf] %v498
  %627 = vst [vmem:[%s3 + $0x5c] sm:$0xf] %v499
  %628 = vst [vmem:[%s3 + $0x60] sm:$0xf] %v500
  %629 = vst [vmem:[%s3 + $0x64] sm:$0xf] %v501
  %630 = vst [vmem:[%s3 + $0x68] sm:$0xf] %v502
  %631 = vst [vmem:[%s3 + $0x6c] sm:$0xf] %v503
  %632 = vst [vmem:[%s3 + $0x70] sm:$0xf] %v504
  %633 = vst [vmem:[%s3 + $0x74] sm:$0xf] %v505
  %634 = vst [vmem:[%s3 + $0x78] sm:$0xf] %v506
  %635 = vst [vmem:[%s3 + $0x7c] sm:$0xf] %v507
  %636 = vst [vmem:[%s3 + $0x80] sm:$0xf] %v508
  %637 = vst [vmem:[%s3 + $0x84] sm:$0xf] %v509
  %638 = vst [vmem:[%s3 + $0x88] sm:$0xf] %v510
  %639 = vst [vmem:[%s3 + $0x8c] sm:$0xf] %v511
  %640 = vst [vmem:[%s3 + $0x90] sm:$0xf] %v512
  %641 = vst [vmem:[%s3 + $0x94] sm:$0xf] %v513
  %642 = vst [vmem:[%s3 + $0x98] sm:$0xf] %v514
  %643 = vst [vmem:[%s3 + $0x9c] sm:$0xf] %v515
  %644 = vst [vmem:[%s3 + $0xa0] sm:$0xf] %v516
  %645 = vst [vmem:[%s3 + $0xa4] sm:$0xf] %v517
  %646 = vst [vmem:[%s3 + $0xa8] sm:$0xf] %v518
  %647 = vst [vmem:[%s3 + $0xac] sm:$0xf] %v519
  %648 = vst [vmem:[%s3 + $0xb0] sm:$0xf] %v520
  %649 = vst [vmem:[%s3 + $0xb4] sm:$0xf] %v521
  %650 = vst [vmem:[%s3 + $0xb8] sm:$0xf] %v522
  %651 = vst [vmem:[%s3 + $0xbc] sm:$0xf] %v523
  %652 = vst [vmem:[%s3 + $0xc0] sm:$0xf] %v524
  %653 = vst [vmem:[%s3 + $0xc4] sm:$0xf] %v525
  %654 = vst [vmem:[%s3 + $0xc8] sm:$0xf] %v526
  %655 = vst [vmem:[%s3 + $0xcc] sm:$0xf] %v527
  %656 = vst [vmem:[%s3 + $0xd0] sm:$0xf] %v528
  %657 = vst [vmem:[%s3 + $0xd4] sm:$0xf] %v529
  %658 = vst [vmem:[%s3 + $0xd8] sm:$0xf] %v530
  %659 = vst [vmem:[%s3 + $0xdc] sm:$0xf] %v531
  %660 = vst [vmem:[%s3 + $0xe0] sm:$0xf] %v532
  %661 = vst [vmem:[%s3 + $0xe4] sm:$0xf] %v533
  %662 = vst [vmem:[%s3 + $0xe8] sm:$0xf] %v534
  %663 = vst [vmem:[%s3 + $0xec] sm:$0xf] %v535
  %664 = vst [vmem:[%s3 + $0xf0] sm:$0xf] %v536
  %665 = vst [vmem:[%s3 + $0xf4] sm:$0xf] %v537
  %666 = vst [vmem:[%s3 + $0xf8] sm:$0xf] %v538
  %667 = vst [vmem:[%s3 + $0xfc] sm:$0xf] %v539
  // Predicated region
  $region14: #{generator_forward.14} parent=0 // pred_check
    _
  $region15: #{generator_forward.14} parent=0 // pred_check_branch
    %669 = sbr.rel (0) target = $region17
  $region16: #{generator_forward.14} parent=0 // pred_region
    _
  $region17: #{generator_forward.14} parent=0 // pred_fallthru
    _
  // Predicated region
  $region18: #{generator_forward.14} parent=0 // pred_check
    _
  $region19: #{generator_forward.14} parent=0 // pred_check_branch
    %671 = sbr.rel (0) target = $region21
  $region20: #{generator_forward.14} parent=0 // pred_region
    _
  $region21: #{generator_forward.14} parent=0 // pred_fallthru
    _

// kernel: generator_forward.15
$region0: #{generator_forward.15}
  #allocation0 [shape = 'u32[]', space=smem, size = 0x4, offset = 0x4, fixed_abs, tag = 'smem constant byte address 0x4 - core index']
  #allocation1 [shape = 'u32[144,128]{1,0:T(1,128)}', space=vmem, size = 0x12000, scoped, tag = 'internal scratch']
  %s0 = inlined_call_operand.vmem [shape: bf16[4,512,512], index: 0, kind: input, shape index: {}]
  %s1 = inlined_call_operand.vmem [shape: bf16[4,512,64], index: 1, kind: input, shape index: {}]
  %s2 = inlined_call_operand.vmem [shape: bf16[2048,64], index: 2, kind: output, shape index: {0}]
  %s3 = inlined_call_operand.vmem [shape: f32[32,64], index: 3, kind: output, shape index: {1}]
  %s4 = inlined_call_operand.vmem [shape: f32[32,64], index: 4, kind: output, shape index: {2}]
  %5 = xla_tuple %s2, %s3, %s4
  %s6 = sld [smem:[#allocation0]]
  $region57: #{generator_forward.15} parent=0
    _
  %s8 = ssub.s32 1, %s6
  %s9 = scalar_select 0, %s8, %s6
  loop: start=0, step=1, limit=6
  $region2: #{generator_forward.15} parent=0 // loop_pre_header
    _
  $region3: #{generator_forward.15} parent=0 // loop_header
    %s11 = sphi 0, %s15
    %p12 = scmp.ge.s32.totalorder %s11, 6
    %s18 = sphi 0, %s30
    %s19 = sphi 0, %s26
    %s20 = sphi 0, %s18
    %s21 = sphi 0, %s19
    %s22 = sphi 0, %s20
    %s23 = sphi 0, %s21
    %s35 = sphi 0, %s37
    %s38 = sphi 0, %s35
    %s39 = sphi 0, %s38
    %s55 = sphi 0, %s39
    %s61 = sphi 0, %s63
    %s64 = sphi 0, %s61
    %s65 = sphi 0, %s64
    %s81 = sphi 0, %s65
    %s89 = sphi 0, %s91
    %s92 = sphi 0, %s89
    %s93 = sphi 0, %s92
    %s109 = sphi 0, %s93
    %s117 = sphi 0, %s119
    %s120 = sphi 0, %s117
    %s121 = sphi 0, %s120
    %s137 = sphi 0, %s121
    %s145 = sphi 0, %s147
    %s148 = sphi 0, %s145
    %s149 = sphi 0, %s148
    %s165 = sphi 0, %s149
  $region4: #{generator_forward.15} parent=0 // loop_header_branch
    %14 = sbr.rel (%p12) target = $region8
  $region5: #{generator_forward.15} parent=0 // loop_body
    %s16 = ssub.s32 %s11, 1
    %s17 = ssub.s32 %s11, 2
    %s24 = sadd.s32 1, %s19
    %p25 = scmp.ge.s32.totalorder %s24, 1
    %s26 = scalar_select %p25, 0, %s24
    %s27 = sadd.s32 1, %s18
    %s28 = scalar_select %p25, %s27, %s18
    %p29 = scmp.ge.s32.totalorder %s28, 4
    %s30 = scalar_select %p29, 0, %s28
    %s31 = ssub.s32 %s18, %s30
    %s32 = ssub.s32 %s19, %s26
    %s33 = sor.u32 %s31, %s32
    %p34 = scmp.eq.s32.totalorder %s33, 0
    %s36 = sadd.s32 %s35, 1
    %s37 = scalar_select %p34, %s35, %s36
    %p40 = pneg %p34
    %p41 = scmp.eq.s32.totalorder %s11, 3
    %p42 = por %p40, %p41
    %p43 = scmp.ne.s32.totalorder %s35, %s38
    %p44 = scmp.eq.s32.totalorder %s11, 0
    %p45 = por %p43, %p44
    %p46 = scmp.ne.s32.totalorder %s35, %s38
    %p47 = scmp.eq.s32.totalorder %s16, 3
    %p48 = por %p46, %p47
    %p49 = scmp.ne.s32.totalorder %s38, %s39
    %p50 = scmp.eq.s32.totalorder %s16, 0
    %p51 = por %p49, %p50
    %p52 = scmp.ne.s32.totalorder %s38, %s39
    %p53 = scmp.eq.s32.totalorder %s17, 3
    %p54 = por %p52, %p53
    %p56 = scmp.ne.s32.totalorder %s39, %s55
    %p57 = scmp.eq.s32.totalorder %s17, 0
    %p58 = por %p56, %p57
    %s59 = ssub.s32 %s18, %s30
    %p60 = scmp.eq.s32.totalorder %s59, 0
    %s62 = sadd.s32 %s61, 1
    %s63 = scalar_select %p60, %s61, %s62
    %p66 = pneg %p60
    %p67 = scmp.eq.s32.totalorder %s11, 3
    %p68 = por %p66, %p67
    %p69 = scmp.ne.s32.totalorder %s61, %s64
    %p70 = scmp.eq.s32.totalorder %s11, 0
    %p71 = por %p69, %p70
    %p72 = scmp.ne.s32.totalorder %s61, %s64
    %p73 = scmp.eq.s32.totalorder %s16, 3
    %p74 = por %p72, %p73
    %p75 = scmp.ne.s32.totalorder %s64, %s65
    %p76 = scmp.eq.s32.totalorder %s16, 0
    %p77 = por %p75, %p76
    %p78 = scmp.ne.s32.totalorder %s64, %s65
    %p79 = scmp.eq.s32.totalorder %s17, 3
    %p80 = por %p78, %p79
    %p82 = scmp.ne.s32.totalorder %s65, %s81
    %p83 = scmp.eq.s32.totalorder %s17, 0
    %p84 = por %p82, %p83
    %s85 = sadd.s32 %s18, %s19
    %s86 = sadd.s32 %s30, %s26
    %s87 = ssub.s32 %s85, %s86
    %p88 = scmp.eq.s32.totalorder %s87, 0
    %s90 = sadd.s32 %s89, 1
    %s91 = scalar_select %p88, %s89, %s90
    %p94 = pneg %p88
    %p95 = scmp.eq.s32.totalorder %s11, 3
    %p96 = por %p94, %p95
    %p97 = scmp.ne.s32.totalorder %s89, %s92
    %p98 = scmp.eq.s32.totalorder %s11, 0
    %p99 = por %p97, %p98
    %p100 = scmp.ne.s32.totalorder %s89, %s92
    %p101 = scmp.eq.s32.totalorder %s16, 3
    %p102 = por %p100, %p101
    %p103 = scmp.ne.s32.totalorder %s92, %s93
    %p104 = scmp.eq.s32.totalorder %s16, 0
    %p105 = por %p103, %p104
    %p106 = scmp.ne.s32.totalorder %s92, %s93
    %p107 = scmp.eq.s32.totalorder %s17, 3
    %p108 = por %p106, %p107
    %p110 = scmp.ne.s32.totalorder %s93, %s109
    %p111 = scmp.eq.s32.totalorder %s17, 0
    %p112 = por %p110, %p111
    %s113 = sadd.s32 %s18, %s19
    %s114 = sadd.s32 %s30, %s26
    %s115 = ssub.s32 %s113, %s114
    %p116 = scmp.eq.s32.totalorder %s115, 0
    %s118 = sadd.s32 %s117, 1
    %s119 = scalar_select %p116, %s117, %s118
    %p122 = pneg %p116
    %p123 = scmp.eq.s32.totalorder %s11, 3
    %p124 = por %p122, %p123
    %p125 = scmp.ne.s32.totalorder %s117, %s120
    %p126 = scmp.eq.s32.totalorder %s11, 0
    %p127 = por %p125, %p126
    %p128 = scmp.ne.s32.totalorder %s117, %s120
    %p129 = scmp.eq.s32.totalorder %s16, 3
    %p130 = por %p128, %p129
    %p131 = scmp.ne.s32.totalorder %s120, %s121
    %p132 = scmp.eq.s32.totalorder %s16, 0
    %p133 = por %p131, %p132
    %p134 = scmp.ne.s32.totalorder %s120, %s121
    %p135 = scmp.eq.s32.totalorder %s17, 3
    %p136 = por %p134, %p135
    %p138 = scmp.ne.s32.totalorder %s121, %s137
    %p139 = scmp.eq.s32.totalorder %s17, 0
    %p140 = por %p138, %p139
    %s141 = sadd.s32 %s18, %s19
    %s142 = sadd.s32 %s30, %s26
    %s143 = ssub.s32 %s141, %s142
    %p144 = scmp.eq.s32.totalorder %s143, 0
    %s146 = sadd.s32 %s145, 1
    %s147 = scalar_select %p144, %s145, %s146
    %p150 = pneg %p144
    %p151 = scmp.eq.s32.totalorder %s11, 3
    %p152 = por %p150, %p151
    %p153 = scmp.ne.s32.totalorder %s145, %s148
    %p154 = scmp.eq.s32.totalorder %s11, 0
    %p155 = por %p153, %p154
    %p156 = scmp.ne.s32.totalorder %s145, %s148
    %p157 = scmp.eq.s32.totalorder %s16, 3
    %p158 = por %p156, %p157
    %p159 = scmp.ne.s32.totalorder %s148, %s149
    %p160 = scmp.eq.s32.totalorder %s16, 0
    %p161 = por %p159, %p160
    %p162 = scmp.ne.s32.totalorder %s148, %s149
    %p163 = scmp.eq.s32.totalorder %s17, 3
    %p164 = por %p162, %p163
    %p166 = scmp.ne.s32.totalorder %s149, %s165
    %p167 = scmp.eq.s32.totalorder %s17, 0
    %p168 = por %p166, %p167
    %p169 = scmp.le.s32.totalorder 1, %s11
    %p170 = scmp.lt.s32.totalorder %s11, 5
    %p171 = pnand %p169, %p170
    %p172 = pneg %p171
    // Predicated region
    $region9: #{generator_forward.15} parent=5 // pred_check
      _
    $region10: #{generator_forward.15} parent=5 // pred_check_branch
      %174 = sbr.rel (%p171) target = $region12
    $region11: #{generator_forward.15} parent=5 // pred_region
      %s175 = ssub.s32 %s11, 1
    $region12: #{generator_forward.15} parent=5 // pred_fallthru
      _
    %p176 = scmp.lt.s32.totalorder %s11, 4
    // Predicated region
    $region13: #{generator_forward.15} parent=5 // pred_check
      %p177 = pneg %p176
    $region14: #{generator_forward.15} parent=5 // pred_check_branch
      %179 = sbr.rel (%p177) target = $region16
    $region15: #{generator_forward.15} parent=5 // pred_region
      // Predicated region
      $region17: #{generator_forward.15} parent=15 // pred_check
        %p180 = pneg %p45
      $region18: #{generator_forward.15} parent=15 // pred_check_branch
        %182 = sbr.rel (%p180) target = $region20
      $region19: #{generator_forward.15} parent=15 // pred_region
        %s183 = smul.u32 64, %s19
        %p184 = scmp.lt.s32.totalorder %s18, 3
        %s185 = scalar_select %p184, %s18, 3
        %p186 = scmp.lt.s32.totalorder %s183, 63
        %s187 = scalar_select %p186, %s183, 63
        %s188 = smul.addr %s187, 4
        %s189 = smul.addr %s185, 256
        %s190 = sadd.s32 %s188, %s189
        %s191 = smul.addr %s190, 4
        %s192 = scalar_lea.vmem %s0, %s191
        %s193 = smul.u32 64, %s19
      $region20: #{generator_forward.15} parent=15 // pred_fallthru
        _
      // Predicated region
      $region21: #{generator_forward.15} parent=15 // pred_check
        %p194 = pneg %p71
      $region22: #{generator_forward.15} parent=15 // pred_check_branch
        %196 = sbr.rel (%p194) target = $region24
      $region23: #{generator_forward.15} parent=15 // pred_region
        %p197 = scmp.lt.s32.totalorder %s18, 3
        %s198 = scalar_select %p197, %s18, 3
        %s199 = smul.addr %s198, 64
        %s200 = smul.addr %s199, 4
        %s201 = scalar_lea.vmem %s1, %s200
      $region24: #{generator_forward.15} parent=15 // pred_fallthru
        _
    $region16: #{generator_forward.15} parent=5 // pred_fallthru
      _
    %p202 = scmp.le.s32.totalorder 1, %s11
    %p203 = scmp.lt.s32.totalorder %s11, 5
    %p204 = pnand %p202, %p203
    %p205 = pneg %p204
    // Predicated region
    $region25: #{generator_forward.15} parent=5 // pred_check
      _
    $region26: #{generator_forward.15} parent=5 // pred_check_branch
      %207 = sbr.rel (%p204) target = $region28
    $region27: #{generator_forward.15} parent=5 // pred_region
      %s208 = ssub.s32 %s11, 1
      %s209 = smul.u32 64, %s21
      %p210 = scmp.lt.s32.totalorder %s20, 3
      %s211 = scalar_select %p210, %s20, 3
      %p212 = scmp.lt.s32.totalorder %s209, 63
      %s213 = scalar_select %p212, %s209, 63
      %s214 = smul.addr %s213, 4
      %s215 = smul.addr %s211, 256
      %s216 = sadd.s32 %s214, %s215
      %s217 = smul.addr %s216, 4
      %s218 = scalar_lea.vmem %s0, %s217
      %p219 = pneg %p51
      %p220 = pneg %p48
      %p221 = scmp.lt.s32.totalorder %s20, 3
      %s222 = scalar_select %p221, %s20, 3
      %s223 = smul.addr %s222, 64
      %s224 = smul.addr %s223, 4
      %s225 = scalar_lea.vmem %s1, %s224
      %p226 = pneg %p77
      %p227 = pneg %p74
      %p228 = pneg %p105
      %p229 = pneg %p102
      %s230 = sadd.s32 %s20, %s21
      %s231 = smul.u32 64, %s230
      %p232 = scmp.lt.s32.totalorder %s231, 255
      %s233 = scalar_select %p232, %s231, 255
      %s234 = smul.addr %s233, 4
      %s235 = scalar_lea.vmem %s2, %s234
      %p236 = pneg %p133
      %p237 = pneg %p130
      %s238 = sadd.s32 %s20, %s21
      %p239 = scmp.lt.s32.totalorder %s238, 3
      %s240 = scalar_select %p239, %s238, 3
      %s241 = smul.addr %s240, 8
      %s242 = scalar_lea.vmem %s3, %s241
      %p243 = pneg %p161
      %p244 = pneg %p158
      %s245 = sadd.s32 %s20, %s21
      %p246 = scmp.lt.s32.totalorder %s245, 3
      %s247 = scalar_select %p246, %s245, 3
      %s248 = smul.addr %s247, 8
      %s249 = scalar_lea.vmem %s4, %s248
      %s250 = smul.u32 64, %s21
      %p251 = scmp.lt.s32.totalorder %s20, 3
      %s252 = scalar_select %p251, %s20, 3
      %p253 = scmp.lt.s32.totalorder %s250, 63
      %s254 = scalar_select %p253, %s250, 63
      %s255 = smul.addr %s254, 4
      %s256 = smul.addr %s252, 256
      %s257 = sadd.s32 %s255, %s256
      %s258 = smul.addr %s257, 4
      %s259 = scalar_lea.vmem %s0, %s258
      %s260 = smul.u32 64, %s21
      %p261 = scmp.lt.s32.totalorder %s20, 3
      %s262 = scalar_select %p261, %s20, 3
      %s263 = smul.addr %s262, 64
      %s264 = smul.addr %s263, 4
      %s265 = scalar_lea.vmem %s1, %s264
      %s266 = sadd.s32 %s20, %s21
      %s267 = smul.u32 64, %s266
      %p268 = scmp.lt.s32.totalorder %s267, 255
      %s269 = scalar_select %p268, %s267, 255
      %s270 = smul.addr %s269, 4
      %s271 = scalar_lea.vmem %s2, %s270
      %s272 = sadd.s32 %s20, %s21
      %s273 = smul.u32 64, %s272
      %s274 = sadd.s32 %s20, %s21
      %p275 = scmp.lt.s32.totalorder %s274, 3
      %s276 = scalar_select %p275, %s274, 3
      %s277 = smul.addr %s276, 8
      %s278 = scalar_lea.vmem %s3, %s277
      %s279 = sadd.s32 %s20, %s21
      %s280 = sadd.s32 %s20, %s21
      %p281 = scmp.lt.s32.totalorder %s280, 3
      %s282 = scalar_select %p281, %s280, 3
      %s283 = smul.addr %s282, 8
      %s284 = scalar_lea.vmem %s4, %s283
      %s285 = sadd.s32 %s20, %s21
      %v287 = vld [vmem:[%s259] sm:$0xff]
      %v288 = vld [vmem:[%s259 + $0x8] sm:$0xff]
      %v289 = vld [vmem:[%s259 + $0x10] sm:$0xff]
      %v290 = vld [vmem:[%s259 + $0x18] sm:$0xff]
      %v291 = vld [vmem:[%s259 + $0x20] sm:$0xff]
      %v292 = vld [vmem:[%s259 + $0x28] sm:$0xff]
      %v293 = vld [vmem:[%s259 + $0x30] sm:$0xff]
      %v294 = vld [vmem:[%s259 + $0x38] sm:$0xff]
      %v295 = vld [vmem:[%s259 + $0x40] sm:$0xff]
      %v296 = vld [vmem:[%s259 + $0x48] sm:$0xff]
      %v297 = vld [vmem:[%s259 + $0x50] sm:$0xff]
      %v298 = vld [vmem:[%s259 + $0x58] sm:$0xff]
      %v299 = vld [vmem:[%s259 + $0x60] sm:$0xff]
      %v300 = vld [vmem:[%s259 + $0x68] sm:$0xff]
      %v301 = vld [vmem:[%s259 + $0x70] sm:$0xff]
      %v302 = vld [vmem:[%s259 + $0x78] sm:$0xff]
      %v303 = vld [vmem:[%s259 + $0x80] sm:$0xff]
      %v304 = vld [vmem:[%s259 + $0x88] sm:$0xff]
      %v305 = vld [vmem:[%s259 + $0x90] sm:$0xff]
      %v306 = vld [vmem:[%s259 + $0x98] sm:$0xff]
      %v307 = vld [vmem:[%s259 + $0xa0] sm:$0xff]
      %v308 = vld [vmem:[%s259 + $0xa8] sm:$0xff]
      %v309 = vld [vmem:[%s259 + $0xb0] sm:$0xff]
      %v310 = vld [vmem:[%s259 + $0xb8] sm:$0xff]
      %v311 = vld [vmem:[%s259 + $0xc0] sm:$0xff]
      %v312 = vld [vmem:[%s259 + $0xc8] sm:$0xff]
      %v313 = vld [vmem:[%s259 + $0xd0] sm:$0xff]
      %v314 = vld [vmem:[%s259 + $0xd8] sm:$0xff]
      %v315 = vld [vmem:[%s259 + $0xe0] sm:$0xff]
      %v316 = vld [vmem:[%s259 + $0xe8] sm:$0xff]
      %v317 = vld [vmem:[%s259 + $0xf0] sm:$0xff]
      %v318 = vld [vmem:[%s259 + $0xf8] sm:$0xff]
      %v319 = vld [vmem:[%s259 + $0x100] sm:$0xff]
      %v320 = vld [vmem:[%s259 + $0x108] sm:$0xff]
      %v321 = vld [vmem:[%s259 + $0x110] sm:$0xff]
      %v322 = vld [vmem:[%s259 + $0x118] sm:$0xff]
      %v323 = vld [vmem:[%s259 + $0x120] sm:$0xff]
      %v324 = vld [vmem:[%s259 + $0x128] sm:$0xff]
      %v325 = vld [vmem:[%s259 + $0x130] sm:$0xff]
      %v326 = vld [vmem:[%s259 + $0x138] sm:$0xff]
      %v327 = vld [vmem:[%s259 + $0x140] sm:$0xff]
      %v328 = vld [vmem:[%s259 + $0x148] sm:$0xff]
      %v329 = vld [vmem:[%s259 + $0x150] sm:$0xff]
      %v330 = vld [vmem:[%s259 + $0x158] sm:$0xff]
      %v331 = vld [vmem:[%s259 + $0x160] sm:$0xff]
      %v332 = vld [vmem:[%s259 + $0x168] sm:$0xff]
      %v333 = vld [vmem:[%s259 + $0x170] sm:$0xff]
      %v334 = vld [vmem:[%s259 + $0x178] sm:$0xff]
      %v335 = vld [vmem:[%s259 + $0x180] sm:$0xff]
      %v336 = vld [vmem:[%s259 + $0x188] sm:$0xff]
      %v337 = vld [vmem:[%s259 + $0x190] sm:$0xff]
      %v338 = vld [vmem:[%s259 + $0x198] sm:$0xff]
      %v339 = vld [vmem:[%s259 + $0x1a0] sm:$0xff]
      %v340 = vld [vmem:[%s259 + $0x1a8] sm:$0xff]
      %v341 = vld [vmem:[%s259 + $0x1b0] sm:$0xff]
      %v342 = vld [vmem:[%s259 + $0x1b8] sm:$0xff]
      %v343 = vld [vmem:[%s259 + $0x1c0] sm:$0xff]
      %v344 = vld [vmem:[%s259 + $0x1c8] sm:$0xff]
      %v345 = vld [vmem:[%s259 + $0x1d0] sm:$0xff]
      %v346 = vld [vmem:[%s259 + $0x1d8] sm:$0xff]
      %v347 = vld [vmem:[%s259 + $0x1e0] sm:$0xff]
      %v348 = vld [vmem:[%s259 + $0x1e8] sm:$0xff]
      %v349 = vld [vmem:[%s259 + $0x1f0] sm:$0xff]
      %v350 = vld [vmem:[%s259 + $0x1f8] sm:$0xff]
      %v351 = vld [vmem:[%s259 + $0x200] sm:$0xff]
      %v352 = vld [vmem:[%s259 + $0x208] sm:$0xff]
      %v353 = vld [vmem:[%s259 + $0x210] sm:$0xff]
      %v354 = vld [vmem:[%s259 + $0x218] sm:$0xff]
      %v355 = vld [vmem:[%s259 + $0x220] sm:$0xff]
      %v356 = vld [vmem:[%s259 + $0x228] sm:$0xff]
      %v357 = vld [vmem:[%s259 + $0x230] sm:$0xff]
      %v358 = vld [vmem:[%s259 + $0x238] sm:$0xff]
      %v359 = vld [vmem:[%s259 + $0x240] sm:$0xff]
      %v360 = vld [vmem:[%s259 + $0x248] sm:$0xff]
      %v361 = vld [vmem:[%s259 + $0x250] sm:$0xff]
      %v362 = vld [vmem:[%s259 + $0x258] sm:$0xff]
      %v363 = vld [vmem:[%s259 + $0x260] sm:$0xff]
      %v364 = vld [vmem:[%s259 + $0x268] sm:$0xff]
      %v365 = vld [vmem:[%s259 + $0x270] sm:$0xff]
      %v366 = vld [vmem:[%s259 + $0x278] sm:$0xff]
      %v367 = vld [vmem:[%s259 + $0x280] sm:$0xff]
      %v368 = vld [vmem:[%s259 + $0x288] sm:$0xff]
      %v369 = vld [vmem:[%s259 + $0x290] sm:$0xff]
      %v370 = vld [vmem:[%s259 + $0x298] sm:$0xff]
      %v371 = vld [vmem:[%s259 + $0x2a0] sm:$0xff]
      %v372 = vld [vmem:[%s259 + $0x2a8] sm:$0xff]
      %v373 = vld [vmem:[%s259 + $0x2b0] sm:$0xff]
      %v374 = vld [vmem:[%s259 + $0x2b8] sm:$0xff]
      %v375 = vld [vmem:[%s259 + $0x2c0] sm:$0xff]
      %v376 = vld [vmem:[%s259 + $0x2c8] sm:$0xff]
      %v377 = vld [vmem:[%s259 + $0x2d0] sm:$0xff]
      %v378 = vld [vmem:[%s259 + $0x2d8] sm:$0xff]
      %v379 = vld [vmem:[%s259 + $0x2e0] sm:$0xff]
      %v380 = vld [vmem:[%s259 + $0x2e8] sm:$0xff]
      %v381 = vld [vmem:[%s259 + $0x2f0] sm:$0xff]
      %v382 = vld [vmem:[%s259 + $0x2f8] sm:$0xff]
      %v383 = vld [vmem:[%s259 + $0x300] sm:$0xff]
      %v384 = vld [vmem:[%s259 + $0x308] sm:$0xff]
      %v385 = vld [vmem:[%s259 + $0x310] sm:$0xff]
      %v386 = vld [vmem:[%s259 + $0x318] sm:$0xff]
      %v387 = vld [vmem:[%s259 + $0x320] sm:$0xff]
      %v388 = vld [vmem:[%s259 + $0x328] sm:$0xff]
      %v389 = vld [vmem:[%s259 + $0x330] sm:$0xff]
      %v390 = vld [vmem:[%s259 + $0x338] sm:$0xff]
      %v391 = vld [vmem:[%s259 + $0x340] sm:$0xff]
      %v392 = vld [vmem:[%s259 + $0x348] sm:$0xff]
      %v393 = vld [vmem:[%s259 + $0x350] sm:$0xff]
      %v394 = vld [vmem:[%s259 + $0x358] sm:$0xff]
      %v395 = vld [vmem:[%s259 + $0x360] sm:$0xff]
      %v396 = vld [vmem:[%s259 + $0x368] sm:$0xff]
      %v397 = vld [vmem:[%s259 + $0x370] sm:$0xff]
      %v398 = vld [vmem:[%s259 + $0x378] sm:$0xff]
      %v399 = vld [vmem:[%s259 + $0x380] sm:$0xff]
      %v400 = vld [vmem:[%s259 + $0x388] sm:$0xff]
      %v401 = vld [vmem:[%s259 + $0x390] sm:$0xff]
      %v402 = vld [vmem:[%s259 + $0x398] sm:$0xff]
      %v403 = vld [vmem:[%s259 + $0x3a0] sm:$0xff]
      %v404 = vld [vmem:[%s259 + $0x3a8] sm:$0xff]
      %v405 = vld [vmem:[%s259 + $0x3b0] sm:$0xff]
      %v406 = vld [vmem:[%s259 + $0x3b8] sm:$0xff]
      %v407 = vld [vmem:[%s259 + $0x3c0] sm:$0xff]
      %v408 = vld [vmem:[%s259 + $0x3c8] sm:$0xff]
      %v409 = vld [vmem:[%s259 + $0x3d0] sm:$0xff]
      %v410 = vld [vmem:[%s259 + $0x3d8] sm:$0xff]
      %v411 = vld [vmem:[%s259 + $0x3e0] sm:$0xff]
      %v412 = vld [vmem:[%s259 + $0x3e8] sm:$0xff]
      %v413 = vld [vmem:[%s259 + $0x3f0] sm:$0xff]
      %v414 = vld [vmem:[%s259 + $0x3f8] sm:$0xff]
      %v415 = vld [vmem:[%s265] sm:$0xf]
      %v416 = vld [vmem:[%s265 + $0x4] sm:$0xf]
      %v417 = vld [vmem:[%s265 + $0x8] sm:$0xf]
      %v418 = vld [vmem:[%s265 + $0xc] sm:$0xf]
      %v419 = vld [vmem:[%s265 + $0x10] sm:$0xf]
      %v420 = vld [vmem:[%s265 + $0x14] sm:$0xf]
      %v421 = vld [vmem:[%s265 + $0x18] sm:$0xf]
      %v422 = vld [vmem:[%s265 + $0x1c] sm:$0xf]
      %v423 = vld [vmem:[%s265 + $0x20] sm:$0xf]
      %v424 = vld [vmem:[%s265 + $0x24] sm:$0xf]
      %v425 = vld [vmem:[%s265 + $0x28] sm:$0xf]
      %v426 = vld [vmem:[%s265 + $0x2c] sm:$0xf]
      %v427 = vld [vmem:[%s265 + $0x30] sm:$0xf]
      %v428 = vld [vmem:[%s265 + $0x34] sm:$0xf]
      %v429 = vld [vmem:[%s265 + $0x38] sm:$0xf]
      %v430 = vld [vmem:[%s265 + $0x3c] sm:$0xf]
      %v431 = vld [vmem:[%s265 + $0x40] sm:$0xf]
      %v432 = vld [vmem:[%s265 + $0x44] sm:$0xf]
      %v433 = vld [vmem:[%s265 + $0x48] sm:$0xf]
      %v434 = vld [vmem:[%s265 + $0x4c] sm:$0xf]
      %v435 = vld [vmem:[%s265 + $0x50] sm:$0xf]
      %v436 = vld [vmem:[%s265 + $0x54] sm:$0xf]
      %v437 = vld [vmem:[%s265 + $0x58] sm:$0xf]
      %v438 = vld [vmem:[%s265 + $0x5c] sm:$0xf]
      %v439 = vld [vmem:[%s265 + $0x60] sm:$0xf]
      %v440 = vld [vmem:[%s265 + $0x64] sm:$0xf]
      %v441 = vld [vmem:[%s265 + $0x68] sm:$0xf]
      %v442 = vld [vmem:[%s265 + $0x6c] sm:$0xf]
      %v443 = vld [vmem:[%s265 + $0x70] sm:$0xf]
      %v444 = vld [vmem:[%s265 + $0x74] sm:$0xf]
      %v445 = vld [vmem:[%s265 + $0x78] sm:$0xf]
      %v446 = vld [vmem:[%s265 + $0x7c] sm:$0xf]
      %v447 = vld [vmem:[%s265 + $0x80] sm:$0xf]
      %v448 = vld [vmem:[%s265 + $0x84] sm:$0xf]
      %v449 = vld [vmem:[%s265 + $0x88] sm:$0xf]
      %v450 = vld [vmem:[%s265 + $0x8c] sm:$0xf]
      %v451 = vld [vmem:[%s265 + $0x90] sm:$0xf]
      %v452 = vld [vmem:[%s265 + $0x94] sm:$0xf]
      %v453 = vld [vmem:[%s265 + $0x98] sm:$0xf]
      %v454 = vld [vmem:[%s265 + $0x9c] sm:$0xf]
      %v455 = vld [vmem:[%s265 + $0xa0] sm:$0xf]
      %v456 = vld [vmem:[%s265 + $0xa4] sm:$0xf]
      %v457 = vld [vmem:[%s265 + $0xa8] sm:$0xf]
      %v458 = vld [vmem:[%s265 + $0xac] sm:$0xf]
      %v459 = vld [vmem:[%s265 + $0xb0] sm:$0xf]
      %v460 = vld [vmem:[%s265 + $0xb4] sm:$0xf]
      %v461 = vld [vmem:[%s265 + $0xb8] sm:$0xf]
      %v462 = vld [vmem:[%s265 + $0xbc] sm:$0xf]
      %v463 = vld [vmem:[%s265 + $0xc0] sm:$0xf]
      %v464 = vld [vmem:[%s265 + $0xc4] sm:$0xf]
      %v465 = vld [vmem:[%s265 + $0xc8] sm:$0xf]
      %v466 = vld [vmem:[%s265 + $0xcc] sm:$0xf]
      %v467 = vld [vmem:[%s265 + $0xd0] sm:$0xf]
      %v468 = vld [vmem:[%s265 + $0xd4] sm:$0xf]
      %v469 = vld [vmem:[%s265 + $0xd8] sm:$0xf]
      %v470 = vld [vmem:[%s265 + $0xdc] sm:$0xf]
      %v471 = vld [vmem:[%s265 + $0xe0] sm:$0xf]
      %v472 = vld [vmem:[%s265 + $0xe4] sm:$0xf]
      %v473 = vld [vmem:[%s265 + $0xe8] sm:$0xf]
      %v474 = vld [vmem:[%s265 + $0xec] sm:$0xf]
      %v475 = vld [vmem:[%s265 + $0xf0] sm:$0xf]
      %v476 = vld [vmem:[%s265 + $0xf4] sm:$0xf]
      %v477 = vld [vmem:[%s265 + $0xf8] sm:$0xf]
      %v478 = vld [vmem:[%s265 + $0xfc] sm:$0xf]
      %v607 = vunpack.c.l.b16 %v287
      %v608 = vunpack.c.h.b16 %v287
      %v609 = vunpack.c.l.b16 %v288
      %v610 = vunpack.c.h.b16 %v288
      %v611 = vunpack.c.l.b16 %v289
      %v612 = vunpack.c.h.b16 %v289
      %v613 = vunpack.c.l.b16 %v290
      %v614 = vunpack.c.h.b16 %v290
      %v615 = vunpack.c.l.b16 %v291
      %v616 = vunpack.c.h.b16 %v291
      %v617 = vunpack.c.l.b16 %v292
      %v618 = vunpack.c.h.b16 %v292
      %v619 = vunpack.c.l.b16 %v293
      %v620 = vunpack.c.h.b16 %v293
      %v621 = vunpack.c.l.b16 %v294
      %v622 = vunpack.c.h.b16 %v294
      %v623 = vunpack.c.l.b16 %v295
      %v624 = vunpack.c.h.b16 %v295
      %v625 = vunpack.c.l.b16 %v296
      %v626 = vunpack.c.h.b16 %v296
      %v627 = vunpack.c.l.b16 %v297
      %v628 = vunpack.c.h.b16 %v297
      %v629 = vunpack.c.l.b16 %v298
      %v630 = vunpack.c.h.b16 %v298
      %v631 = vunpack.c.l.b16 %v299
      %v632 = vunpack.c.h.b16 %v299
      %v633 = vunpack.c.l.b16 %v300
      %v634 = vunpack.c.h.b16 %v300
      %v635 = vunpack.c.l.b16 %v301
      %v636 = vunpack.c.h.b16 %v301
      %v637 = vunpack.c.l.b16 %v302
      %v638 = vunpack.c.h.b16 %v302
      %v639 = vunpack.c.l.b16 %v303
      %v640 = vunpack.c.h.b16 %v303
      %v641 = vunpack.c.l.b16 %v304
      %v642 = vunpack.c.h.b16 %v304
      %v643 = vunpack.c.l.b16 %v305
      %v644 = vunpack.c.h.b16 %v305
      %v645 = vunpack.c.l.b16 %v306
      %v646 = vunpack.c.h.b16 %v306
      %v647 = vunpack.c.l.b16 %v307
      %v648 = vunpack.c.h.b16 %v307
      %v649 = vunpack.c.l.b16 %v308
      %v650 = vunpack.c.h.b16 %v308
      %v651 = vunpack.c.l.b16 %v309
      %v652 = vunpack.c.h.b16 %v309
      %v653 = vunpack.c.l.b16 %v310
      %v654 = vunpack.c.h.b16 %v310
      %v655 = vunpack.c.l.b16 %v311
      %v656 = vunpack.c.h.b16 %v311
      %v657 = vunpack.c.l.b16 %v312
      %v658 = vunpack.c.h.b16 %v312
      %v659 = vunpack.c.l.b16 %v313
      %v660 = vunpack.c.h.b16 %v313
      %v661 = vunpack.c.l.b16 %v314
      %v662 = vunpack.c.h.b16 %v314
      %v663 = vunpack.c.l.b16 %v315
      %v664 = vunpack.c.h.b16 %v315
      %v665 = vunpack.c.l.b16 %v316
      %v666 = vunpack.c.h.b16 %v316
      %v667 = vunpack.c.l.b16 %v317
      %v668 = vunpack.c.h.b16 %v317
      %v669 = vunpack.c.l.b16 %v318
      %v670 = vunpack.c.h.b16 %v318
      %v671 = vunpack.c.l.b16 %v319
      %v672 = vunpack.c.h.b16 %v319
      %v673 = vunpack.c.l.b16 %v320
      %v674 = vunpack.c.h.b16 %v320
      %v675 = vunpack.c.l.b16 %v321
      %v676 = vunpack.c.h.b16 %v321
      %v677 = vunpack.c.l.b16 %v322
      %v678 = vunpack.c.h.b16 %v322
      %v679 = vunpack.c.l.b16 %v323
      %v680 = vunpack.c.h.b16 %v323
      %v681 = vunpack.c.l.b16 %v324
      %v682 = vunpack.c.h.b16 %v324
      %v683 = vunpack.c.l.b16 %v325
      %v684 = vunpack.c.h.b16 %v325
      %v685 = vunpack.c.l.b16 %v326
      %v686 = vunpack.c.h.b16 %v326
      %v687 = vunpack.c.l.b16 %v327
      %v688 = vunpack.c.h.b16 %v327
      %v689 = vunpack.c.l.b16 %v328
      %v690 = vunpack.c.h.b16 %v328
      %v691 = vunpack.c.l.b16 %v329
      %v692 = vunpack.c.h.b16 %v329
      %v693 = vunpack.c.l.b16 %v330
      %v694 = vunpack.c.h.b16 %v330
      %v695 = vunpack.c.l.b16 %v331
      %v696 = vunpack.c.h.b16 %v331
      %v697 = vunpack.c.l.b16 %v332
      %v698 = vunpack.c.h.b16 %v332
      %v699 = vunpack.c.l.b16 %v333
      %v700 = vunpack.c.h.b16 %v333
      %v701 = vunpack.c.l.b16 %v334
      %v702 = vunpack.c.h.b16 %v334
      %v703 = vunpack.c.l.b16 %v335
      %v704 = vunpack.c.h.b16 %v335
      %v705 = vunpack.c.l.b16 %v336
      %v706 = vunpack.c.h.b16 %v336
      %v707 = vunpack.c.l.b16 %v337
      %v708 = vunpack.c.h.b16 %v337
      %v709 = vunpack.c.l.b16 %v338
      %v710 = vunpack.c.h.b16 %v338
      %v711 = vunpack.c.l.b16 %v339
      %v712 = vunpack.c.h.b16 %v339
      %v713 = vunpack.c.l.b16 %v340
      %v714 = vunpack.c.h.b16 %v340
      %v715 = vunpack.c.l.b16 %v341
      %v716 = vunpack.c.h.b16 %v341
      %v717 = vunpack.c.l.b16 %v342
      %v718 = vunpack.c.h.b16 %v342
      %v719 = vunpack.c.l.b16 %v343
      %v720 = vunpack.c.h.b16 %v343
      %v721 = vunpack.c.l.b16 %v344
      %v722 = vunpack.c.h.b16 %v344
      %v723 = vunpack.c.l.b16 %v345
      %v724 = vunpack.c.h.b16 %v345
      %v725 = vunpack.c.l.b16 %v346
      %v726 = vunpack.c.h.b16 %v346
      %v727 = vunpack.c.l.b16 %v347
      %v728 = vunpack.c.h.b16 %v347
      %v729 = vunpack.c.l.b16 %v348
      %v730 = vunpack.c.h.b16 %v348
      %v731 = vunpack.c.l.b16 %v349
      %v732 = vunpack.c.h.b16 %v349
      %v733 = vunpack.c.l.b16 %v350
      %v734 = vunpack.c.h.b16 %v350
      %v735 = vunpack.c.l.b16 %v351
      %v736 = vunpack.c.h.b16 %v351
      %v737 = vunpack.c.l.b16 %v352
      %v738 = vunpack.c.h.b16 %v352
      %v739 = vunpack.c.l.b16 %v353
      %v740 = vunpack.c.h.b16 %v353
      %v741 = vunpack.c.l.b16 %v354
      %v742 = vunpack.c.h.b16 %v354
      %v743 = vunpack.c.l.b16 %v355
      %v744 = vunpack.c.h.b16 %v355
      %v745 = vunpack.c.l.b16 %v356
      %v746 = vunpack.c.h.b16 %v356
      %v747 = vunpack.c.l.b16 %v357
      %v748 = vunpack.c.h.b16 %v357
      %v749 = vunpack.c.l.b16 %v358
      %v750 = vunpack.c.h.b16 %v358
      %v751 = vunpack.c.l.b16 %v359
      %v752 = vunpack.c.h.b16 %v359
      %v753 = vunpack.c.l.b16 %v360
      %v754 = vunpack.c.h.b16 %v360
      %v755 = vunpack.c.l.b16 %v361
      %v756 = vunpack.c.h.b16 %v361
      %v757 = vunpack.c.l.b16 %v362
      %v758 = vunpack.c.h.b16 %v362
      %v759 = vunpack.c.l.b16 %v363
      %v760 = vunpack.c.h.b16 %v363
      %v761 = vunpack.c.l.b16 %v364
      %v762 = vunpack.c.h.b16 %v364
      %v763 = vunpack.c.l.b16 %v365
      %v764 = vunpack.c.h.b16 %v365
      %v765 = vunpack.c.l.b16 %v366
      %v766 = vunpack.c.h.b16 %v366
      %v767 = vunpack.c.l.b16 %v367
      %v768 = vunpack.c.h.b16 %v367
      %v769 = vunpack.c.l.b16 %v368
      %v770 = vunpack.c.h.b16 %v368
      %v771 = vunpack.c.l.b16 %v369
      %v772 = vunpack.c.h.b16 %v369
      %v773 = vunpack.c.l.b16 %v370
      %v774 = vunpack.c.h.b16 %v370
      %v775 = vunpack.c.l.b16 %v371
      %v776 = vunpack.c.h.b16 %v371
      %v777 = vunpack.c.l.b16 %v372
      %v778 = vunpack.c.h.b16 %v372
      %v779 = vunpack.c.l.b16 %v373
      %v780 = vunpack.c.h.b16 %v373
      %v781 = vunpack.c.l.b16 %v374
      %v782 = vunpack.c.h.b16 %v374
      %v783 = vunpack.c.l.b16 %v375
      %v784 = vunpack.c.h.b16 %v375
      %v785 = vunpack.c.l.b16 %v376
      %v786 = vunpack.c.h.b16 %v376
      %v787 = vunpack.c.l.b16 %v377
      %v788 = vunpack.c.h.b16 %v377
      %v789 = vunpack.c.l.b16 %v378
      %v790 = vunpack.c.h.b16 %v378
      %v791 = vunpack.c.l.b16 %v379
      %v792 = vunpack.c.h.b16 %v379
      %v793 = vunpack.c.l.b16 %v380
      %v794 = vunpack.c.h.b16 %v380
      %v795 = vunpack.c.l.b16 %v381
      %v796 = vunpack.c.h.b16 %v381
      %v797 = vunpack.c.l.b16 %v382
      %v798 = vunpack.c.h.b16 %v382
      %v799 = vunpack.c.l.b16 %v383
      %v800 = vunpack.c.h.b16 %v383
      %v801 = vunpack.c.l.b16 %v384
      %v802 = vunpack.c.h.b16 %v384
      %v803 = vunpack.c.l.b16 %v385
      %v804 = vunpack.c.h.b16 %v385
      %v805 = vunpack.c.l.b16 %v386
      %v806 = vunpack.c.h.b16 %v386
      %v807 = vunpack.c.l.b16 %v387
      %v808 = vunpack.c.h.b16 %v387
      %v809 = vunpack.c.l.b16 %v388
      %v810 = vunpack.c.h.b16 %v388
      %v811 = vunpack.c.l.b16 %v389
      %v812 = vunpack.c.h.b16 %v389
      %v813 = vunpack.c.l.b16 %v390
      %v814 = vunpack.c.h.b16 %v390
      %v815 = vunpack.c.l.b16 %v391
      %v816 = vunpack.c.h.b16 %v391
      %v817 = vunpack.c.l.b16 %v392
      %v818 = vunpack.c.h.b16 %v392
      %v819 = vunpack.c.l.b16 %v393
      %v820 = vunpack.c.h.b16 %v393
      %v821 = vunpack.c.l.b16 %v394
      %v822 = vunpack.c.h.b16 %v394
      %v823 = vunpack.c.l.b16 %v395
      %v824 = vunpack.c.h.b16 %v395
      %v825 = vunpack.c.l.b16 %v396
      %v826 = vunpack.c.h.b16 %v396
      %v827 = vunpack.c.l.b16 %v397
      %v828 = vunpack.c.h.b16 %v397
      %v829 = vunpack.c.l.b16 %v398
      %v830 = vunpack.c.h.b16 %v398
      %v831 = vunpack.c.l.b16 %v399
      %v832 = vunpack.c.h.b16 %v399
      %v833 = vunpack.c.l.b16 %v400
      %v834 = vunpack.c.h.b16 %v400
      %v835 = vunpack.c.l.b16 %v401
      %v836 = vunpack.c.h.b16 %v401
      %v837 = vunpack.c.l.b16 %v402
      %v838 = vunpack.c.h.b16 %v402
      %v839 = vunpack.c.l.b16 %v403
      %v840 = vunpack.c.h.b16 %v403
      %v841 = vunpack.c.l.b16 %v404
      %v842 = vunpack.c.h.b16 %v404
      %v843 = vunpack.c.l.b16 %v405
      %v844 = vunpack.c.h.b16 %v405
      %v845 = vunpack.c.l.b16 %v406
      %v846 = vunpack.c.h.b16 %v406
      %v847 = vunpack.c.l.b16 %v407
      %v848 = vunpack.c.h.b16 %v407
      %v849 = vunpack.c.l.b16 %v408
      %v850 = vunpack.c.h.b16 %v408
      %v851 = vunpack.c.l.b16 %v409
      %v852 = vunpack.c.h.b16 %v409
      %v853 = vunpack.c.l.b16 %v410
      %v854 = vunpack.c.h.b16 %v410
      %v855 = vunpack.c.l.b16 %v411
      %v856 = vunpack.c.h.b16 %v411
      %v857 = vunpack.c.l.b16 %v412
      %v858 = vunpack.c.h.b16 %v412
      %v859 = vunpack.c.l.b16 %v413
      %v860 = vunpack.c.h.b16 %v413
      %v861 = vunpack.c.l.b16 %v414
      %v862 = vunpack.c.h.b16 %v414
      %v863 = vpack.c.b16 %v611, %v607
      %v864 = vpack.c.b16 %v612, %v608
      %v865 = vpack.c.b16 %v613, %v609
      %v866 = vpack.c.b16 %v614, %v610
      %v867 = vpack.c.b16 %v619, %v615
      %v868 = vpack.c.b16 %v620, %v616
      %v869 = vpack.c.b16 %v621, %v617
      %v870 = vpack.c.b16 %v622, %v618
      %v871 = vpack.c.b16 %v627, %v623
      %v872 = vpack.c.b16 %v628, %v624
      %v873 = vpack.c.b16 %v629, %v625
      %v874 = vpack.c.b16 %v630, %v626
      %v875 = vpack.c.b16 %v635, %v631
      %v876 = vpack.c.b16 %v636, %v632
      %v877 = vpack.c.b16 %v637, %v633
      %v878 = vpack.c.b16 %v638, %v634
      %v879 = vpack.c.b16 %v643, %v639
      %v880 = vpack.c.b16 %v644, %v640
      %v881 = vpack.c.b16 %v645, %v641
      %v882 = vpack.c.b16 %v646, %v642
      %v883 = vpack.c.b16 %v651, %v647
      %v884 = vpack.c.b16 %v652, %v648
      %v885 = vpack.c.b16 %v653, %v649
      %v886 = vpack.c.b16 %v654, %v650
      %v887 = vpack.c.b16 %v659, %v655
      %v888 = vpack.c.b16 %v660, %v656
      %v889 = vpack.c.b16 %v661, %v657
      %v890 = vpack.c.b16 %v662, %v658
      %v891 = vpack.c.b16 %v667, %v663
      %v892 = vpack.c.b16 %v668, %v664
      %v893 = vpack.c.b16 %v669, %v665
      %v894 = vpack.c.b16 %v670, %v666
      %v895 = vpack.c.b16 %v675, %v671
      %v896 = vpack.c.b16 %v676, %v672
      %v897 = vpack.c.b16 %v677, %v673
      %v898 = vpack.c.b16 %v678, %v674
      %v899 = vpack.c.b16 %v683, %v679
      %v900 = vpack.c.b16 %v684, %v680
      %v901 = vpack.c.b16 %v685, %v681
      %v902 = vpack.c.b16 %v686, %v682
      %v903 = vpack.c.b16 %v691, %v687
      %v904 = vpack.c.b16 %v692, %v688
      %v905 = vpack.c.b16 %v693, %v689
      %v906 = vpack.c.b16 %v694, %v690
      %v907 = vpack.c.b16 %v699, %v695
      %v908 = vpack.c.b16 %v700, %v696
      %v909 = vpack.c.b16 %v701, %v697
      %v910 = vpack.c.b16 %v702, %v698
      %v911 = vpack.c.b16 %v707, %v703
      %v912 = vpack.c.b16 %v708, %v704
      %v913 = vpack.c.b16 %v709, %v705
      %v914 = vpack.c.b16 %v710, %v706
      %v915 = vpack.c.b16 %v715, %v711
      %v916 = vpack.c.b16 %v716, %v712
      %v917 = vpack.c.b16 %v717, %v713
      %v918 = vpack.c.b16 %v718, %v714
      %v919 = vpack.c.b16 %v723, %v719
      %v920 = vpack.c.b16 %v724, %v720
      %v921 = vpack.c.b16 %v725, %v721
      %v922 = vpack.c.b16 %v726, %v722
      %v923 = vpack.c.b16 %v731, %v727
      %v924 = vpack.c.b16 %v732, %v728
      %v925 = vpack.c.b16 %v733, %v729
      %v926 = vpack.c.b16 %v734, %v730
      %v927 = vpack.c.b16 %v739, %v735
      %v928 = vpack.c.b16 %v740, %v736
      %v929 = vpack.c.b16 %v741, %v737
      %v930 = vpack.c.b16 %v742, %v738
      %v931 = vpack.c.b16 %v747, %v743
      %v932 = vpack.c.b16 %v748, %v744
      %v933 = vpack.c.b16 %v749, %v745
      %v934 = vpack.c.b16 %v750, %v746
      %v935 = vpack.c.b16 %v755, %v751
      %v936 = vpack.c.b16 %v756, %v752
      %v937 = vpack.c.b16 %v757, %v753
      %v938 = vpack.c.b16 %v758, %v754
      %v939 = vpack.c.b16 %v763, %v759
      %v940 = vpack.c.b16 %v764, %v760
      %v941 = vpack.c.b16 %v765, %v761
      %v942 = vpack.c.b16 %v766, %v762
      %v943 = vpack.c.b16 %v771, %v767
      %v944 = vpack.c.b16 %v772, %v768
      %v945 = vpack.c.b16 %v773, %v769
      %v946 = vpack.c.b16 %v774, %v770
      %v947 = vpack.c.b16 %v779, %v775
      %v948 = vpack.c.b16 %v780, %v776
      %v949 = vpack.c.b16 %v781, %v777
      %v950 = vpack.c.b16 %v782, %v778
      %v951 = vpack.c.b16 %v787, %v783
      %v952 = vpack.c.b16 %v788, %v784
      %v953 = vpack.c.b16 %v789, %v785
      %v954 = vpack.c.b16 %v790, %v786
      %v955 = vpack.c.b16 %v795, %v791
      %v956 = vpack.c.b16 %v796, %v792
      %v957 = vpack.c.b16 %v797, %v793
      %v958 = vpack.c.b16 %v798, %v794
      %v959 = vpack.c.b16 %v803, %v799
      %v960 = vpack.c.b16 %v804, %v800
      %v961 = vpack.c.b16 %v805, %v801
      %v962 = vpack.c.b16 %v806, %v802
      %v963 = vpack.c.b16 %v811, %v807
      %v964 = vpack.c.b16 %v812, %v808
      %v965 = vpack.c.b16 %v813, %v809
      %v966 = vpack.c.b16 %v814, %v810
      %v967 = vpack.c.b16 %v819, %v815
      %v968 = vpack.c.b16 %v820, %v816
      %v969 = vpack.c.b16 %v821, %v817
      %v970 = vpack.c.b16 %v822, %v818
      %v971 = vpack.c.b16 %v827, %v823
      %v972 = vpack.c.b16 %v828, %v824
      %v973 = vpack.c.b16 %v829, %v825
      %v974 = vpack.c.b16 %v830, %v826
      %v975 = vpack.c.b16 %v835, %v831
      %v976 = vpack.c.b16 %v836, %v832
      %v977 = vpack.c.b16 %v837, %v833
      %v978 = vpack.c.b16 %v838, %v834
      %v979 = vpack.c.b16 %v843, %v839
      %v980 = vpack.c.b16 %v844, %v840
      %v981 = vpack.c.b16 %v845, %v841
      %v982 = vpack.c.b16 %v846, %v842
      %v983 = vpack.c.b16 %v851, %v847
      %v984 = vpack.c.b16 %v852, %v848
      %v985 = vpack.c.b16 %v853, %v849
      %v986 = vpack.c.b16 %v854, %v850
      %v987 = vpack.c.b16 %v859, %v855
      %v988 = vpack.c.b16 %v860, %v856
      %v989 = vpack.c.b16 %v861, %v857
      %v990 = vpack.c.b16 %v862, %v858
      %v1183 = vunpack.c.l.b16 %v415
      %v1184 = vunpack.c.l.b16 %v416
      %v1185 = vunpack.c.l.b16 %v417
      %v1186 = vunpack.c.l.b16 %v418
      %v1187 = vunpack.c.l.b16 %v419
      %v1188 = vunpack.c.l.b16 %v420
      %v1189 = vunpack.c.l.b16 %v421
      %v1190 = vunpack.c.l.b16 %v422
      %v1191 = vunpack.c.l.b16 %v423
      %v1192 = vunpack.c.l.b16 %v424
      %v1193 = vunpack.c.l.b16 %v425
      %v1194 = vunpack.c.l.b16 %v426
      %v1195 = vunpack.c.l.b16 %v427
      %v1196 = vunpack.c.l.b16 %v428
      %v1197 = vunpack.c.l.b16 %v429
      %v1198 = vunpack.c.l.b16 %v430
      %v1199 = vunpack.c.l.b16 %v431
      %v1200 = vunpack.c.l.b16 %v432
      %v1201 = vunpack.c.l.b16 %v433
      %v1202 = vunpack.c.l.b16 %v434
      %v1203 = vunpack.c.l.b16 %v435
      %v1204 = vunpack.c.l.b16 %v436
      %v1205 = vunpack.c.l.b16 %v437
      %v1206 = vunpack.c.l.b16 %v438
      %v1207 = vunpack.c.l.b16 %v439
      %v1208 = vunpack.c.l.b16 %v440
      %v1209 = vunpack.c.l.b16 %v441
      %v1210 = vunpack.c.l.b16 %v442
      %v1211 = vunpack.c.l.b16 %v443
      %v1212 = vunpack.c.l.b16 %v444
      %v1213 = vunpack.c.l.b16 %v445
      %v1214 = vunpack.c.l.b16 %v446
      %v1215 = vunpack.c.l.b16 %v447
      %v1216 = vunpack.c.l.b16 %v448
      %v1217 = vunpack.c.l.b16 %v449
      %v1218 = vunpack.c.l.b16 %v450
      %v1219 = vunpack.c.l.b16 %v451
      %v1220 = vunpack.c.l.b16 %v452
      %v1221 = vunpack.c.l.b16 %v453
      %v1222 = vunpack.c.l.b16 %v454
      %v1223 = vunpack.c.l.b16 %v455
      %v1224 = vunpack.c.l.b16 %v456
      %v1225 = vunpack.c.l.b16 %v457
      %v1226 = vunpack.c.l.b16 %v458
      %v1227 = vunpack.c.l.b16 %v459
      %v1228 = vunpack.c.l.b16 %v460
      %v1229 = vunpack.c.l.b16 %v461
      %v1230 = vunpack.c.l.b16 %v462
      %v1231 = vunpack.c.l.b16 %v463
      %v1232 = vunpack.c.l.b16 %v464
      %v1233 = vunpack.c.l.b16 %v465
      %v1234 = vunpack.c.l.b16 %v466
      %v1235 = vunpack.c.l.b16 %v467
      %v1236 = vunpack.c.l.b16 %v468
      %v1237 = vunpack.c.l.b16 %v469
      %v1238 = vunpack.c.l.b16 %v470
      %v1239 = vunpack.c.l.b16 %v471
      %v1240 = vunpack.c.l.b16 %v472
      %v1241 = vunpack.c.l.b16 %v473
      %v1242 = vunpack.c.l.b16 %v474
      %v1243 = vunpack.c.l.b16 %v475
      %v1244 = vunpack.c.l.b16 %v476
      %v1245 = vunpack.c.l.b16 %v477
      %v1246 = vunpack.c.l.b16 %v478
      %v1247 = vpack.c.b16 %v1184, %v1183
      %v1248 = vpack.c.b16 %v1186, %v1185
      %v1249 = vpack.c.b16 %v1188, %v1187
      %v1250 = vpack.c.b16 %v1190, %v1189
      %v1251 = vpack.c.b16 %v1192, %v1191
      %v1252 = vpack.c.b16 %v1194, %v1193
      %v1253 = vpack.c.b16 %v1196, %v1195
      %v1254 = vpack.c.b16 %v1198, %v1197
      %v1255 = vpack.c.b16 %v1200, %v1199
      %v1256 = vpack.c.b16 %v1202, %v1201
      %v1257 = vpack.c.b16 %v1204, %v1203
      %v1258 = vpack.c.b16 %v1206, %v1205
      %v1259 = vpack.c.b16 %v1208, %v1207
      %v1260 = vpack.c.b16 %v1210, %v1209
      %v1261 = vpack.c.b16 %v1212, %v1211
      %v1262 = vpack.c.b16 %v1214, %v1213
      %v1263 = vpack.c.b16 %v1216, %v1215
      %v1264 = vpack.c.b16 %v1218, %v1217
      %v1265 = vpack.c.b16 %v1220, %v1219
      %v1266 = vpack.c.b16 %v1222, %v1221
      %v1267 = vpack.c.b16 %v1224, %v1223
      %v1268 = vpack.c.b16 %v1226, %v1225
      %v1269 = vpack.c.b16 %v1228, %v1227
      %v1270 = vpack.c.b16 %v1230, %v1229
      %v1271 = vpack.c.b16 %v1232, %v1231
      %v1272 = vpack.c.b16 %v1234, %v1233
      %v1273 = vpack.c.b16 %v1236, %v1235
      %v1274 = vpack.c.b16 %v1238, %v1237
      %v1275 = vpack.c.b16 %v1240, %v1239
      %v1276 = vpack.c.b16 %v1242, %v1241
      %v1277 = vpack.c.b16 %v1244, %v1243
      %v1278 = vpack.c.b16 %v1246, %v1245
      %1311 = vmatprep.subr.bf16.mxu0 0
      %1312 = vmatpush1.bf16.msra.mxu0 %v1247
      %1313 = vmatprep.subr.bf16.mxu0 0
      %1314 = vmatpush1.bf16.msra.mxu0 %v1248
      %1315 = vmatprep.subr.bf16.mxu0 0
      %1316 = vmatpush1.bf16.msra.mxu0 %v1249
      %1317 = vmatprep.subr.bf16.mxu0 0
      %1318 = vmatpush1.bf16.msra.mxu0 %v1250
      %1319 = vmatprep.subr.bf16.mxu0 0
      %1320 = vmatpush1.bf16.msra.mxu0 %v1251
      %1321 = vmatprep.subr.bf16.mxu0 0
      %1322 = vmatpush1.bf16.msra.mxu0 %v1252
      %1323 = vmatprep.subr.bf16.mxu0 0
      %1324 = vmatpush1.bf16.msra.mxu0 %v1253
      %1325 = vmatprep.subr.bf16.mxu0 0
      %1326 = vmatpush1.bf16.msra.mxu0 %v1254
      %1327 = vmatprep.subr.bf16.mxu0 0
      %1328 = vmatpush1.bf16.msra.mxu0 %v1255
      %1329 = vmatprep.subr.bf16.mxu0 0
      %1330 = vmatpush1.bf16.msra.mxu0 %v1256
      %1331 = vmatprep.subr.bf16.mxu0 0
      %1332 = vmatpush1.bf16.msra.mxu0 %v1257
      %1333 = vmatprep.subr.bf16.mxu0 0
      %1334 = vmatpush1.bf16.msra.mxu0 %v1258
      %1335 = vmatprep.subr.bf16.mxu0 0
      %1336 = vmatpush1.bf16.msra.mxu0 %v1259
      %1337 = vmatprep.subr.bf16.mxu0 0
      %1338 = vmatpush1.bf16.msra.mxu0 %v1260
      %1339 = vmatprep.subr.bf16.mxu0 0
      %1340 = vmatpush1.bf16.msra.mxu0 %v1261
      %1341 = vmatprep.subr.bf16.mxu0 0
      %1342 = vmatpush1.bf16.msra.mxu0 %v1262
      %1343 = vmatprep.mubr.bf16.mxu0 %v864
      %1344 = vmatmul.mubr.bf16.gmra.mrb[0].mxu0 %v863
      %v1345 = vpop.f32.mrb[0].mxu0
      %v1346 = vadd.f32 0.0, %v1345
      %v1347 = vpop.f32.mrb[0].mxu0
      %v1348 = vpop.f32.mrb[0].mxu0
      %v1349 = vadd.f32 0.0, %v1348
      %v1350 = vpop.f32.mrb[0].mxu0
      %1351 = vmatprep.mubr.bf16.mxu0 %v868
      %1352 = vmatmul.mubr.bf16.gmra.mrb[0].mxu0 %v867
      %v1353 = vpop.f32.mrb[0].mxu0
      %v1354 = vadd.f32 0.0, %v1353
      %v1355 = vpop.f32.mrb[0].mxu0
      %v1356 = vpop.f32.mrb[0].mxu0
      %v1357 = vadd.f32 0.0, %v1356
      %v1358 = vpop.f32.mrb[0].mxu0
      %1359 = vmatprep.mubr.bf16.mxu0 %v872
      %1360 = vmatmul.mubr.bf16.gmra.mrb[0].mxu0 %v871
      %v1361 = vpop.f32.mrb[0].mxu0
      %v1362 = vadd.f32 0.0, %v1361
      %v1363 = vpop.f32.mrb[0].mxu0
      %v1364 = vpop.f32.mrb[0].mxu0
      %v1365 = vadd.f32 0.0, %v1364
      %v1366 = vpop.f32.mrb[0].mxu0
      %1367 = vmatprep.mubr.bf16.mxu0 %v876
      %1368 = vmatmul.mubr.bf16.gmra.mrb[0].mxu0 %v875
      %v1369 = vpop.f32.mrb[0].mxu0
      %v1370 = vadd.f32 0.0, %v1369
      %v1371 = vpop.f32.mrb[0].mxu0
      %v1372 = vpop.f32.mrb[0].mxu0
      %v1373 = vadd.f32 0.0, %v1372
      %v1374 = vpop.f32.mrb[0].mxu0
      %1375 = vmatprep.mubr.bf16.mxu0 %v880
      %1376 = vmatmul.mubr.bf16.gmra.mrb[0].mxu0 %v879
      %v1377 = vpop.f32.mrb[0].mxu0
      %v1378 = vadd.f32 0.0, %v1377
      %v1379 = vpop.f32.mrb[0].mxu0
      %v1380 = vpop.f32.mrb[0].mxu0
      %v1381 = vadd.f32 0.0, %v1380
      %v1382 = vpop.f32.mrb[0].mxu0
      %1383 = vmatprep.mubr.bf16.mxu0 %v884
      %1384 = vmatmul.mubr.bf16.gmra.mrb[0].mxu0 %v883
      %v1385 = vpop.f32.mrb[0].mxu0
      %v1386 = vadd.f32 0.0, %v1385
      %v1387 = vpop.f32.mrb[0].mxu0
      %v1388 = vpop.f32.mrb[0].mxu0
      %v1389 = vadd.f32 0.0, %v1388
      %v1390 = vpop.f32.mrb[0].mxu0
      %1391 = vmatprep.mubr.bf16.mxu0 %v888
      %1392 = vmatmul.mubr.bf16.gmra.mrb[0].mxu0 %v887
      %v1393 = vpop.f32.mrb[0].mxu0
      %v1394 = vadd.f32 0.0, %v1393
      %v1395 = vpop.f32.mrb[0].mxu0
      %v1396 = vpop.f32.mrb[0].mxu0
      %v1397 = vadd.f32 0.0, %v1396
      %v1398 = vpop.f32.mrb[0].mxu0
      %1399 = vmatprep.mubr.bf16.mxu0 %v892
      %1400 = vmatmul.mubr.bf16.gmra.mrb[0].mxu0 %v891
      %v1401 = vpop.f32.mrb[0].mxu0
      %v1402 = vadd.f32 0.0, %v1401
      %v1403 = vpop.f32.mrb[0].mxu0
      %v1404 = vpop.f32.mrb[0].mxu0
      %v1405 = vadd.f32 0.0, %v1404
      %v1406 = vpop.f32.mrb[0].mxu0
      %1407 = vmatprep.mubr.bf16.mxu0 %v896
      %1408 = vmatmul.mubr.bf16.gmra.mrb[0].mxu0 %v895
      %v1409 = vpop.f32.mrb[0].mxu0
      %v1410 = vadd.f32 0.0, %v1409
      %v1411 = vpop.f32.mrb[0].mxu0
      %v1412 = vpop.f32.mrb[0].mxu0
      %v1413 = vadd.f32 0.0, %v1412
      %v1414 = vpop.f32.mrb[0].mxu0
      %1415 = vmatprep.mubr.bf16.mxu0 %v900
      %1416 = vmatmul.mubr.bf16.gmra.mrb[0].mxu0 %v899
      %v1417 = vpop.f32.mrb[0].mxu0
      %v1418 = vadd.f32 0.0, %v1417
      %v1419 = vpop.f32.mrb[0].mxu0
      %v1420 = vpop.f32.mrb[0].mxu0
      %v1421 = vadd.f32 0.0, %v1420
      %v1422 = vpop.f32.mrb[0].mxu0
      %1423 = vmatprep.mubr.bf16.mxu0 %v904
      %1424 = vmatmul.mubr.bf16.gmra.mrb[0].mxu0 %v903
      %v1425 = vpop.f32.mrb[0].mxu0
      %v1426 = vadd.f32 0.0, %v1425
      %v1427 = vpop.f32.mrb[0].mxu0
      %v1428 = vpop.f32.mrb[0].mxu0
      %v1429 = vadd.f32 0.0, %v1428
      %v1430 = vpop.f32.mrb[0].mxu0
      %1431 = vmatprep.mubr.bf16.mxu0 %v908
      %1432 = vmatmul.mubr.bf16.gmra.mrb[0].mxu0 %v907
      %v1433 = vpop.f32.mrb[0].mxu0
      %v1434 = vadd.f32 0.0, %v1433
      %v1435 = vpop.f32.mrb[0].mxu0
      %v1436 = vpop.f32.mrb[0].mxu0
      %v1437 = vadd.f32 0.0, %v1436
      %v1438 = vpop.f32.mrb[0].mxu0
      %1439 = vmatprep.mubr.bf16.mxu0 %v912
      %1440 = vmatmul.mubr.bf16.gmra.mrb[0].mxu0 %v911
      %v1441 = vpop.f32.mrb[0].mxu0
      %v1442 = vadd.f32 0.0, %v1441
      %v1443 = vpop.f32.mrb[0].mxu0
      %v1444 = vpop.f32.mrb[0].mxu0
      %v1445 = vadd.f32 0.0, %v1444
      %v1446 = vpop.f32.mrb[0].mxu0
      %1447 = vmatprep.mubr.bf16.mxu0 %v916
      %1448 = vmatmul.mubr.bf16.gmra.mrb[0].mxu0 %v915
      %v1449 = vpop.f32.mrb[0].mxu0
      %v1450 = vadd.f32 0.0, %v1449
      %v1451 = vpop.f32.mrb[0].mxu0
      %v1452 = vpop.f32.mrb[0].mxu0
      %v1453 = vadd.f32 0.0, %v1452
      %v1454 = vpop.f32.mrb[0].mxu0
      %1455 = vmatprep.mubr.bf16.mxu0 %v920
      %1456 = vmatmul.mubr.bf16.gmra.mrb[0].mxu0 %v919
      %v1457 = vpop.f32.mrb[0].mxu0
      %v1458 = vadd.f32 0.0, %v1457
      %v1459 = vpop.f32.mrb[0].mxu0
      %v1460 = vpop.f32.mrb[0].mxu0
      %v1461 = vadd.f32 0.0, %v1460
      %v1462 = vpop.f32.mrb[0].mxu0
      %1463 = vmatprep.mubr.bf16.mxu0 %v924
      %1464 = vmatmul.mubr.bf16.gmra.mrb[0].mxu0 %v923
      %v1465 = vpop.f32.mrb[0].mxu0
      %v1466 = vadd.f32 0.0, %v1465
      %v1467 = vpop.f32.mrb[0].mxu0
      %v1468 = vpop.f32.mrb[0].mxu0
      %v1469 = vadd.f32 0.0, %v1468
      %v1470 = vpop.f32.mrb[0].mxu0
      %1471 = vmatprep.mubr.bf16.mxu0 %v928
      %1472 = vmatmul.mubr.bf16.gmra.mrb[0].mxu0 %v927
      %v1473 = vpop.f32.mrb[0].mxu0
      %v1474 = vadd.f32 0.0, %v1473
      %v1475 = vpop.f32.mrb[0].mxu0
      %v1476 = vpop.f32.mrb[0].mxu0
      %v1477 = vadd.f32 0.0, %v1476
      %v1478 = vpop.f32.mrb[0].mxu0
      %1479 = vmatprep.mubr.bf16.mxu0 %v932
      %1480 = vmatmul.mubr.bf16.gmra.mrb[0].mxu0 %v931
      %v1481 = vpop.f32.mrb[0].mxu0
      %v1482 = vadd.f32 0.0, %v1481
      %v1483 = vpop.f32.mrb[0].mxu0
      %v1484 = vpop.f32.mrb[0].mxu0
      %v1485 = vadd.f32 0.0, %v1484
      %v1486 = vpop.f32.mrb[0].mxu0
      %1487 = vmatprep.mubr.bf16.mxu0 %v936
      %1488 = vmatmul.mubr.bf16.gmra.mrb[0].mxu0 %v935
      %v1489 = vpop.f32.mrb[0].mxu0
      %v1490 = vadd.f32 0.0, %v1489
      %v1491 = vpop.f32.mrb[0].mxu0
      %v1492 = vpop.f32.mrb[0].mxu0
      %v1493 = vadd.f32 0.0, %v1492
      %v1494 = vpop.f32.mrb[0].mxu0
      %1495 = vmatprep.mubr.bf16.mxu0 %v940
      %1496 = vmatmul.mubr.bf16.gmra.mrb[0].mxu0 %v939
      %v1497 = vpop.f32.mrb[0].mxu0
      %v1498 = vadd.f32 0.0, %v1497
      %v1499 = vpop.f32.mrb[0].mxu0
      %v1500 = vpop.f32.mrb[0].mxu0
      %v1501 = vadd.f32 0.0, %v1500
      %v1502 = vpop.f32.mrb[0].mxu0
      %1503 = vmatprep.mubr.bf16.mxu0 %v944
      %1504 = vmatmul.mubr.bf16.gmra.mrb[0].mxu0 %v943
      %v1505 = vpop.f32.mrb[0].mxu0
      %v1506 = vadd.f32 0.0, %v1505
      %v1507 = vpop.f32.mrb[0].mxu0
      %v1508 = vpop.f32.mrb[0].mxu0
      %v1509 = vadd.f32 0.0, %v1508
      %v1510 = vpop.f32.mrb[0].mxu0
      %1511 = vmatprep.mubr.bf16.mxu0 %v948
      %1512 = vmatmul.mubr.bf16.gmra.mrb[0].mxu0 %v947
      %v1513 = vpop.f32.mrb[0].mxu0
      %v1514 = vadd.f32 0.0, %v1513
      %v1515 = vpop.f32.mrb[0].mxu0
      %v1516 = vpop.f32.mrb[0].mxu0
      %v1517 = vadd.f32 0.0, %v1516
      %v1518 = vpop.f32.mrb[0].mxu0
      %1519 = vmatprep.mubr.bf16.mxu0 %v952
      %1520 = vmatmul.mubr.bf16.gmra.mrb[0].mxu0 %v951
      %v1521 = vpop.f32.mrb[0].mxu0
      %v1522 = vadd.f32 0.0, %v1521
      %v1523 = vpop.f32.mrb[0].mxu0
      %v1524 = vpop.f32.mrb[0].mxu0
      %v1525 = vadd.f32 0.0, %v1524
      %v1526 = vpop.f32.mrb[0].mxu0
      %1527 = vmatprep.mubr.bf16.mxu0 %v956
      %1528 = vmatmul.mubr.bf16.gmra.mrb[0].mxu0 %v955
      %v1529 = vpop.f32.mrb[0].mxu0
      %v1530 = vadd.f32 0.0, %v1529
      %v1531 = vpop.f32.mrb[0].mxu0
      %v1532 = vpop.f32.mrb[0].mxu0
      %v1533 = vadd.f32 0.0, %v1532
      %v1534 = vpop.f32.mrb[0].mxu0
      %1535 = vmatprep.mubr.bf16.mxu0 %v960
      %1536 = vmatmul.mubr.bf16.gmra.mrb[0].mxu0 %v959
      %v1537 = vpop.f32.mrb[0].mxu0
      %v1538 = vadd.f32 0.0, %v1537
      %v1539 = vpop.f32.mrb[0].mxu0
      %v1540 = vpop.f32.mrb[0].mxu0
      %v1541 = vadd.f32 0.0, %v1540
      %v1542 = vpop.f32.mrb[0].mxu0
      %1543 = vmatprep.mubr.bf16.mxu0 %v964
      %1544 = vmatmul.mubr.bf16.gmra.mrb[0].mxu0 %v963
      %v1545 = vpop.f32.mrb[0].mxu0
      %v1546 = vadd.f32 0.0, %v1545
      %v1547 = vpop.f32.mrb[0].mxu0
      %v1548 = vpop.f32.mrb[0].mxu0
      %v1549 = vadd.f32 0.0, %v1548
      %v1550 = vpop.f32.mrb[0].mxu0
      %1551 = vmatprep.mubr.bf16.mxu0 %v968
      %1552 = vmatmul.mubr.bf16.gmra.mrb[0].mxu0 %v967
      %v1553 = vpop.f32.mrb[0].mxu0
      %v1554 = vadd.f32 0.0, %v1553
      %v1555 = vpop.f32.mrb[0].mxu0
      %v1556 = vpop.f32.mrb[0].mxu0
      %v1557 = vadd.f32 0.0, %v1556
      %v1558 = vpop.f32.mrb[0].mxu0
      %1559 = vmatprep.mubr.bf16.mxu0 %v972
      %1560 = vmatmul.mubr.bf16.gmra.mrb[0].mxu0 %v971
      %v1561 = vpop.f32.mrb[0].mxu0
      %v1562 = vadd.f32 0.0, %v1561
      %v1563 = vpop.f32.mrb[0].mxu0
      %v1564 = vpop.f32.mrb[0].mxu0
      %v1565 = vadd.f32 0.0, %v1564
      %v1566 = vpop.f32.mrb[0].mxu0
      %1567 = vmatprep.mubr.bf16.mxu0 %v976
      %1568 = vmatmul.mubr.bf16.gmra.mrb[0].mxu0 %v975
      %v1569 = vpop.f32.mrb[0].mxu0
      %v1570 = vadd.f32 0.0, %v1569
      %v1571 = vpop.f32.mrb[0].mxu0
      %v1572 = vpop.f32.mrb[0].mxu0
      %v1573 = vadd.f32 0.0, %v1572
      %v1574 = vpop.f32.mrb[0].mxu0
      %1575 = vmatprep.mubr.bf16.mxu0 %v980
      %1576 = vmatmul.mubr.bf16.gmra.mrb[0].mxu0 %v979
      %v1577 = vpop.f32.mrb[0].mxu0
      %v1578 = vadd.f32 0.0, %v1577
      %v1579 = vpop.f32.mrb[0].mxu0
      %v1580 = vpop.f32.mrb[0].mxu0
      %v1581 = vadd.f32 0.0, %v1580
      %v1582 = vpop.f32.mrb[0].mxu0
      %1583 = vmatprep.mubr.bf16.mxu0 %v984
      %1584 = vmatmul.mubr.bf16.gmra.mrb[0].mxu0 %v983
      %v1585 = vpop.f32.mrb[0].mxu0
      %v1586 = vadd.f32 0.0, %v1585
      %v1587 = vpop.f32.mrb[0].mxu0
      %v1588 = vpop.f32.mrb[0].mxu0
      %v1589 = vadd.f32 0.0, %v1588
      %v1590 = vpop.f32.mrb[0].mxu0
      %1591 = vmatprep.mubr.bf16.mxu0 %v988
      %1592 = vmatmul.mubr.bf16.gmra.mrb[0].mxu0 %v987
      %v1593 = vpop.f32.mrb[0].mxu0
      %v1594 = vadd.f32 0.0, %v1593
      %v1595 = vpop.f32.mrb[0].mxu0
      %v1596 = vpop.f32.mrb[0].mxu0
      %v1597 = vadd.f32 0.0, %v1596
      %v1598 = vpop.f32.mrb[0].mxu0
      %1599 = vdwg.mxu0
      %1600 = vmatprep.subr.bf16.mxu0 0
      %1601 = vmatpush1.bf16.msra.mxu0 %v1263
      %1602 = vmatprep.subr.bf16.mxu0 0
      %1603 = vmatpush1.bf16.msra.mxu0 %v1264
      %1604 = vmatprep.subr.bf16.mxu0 0
      %1605 = vmatpush1.bf16.msra.mxu0 %v1265
      %1606 = vmatprep.subr.bf16.mxu0 0
      %1607 = vmatpush1.bf16.msra.mxu0 %v1266
      %1608 = vmatprep.subr.bf16.mxu0 0
      %1609 = vmatpush1.bf16.msra.mxu0 %v1267
      %1610 = vmatprep.subr.bf16.mxu0 0
      %1611 = vmatpush1.bf16.msra.mxu0 %v1268
      %1612 = vmatprep.subr.bf16.mxu0 0
      %1613 = vmatpush1.bf16.msra.mxu0 %v1269
      %1614 = vmatprep.subr.bf16.mxu0 0
      %1615 = vmatpush1.bf16.msra.mxu0 %v1270
      %1616 = vmatprep.subr.bf16.mxu0 0
      %1617 = vmatpush1.bf16.msra.mxu0 %v1271
      %1618 = vmatprep.subr.bf16.mxu0 0
      %1619 = vmatpush1.bf16.msra.mxu0 %v1272
      %1620 = vmatprep.subr.bf16.mxu0 0
      %1621 = vmatpush1.bf16.msra.mxu0 %v1273
      %1622 = vmatprep.subr.bf16.mxu0 0
      %1623 = vmatpush1.bf16.msra.mxu0 %v1274
      %1624 = vmatprep.subr.bf16.mxu0 0
      %1625 = vmatpush1.bf16.msra.mxu0 %v1275
      %1626 = vmatprep.subr.bf16.mxu0 0
      %1627 = vmatpush1.bf16.msra.mxu0 %v1276
      %1628 = vmatprep.subr.bf16.mxu0 0
      %1629 = vmatpush1.bf16.msra.mxu0 %v1277
      %1630 = vmatprep.subr.bf16.mxu0 0
      %1631 = vmatpush1.bf16.msra.mxu0 %v1278
      %1632 = vmatprep.mubr.bf16.mxu0 %v866
      %1633 = vmatmul.mubr.bf16.gmra.mrb[0].mxu0 %v865
      %v1634 = vpop.f32.mrb[0].mxu0
      %v1635 = vadd.f32 %v1346, %v1634
      %v1636 = vpop.f32.mrb[0].mxu0
      %v1637 = vpop.f32.mrb[0].mxu0
      %v1638 = vadd.f32 %v1349, %v1637
      %v1639 = vpop.f32.mrb[0].mxu0
      %1640 = vmatprep.mubr.bf16.mxu0 %v870
      %1641 = vmatmul.mubr.bf16.gmra.mrb[0].mxu0 %v869
      %v1642 = vpop.f32.mrb[0].mxu0
      %v1643 = vadd.f32 %v1354, %v1642
      %v1644 = vpop.f32.mrb[0].mxu0
      %v1645 = vpop.f32.mrb[0].mxu0
      %v1646 = vadd.f32 %v1357, %v1645
      %v1647 = vpop.f32.mrb[0].mxu0
      %1648 = vmatprep.mubr.bf16.mxu0 %v874
      %1649 = vmatmul.mubr.bf16.gmra.mrb[0].mxu0 %v873
      %v1650 = vpop.f32.mrb[0].mxu0
      %v1651 = vadd.f32 %v1362, %v1650
      %v1652 = vpop.f32.mrb[0].mxu0
      %v1653 = vpop.f32.mrb[0].mxu0
      %v1654 = vadd.f32 %v1365, %v1653
      %v1655 = vpop.f32.mrb[0].mxu0
      %1656 = vmatprep.mubr.bf16.mxu0 %v878
      %1657 = vmatmul.mubr.bf16.gmra.mrb[0].mxu0 %v877
      %v1658 = vpop.f32.mrb[0].mxu0
      %v1659 = vadd.f32 %v1370, %v1658
      %v1660 = vpop.f32.mrb[0].mxu0
      %v1661 = vpop.f32.mrb[0].mxu0
      %v1662 = vadd.f32 %v1373, %v1661
      %v1663 = vpop.f32.mrb[0].mxu0
      %1664 = vmatprep.mubr.bf16.mxu0 %v882
      %1665 = vmatmul.mubr.bf16.gmra.mrb[0].mxu0 %v881
      %v1666 = vpop.f32.mrb[0].mxu0
      %v1667 = vadd.f32 %v1378, %v1666
      %v1668 = vpop.f32.mrb[0].mxu0
      %v1669 = vpop.f32.mrb[0].mxu0
      %v1670 = vadd.f32 %v1381, %v1669
      %v1671 = vpop.f32.mrb[0].mxu0
      %1672 = vmatprep.mubr.bf16.mxu0 %v886
      %1673 = vmatmul.mubr.bf16.gmra.mrb[0].mxu0 %v885
      %v1674 = vpop.f32.mrb[0].mxu0
      %v1675 = vadd.f32 %v1386, %v1674
      %v1676 = vpop.f32.mrb[0].mxu0
      %v1677 = vpop.f32.mrb[0].mxu0
      %v1678 = vadd.f32 %v1389, %v1677
      %v1679 = vpop.f32.mrb[0].mxu0
      %1680 = vmatprep.mubr.bf16.mxu0 %v890
      %1681 = vmatmul.mubr.bf16.gmra.mrb[0].mxu0 %v889
      %v1682 = vpop.f32.mrb[0].mxu0
      %v1683 = vadd.f32 %v1394, %v1682
      %v1684 = vpop.f32.mrb[0].mxu0
      %v1685 = vpop.f32.mrb[0].mxu0
      %v1686 = vadd.f32 %v1397, %v1685
      %v1687 = vpop.f32.mrb[0].mxu0
      %1688 = vmatprep.mubr.bf16.mxu0 %v894
      %1689 = vmatmul.mubr.bf16.gmra.mrb[0].mxu0 %v893
      %v1690 = vpop.f32.mrb[0].mxu0
      %v1691 = vadd.f32 %v1402, %v1690
      %v1692 = vpop.f32.mrb[0].mxu0
      %v1693 = vpop.f32.mrb[0].mxu0
      %v1694 = vadd.f32 %v1405, %v1693
      %v1695 = vpop.f32.mrb[0].mxu0
      %1696 = vmatprep.mubr.bf16.mxu0 %v898
      %1697 = vmatmul.mubr.bf16.gmra.mrb[0].mxu0 %v897
      %v1698 = vpop.f32.mrb[0].mxu0
      %v1699 = vadd.f32 %v1410, %v1698
      %v1700 = vpop.f32.mrb[0].mxu0
      %v1701 = vpop.f32.mrb[0].mxu0
      %v1702 = vadd.f32 %v1413, %v1701
      %v1703 = vpop.f32.mrb[0].mxu0
      %1704 = vmatprep.mubr.bf16.mxu0 %v902
      %1705 = vmatmul.mubr.bf16.gmra.mrb[0].mxu0 %v901
      %v1706 = vpop.f32.mrb[0].mxu0
      %v1707 = vadd.f32 %v1418, %v1706
      %v1708 = vpop.f32.mrb[0].mxu0
      %v1709 = vpop.f32.mrb[0].mxu0
      %v1710 = vadd.f32 %v1421, %v1709
      %v1711 = vpop.f32.mrb[0].mxu0
      %1712 = vmatprep.mubr.bf16.mxu0 %v906
      %1713 = vmatmul.mubr.bf16.gmra.mrb[0].mxu0 %v905
      %v1714 = vpop.f32.mrb[0].mxu0
      %v1715 = vadd.f32 %v1426, %v1714
      %v1716 = vpop.f32.mrb[0].mxu0
      %v1717 = vpop.f32.mrb[0].mxu0
      %v1718 = vadd.f32 %v1429, %v1717
      %v1719 = vpop.f32.mrb[0].mxu0
      %1720 = vmatprep.mubr.bf16.mxu0 %v910
      %1721 = vmatmul.mubr.bf16.gmra.mrb[0].mxu0 %v909
      %v1722 = vpop.f32.mrb[0].mxu0
      %v1723 = vadd.f32 %v1434, %v1722
      %v1724 = vpop.f32.mrb[0].mxu0
      %v1725 = vpop.f32.mrb[0].mxu0
      %v1726 = vadd.f32 %v1437, %v1725
      %v1727 = vpop.f32.mrb[0].mxu0
      %1728 = vmatprep.mubr.bf16.mxu0 %v914
      %1729 = vmatmul.mubr.bf16.gmra.mrb[0].mxu0 %v913
      %v1730 = vpop.f32.mrb[0].mxu0
      %v1731 = vadd.f32 %v1442, %v1730
      %v1732 = vpop.f32.mrb[0].mxu0
      %v1733 = vpop.f32.mrb[0].mxu0
      %v1734 = vadd.f32 %v1445, %v1733
      %v1735 = vpop.f32.mrb[0].mxu0
      %1736 = vmatprep.mubr.bf16.mxu0 %v918
      %1737 = vmatmul.mubr.bf16.gmra.mrb[0].mxu0 %v917
      %v1738 = vpop.f32.mrb[0].mxu0
      %v1739 = vadd.f32 %v1450, %v1738
      %v1740 = vpop.f32.mrb[0].mxu0
      %v1741 = vpop.f32.mrb[0].mxu0
      %v1742 = vadd.f32 %v1453, %v1741
      %v1743 = vpop.f32.mrb[0].mxu0
      %1744 = vmatprep.mubr.bf16.mxu0 %v922
      %1745 = vmatmul.mubr.bf16.gmra.mrb[0].mxu0 %v921
      %v1746 = vpop.f32.mrb[0].mxu0
      %v1747 = vadd.f32 %v1458, %v1746
      %v1748 = vpop.f32.mrb[0].mxu0
      %v1749 = vpop.f32.mrb[0].mxu0
      %v1750 = vadd.f32 %v1461, %v1749
      %v1751 = vpop.f32.mrb[0].mxu0
      %1752 = vmatprep.mubr.bf16.mxu0 %v926
      %1753 = vmatmul.mubr.bf16.gmra.mrb[0].mxu0 %v925
      %v1754 = vpop.f32.mrb[0].mxu0
      %v1755 = vadd.f32 %v1466, %v1754
      %v1756 = vpop.f32.mrb[0].mxu0
      %v1757 = vpop.f32.mrb[0].mxu0
      %v1758 = vadd.f32 %v1469, %v1757
      %v1759 = vpop.f32.mrb[0].mxu0
      %1760 = vmatprep.mubr.bf16.mxu0 %v930
      %1761 = vmatmul.mubr.bf16.gmra.mrb[0].mxu0 %v929
      %v1762 = vpop.f32.mrb[0].mxu0
      %v1763 = vadd.f32 %v1474, %v1762
      %v1764 = vpop.f32.mrb[0].mxu0
      %v1765 = vpop.f32.mrb[0].mxu0
      %v1766 = vadd.f32 %v1477, %v1765
      %v1767 = vpop.f32.mrb[0].mxu0
      %1768 = vmatprep.mubr.bf16.mxu0 %v934
      %1769 = vmatmul.mubr.bf16.gmra.mrb[0].mxu0 %v933
      %v1770 = vpop.f32.mrb[0].mxu0
      %v1771 = vadd.f32 %v1482, %v1770
      %v1772 = vpop.f32.mrb[0].mxu0
      %v1773 = vpop.f32.mrb[0].mxu0
      %v1774 = vadd.f32 %v1485, %v1773
      %v1775 = vpop.f32.mrb[0].mxu0
      %1776 = vmatprep.mubr.bf16.mxu0 %v938
      %1777 = vmatmul.mubr.bf16.gmra.mrb[0].mxu0 %v937
      %v1778 = vpop.f32.mrb[0].mxu0
      %v1779 = vadd.f32 %v1490, %v1778
      %v1780 = vpop.f32.mrb[0].mxu0
      %v1781 = vpop.f32.mrb[0].mxu0
      %v1782 = vadd.f32 %v1493, %v1781
      %v1783 = vpop.f32.mrb[0].mxu0
      %1784 = vmatprep.mubr.bf16.mxu0 %v942
      %1785 = vmatmul.mubr.bf16.gmra.mrb[0].mxu0 %v941
      %v1786 = vpop.f32.mrb[0].mxu0
      %v1787 = vadd.f32 %v1498, %v1786
      %v1788 = vpop.f32.mrb[0].mxu0
      %v1789 = vpop.f32.mrb[0].mxu0
      %v1790 = vadd.f32 %v1501, %v1789
      %v1791 = vpop.f32.mrb[0].mxu0
      %1792 = vmatprep.mubr.bf16.mxu0 %v946
      %1793 = vmatmul.mubr.bf16.gmra.mrb[0].mxu0 %v945
      %v1794 = vpop.f32.mrb[0].mxu0
      %v1795 = vadd.f32 %v1506, %v1794
      %v1796 = vpop.f32.mrb[0].mxu0
      %v1797 = vpop.f32.mrb[0].mxu0
      %v1798 = vadd.f32 %v1509, %v1797
      %v1799 = vpop.f32.mrb[0].mxu0
      %1800 = vmatprep.mubr.bf16.mxu0 %v950
      %1801 = vmatmul.mubr.bf16.gmra.mrb[0].mxu0 %v949
      %v1802 = vpop.f32.mrb[0].mxu0
      %v1803 = vadd.f32 %v1514, %v1802
      %v1804 = vpop.f32.mrb[0].mxu0
      %v1805 = vpop.f32.mrb[0].mxu0
      %v1806 = vadd.f32 %v1517, %v1805
      %v1807 = vpop.f32.mrb[0].mxu0
      %1808 = vmatprep.mubr.bf16.mxu0 %v954
      %1809 = vmatmul.mubr.bf16.gmra.mrb[0].mxu0 %v953
      %v1810 = vpop.f32.mrb[0].mxu0
      %v1811 = vadd.f32 %v1522, %v1810
      %v1812 = vpop.f32.mrb[0].mxu0
      %v1813 = vpop.f32.mrb[0].mxu0
      %v1814 = vadd.f32 %v1525, %v1813
      %v1815 = vpop.f32.mrb[0].mxu0
      %1816 = vmatprep.mubr.bf16.mxu0 %v958
      %1817 = vmatmul.mubr.bf16.gmra.mrb[0].mxu0 %v957
      %v1818 = vpop.f32.mrb[0].mxu0
      %v1819 = vadd.f32 %v1530, %v1818
      %v1820 = vpop.f32.mrb[0].mxu0
      %v1821 = vpop.f32.mrb[0].mxu0
      %v1822 = vadd.f32 %v1533, %v1821
      %v1823 = vpop.f32.mrb[0].mxu0
      %1824 = vmatprep.mubr.bf16.mxu0 %v962
      %1825 = vmatmul.mubr.bf16.gmra.mrb[0].mxu0 %v961
      %v1826 = vpop.f32.mrb[0].mxu0
      %v1827 = vadd.f32 %v1538, %v1826
      %v1828 = vpop.f32.mrb[0].mxu0
      %v1829 = vpop.f32.mrb[0].mxu0
      %v1830 = vadd.f32 %v1541, %v1829
      %v1831 = vpop.f32.mrb[0].mxu0
      %1832 = vmatprep.mubr.bf16.mxu0 %v966
      %1833 = vmatmul.mubr.bf16.gmra.mrb[0].mxu0 %v965
      %v1834 = vpop.f32.mrb[0].mxu0
      %v1835 = vadd.f32 %v1546, %v1834
      %v1836 = vpop.f32.mrb[0].mxu0
      %v1837 = vpop.f32.mrb[0].mxu0
      %v1838 = vadd.f32 %v1549, %v1837
      %v1839 = vpop.f32.mrb[0].mxu0
      %1840 = vmatprep.mubr.bf16.mxu0 %v970
      %1841 = vmatmul.mubr.bf16.gmra.mrb[0].mxu0 %v969
      %v1842 = vpop.f32.mrb[0].mxu0
      %v1843 = vadd.f32 %v1554, %v1842
      %v1844 = vpop.f32.mrb[0].mxu0
      %v1845 = vpop.f32.mrb[0].mxu0
      %v1846 = vadd.f32 %v1557, %v1845
      %v1847 = vpop.f32.mrb[0].mxu0
      %1848 = vmatprep.mubr.bf16.mxu0 %v974
      %1849 = vmatmul.mubr.bf16.gmra.mrb[0].mxu0 %v973
      %v1850 = vpop.f32.mrb[0].mxu0
      %v1851 = vadd.f32 %v1562, %v1850
      %v1852 = vpop.f32.mrb[0].mxu0
      %v1853 = vpop.f32.mrb[0].mxu0
      %v1854 = vadd.f32 %v1565, %v1853
      %v1855 = vpop.f32.mrb[0].mxu0
      %1856 = vmatprep.mubr.bf16.mxu0 %v978
      %1857 = vmatmul.mubr.bf16.gmra.mrb[0].mxu0 %v977
      %v1858 = vpop.f32.mrb[0].mxu0
      %v1859 = vadd.f32 %v1570, %v1858
      %v1860 = vpop.f32.mrb[0].mxu0
      %v1861 = vpop.f32.mrb[0].mxu0
      %v1862 = vadd.f32 %v1573, %v1861
      %v1863 = vpop.f32.mrb[0].mxu0
      %1864 = vmatprep.mubr.bf16.mxu0 %v982
      %1865 = vmatmul.mubr.bf16.gmra.mrb[0].mxu0 %v981
      %v1866 = vpop.f32.mrb[0].mxu0
      %v1867 = vadd.f32 %v1578, %v1866
      %v1868 = vpop.f32.mrb[0].mxu0
      %v1869 = vpop.f32.mrb[0].mxu0
      %v1870 = vadd.f32 %v1581, %v1869
      %v1871 = vpop.f32.mrb[0].mxu0
      %1872 = vmatprep.mubr.bf16.mxu0 %v986
      %1873 = vmatmul.mubr.bf16.gmra.mrb[0].mxu0 %v985
      %v1874 = vpop.f32.mrb[0].mxu0
      %v1875 = vadd.f32 %v1586, %v1874
      %v1876 = vpop.f32.mrb[0].mxu0
      %v1877 = vpop.f32.mrb[0].mxu0
      %v1878 = vadd.f32 %v1589, %v1877
      %v1879 = vpop.f32.mrb[0].mxu0
      %1880 = vmatprep.mubr.bf16.mxu0 %v990
      %1881 = vmatmul.mubr.bf16.gmra.mrb[0].mxu0 %v989
      %v1882 = vpop.f32.mrb[0].mxu0
      %v1883 = vadd.f32 %v1594, %v1882
      %v1884 = vpop.f32.mrb[0].mxu0
      %v1885 = vpop.f32.mrb[0].mxu0
      %v1886 = vadd.f32 %v1597, %v1885
      %v1887 = vpop.f32.mrb[0].mxu0
      %1888 = vdwg.mxu0
      %v1889 = vpack.c.bf16 %v1638, %v1635
      %v1890 = vpack.c.bf16 %v1646, %v1643
      %v1891 = vpack.c.bf16 %v1654, %v1651
      %v1892 = vpack.c.bf16 %v1662, %v1659
      %v1893 = vpack.c.bf16 %v1670, %v1667
      %v1894 = vpack.c.bf16 %v1678, %v1675
      %v1895 = vpack.c.bf16 %v1686, %v1683
      %v1896 = vpack.c.bf16 %v1694, %v1691
      %v1897 = vpack.c.bf16 %v1702, %v1699
      %v1898 = vpack.c.bf16 %v1710, %v1707
      %v1899 = vpack.c.bf16 %v1718, %v1715
      %v1900 = vpack.c.bf16 %v1726, %v1723
      %v1901 = vpack.c.bf16 %v1734, %v1731
      %v1902 = vpack.c.bf16 %v1742, %v1739
      %v1903 = vpack.c.bf16 %v1750, %v1747
      %v1904 = vpack.c.bf16 %v1758, %v1755
      %v1905 = vpack.c.bf16 %v1766, %v1763
      %v1906 = vpack.c.bf16 %v1774, %v1771
      %v1907 = vpack.c.bf16 %v1782, %v1779
      %v1908 = vpack.c.bf16 %v1790, %v1787
      %v1909 = vpack.c.bf16 %v1798, %v1795
      %v1910 = vpack.c.bf16 %v1806, %v1803
      %v1911 = vpack.c.bf16 %v1814, %v1811
      %v1912 = vpack.c.bf16 %v1822, %v1819
      %v1913 = vpack.c.bf16 %v1830, %v1827
      %v1914 = vpack.c.bf16 %v1838, %v1835
      %v1915 = vpack.c.bf16 %v1846, %v1843
      %v1916 = vpack.c.bf16 %v1854, %v1851
      %v1917 = vpack.c.bf16 %v1862, %v1859
      %v1918 = vpack.c.bf16 %v1870, %v1867
      %v1919 = vpack.c.bf16 %v1878, %v1875
      %v1920 = vpack.c.bf16 %v1886, %v1883
      %v1953 = vunpack.c.l.b16 %v1889
      %v1954 = vunpack.c.h.b16 %v1889
      %v1955 = vunpack.c.l.b16 %v1890
      %v1956 = vunpack.c.h.b16 %v1890
      %v1957 = vunpack.c.l.b16 %v1891
      %v1958 = vunpack.c.h.b16 %v1891
      %v1959 = vunpack.c.l.b16 %v1892
      %v1960 = vunpack.c.h.b16 %v1892
      %v1961 = vunpack.c.l.b16 %v1893
      %v1962 = vunpack.c.h.b16 %v1893
      %v1963 = vunpack.c.l.b16 %v1894
      %v1964 = vunpack.c.h.b16 %v1894
      %v1965 = vunpack.c.l.b16 %v1895
      %v1966 = vunpack.c.h.b16 %v1895
      %v1967 = vunpack.c.l.b16 %v1896
      %v1968 = vunpack.c.h.b16 %v1896
      %v1969 = vunpack.c.l.b16 %v1897
      %v1970 = vunpack.c.h.b16 %v1897
      %v1971 = vunpack.c.l.b16 %v1898
      %v1972 = vunpack.c.h.b16 %v1898
      %v1973 = vunpack.c.l.b16 %v1899
      %v1974 = vunpack.c.h.b16 %v1899
      %v1975 = vunpack.c.l.b16 %v1900
      %v1976 = vunpack.c.h.b16 %v1900
      %v1977 = vunpack.c.l.b16 %v1901
      %v1978 = vunpack.c.h.b16 %v1901
      %v1979 = vunpack.c.l.b16 %v1902
      %v1980 = vunpack.c.h.b16 %v1902
      %v1981 = vunpack.c.l.b16 %v1903
      %v1982 = vunpack.c.h.b16 %v1903
      %v1983 = vunpack.c.l.b16 %v1904
      %v1984 = vunpack.c.h.b16 %v1904
      %v1985 = vunpack.c.l.b16 %v1905
      %v1986 = vunpack.c.h.b16 %v1905
      %v1987 = vunpack.c.l.b16 %v1906
      %v1988 = vunpack.c.h.b16 %v1906
      %v1989 = vunpack.c.l.b16 %v1907
      %v1990 = vunpack.c.h.b16 %v1907
      %v1991 = vunpack.c.l.b16 %v1908
      %v1992 = vunpack.c.h.b16 %v1908
      %v1993 = vunpack.c.l.b16 %v1909
      %v1994 = vunpack.c.h.b16 %v1909
      %v1995 = vunpack.c.l.b16 %v1910
      %v1996 = vunpack.c.h.b16 %v1910
      %v1997 = vunpack.c.l.b16 %v1911
      %v1998 = vunpack.c.h.b16 %v1911
      %v1999 = vunpack.c.l.b16 %v1912
      %v2000 = vunpack.c.h.b16 %v1912
      %v2001 = vunpack.c.l.b16 %v1913
      %v2002 = vunpack.c.h.b16 %v1913
      %v2003 = vunpack.c.l.b16 %v1914
      %v2004 = vunpack.c.h.b16 %v1914
      %v2005 = vunpack.c.l.b16 %v1915
      %v2006 = vunpack.c.h.b16 %v1915
      %v2007 = vunpack.c.l.b16 %v1916
      %v2008 = vunpack.c.h.b16 %v1916
      %v2009 = vunpack.c.l.b16 %v1917
      %v2010 = vunpack.c.h.b16 %v1917
      %v2011 = vunpack.c.l.b16 %v1918
      %v2012 = vunpack.c.h.b16 %v1918
      %v2013 = vunpack.c.l.b16 %v1919
      %v2014 = vunpack.c.h.b16 %v1919
      %v2015 = vunpack.c.l.b16 %v1920
      %v2016 = vunpack.c.h.b16 %v1920
      %v2017 = vpack.c.b16 %v1953, %v1953
      %v2018 = vpack.c.b16 %v1954, %v1954
      %v2019 = vpack.c.b16 %v1955, %v1955
      %v2020 = vpack.c.b16 %v1956, %v1956
      %v2021 = vpack.c.b16 %v1957, %v1957
      %v2022 = vpack.c.b16 %v1958, %v1958
      %v2023 = vpack.c.b16 %v1959, %v1959
      %v2024 = vpack.c.b16 %v1960, %v1960
      %v2025 = vpack.c.b16 %v1961, %v1961
      %v2026 = vpack.c.b16 %v1962, %v1962
      %v2027 = vpack.c.b16 %v1963, %v1963
      %v2028 = vpack.c.b16 %v1964, %v1964
      %v2029 = vpack.c.b16 %v1965, %v1965
      %v2030 = vpack.c.b16 %v1966, %v1966
      %v2031 = vpack.c.b16 %v1967, %v1967
      %v2032 = vpack.c.b16 %v1968, %v1968
      %v2033 = vpack.c.b16 %v1969, %v1969
      %v2034 = vpack.c.b16 %v1970, %v1970
      %v2035 = vpack.c.b16 %v1971, %v1971
      %v2036 = vpack.c.b16 %v1972, %v1972
      %v2037 = vpack.c.b16 %v1973, %v1973
      %v2038 = vpack.c.b16 %v1974, %v1974
      %v2039 = vpack.c.b16 %v1975, %v1975
      %v2040 = vpack.c.b16 %v1976, %v1976
      %v2041 = vpack.c.b16 %v1977, %v1977
      %v2042 = vpack.c.b16 %v1978, %v1978
      %v2043 = vpack.c.b16 %v1979, %v1979
      %v2044 = vpack.c.b16 %v1980, %v1980
      %v2045 = vpack.c.b16 %v1981, %v1981
      %v2046 = vpack.c.b16 %v1982, %v1982
      %v2047 = vpack.c.b16 %v1983, %v1983
      %v2048 = vpack.c.b16 %v1984, %v1984
      %v2049 = vpack.c.b16 %v1985, %v1985
      %v2050 = vpack.c.b16 %v1986, %v1986
      %v2051 = vpack.c.b16 %v1987, %v1987
      %v2052 = vpack.c.b16 %v1988, %v1988
      %v2053 = vpack.c.b16 %v1989, %v1989
      %v2054 = vpack.c.b16 %v1990, %v1990
      %v2055 = vpack.c.b16 %v1991, %v1991
      %v2056 = vpack.c.b16 %v1992, %v1992
      %v2057 = vpack.c.b16 %v1993, %v1993
      %v2058 = vpack.c.b16 %v1994, %v1994
      %v2059 = vpack.c.b16 %v1995, %v1995
      %v2060 = vpack.c.b16 %v1996, %v1996
      %v2061 = vpack.c.b16 %v1997, %v1997
      %v2062 = vpack.c.b16 %v1998, %v1998
      %v2063 = vpack.c.b16 %v1999, %v1999
      %v2064 = vpack.c.b16 %v2000, %v2000
      %v2065 = vpack.c.b16 %v2001, %v2001
      %v2066 = vpack.c.b16 %v2002, %v2002
      %v2067 = vpack.c.b16 %v2003, %v2003
      %v2068 = vpack.c.b16 %v2004, %v2004
      %v2069 = vpack.c.b16 %v2005, %v2005
      %v2070 = vpack.c.b16 %v2006, %v2006
      %v2071 = vpack.c.b16 %v2007, %v2007
      %v2072 = vpack.c.b16 %v2008, %v2008
      %v2073 = vpack.c.b16 %v2009, %v2009
      %v2074 = vpack.c.b16 %v2010, %v2010
      %v2075 = vpack.c.b16 %v2011, %v2011
      %v2076 = vpack.c.b16 %v2012, %v2012
      %v2077 = vpack.c.b16 %v2013, %v2013
      %v2078 = vpack.c.b16 %v2014, %v2014
      %v2079 = vpack.c.b16 %v2015, %v2015
      %v2080 = vpack.c.b16 %v2016, %v2016
      %vm2145 = vcmask 519168
      %2146 = vst.msk [vmem:[%s271] sm:$0xf] %vm2145, %v2017
      %2147 = vst.msk [vmem:[%s271 + $0x4] sm:$0xf] %vm2145, %v2018
      %2148 = vst.msk [vmem:[%s271 + $0x8] sm:$0xf] %vm2145, %v2019
      %2149 = vst.msk [vmem:[%s271 + $0xc] sm:$0xf] %vm2145, %v2020
      %2150 = vst.msk [vmem:[%s271 + $0x10] sm:$0xf] %vm2145, %v2021
      %2151 = vst.msk [vmem:[%s271 + $0x14] sm:$0xf] %vm2145, %v2022
      %2152 = vst.msk [vmem:[%s271 + $0x18] sm:$0xf] %vm2145, %v2023
      %2153 = vst.msk [vmem:[%s271 + $0x1c] sm:$0xf] %vm2145, %v2024
      %2154 = vst.msk [vmem:[%s271 + $0x20] sm:$0xf] %vm2145, %v2025
      %2155 = vst.msk [vmem:[%s271 + $0x24] sm:$0xf] %vm2145, %v2026
      %2156 = vst.msk [vmem:[%s271 + $0x28] sm:$0xf] %vm2145, %v2027
      %2157 = vst.msk [vmem:[%s271 + $0x2c] sm:$0xf] %vm2145, %v2028
      %2158 = vst.msk [vmem:[%s271 + $0x30] sm:$0xf] %vm2145, %v2029
      %2159 = vst.msk [vmem:[%s271 + $0x34] sm:$0xf] %vm2145, %v2030
      %2160 = vst.msk [vmem:[%s271 + $0x38] sm:$0xf] %vm2145, %v2031
      %2161 = vst.msk [vmem:[%s271 + $0x3c] sm:$0xf] %vm2145, %v2032
      %2162 = vst.msk [vmem:[%s271 + $0x40] sm:$0xf] %vm2145, %v2033
      %2163 = vst.msk [vmem:[%s271 + $0x44] sm:$0xf] %vm2145, %v2034
      %2164 = vst.msk [vmem:[%s271 + $0x48] sm:$0xf] %vm2145, %v2035
      %2165 = vst.msk [vmem:[%s271 + $0x4c] sm:$0xf] %vm2145, %v2036
      %2166 = vst.msk [vmem:[%s271 + $0x50] sm:$0xf] %vm2145, %v2037
      %2167 = vst.msk [vmem:[%s271 + $0x54] sm:$0xf] %vm2145, %v2038
      %2168 = vst.msk [vmem:[%s271 + $0x58] sm:$0xf] %vm2145, %v2039
      %2169 = vst.msk [vmem:[%s271 + $0x5c] sm:$0xf] %vm2145, %v2040
      %2170 = vst.msk [vmem:[%s271 + $0x60] sm:$0xf] %vm2145, %v2041
      %2171 = vst.msk [vmem:[%s271 + $0x64] sm:$0xf] %vm2145, %v2042
      %2172 = vst.msk [vmem:[%s271 + $0x68] sm:$0xf] %vm2145, %v2043
      %2173 = vst.msk [vmem:[%s271 + $0x6c] sm:$0xf] %vm2145, %v2044
      %2174 = vst.msk [vmem:[%s271 + $0x70] sm:$0xf] %vm2145, %v2045
      %2175 = vst.msk [vmem:[%s271 + $0x74] sm:$0xf] %vm2145, %v2046
      %2176 = vst.msk [vmem:[%s271 + $0x78] sm:$0xf] %vm2145, %v2047
      %2177 = vst.msk [vmem:[%s271 + $0x7c] sm:$0xf] %vm2145, %v2048
      %2178 = vst.msk [vmem:[%s271 + $0x80] sm:$0xf] %vm2145, %v2049
      %2179 = vst.msk [vmem:[%s271 + $0x84] sm:$0xf] %vm2145, %v2050
      %2180 = vst.msk [vmem:[%s271 + $0x88] sm:$0xf] %vm2145, %v2051
      %2181 = vst.msk [vmem:[%s271 + $0x8c] sm:$0xf] %vm2145, %v2052
      %2182 = vst.msk [vmem:[%s271 + $0x90] sm:$0xf] %vm2145, %v2053
      %2183 = vst.msk [vmem:[%s271 + $0x94] sm:$0xf] %vm2145, %v2054
      %2184 = vst.msk [vmem:[%s271 + $0x98] sm:$0xf] %vm2145, %v2055
      %2185 = vst.msk [vmem:[%s271 + $0x9c] sm:$0xf] %vm2145, %v2056
      %2186 = vst.msk [vmem:[%s271 + $0xa0] sm:$0xf] %vm2145, %v2057
      %2187 = vst.msk [vmem:[%s271 + $0xa4] sm:$0xf] %vm2145, %v2058
      %2188 = vst.msk [vmem:[%s271 + $0xa8] sm:$0xf] %vm2145, %v2059
      %2189 = vst.msk [vmem:[%s271 + $0xac] sm:$0xf] %vm2145, %v2060
      %2190 = vst.msk [vmem:[%s271 + $0xb0] sm:$0xf] %vm2145, %v2061
      %2191 = vst.msk [vmem:[%s271 + $0xb4] sm:$0xf] %vm2145, %v2062
      %2192 = vst.msk [vmem:[%s271 + $0xb8] sm:$0xf] %vm2145, %v2063
      %2193 = vst.msk [vmem:[%s271 + $0xbc] sm:$0xf] %vm2145, %v2064
      %2194 = vst.msk [vmem:[%s271 + $0xc0] sm:$0xf] %vm2145, %v2065
      %2195 = vst.msk [vmem:[%s271 + $0xc4] sm:$0xf] %vm2145, %v2066
      %2196 = vst.msk [vmem:[%s271 + $0xc8] sm:$0xf] %vm2145, %v2067
      %2197 = vst.msk [vmem:[%s271 + $0xcc] sm:$0xf] %vm2145, %v2068
      %2198 = vst.msk [vmem:[%s271 + $0xd0] sm:$0xf] %vm2145, %v2069
      %2199 = vst.msk [vmem:[%s271 + $0xd4] sm:$0xf] %vm2145, %v2070
      %2200 = vst.msk [vmem:[%s271 + $0xd8] sm:$0xf] %vm2145, %v2071
      %2201 = vst.msk [vmem:[%s271 + $0xdc] sm:$0xf] %vm2145, %v2072
      %2202 = vst.msk [vmem:[%s271 + $0xe0] sm:$0xf] %vm2145, %v2073
      %2203 = vst.msk [vmem:[%s271 + $0xe4] sm:$0xf] %vm2145, %v2074
      %2204 = vst.msk [vmem:[%s271 + $0xe8] sm:$0xf] %vm2145, %v2075
      %2205 = vst.msk [vmem:[%s271 + $0xec] sm:$0xf] %vm2145, %v2076
      %2206 = vst.msk [vmem:[%s271 + $0xf0] sm:$0xf] %vm2145, %v2077
      %2207 = vst.msk [vmem:[%s271 + $0xf4] sm:$0xf] %vm2145, %v2078
      %2208 = vst.msk [vmem:[%s271 + $0xf8] sm:$0xf] %vm2145, %v2079
      %2209 = vst.msk [vmem:[%s271 + $0xfc] sm:$0xf] %vm2145, %v2080
      %vm2210 = vcmask 523264
      %v2211 = vsel %vm2210, %v1635, 0.0
      %v2212 = vsel %vm2210, %v1638, 0.0
      %v2213 = vadd.f32 %v2211, %v2212
      %v2214 = vsel %vm2210, %v1643, 0.0
      %v2215 = vadd.f32 %v2213, %v2214
      %v2216 = vsel %vm2210, %v1646, 0.0
      %v2217 = vadd.f32 %v2215, %v2216
      %v2218 = vsel %vm2210, %v1651, 0.0
      %v2219 = vadd.f32 %v2217, %v2218
      %v2220 = vsel %vm2210, %v1654, 0.0
      %v2221 = vadd.f32 %v2219, %v2220
      %v2222 = vsel %vm2210, %v1659, 0.0
      %v2223 = vadd.f32 %v2221, %v2222
      %v2224 = vsel %vm2210, %v1662, 0.0
      %v2225 = vadd.f32 %v2223, %v2224
      %v2226 = vsel %vm2210, %v1667, 0.0
      %v2227 = vadd.f32 %v2225, %v2226
      %v2228 = vsel %vm2210, %v1670, 0.0
      %v2229 = vadd.f32 %v2227, %v2228
      %v2230 = vsel %vm2210, %v1675, 0.0
      %v2231 = vadd.f32 %v2229, %v2230
      %v2232 = vsel %vm2210, %v1678, 0.0
      %v2233 = vadd.f32 %v2231, %v2232
      %v2234 = vsel %vm2210, %v1683, 0.0
      %v2235 = vadd.f32 %v2233, %v2234
      %v2236 = vsel %vm2210, %v1686, 0.0
      %v2237 = vadd.f32 %v2235, %v2236
      %v2238 = vsel %vm2210, %v1691, 0.0
      %v2239 = vadd.f32 %v2237, %v2238
      %v2240 = vsel %vm2210, %v1694, 0.0
      %v2241 = vadd.f32 %v2239, %v2240
      %v2242 = vsel %vm2210, %v1699, 0.0
      %v2243 = vadd.f32 %v2241, %v2242
      %v2244 = vsel %vm2210, %v1702, 0.0
      %v2245 = vadd.f32 %v2243, %v2244
      %v2246 = vsel %vm2210, %v1707, 0.0
      %v2247 = vadd.f32 %v2245, %v2246
      %v2248 = vsel %vm2210, %v1710, 0.0
      %v2249 = vadd.f32 %v2247, %v2248
      %v2250 = vsel %vm2210, %v1715, 0.0
      %v2251 = vadd.f32 %v2249, %v2250
      %v2252 = vsel %vm2210, %v1718, 0.0
      %v2253 = vadd.f32 %v2251, %v2252
      %v2254 = vsel %vm2210, %v1723, 0.0
      %v2255 = vadd.f32 %v2253, %v2254
      %v2256 = vsel %vm2210, %v1726, 0.0
      %v2257 = vadd.f32 %v2255, %v2256
      %v2258 = vsel %vm2210, %v1731, 0.0
      %v2259 = vadd.f32 %v2257, %v2258
      %v2260 = vsel %vm2210, %v1734, 0.0
      %v2261 = vadd.f32 %v2259, %v2260
      %v2262 = vsel %vm2210, %v1739, 0.0
      %v2263 = vadd.f32 %v2261, %v2262
      %v2264 = vsel %vm2210, %v1742, 0.0
      %v2265 = vadd.f32 %v2263, %v2264
      %v2266 = vsel %vm2210, %v1747, 0.0
      %v2267 = vadd.f32 %v2265, %v2266
      %v2268 = vsel %vm2210, %v1750, 0.0
      %v2269 = vadd.f32 %v2267, %v2268
      %v2270 = vsel %vm2210, %v1755, 0.0
      %v2271 = vadd.f32 %v2269, %v2270
      %v2272 = vsel %vm2210, %v1758, 0.0
      %v2273 = vadd.f32 %v2271, %v2272
      %v2274 = vsel %vm2210, %v1763, 0.0
      %v2275 = vadd.f32 %v2273, %v2274
      %v2276 = vsel %vm2210, %v1766, 0.0
      %v2277 = vadd.f32 %v2275, %v2276
      %v2278 = vsel %vm2210, %v1771, 0.0
      %v2279 = vadd.f32 %v2277, %v2278
      %v2280 = vsel %vm2210, %v1774, 0.0
      %v2281 = vadd.f32 %v2279, %v2280
      %v2282 = vsel %vm2210, %v1779, 0.0
      %v2283 = vadd.f32 %v2281, %v2282
      %v2284 = vsel %vm2210, %v1782, 0.0
      %v2285 = vadd.f32 %v2283, %v2284
      %v2286 = vsel %vm2210, %v1787, 0.0
      %v2287 = vadd.f32 %v2285, %v2286
      %v2288 = vsel %vm2210, %v1790, 0.0
      %v2289 = vadd.f32 %v2287, %v2288
      %v2290 = vsel %vm2210, %v1795, 0.0
      %v2291 = vadd.f32 %v2289, %v2290
      %v2292 = vsel %vm2210, %v1798, 0.0
      %v2293 = vadd.f32 %v2291, %v2292
      %v2294 = vsel %vm2210, %v1803, 0.0
      %v2295 = vadd.f32 %v2293, %v2294
      %v2296 = vsel %vm2210, %v1806, 0.0
      %v2297 = vadd.f32 %v2295, %v2296
      %v2298 = vsel %vm2210, %v1811, 0.0
      %v2299 = vadd.f32 %v2297, %v2298
      %v2300 = vsel %vm2210, %v1814, 0.0
      %v2301 = vadd.f32 %v2299, %v2300
      %v2302 = vsel %vm2210, %v1819, 0.0
      %v2303 = vadd.f32 %v2301, %v2302
      %v2304 = vsel %vm2210, %v1822, 0.0
      %v2305 = vadd.f32 %v2303, %v2304
      %v2306 = vsel %vm2210, %v1827, 0.0
      %v2307 = vadd.f32 %v2305, %v2306
      %v2308 = vsel %vm2210, %v1830, 0.0
      %v2309 = vadd.f32 %v2307, %v2308
      %v2310 = vsel %vm2210, %v1835, 0.0
      %v2311 = vadd.f32 %v2309, %v2310
      %v2312 = vsel %vm2210, %v1838, 0.0
      %v2313 = vadd.f32 %v2311, %v2312
      %v2314 = vsel %vm2210, %v1843, 0.0
      %v2315 = vadd.f32 %v2313, %v2314
      %v2316 = vsel %vm2210, %v1846, 0.0
      %v2317 = vadd.f32 %v2315, %v2316
      %v2318 = vsel %vm2210, %v1851, 0.0
      %v2319 = vadd.f32 %v2317, %v2318
      %v2320 = vsel %vm2210, %v1854, 0.0
      %v2321 = vadd.f32 %v2319, %v2320
      %v2322 = vsel %vm2210, %v1859, 0.0
      %v2323 = vadd.f32 %v2321, %v2322
      %v2324 = vsel %vm2210, %v1862, 0.0
      %v2325 = vadd.f32 %v2323, %v2324
      %v2326 = vsel %vm2210, %v1867, 0.0
      %v2327 = vadd.f32 %v2325, %v2326
      %v2328 = vsel %vm2210, %v1870, 0.0
      %v2329 = vadd.f32 %v2327, %v2328
      %v2330 = vsel %vm2210, %v1875, 0.0
      %v2331 = vadd.f32 %v2329, %v2330
      %v2332 = vsel %vm2210, %v1878, 0.0
      %v2333 = vadd.f32 %v2331, %v2332
      %v2334 = vsel %vm2210, %v1883, 0.0
      %v2335 = vadd.f32 %v2333, %v2334
      %v2336 = vsel %vm2210, %v1886, 0.0
      %v2337 = vadd.f32 %v2335, %v2336
      %v2338 = vrot.slane %v2337, 4
      %v2339 = vadd.f32 %v2337, %v2338
      %v2340 = vrot.slane %v2339, 2
      %v2341 = vadd.f32 %v2339, %v2340
      %v2342 = vrot.slane %v2341, 1
      %v2343 = vadd.f32 %v2341, %v2342
      %v2344 = vmul.f32 %v1635, %v1635
      %v2345 = vmul.f32 %v1638, %v1638
      %v2346 = vmul.f32 %v1643, %v1643
      %v2347 = vmul.f32 %v1646, %v1646
      %v2348 = vmul.f32 %v1651, %v1651
      %v2349 = vmul.f32 %v1654, %v1654
      %v2350 = vmul.f32 %v1659, %v1659
      %v2351 = vmul.f32 %v1662, %v1662
      %v2352 = vmul.f32 %v1667, %v1667
      %v2353 = vmul.f32 %v1670, %v1670
      %v2354 = vmul.f32 %v1675, %v1675
      %v2355 = vmul.f32 %v1678, %v1678
      %v2356 = vmul.f32 %v1683, %v1683
      %v2357 = vmul.f32 %v1686, %v1686
      %v2358 = vmul.f32 %v1691, %v1691
      %v2359 = vmul.f32 %v1694, %v1694
      %v2360 = vmul.f32 %v1699, %v1699
      %v2361 = vmul.f32 %v1702, %v1702
      %v2362 = vmul.f32 %v1707, %v1707
      %v2363 = vmul.f32 %v1710, %v1710
      %v2364 = vmul.f32 %v1715, %v1715
      %v2365 = vmul.f32 %v1718, %v1718
      %v2366 = vmul.f32 %v1723, %v1723
      %v2367 = vmul.f32 %v1726, %v1726
      %v2368 = vmul.f32 %v1731, %v1731
      %v2369 = vmul.f32 %v1734, %v1734
      %v2370 = vmul.f32 %v1739, %v1739
      %v2371 = vmul.f32 %v1742, %v1742
      %v2372 = vmul.f32 %v1747, %v1747
      %v2373 = vmul.f32 %v1750, %v1750
      %v2374 = vmul.f32 %v1755, %v1755
      %v2375 = vmul.f32 %v1758, %v1758
      %v2376 = vmul.f32 %v1763, %v1763
      %v2377 = vmul.f32 %v1766, %v1766
      %v2378 = vmul.f32 %v1771, %v1771
      %v2379 = vmul.f32 %v1774, %v1774
      %v2380 = vmul.f32 %v1779, %v1779
      %v2381 = vmul.f32 %v1782, %v1782
      %v2382 = vmul.f32 %v1787, %v1787
      %v2383 = vmul.f32 %v1790, %v1790
      %v2384 = vmul.f32 %v1795, %v1795
      %v2385 = vmul.f32 %v1798, %v1798
      %v2386 = vmul.f32 %v1803, %v1803
      %v2387 = vmul.f32 %v1806, %v1806
      %v2388 = vmul.f32 %v1811, %v1811
      %v2389 = vmul.f32 %v1814, %v1814
      %v2390 = vmul.f32 %v1819, %v1819
      %v2391 = vmul.f32 %v1822, %v1822
      %v2392 = vmul.f32 %v1827, %v1827
      %v2393 = vmul.f32 %v1830, %v1830
      %v2394 = vmul.f32 %v1835, %v1835
      %v2395 = vmul.f32 %v1838, %v1838
      %v2396 = vmul.f32 %v1843, %v1843
      %v2397 = vmul.f32 %v1846, %v1846
      %v2398 = vmul.f32 %v1851, %v1851
      %v2399 = vmul.f32 %v1854, %v1854
      %v2400 = vmul.f32 %v1859, %v1859
      %v2401 = vmul.f32 %v1862, %v1862
      %v2402 = vmul.f32 %v1867, %v1867
      %v2403 = vmul.f32 %v1870, %v1870
      %v2404 = vmul.f32 %v1875, %v1875
      %v2405 = vmul.f32 %v1878, %v1878
      %v2406 = vmul.f32 %v1883, %v1883
      %v2407 = vmul.f32 %v1886, %v1886
      %v2408 = vsel %vm2210, %v2344, 0.0
      %v2409 = vsel %vm2210, %v2345, 0.0
      %v2410 = vadd.f32 %v2408, %v2409
      %v2411 = vsel %vm2210, %v2346, 0.0
      %v2412 = vadd.f32 %v2410, %v2411
      %v2413 = vsel %vm2210, %v2347, 0.0
      %v2414 = vadd.f32 %v2412, %v2413
      %v2415 = vsel %vm2210, %v2348, 0.0
      %v2416 = vadd.f32 %v2414, %v2415
      %v2417 = vsel %vm2210, %v2349, 0.0
      %v2418 = vadd.f32 %v2416, %v2417
      %v2419 = vsel %vm2210, %v2350, 0.0
      %v2420 = vadd.f32 %v2418, %v2419
      %v2421 = vsel %vm2210, %v2351, 0.0
      %v2422 = vadd.f32 %v2420, %v2421
      %v2423 = vsel %vm2210, %v2352, 0.0
      %v2424 = vadd.f32 %v2422, %v2423
      %v2425 = vsel %vm2210, %v2353, 0.0
      %v2426 = vadd.f32 %v2424, %v2425
      %v2427 = vsel %vm2210, %v2354, 0.0
      %v2428 = vadd.f32 %v2426, %v2427
      %v2429 = vsel %vm2210, %v2355, 0.0
      %v2430 = vadd.f32 %v2428, %v2429
      %v2431 = vsel %vm2210, %v2356, 0.0
      %v2432 = vadd.f32 %v2430, %v2431
      %v2433 = vsel %vm2210, %v2357, 0.0
      %v2434 = vadd.f32 %v2432, %v2433
      %v2435 = vsel %vm2210, %v2358, 0.0
      %v2436 = vadd.f32 %v2434, %v2435
      %v2437 = vsel %vm2210, %v2359, 0.0
      %v2438 = vadd.f32 %v2436, %v2437
      %v2439 = vsel %vm2210, %v2360, 0.0
      %v2440 = vadd.f32 %v2438, %v2439
      %v2441 = vsel %vm2210, %v2361, 0.0
      %v2442 = vadd.f32 %v2440, %v2441
      %v2443 = vsel %vm2210, %v2362, 0.0
      %v2444 = vadd.f32 %v2442, %v2443
      %v2445 = vsel %vm2210, %v2363, 0.0
      %v2446 = vadd.f32 %v2444, %v2445
      %v2447 = vsel %vm2210, %v2364, 0.0
      %v2448 = vadd.f32 %v2446, %v2447
      %v2449 = vsel %vm2210, %v2365, 0.0
      %v2450 = vadd.f32 %v2448, %v2449
      %v2451 = vsel %vm2210, %v2366, 0.0
      %v2452 = vadd.f32 %v2450, %v2451
      %v2453 = vsel %vm2210, %v2367, 0.0
      %v2454 = vadd.f32 %v2452, %v2453
      %v2455 = vsel %vm2210, %v2368, 0.0
      %v2456 = vadd.f32 %v2454, %v2455
      %v2457 = vsel %vm2210, %v2369, 0.0
      %v2458 = vadd.f32 %v2456, %v2457
      %v2459 = vsel %vm2210, %v2370, 0.0
      %v2460 = vadd.f32 %v2458, %v2459
      %v2461 = vsel %vm2210, %v2371, 0.0
      %v2462 = vadd.f32 %v2460, %v2461
      %v2463 = vsel %vm2210, %v2372, 0.0
      %v2464 = vadd.f32 %v2462, %v2463
      %v2465 = vsel %vm2210, %v2373, 0.0
      %v2466 = vadd.f32 %v2464, %v2465
      %v2467 = vsel %vm2210, %v2374, 0.0
      %v2468 = vadd.f32 %v2466, %v2467
      %v2469 = vsel %vm2210, %v2375, 0.0
      %v2470 = vadd.f32 %v2468, %v2469
      %v2471 = vsel %vm2210, %v2376, 0.0
      %v2472 = vadd.f32 %v2470, %v2471
      %v2473 = vsel %vm2210, %v2377, 0.0
      %v2474 = vadd.f32 %v2472, %v2473
      %v2475 = vsel %vm2210, %v2378, 0.0
      %v2476 = vadd.f32 %v2474, %v2475
      %v2477 = vsel %vm2210, %v2379, 0.0
      %v2478 = vadd.f32 %v2476, %v2477
      %v2479 = vsel %vm2210, %v2380, 0.0
      %v2480 = vadd.f32 %v2478, %v2479
      %v2481 = vsel %vm2210, %v2381, 0.0
      %v2482 = vadd.f32 %v2480, %v2481
      %v2483 = vsel %vm2210, %v2382, 0.0
      %v2484 = vadd.f32 %v2482, %v2483
      %v2485 = vsel %vm2210, %v2383, 0.0
      %v2486 = vadd.f32 %v2484, %v2485
      %v2487 = vsel %vm2210, %v2384, 0.0
      %v2488 = vadd.f32 %v2486, %v2487
      %v2489 = vsel %vm2210, %v2385, 0.0
      %v2490 = vadd.f32 %v2488, %v2489
      %v2491 = vsel %vm2210, %v2386, 0.0
      %v2492 = vadd.f32 %v2490, %v2491
      %v2493 = vsel %vm2210, %v2387, 0.0
      %v2494 = vadd.f32 %v2492, %v2493
      %v2495 = vsel %vm2210, %v2388, 0.0
      %v2496 = vadd.f32 %v2494, %v2495
      %v2497 = vsel %vm2210, %v2389, 0.0
      %v2498 = vadd.f32 %v2496, %v2497
      %v2499 = vsel %vm2210, %v2390, 0.0
      %v2500 = vadd.f32 %v2498, %v2499
      %v2501 = vsel %vm2210, %v2391, 0.0
      %v2502 = vadd.f32 %v2500, %v2501
      %v2503 = vsel %vm2210, %v2392, 0.0
      %v2504 = vadd.f32 %v2502, %v2503
      %v2505 = vsel %vm2210, %v2393, 0.0
      %v2506 = vadd.f32 %v2504, %v2505
      %v2507 = vsel %vm2210, %v2394, 0.0
      %v2508 = vadd.f32 %v2506, %v2507
      %v2509 = vsel %vm2210, %v2395, 0.0
      %v2510 = vadd.f32 %v2508, %v2509
      %v2511 = vsel %vm2210, %v2396, 0.0
      %v2512 = vadd.f32 %v2510, %v2511
      %v2513 = vsel %vm2210, %v2397, 0.0
      %v2514 = vadd.f32 %v2512, %v2513
      %v2515 = vsel %vm2210, %v2398, 0.0
      %v2516 = vadd.f32 %v2514, %v2515
      %v2517 = vsel %vm2210, %v2399, 0.0
      %v2518 = vadd.f32 %v2516, %v2517
      %v2519 = vsel %vm2210, %v2400, 0.0
      %v2520 = vadd.f32 %v2518, %v2519
      %v2521 = vsel %vm2210, %v2401, 0.0
      %v2522 = vadd.f32 %v2520, %v2521
      %v2523 = vsel %vm2210, %v2402, 0.0
      %v2524 = vadd.f32 %v2522, %v2523
      %v2525 = vsel %vm2210, %v2403, 0.0
      %v2526 = vadd.f32 %v2524, %v2525
      %v2527 = vsel %vm2210, %v2404, 0.0
      %v2528 = vadd.f32 %v2526, %v2527
      %v2529 = vsel %vm2210, %v2405, 0.0
      %v2530 = vadd.f32 %v2528, %v2529
      %v2531 = vsel %vm2210, %v2406, 0.0
      %v2532 = vadd.f32 %v2530, %v2531
      %v2533 = vsel %vm2210, %v2407, 0.0
      %v2534 = vadd.f32 %v2532, %v2533
      %v2535 = vrot.slane %v2534, 4
      %v2536 = vadd.f32 %v2534, %v2535
      %v2537 = vrot.slane %v2536, 2
      %v2538 = vadd.f32 %v2536, %v2537
      %v2539 = vrot.slane %v2538, 1
      %v2540 = vadd.f32 %v2538, %v2539
      %2541 = vst.msk [vmem:[%s278] sm:$0xff] %vm2210, %v2343
      %2542 = vst.msk [vmem:[%s284] sm:$0xff] %vm2210, %v2540
      %s2543 = sadd.s32 %s20, %s21
      %s2544 = smul.u32 64, %s2543
      %p2545 = scmp.lt.s32.totalorder %s2544, 255
      %s2546 = scalar_select %p2545, %s2544, 255
      %s2547 = smul.addr %s2546, 4
      %s2548 = scalar_lea.vmem %s2, %s2547
      %s2549 = sadd.s32 %s20, %s21
      %p2550 = scmp.lt.s32.totalorder %s2549, 3
      %s2551 = scalar_select %p2550, %s2549, 3
      %s2552 = smul.addr %s2551, 8
      %s2553 = scalar_lea.vmem %s3, %s2552
      %s2554 = sadd.s32 %s20, %s21
      %p2555 = scmp.lt.s32.totalorder %s2554, 3
      %s2556 = scalar_select %p2555, %s2554, 3
      %s2557 = smul.addr %s2556, 8
      %s2558 = scalar_lea.vmem %s4, %s2557
      // Predicated region
      $region29: #{generator_forward.15} parent=27 // pred_check
        %p2559 = pneg %p102
      $region30: #{generator_forward.15} parent=27 // pred_check_branch
        %2561 = sbr.rel (%p2559) target = $region32
      $region31: #{generator_forward.15} parent=27 // pred_region
        %s2562 = sadd.s32 %s20, %s21
        %s2563 = smul.u32 64, %s2562
      $region32: #{generator_forward.15} parent=27 // pred_fallthru
        _
      // Predicated region
      $region33: #{generator_forward.15} parent=27 // pred_check
        %p2564 = pneg %p130
      $region34: #{generator_forward.15} parent=27 // pred_check_branch
        %2566 = sbr.rel (%p2564) target = $region36
      $region35: #{generator_forward.15} parent=27 // pred_region
        %s2567 = sadd.s32 %s20, %s21
      $region36: #{generator_forward.15} parent=27 // pred_fallthru
        _
      // Predicated region
      $region37: #{generator_forward.15} parent=27 // pred_check
        %p2568 = pneg %p158
      $region38: #{generator_forward.15} parent=27 // pred_check_branch
        %2570 = sbr.rel (%p2568) target = $region40
      $region39: #{generator_forward.15} parent=27 // pred_region
        %s2571 = sadd.s32 %s20, %s21
      $region40: #{generator_forward.15} parent=27 // pred_fallthru
        _
    $region28: #{generator_forward.15} parent=5 // pred_fallthru
      _
    %p2572 = scmp.le.s32.totalorder 2, %s11
    // Predicated region
    $region41: #{generator_forward.15} parent=5 // pred_check
      %p2573 = pneg %p2572
    $region42: #{generator_forward.15} parent=5 // pred_check_branch
      %2575 = sbr.rel (%p2573) target = $region44
    $region43: #{generator_forward.15} parent=5 // pred_region
      %s2576 = ssub.s32 %s11, 2
      // Predicated region
      $region45: #{generator_forward.15} parent=43 // pred_check
        %p2577 = pneg %p108
      $region46: #{generator_forward.15} parent=43 // pred_check_branch
        %2579 = sbr.rel (%p2577) target = $region48
      $region47: #{generator_forward.15} parent=43 // pred_region
        %s2580 = sadd.s32 %s22, %s23
        %s2581 = smul.u32 64, %s2580
        %p2582 = scmp.lt.s32.totalorder %s2581, 255
        %s2583 = scalar_select %p2582, %s2581, 255
        %s2584 = smul.addr %s2583, 4
        %s2585 = scalar_lea.vmem %s2, %s2584
      $region48: #{generator_forward.15} parent=43 // pred_fallthru
        _
      // Predicated region
      $region49: #{generator_forward.15} parent=43 // pred_check
        %p2586 = pneg %p136
      $region50: #{generator_forward.15} parent=43 // pred_check_branch
        %2588 = sbr.rel (%p2586) target = $region52
      $region51: #{generator_forward.15} parent=43 // pred_region
        %s2589 = sadd.s32 %s22, %s23
        %p2590 = scmp.lt.s32.totalorder %s2589, 3
        %s2591 = scalar_select %p2590, %s2589, 3
        %s2592 = smul.addr %s2591, 8
        %s2593 = scalar_lea.vmem %s3, %s2592
      $region52: #{generator_forward.15} parent=43 // pred_fallthru
        _
      // Predicated region
      $region53: #{generator_forward.15} parent=43 // pred_check
        %p2594 = pneg %p164
      $region54: #{generator_forward.15} parent=43 // pred_check_branch
        %2596 = sbr.rel (%p2594) target = $region56
      $region55: #{generator_forward.15} parent=43 // pred_region
        %s2597 = sadd.s32 %s22, %s23
        %p2598 = scmp.lt.s32.totalorder %s2597, 3
        %s2599 = scalar_select %p2598, %s2597, 3
        %s2600 = smul.addr %s2599, 8
        %s2601 = scalar_lea.vmem %s4, %s2600
      $region56: #{generator_forward.15} parent=43 // pred_fallthru
        _
    $region44: #{generator_forward.15} parent=5 // pred_fallthru
      _
  $region6: #{generator_forward.15} parent=0 // loop_footer
    %s15 = sadd.s32 1, %s11
  $region7: #{generator_forward.15} parent=0 // loop_footer_branch
    %10 = sbr.rel target = $region3
  $region8: #{generator_forward.15} parent=0 // loop_exit
    _

// kernel: generator_forward.16
$region0: #{generator_forward.16}
  #allocation0 [shape = 'u32[]', space=smem, size = 0x4, offset = 0x4, fixed_abs, tag = 'smem constant byte address 0x4 - core index']
  #allocation1 [shape = 'u32[144,128]{1,0:T(1,128)}', space=vmem, size = 0x12000, scoped, tag = 'internal scratch']
  %s0 = inlined_call_operand.vmem [shape: bf16[2048,64], index: 0, kind: input, shape index: {}]
  %s1 = inlined_call_operand.vmem [shape: f32[1,64], index: 1, kind: input, shape index: {}]
  %s2 = inlined_call_operand.vmem [shape: f32[1,64], index: 2, kind: input, shape index: {}]
  %s3 = inlined_call_operand.vmem [shape: bf16[2048,64], index: 3, kind: output, shape index: {}]
  %s4 = sld [smem:[#allocation0]]
  $region45: #{generator_forward.16} parent=0
    _
  %s6 = ssub.s32 1, %s4
  %s7 = scalar_select 0, %s6, %s4
  loop: start=0, step=1, limit=4
  $region2: #{generator_forward.16} parent=0 // loop_pre_header
    _
  $region3: #{generator_forward.16} parent=0 // loop_header
    %s9 = sphi 0, %s13
    %p10 = scmp.ge.s32.totalorder %s9, 4
    %s19 = sphi 0, %s21
    %s22 = sphi 0, %s19
    %s23 = sphi 0, %s22
    %s39 = sphi 0, %s23
    %s43 = sphi 0, %s43
    %s45 = sphi 0, %s43
    %s46 = sphi 0, %s45
    %s60 = sphi 0, %s46
    %s64 = sphi 0, %s64
    %s66 = sphi 0, %s64
    %s67 = sphi 0, %s66
    %s81 = sphi 0, %s67
    %s87 = sphi 0, %s89
    %s90 = sphi 0, %s87
    %s91 = sphi 0, %s90
    %s107 = sphi 0, %s91
  $region4: #{generator_forward.16} parent=0 // loop_header_branch
    %12 = sbr.rel (%p10) target = $region8
  $region5: #{generator_forward.16} parent=0 // loop_body
    %s14 = ssub.s32 %s9, 1
    %s15 = ssub.s32 %s9, 2
    %s16 = sadd.s32 %s9, 1
    %s17 = ssub.s32 %s9, %s16
    %p18 = scmp.eq.s32.totalorder %s17, 0
    %s20 = sadd.s32 %s19, 1
    %s21 = scalar_select %p18, %s19, %s20
    %p24 = pneg %p18
    %p25 = scmp.eq.s32.totalorder %s9, 1
    %p26 = por %p24, %p25
    %p27 = scmp.ne.s32.totalorder %s19, %s22
    %p28 = scmp.eq.s32.totalorder %s9, 0
    %p29 = por %p27, %p28
    %p30 = scmp.ne.s32.totalorder %s19, %s22
    %p31 = scmp.eq.s32.totalorder %s14, 1
    %p32 = por %p30, %p31
    %p33 = scmp.ne.s32.totalorder %s22, %s23
    %p34 = scmp.eq.s32.totalorder %s14, 0
    %p35 = por %p33, %p34
    %p36 = scmp.ne.s32.totalorder %s22, %s23
    %p37 = scmp.eq.s32.totalorder %s15, 1
    %p38 = por %p36, %p37
    %p40 = scmp.ne.s32.totalorder %s23, %s39
    %p41 = scmp.eq.s32.totalorder %s15, 0
    %p42 = por %p40, %p41
    %s44 = sadd.s32 %s43, 1
    %p47 = scmp.eq.s32.totalorder %s9, 1
    %p48 = scmp.ne.s32.totalorder %s43, %s45
    %p49 = scmp.eq.s32.totalorder %s9, 0
    %p50 = por %p48, %p49
    %p51 = scmp.ne.s32.totalorder %s43, %s45
    %p52 = scmp.eq.s32.totalorder %s14, 1
    %p53 = por %p51, %p52
    %p54 = scmp.ne.s32.totalorder %s45, %s46
    %p55 = scmp.eq.s32.totalorder %s14, 0
    %p56 = por %p54, %p55
    %p57 = scmp.ne.s32.totalorder %s45, %s46
    %p58 = scmp.eq.s32.totalorder %s15, 1
    %p59 = por %p57, %p58
    %p61 = scmp.ne.s32.totalorder %s46, %s60
    %p62 = scmp.eq.s32.totalorder %s15, 0
    %p63 = por %p61, %p62
    %s65 = sadd.s32 %s64, 1
    %p68 = scmp.eq.s32.totalorder %s9, 1
    %p69 = scmp.ne.s32.totalorder %s64, %s66
    %p70 = scmp.eq.s32.totalorder %s9, 0
    %p71 = por %p69, %p70
    %p72 = scmp.ne.s32.totalorder %s64, %s66
    %p73 = scmp.eq.s32.totalorder %s14, 1
    %p74 = por %p72, %p73
    %p75 = scmp.ne.s32.totalorder %s66, %s67
    %p76 = scmp.eq.s32.totalorder %s14, 0
    %p77 = por %p75, %p76
    %p78 = scmp.ne.s32.totalorder %s66, %s67
    %p79 = scmp.eq.s32.totalorder %s15, 1
    %p80 = por %p78, %p79
    %p82 = scmp.ne.s32.totalorder %s67, %s81
    %p83 = scmp.eq.s32.totalorder %s15, 0
    %p84 = por %p82, %p83
    %s85 = ssub.s32 %s9, %s16
    %p86 = scmp.eq.s32.totalorder %s85, 0
    %s88 = sadd.s32 %s87, 1
    %s89 = scalar_select %p86, %s87, %s88
    %p92 = pneg %p86
    %p93 = scmp.eq.s32.totalorder %s9, 1
    %p94 = por %p92, %p93
    %p95 = scmp.ne.s32.totalorder %s87, %s90
    %p96 = scmp.eq.s32.totalorder %s9, 0
    %p97 = por %p95, %p96
    %p98 = scmp.ne.s32.totalorder %s87, %s90
    %p99 = scmp.eq.s32.totalorder %s14, 1
    %p100 = por %p98, %p99
    %p101 = scmp.ne.s32.totalorder %s90, %s91
    %p102 = scmp.eq.s32.totalorder %s14, 0
    %p103 = por %p101, %p102
    %p104 = scmp.ne.s32.totalorder %s90, %s91
    %p105 = scmp.eq.s32.totalorder %s15, 1
    %p106 = por %p104, %p105
    %p108 = scmp.ne.s32.totalorder %s91, %s107
    %p109 = scmp.eq.s32.totalorder %s15, 0
    %p110 = por %p108, %p109
    %p111 = scmp.le.s32.totalorder 1, %s9
    %p112 = scmp.lt.s32.totalorder %s9, 3
    %p113 = pnand %p111, %p112
    %p114 = pneg %p113
    // Predicated region
    $region9: #{generator_forward.16} parent=5 // pred_check
      _
    $region10: #{generator_forward.16} parent=5 // pred_check_branch
      %116 = sbr.rel (%p113) target = $region12
    $region11: #{generator_forward.16} parent=5 // pred_region
      %s117 = ssub.s32 %s9, 1
      // Predicated region
      $region13: #{generator_forward.16} parent=11 // pred_check
        %p118 = pneg %p56
      $region14: #{generator_forward.16} parent=11 // pred_check_branch
        %120 = sbr.rel (%p118) target = $region16
      $region15: #{generator_forward.16} parent=11 // pred_region
        _
      $region16: #{generator_forward.16} parent=11 // pred_fallthru
        _
      // Predicated region
      $region17: #{generator_forward.16} parent=11 // pred_check
        %p121 = pneg %p77
      $region18: #{generator_forward.16} parent=11 // pred_check_branch
        %123 = sbr.rel (%p121) target = $region20
      $region19: #{generator_forward.16} parent=11 // pred_region
        _
      $region20: #{generator_forward.16} parent=11 // pred_fallthru
        _
    $region12: #{generator_forward.16} parent=5 // pred_fallthru
      _
    %p124 = scmp.lt.s32.totalorder %s9, 2
    // Predicated region
    $region21: #{generator_forward.16} parent=5 // pred_check
      %p125 = pneg %p124
    $region22: #{generator_forward.16} parent=5 // pred_check_branch
      %127 = sbr.rel (%p125) target = $region24
    $region23: #{generator_forward.16} parent=5 // pred_region
      // Predicated region
      $region25: #{generator_forward.16} parent=23 // pred_check
        %p128 = pneg %p29
      $region26: #{generator_forward.16} parent=23 // pred_check_branch
        %130 = sbr.rel (%p128) target = $region28
      $region27: #{generator_forward.16} parent=23 // pred_region
        %s131 = smul.u32 128, %s9
        %p132 = scmp.lt.s32.totalorder %s131, 255
        %s133 = scalar_select %p132, %s131, 255
        %s134 = smul.addr %s133, 4
        %s135 = scalar_lea.vmem %s0, %s134
        %s136 = smul.u32 128, %s9
      $region28: #{generator_forward.16} parent=23 // pred_fallthru
        _
    $region24: #{generator_forward.16} parent=5 // pred_fallthru
      _
    %p137 = scmp.le.s32.totalorder 1, %s9
    %p138 = scmp.lt.s32.totalorder %s9, 3
    %p139 = pnand %p137, %p138
    %p140 = pneg %p139
    // Predicated region
    $region29: #{generator_forward.16} parent=5 // pred_check
      _
    $region30: #{generator_forward.16} parent=5 // pred_check_branch
      %142 = sbr.rel (%p139) target = $region32
    $region31: #{generator_forward.16} parent=5 // pred_region
      %s143 = ssub.s32 %s9, 1
      %s144 = smul.u32 128, %s14
      %p145 = scmp.lt.s32.totalorder %s144, 255
      %s146 = scalar_select %p145, %s144, 255
      %s147 = smul.addr %s146, 4
      %s148 = scalar_lea.vmem %s0, %s147
      %p149 = pneg %p35
      %p150 = pneg %p32
      %p151 = pneg %p56
      %p152 = pneg %p53
      %p153 = pneg %p77
      %p154 = pneg %p74
      %p155 = pneg %p103
      %p156 = pneg %p100
      %s157 = smul.u32 128, %s14
      %p158 = scmp.lt.s32.totalorder %s157, 255
      %s159 = scalar_select %p158, %s157, 255
      %s160 = smul.addr %s159, 4
      %s161 = scalar_lea.vmem %s3, %s160
      %s162 = smul.u32 128, %s14
      %p163 = scmp.lt.s32.totalorder %s162, 255
      %s164 = scalar_select %p163, %s162, 255
      %s165 = smul.addr %s164, 4
      %s166 = scalar_lea.vmem %s0, %s165
      %s167 = smul.u32 128, %s14
      %s168 = smul.u32 128, %s14
      %p169 = scmp.lt.s32.totalorder %s168, 255
      %s170 = scalar_select %p169, %s168, 255
      %s171 = smul.addr %s170, 4
      %s172 = scalar_lea.vmem %s3, %s171
      %s173 = smul.u32 128, %s14
      %v174 = vld [vmem:[%s166] sm:$0xf]
      %v175 = vld [vmem:[%s166 + $0x4] sm:$0xf]
      %v176 = vld [vmem:[%s166 + $0x8] sm:$0xf]
      %v177 = vld [vmem:[%s166 + $0xc] sm:$0xf]
      %v178 = vld [vmem:[%s166 + $0x10] sm:$0xf]
      %v179 = vld [vmem:[%s166 + $0x14] sm:$0xf]
      %v180 = vld [vmem:[%s166 + $0x18] sm:$0xf]
      %v181 = vld [vmem:[%s166 + $0x1c] sm:$0xf]
      %v182 = vld [vmem:[%s166 + $0x20] sm:$0xf]
      %v183 = vld [vmem:[%s166 + $0x24] sm:$0xf]
      %v184 = vld [vmem:[%s166 + $0x28] sm:$0xf]
      %v185 = vld [vmem:[%s166 + $0x2c] sm:$0xf]
      %v186 = vld [vmem:[%s166 + $0x30] sm:$0xf]
      %v187 = vld [vmem:[%s166 + $0x34] sm:$0xf]
      %v188 = vld [vmem:[%s166 + $0x38] sm:$0xf]
      %v189 = vld [vmem:[%s166 + $0x3c] sm:$0xf]
      %v190 = vld [vmem:[%s166 + $0x40] sm:$0xf]
      %v191 = vld [vmem:[%s166 + $0x44] sm:$0xf]
      %v192 = vld [vmem:[%s166 + $0x48] sm:$0xf]
      %v193 = vld [vmem:[%s166 + $0x4c] sm:$0xf]
      %v194 = vld [vmem:[%s166 + $0x50] sm:$0xf]
      %v195 = vld [vmem:[%s166 + $0x54] sm:$0xf]
      %v196 = vld [vmem:[%s166 + $0x58] sm:$0xf]
      %v197 = vld [vmem:[%s166 + $0x5c] sm:$0xf]
      %v198 = vld [vmem:[%s166 + $0x60] sm:$0xf]
      %v199 = vld [vmem:[%s166 + $0x64] sm:$0xf]
      %v200 = vld [vmem:[%s166 + $0x68] sm:$0xf]
      %v201 = vld [vmem:[%s166 + $0x6c] sm:$0xf]
      %v202 = vld [vmem:[%s166 + $0x70] sm:$0xf]
      %v203 = vld [vmem:[%s166 + $0x74] sm:$0xf]
      %v204 = vld [vmem:[%s166 + $0x78] sm:$0xf]
      %v205 = vld [vmem:[%s166 + $0x7c] sm:$0xf]
      %v206 = vld [vmem:[%s166 + $0x80] sm:$0xf]
      %v207 = vld [vmem:[%s166 + $0x84] sm:$0xf]
      %v208 = vld [vmem:[%s166 + $0x88] sm:$0xf]
      %v209 = vld [vmem:[%s166 + $0x8c] sm:$0xf]
      %v210 = vld [vmem:[%s166 + $0x90] sm:$0xf]
      %v211 = vld [vmem:[%s166 + $0x94] sm:$0xf]
      %v212 = vld [vmem:[%s166 + $0x98] sm:$0xf]
      %v213 = vld [vmem:[%s166 + $0x9c] sm:$0xf]
      %v214 = vld [vmem:[%s166 + $0xa0] sm:$0xf]
      %v215 = vld [vmem:[%s166 + $0xa4] sm:$0xf]
      %v216 = vld [vmem:[%s166 + $0xa8] sm:$0xf]
      %v217 = vld [vmem:[%s166 + $0xac] sm:$0xf]
      %v218 = vld [vmem:[%s166 + $0xb0] sm:$0xf]
      %v219 = vld [vmem:[%s166 + $0xb4] sm:$0xf]
      %v220 = vld [vmem:[%s166 + $0xb8] sm:$0xf]
      %v221 = vld [vmem:[%s166 + $0xbc] sm:$0xf]
      %v222 = vld [vmem:[%s166 + $0xc0] sm:$0xf]
      %v223 = vld [vmem:[%s166 + $0xc4] sm:$0xf]
      %v224 = vld [vmem:[%s166 + $0xc8] sm:$0xf]
      %v225 = vld [vmem:[%s166 + $0xcc] sm:$0xf]
      %v226 = vld [vmem:[%s166 + $0xd0] sm:$0xf]
      %v227 = vld [vmem:[%s166 + $0xd4] sm:$0xf]
      %v228 = vld [vmem:[%s166 + $0xd8] sm:$0xf]
      %v229 = vld [vmem:[%s166 + $0xdc] sm:$0xf]
      %v230 = vld [vmem:[%s166 + $0xe0] sm:$0xf]
      %v231 = vld [vmem:[%s166 + $0xe4] sm:$0xf]
      %v232 = vld [vmem:[%s166 + $0xe8] sm:$0xf]
      %v233 = vld [vmem:[%s166 + $0xec] sm:$0xf]
      %v234 = vld [vmem:[%s166 + $0xf0] sm:$0xf]
      %v235 = vld [vmem:[%s166 + $0xf4] sm:$0xf]
      %v236 = vld [vmem:[%s166 + $0xf8] sm:$0xf]
      %v237 = vld [vmem:[%s166 + $0xfc] sm:$0xf]
      %v238 = vld [vmem:[%s166 + $0x100] sm:$0xf]
      %v239 = vld [vmem:[%s166 + $0x104] sm:$0xf]
      %v240 = vld [vmem:[%s166 + $0x108] sm:$0xf]
      %v241 = vld [vmem:[%s166 + $0x10c] sm:$0xf]
      %v242 = vld [vmem:[%s166 + $0x110] sm:$0xf]
      %v243 = vld [vmem:[%s166 + $0x114] sm:$0xf]
      %v244 = vld [vmem:[%s166 + $0x118] sm:$0xf]
      %v245 = vld [vmem:[%s166 + $0x11c] sm:$0xf]
      %v246 = vld [vmem:[%s166 + $0x120] sm:$0xf]
      %v247 = vld [vmem:[%s166 + $0x124] sm:$0xf]
      %v248 = vld [vmem:[%s166 + $0x128] sm:$0xf]
      %v249 = vld [vmem:[%s166 + $0x12c] sm:$0xf]
      %v250 = vld [vmem:[%s166 + $0x130] sm:$0xf]
      %v251 = vld [vmem:[%s166 + $0x134] sm:$0xf]
      %v252 = vld [vmem:[%s166 + $0x138] sm:$0xf]
      %v253 = vld [vmem:[%s166 + $0x13c] sm:$0xf]
      %v254 = vld [vmem:[%s166 + $0x140] sm:$0xf]
      %v255 = vld [vmem:[%s166 + $0x144] sm:$0xf]
      %v256 = vld [vmem:[%s166 + $0x148] sm:$0xf]
      %v257 = vld [vmem:[%s166 + $0x14c] sm:$0xf]
      %v258 = vld [vmem:[%s166 + $0x150] sm:$0xf]
      %v259 = vld [vmem:[%s166 + $0x154] sm:$0xf]
      %v260 = vld [vmem:[%s166 + $0x158] sm:$0xf]
      %v261 = vld [vmem:[%s166 + $0x15c] sm:$0xf]
      %v262 = vld [vmem:[%s166 + $0x160] sm:$0xf]
      %v263 = vld [vmem:[%s166 + $0x164] sm:$0xf]
      %v264 = vld [vmem:[%s166 + $0x168] sm:$0xf]
      %v265 = vld [vmem:[%s166 + $0x16c] sm:$0xf]
      %v266 = vld [vmem:[%s166 + $0x170] sm:$0xf]
      %v267 = vld [vmem:[%s166 + $0x174] sm:$0xf]
      %v268 = vld [vmem:[%s166 + $0x178] sm:$0xf]
      %v269 = vld [vmem:[%s166 + $0x17c] sm:$0xf]
      %v270 = vld [vmem:[%s166 + $0x180] sm:$0xf]
      %v271 = vld [vmem:[%s166 + $0x184] sm:$0xf]
      %v272 = vld [vmem:[%s166 + $0x188] sm:$0xf]
      %v273 = vld [vmem:[%s166 + $0x18c] sm:$0xf]
      %v274 = vld [vmem:[%s166 + $0x190] sm:$0xf]
      %v275 = vld [vmem:[%s166 + $0x194] sm:$0xf]
      %v276 = vld [vmem:[%s166 + $0x198] sm:$0xf]
      %v277 = vld [vmem:[%s166 + $0x19c] sm:$0xf]
      %v278 = vld [vmem:[%s166 + $0x1a0] sm:$0xf]
      %v279 = vld [vmem:[%s166 + $0x1a4] sm:$0xf]
      %v280 = vld [vmem:[%s166 + $0x1a8] sm:$0xf]
      %v281 = vld [vmem:[%s166 + $0x1ac] sm:$0xf]
      %v282 = vld [vmem:[%s166 + $0x1b0] sm:$0xf]
      %v283 = vld [vmem:[%s166 + $0x1b4] sm:$0xf]
      %v284 = vld [vmem:[%s166 + $0x1b8] sm:$0xf]
      %v285 = vld [vmem:[%s166 + $0x1bc] sm:$0xf]
      %v286 = vld [vmem:[%s166 + $0x1c0] sm:$0xf]
      %v287 = vld [vmem:[%s166 + $0x1c4] sm:$0xf]
      %v288 = vld [vmem:[%s166 + $0x1c8] sm:$0xf]
      %v289 = vld [vmem:[%s166 + $0x1cc] sm:$0xf]
      %v290 = vld [vmem:[%s166 + $0x1d0] sm:$0xf]
      %v291 = vld [vmem:[%s166 + $0x1d4] sm:$0xf]
      %v292 = vld [vmem:[%s166 + $0x1d8] sm:$0xf]
      %v293 = vld [vmem:[%s166 + $0x1dc] sm:$0xf]
      %v294 = vld [vmem:[%s166 + $0x1e0] sm:$0xf]
      %v295 = vld [vmem:[%s166 + $0x1e4] sm:$0xf]
      %v296 = vld [vmem:[%s166 + $0x1e8] sm:$0xf]
      %v297 = vld [vmem:[%s166 + $0x1ec] sm:$0xf]
      %v298 = vld [vmem:[%s166 + $0x1f0] sm:$0xf]
      %v299 = vld [vmem:[%s166 + $0x1f4] sm:$0xf]
      %v300 = vld [vmem:[%s166 + $0x1f8] sm:$0xf]
      %v301 = vld [vmem:[%s166 + $0x1fc] sm:$0xf]
      %v302 = vunpack.c.l.bf16 %v174
      %v303 = vunpack.c.l.bf16 %v175
      %v304 = vunpack.c.l.bf16 %v176
      %v305 = vunpack.c.l.bf16 %v177
      %v306 = vunpack.c.l.bf16 %v178
      %v307 = vunpack.c.l.bf16 %v179
      %v308 = vunpack.c.l.bf16 %v180
      %v309 = vunpack.c.l.bf16 %v181
      %v310 = vunpack.c.l.bf16 %v182
      %v311 = vunpack.c.l.bf16 %v183
      %v312 = vunpack.c.l.bf16 %v184
      %v313 = vunpack.c.l.bf16 %v185
      %v314 = vunpack.c.l.bf16 %v186
      %v315 = vunpack.c.l.bf16 %v187
      %v316 = vunpack.c.l.bf16 %v188
      %v317 = vunpack.c.l.bf16 %v189
      %v318 = vunpack.c.l.bf16 %v190
      %v319 = vunpack.c.l.bf16 %v191
      %v320 = vunpack.c.l.bf16 %v192
      %v321 = vunpack.c.l.bf16 %v193
      %v322 = vunpack.c.l.bf16 %v194
      %v323 = vunpack.c.l.bf16 %v195
      %v324 = vunpack.c.l.bf16 %v196
      %v325 = vunpack.c.l.bf16 %v197
      %v326 = vunpack.c.l.bf16 %v198
      %v327 = vunpack.c.l.bf16 %v199
      %v328 = vunpack.c.l.bf16 %v200
      %v329 = vunpack.c.l.bf16 %v201
      %v330 = vunpack.c.l.bf16 %v202
      %v331 = vunpack.c.l.bf16 %v203
      %v332 = vunpack.c.l.bf16 %v204
      %v333 = vunpack.c.l.bf16 %v205
      %v334 = vunpack.c.l.bf16 %v206
      %v335 = vunpack.c.l.bf16 %v207
      %v336 = vunpack.c.l.bf16 %v208
      %v337 = vunpack.c.l.bf16 %v209
      %v338 = vunpack.c.l.bf16 %v210
      %v339 = vunpack.c.l.bf16 %v211
      %v340 = vunpack.c.l.bf16 %v212
      %v341 = vunpack.c.l.bf16 %v213
      %v342 = vunpack.c.l.bf16 %v214
      %v343 = vunpack.c.l.bf16 %v215
      %v344 = vunpack.c.l.bf16 %v216
      %v345 = vunpack.c.l.bf16 %v217
      %v346 = vunpack.c.l.bf16 %v218
      %v347 = vunpack.c.l.bf16 %v219
      %v348 = vunpack.c.l.bf16 %v220
      %v349 = vunpack.c.l.bf16 %v221
      %v350 = vunpack.c.l.bf16 %v222
      %v351 = vunpack.c.l.bf16 %v223
      %v352 = vunpack.c.l.bf16 %v224
      %v353 = vunpack.c.l.bf16 %v225
      %v354 = vunpack.c.l.bf16 %v226
      %v355 = vunpack.c.l.bf16 %v227
      %v356 = vunpack.c.l.bf16 %v228
      %v357 = vunpack.c.l.bf16 %v229
      %v358 = vunpack.c.l.bf16 %v230
      %v359 = vunpack.c.l.bf16 %v231
      %v360 = vunpack.c.l.bf16 %v232
      %v361 = vunpack.c.l.bf16 %v233
      %v362 = vunpack.c.l.bf16 %v234
      %v363 = vunpack.c.l.bf16 %v235
      %v364 = vunpack.c.l.bf16 %v236
      %v365 = vunpack.c.l.bf16 %v237
      %v366 = vunpack.c.l.bf16 %v238
      %v367 = vunpack.c.l.bf16 %v239
      %v368 = vunpack.c.l.bf16 %v240
      %v369 = vunpack.c.l.bf16 %v241
      %v370 = vunpack.c.l.bf16 %v242
      %v371 = vunpack.c.l.bf16 %v243
      %v372 = vunpack.c.l.bf16 %v244
      %v373 = vunpack.c.l.bf16 %v245
      %v374 = vunpack.c.l.bf16 %v246
      %v375 = vunpack.c.l.bf16 %v247
      %v376 = vunpack.c.l.bf16 %v248
      %v377 = vunpack.c.l.bf16 %v249
      %v378 = vunpack.c.l.bf16 %v250
      %v379 = vunpack.c.l.bf16 %v251
      %v380 = vunpack.c.l.bf16 %v252
      %v381 = vunpack.c.l.bf16 %v253
      %v382 = vunpack.c.l.bf16 %v254
      %v383 = vunpack.c.l.bf16 %v255
      %v384 = vunpack.c.l.bf16 %v256
      %v385 = vunpack.c.l.bf16 %v257
      %v386 = vunpack.c.l.bf16 %v258
      %v387 = vunpack.c.l.bf16 %v259
      %v388 = vunpack.c.l.bf16 %v260
      %v389 = vunpack.c.l.bf16 %v261
      %v390 = vunpack.c.l.bf16 %v262
      %v391 = vunpack.c.l.bf16 %v263
      %v392 = vunpack.c.l.bf16 %v264
      %v393 = vunpack.c.l.bf16 %v265
      %v394 = vunpack.c.l.bf16 %v266
      %v395 = vunpack.c.l.bf16 %v267
      %v396 = vunpack.c.l.bf16 %v268
      %v397 = vunpack.c.l.bf16 %v269
      %v398 = vunpack.c.l.bf16 %v270
      %v399 = vunpack.c.l.bf16 %v271
      %v400 = vunpack.c.l.bf16 %v272
      %v401 = vunpack.c.l.bf16 %v273
      %v402 = vunpack.c.l.bf16 %v274
      %v403 = vunpack.c.l.bf16 %v275
      %v404 = vunpack.c.l.bf16 %v276
      %v405 = vunpack.c.l.bf16 %v277
      %v406 = vunpack.c.l.bf16 %v278
      %v407 = vunpack.c.l.bf16 %v279
      %v408 = vunpack.c.l.bf16 %v280
      %v409 = vunpack.c.l.bf16 %v281
      %v410 = vunpack.c.l.bf16 %v282
      %v411 = vunpack.c.l.bf16 %v283
      %v412 = vunpack.c.l.bf16 %v284
      %v413 = vunpack.c.l.bf16 %v285
      %v414 = vunpack.c.l.bf16 %v286
      %v415 = vunpack.c.l.bf16 %v287
      %v416 = vunpack.c.l.bf16 %v288
      %v417 = vunpack.c.l.bf16 %v289
      %v418 = vunpack.c.l.bf16 %v290
      %v419 = vunpack.c.l.bf16 %v291
      %v420 = vunpack.c.l.bf16 %v292
      %v421 = vunpack.c.l.bf16 %v293
      %v422 = vunpack.c.l.bf16 %v294
      %v423 = vunpack.c.l.bf16 %v295
      %v424 = vunpack.c.l.bf16 %v296
      %v425 = vunpack.c.l.bf16 %v297
      %v426 = vunpack.c.l.bf16 %v298
      %v427 = vunpack.c.l.bf16 %v299
      %v428 = vunpack.c.l.bf16 %v300
      %v429 = vunpack.c.l.bf16 %v301
      %v430 = vld [vmem:[%s1] sm:$0x1]
      %v432 = vlaneseq
      %v433 = vshrl.u32 %v432, 7
      %v434 = vsub.s32 0, %v433
      %v435 = vrot.slane %v430, %v434
      %v437 = vmul.f32 %v302, %v435
      %v438 = vmul.f32 %v303, %v435
      %v439 = vmul.f32 %v304, %v435
      %v440 = vmul.f32 %v305, %v435
      %v441 = vmul.f32 %v306, %v435
      %v442 = vmul.f32 %v307, %v435
      %v443 = vmul.f32 %v308, %v435
      %v444 = vmul.f32 %v309, %v435
      %v445 = vmul.f32 %v310, %v435
      %v446 = vmul.f32 %v311, %v435
      %v447 = vmul.f32 %v312, %v435
      %v448 = vmul.f32 %v313, %v435
      %v449 = vmul.f32 %v314, %v435
      %v450 = vmul.f32 %v315, %v435
      %v451 = vmul.f32 %v316, %v435
      %v452 = vmul.f32 %v317, %v435
      %v453 = vmul.f32 %v318, %v435
      %v454 = vmul.f32 %v319, %v435
      %v455 = vmul.f32 %v320, %v435
      %v456 = vmul.f32 %v321, %v435
      %v457 = vmul.f32 %v322, %v435
      %v458 = vmul.f32 %v323, %v435
      %v459 = vmul.f32 %v324, %v435
      %v460 = vmul.f32 %v325, %v435
      %v461 = vmul.f32 %v326, %v435
      %v462 = vmul.f32 %v327, %v435
      %v463 = vmul.f32 %v328, %v435
      %v464 = vmul.f32 %v329, %v435
      %v465 = vmul.f32 %v330, %v435
      %v466 = vmul.f32 %v331, %v435
      %v467 = vmul.f32 %v332, %v435
      %v468 = vmul.f32 %v333, %v435
      %v469 = vmul.f32 %v334, %v435
      %v470 = vmul.f32 %v335, %v435
      %v471 = vmul.f32 %v336, %v435
      %v472 = vmul.f32 %v337, %v435
      %v473 = vmul.f32 %v338, %v435
      %v474 = vmul.f32 %v339, %v435
      %v475 = vmul.f32 %v340, %v435
      %v476 = vmul.f32 %v341, %v435
      %v477 = vmul.f32 %v342, %v435
      %v478 = vmul.f32 %v343, %v435
      %v479 = vmul.f32 %v344, %v435
      %v480 = vmul.f32 %v345, %v435
      %v481 = vmul.f32 %v346, %v435
      %v482 = vmul.f32 %v347, %v435
      %v483 = vmul.f32 %v348, %v435
      %v484 = vmul.f32 %v349, %v435
      %v485 = vmul.f32 %v350, %v435
      %v486 = vmul.f32 %v351, %v435
      %v487 = vmul.f32 %v352, %v435
      %v488 = vmul.f32 %v353, %v435
      %v489 = vmul.f32 %v354, %v435
      %v490 = vmul.f32 %v355, %v435
      %v491 = vmul.f32 %v356, %v435
      %v492 = vmul.f32 %v357, %v435
      %v493 = vmul.f32 %v358, %v435
      %v494 = vmul.f32 %v359, %v435
      %v495 = vmul.f32 %v360, %v435
      %v496 = vmul.f32 %v361, %v435
      %v497 = vmul.f32 %v362, %v435
      %v498 = vmul.f32 %v363, %v435
      %v499 = vmul.f32 %v364, %v435
      %v500 = vmul.f32 %v365, %v435
      %v501 = vmul.f32 %v366, %v435
      %v502 = vmul.f32 %v367, %v435
      %v503 = vmul.f32 %v368, %v435
      %v504 = vmul.f32 %v369, %v435
      %v505 = vmul.f32 %v370, %v435
      %v506 = vmul.f32 %v371, %v435
      %v507 = vmul.f32 %v372, %v435
      %v508 = vmul.f32 %v373, %v435
      %v509 = vmul.f32 %v374, %v435
      %v510 = vmul.f32 %v375, %v435
      %v511 = vmul.f32 %v376, %v435
      %v512 = vmul.f32 %v377, %v435
      %v513 = vmul.f32 %v378, %v435
      %v514 = vmul.f32 %v379, %v435
      %v515 = vmul.f32 %v380, %v435
      %v516 = vmul.f32 %v381, %v435
      %v517 = vmul.f32 %v382, %v435
      %v518 = vmul.f32 %v383, %v435
      %v519 = vmul.f32 %v384, %v435
      %v520 = vmul.f32 %v385, %v435
      %v521 = vmul.f32 %v386, %v435
      %v522 = vmul.f32 %v387, %v435
      %v523 = vmul.f32 %v388, %v435
      %v524 = vmul.f32 %v389, %v435
      %v525 = vmul.f32 %v390, %v435
      %v526 = vmul.f32 %v391, %v435
      %v527 = vmul.f32 %v392, %v435
      %v528 = vmul.f32 %v393, %v435
      %v529 = vmul.f32 %v394, %v435
      %v530 = vmul.f32 %v395, %v435
      %v531 = vmul.f32 %v396, %v435
      %v532 = vmul.f32 %v397, %v435
      %v533 = vmul.f32 %v398, %v435
      %v534 = vmul.f32 %v399, %v435
      %v535 = vmul.f32 %v400, %v435
      %v536 = vmul.f32 %v401, %v435
      %v537 = vmul.f32 %v402, %v435
      %v538 = vmul.f32 %v403, %v435
      %v539 = vmul.f32 %v404, %v435
      %v540 = vmul.f32 %v405, %v435
      %v541 = vmul.f32 %v406, %v435
      %v542 = vmul.f32 %v407, %v435
      %v543 = vmul.f32 %v408, %v435
      %v544 = vmul.f32 %v409, %v435
      %v545 = vmul.f32 %v410, %v435
      %v546 = vmul.f32 %v411, %v435
      %v547 = vmul.f32 %v412, %v435
      %v548 = vmul.f32 %v413, %v435
      %v549 = vmul.f32 %v414, %v435
      %v550 = vmul.f32 %v415, %v435
      %v551 = vmul.f32 %v416, %v435
      %v552 = vmul.f32 %v417, %v435
      %v553 = vmul.f32 %v418, %v435
      %v554 = vmul.f32 %v419, %v435
      %v555 = vmul.f32 %v420, %v435
      %v556 = vmul.f32 %v421, %v435
      %v557 = vmul.f32 %v422, %v435
      %v558 = vmul.f32 %v423, %v435
      %v559 = vmul.f32 %v424, %v435
      %v560 = vmul.f32 %v425, %v435
      %v561 = vmul.f32 %v426, %v435
      %v562 = vmul.f32 %v427, %v435
      %v563 = vmul.f32 %v428, %v435
      %v564 = vmul.f32 %v429, %v435
      %v565 = vld [vmem:[%s2] sm:$0x1]
      %v567 = vlaneseq
      %v568 = vshrl.u32 %v567, 7
      %v569 = vsub.s32 0, %v568
      %v570 = vrot.slane %v565, %v569
      %v572 = vadd.f32 %v437, %v570
      %v573 = vadd.f32 %v438, %v570
      %v574 = vadd.f32 %v439, %v570
      %v575 = vadd.f32 %v440, %v570
      %v576 = vadd.f32 %v441, %v570
      %v577 = vadd.f32 %v442, %v570
      %v578 = vadd.f32 %v443, %v570
      %v579 = vadd.f32 %v444, %v570
      %v580 = vadd.f32 %v445, %v570
      %v581 = vadd.f32 %v446, %v570
      %v582 = vadd.f32 %v447, %v570
      %v583 = vadd.f32 %v448, %v570
      %v584 = vadd.f32 %v449, %v570
      %v585 = vadd.f32 %v450, %v570
      %v586 = vadd.f32 %v451, %v570
      %v587 = vadd.f32 %v452, %v570
      %v588 = vadd.f32 %v453, %v570
      %v589 = vadd.f32 %v454, %v570
      %v590 = vadd.f32 %v455, %v570
      %v591 = vadd.f32 %v456, %v570
      %v592 = vadd.f32 %v457, %v570
      %v593 = vadd.f32 %v458, %v570
      %v594 = vadd.f32 %v459, %v570
      %v595 = vadd.f32 %v460, %v570
      %v596 = vadd.f32 %v461, %v570
      %v597 = vadd.f32 %v462, %v570
      %v598 = vadd.f32 %v463, %v570
      %v599 = vadd.f32 %v464, %v570
      %v600 = vadd.f32 %v465, %v570
      %v601 = vadd.f32 %v466, %v570
      %v602 = vadd.f32 %v467, %v570
      %v603 = vadd.f32 %v468, %v570
      %v604 = vadd.f32 %v469, %v570
      %v605 = vadd.f32 %v470, %v570
      %v606 = vadd.f32 %v471, %v570
      %v607 = vadd.f32 %v472, %v570
      %v608 = vadd.f32 %v473, %v570
      %v609 = vadd.f32 %v474, %v570
      %v610 = vadd.f32 %v475, %v570
      %v611 = vadd.f32 %v476, %v570
      %v612 = vadd.f32 %v477, %v570
      %v613 = vadd.f32 %v478, %v570
      %v614 = vadd.f32 %v479, %v570
      %v615 = vadd.f32 %v480, %v570
      %v616 = vadd.f32 %v481, %v570
      %v617 = vadd.f32 %v482, %v570
      %v618 = vadd.f32 %v483, %v570
      %v619 = vadd.f32 %v484, %v570
      %v620 = vadd.f32 %v485, %v570
      %v621 = vadd.f32 %v486, %v570
      %v622 = vadd.f32 %v487, %v570
      %v623 = vadd.f32 %v488, %v570
      %v624 = vadd.f32 %v489, %v570
      %v625 = vadd.f32 %v490, %v570
      %v626 = vadd.f32 %v491, %v570
      %v627 = vadd.f32 %v492, %v570
      %v628 = vadd.f32 %v493, %v570
      %v629 = vadd.f32 %v494, %v570
      %v630 = vadd.f32 %v495, %v570
      %v631 = vadd.f32 %v496, %v570
      %v632 = vadd.f32 %v497, %v570
      %v633 = vadd.f32 %v498, %v570
      %v634 = vadd.f32 %v499, %v570
      %v635 = vadd.f32 %v500, %v570
      %v636 = vadd.f32 %v501, %v570
      %v637 = vadd.f32 %v502, %v570
      %v638 = vadd.f32 %v503, %v570
      %v639 = vadd.f32 %v504, %v570
      %v640 = vadd.f32 %v505, %v570
      %v641 = vadd.f32 %v506, %v570
      %v642 = vadd.f32 %v507, %v570
      %v643 = vadd.f32 %v508, %v570
      %v644 = vadd.f32 %v509, %v570
      %v645 = vadd.f32 %v510, %v570
      %v646 = vadd.f32 %v511, %v570
      %v647 = vadd.f32 %v512, %v570
      %v648 = vadd.f32 %v513, %v570
      %v649 = vadd.f32 %v514, %v570
      %v650 = vadd.f32 %v515, %v570
      %v651 = vadd.f32 %v516, %v570
      %v652 = vadd.f32 %v517, %v570
      %v653 = vadd.f32 %v518, %v570
      %v654 = vadd.f32 %v519, %v570
      %v655 = vadd.f32 %v520, %v570
      %v656 = vadd.f32 %v521, %v570
      %v657 = vadd.f32 %v522, %v570
      %v658 = vadd.f32 %v523, %v570
      %v659 = vadd.f32 %v524, %v570
      %v660 = vadd.f32 %v525, %v570
      %v661 = vadd.f32 %v526, %v570
      %v662 = vadd.f32 %v527, %v570
      %v663 = vadd.f32 %v528, %v570
      %v664 = vadd.f32 %v529, %v570
      %v665 = vadd.f32 %v530, %v570
      %v666 = vadd.f32 %v531, %v570
      %v667 = vadd.f32 %v532, %v570
      %v668 = vadd.f32 %v533, %v570
      %v669 = vadd.f32 %v534, %v570
      %v670 = vadd.f32 %v535, %v570
      %v671 = vadd.f32 %v536, %v570
      %v672 = vadd.f32 %v537, %v570
      %v673 = vadd.f32 %v538, %v570
      %v674 = vadd.f32 %v539, %v570
      %v675 = vadd.f32 %v540, %v570
      %v676 = vadd.f32 %v541, %v570
      %v677 = vadd.f32 %v542, %v570
      %v678 = vadd.f32 %v543, %v570
      %v679 = vadd.f32 %v544, %v570
      %v680 = vadd.f32 %v545, %v570
      %v681 = vadd.f32 %v546, %v570
      %v682 = vadd.f32 %v547, %v570
      %v683 = vadd.f32 %v548, %v570
      %v684 = vadd.f32 %v549, %v570
      %v685 = vadd.f32 %v550, %v570
      %v686 = vadd.f32 %v551, %v570
      %v687 = vadd.f32 %v552, %v570
      %v688 = vadd.f32 %v553, %v570
      %v689 = vadd.f32 %v554, %v570
      %v690 = vadd.f32 %v555, %v570
      %v691 = vadd.f32 %v556, %v570
      %v692 = vadd.f32 %v557, %v570
      %v693 = vadd.f32 %v558, %v570
      %v694 = vadd.f32 %v559, %v570
      %v695 = vadd.f32 %v560, %v570
      %v696 = vadd.f32 %v561, %v570
      %v697 = vadd.f32 %v562, %v570
      %v698 = vadd.f32 %v563, %v570
      %v699 = vadd.f32 %v564, %v570
      %v700 = vmax.f32 %v572, 0.0
      %v701 = vmax.f32 %v573, 0.0
      %v702 = vmax.f32 %v574, 0.0
      %v703 = vmax.f32 %v575, 0.0
      %v704 = vmax.f32 %v576, 0.0
      %v705 = vmax.f32 %v577, 0.0
      %v706 = vmax.f32 %v578, 0.0
      %v707 = vmax.f32 %v579, 0.0
      %v708 = vmax.f32 %v580, 0.0
      %v709 = vmax.f32 %v581, 0.0
      %v710 = vmax.f32 %v582, 0.0
      %v711 = vmax.f32 %v583, 0.0
      %v712 = vmax.f32 %v584, 0.0
      %v713 = vmax.f32 %v585, 0.0
      %v714 = vmax.f32 %v586, 0.0
      %v715 = vmax.f32 %v587, 0.0
      %v716 = vmax.f32 %v588, 0.0
      %v717 = vmax.f32 %v589, 0.0
      %v718 = vmax.f32 %v590, 0.0
      %v719 = vmax.f32 %v591, 0.0
      %v720 = vmax.f32 %v592, 0.0
      %v721 = vmax.f32 %v593, 0.0
      %v722 = vmax.f32 %v594, 0.0
      %v723 = vmax.f32 %v595, 0.0
      %v724 = vmax.f32 %v596, 0.0
      %v725 = vmax.f32 %v597, 0.0
      %v726 = vmax.f32 %v598, 0.0
      %v727 = vmax.f32 %v599, 0.0
      %v728 = vmax.f32 %v600, 0.0
      %v729 = vmax.f32 %v601, 0.0
      %v730 = vmax.f32 %v602, 0.0
      %v731 = vmax.f32 %v603, 0.0
      %v732 = vmax.f32 %v604, 0.0
      %v733 = vmax.f32 %v605, 0.0
      %v734 = vmax.f32 %v606, 0.0
      %v735 = vmax.f32 %v607, 0.0
      %v736 = vmax.f32 %v608, 0.0
      %v737 = vmax.f32 %v609, 0.0
      %v738 = vmax.f32 %v610, 0.0
      %v739 = vmax.f32 %v611, 0.0
      %v740 = vmax.f32 %v612, 0.0
      %v741 = vmax.f32 %v613, 0.0
      %v742 = vmax.f32 %v614, 0.0
      %v743 = vmax.f32 %v615, 0.0
      %v744 = vmax.f32 %v616, 0.0
      %v745 = vmax.f32 %v617, 0.0
      %v746 = vmax.f32 %v618, 0.0
      %v747 = vmax.f32 %v619, 0.0
      %v748 = vmax.f32 %v620, 0.0
      %v749 = vmax.f32 %v621, 0.0
      %v750 = vmax.f32 %v622, 0.0
      %v751 = vmax.f32 %v623, 0.0
      %v752 = vmax.f32 %v624, 0.0
      %v753 = vmax.f32 %v625, 0.0
      %v754 = vmax.f32 %v626, 0.0
      %v755 = vmax.f32 %v627, 0.0
      %v756 = vmax.f32 %v628, 0.0
      %v757 = vmax.f32 %v629, 0.0
      %v758 = vmax.f32 %v630, 0.0
      %v759 = vmax.f32 %v631, 0.0
      %v760 = vmax.f32 %v632, 0.0
      %v761 = vmax.f32 %v633, 0.0
      %v762 = vmax.f32 %v634, 0.0
      %v763 = vmax.f32 %v635, 0.0
      %v764 = vmax.f32 %v636, 0.0
      %v765 = vmax.f32 %v637, 0.0
      %v766 = vmax.f32 %v638, 0.0
      %v767 = vmax.f32 %v639, 0.0
      %v768 = vmax.f32 %v640, 0.0
      %v769 = vmax.f32 %v641, 0.0
      %v770 = vmax.f32 %v642, 0.0
      %v771 = vmax.f32 %v643, 0.0
      %v772 = vmax.f32 %v644, 0.0
      %v773 = vmax.f32 %v645, 0.0
      %v774 = vmax.f32 %v646, 0.0
      %v775 = vmax.f32 %v647, 0.0
      %v776 = vmax.f32 %v648, 0.0
      %v777 = vmax.f32 %v649, 0.0
      %v778 = vmax.f32 %v650, 0.0
      %v779 = vmax.f32 %v651, 0.0
      %v780 = vmax.f32 %v652, 0.0
      %v781 = vmax.f32 %v653, 0.0
      %v782 = vmax.f32 %v654, 0.0
      %v783 = vmax.f32 %v655, 0.0
      %v784 = vmax.f32 %v656, 0.0
      %v785 = vmax.f32 %v657, 0.0
      %v786 = vmax.f32 %v658, 0.0
      %v787 = vmax.f32 %v659, 0.0
      %v788 = vmax.f32 %v660, 0.0
      %v789 = vmax.f32 %v661, 0.0
      %v790 = vmax.f32 %v662, 0.0
      %v791 = vmax.f32 %v663, 0.0
      %v792 = vmax.f32 %v664, 0.0
      %v793 = vmax.f32 %v665, 0.0
      %v794 = vmax.f32 %v666, 0.0
      %v795 = vmax.f32 %v667, 0.0
      %v796 = vmax.f32 %v668, 0.0
      %v797 = vmax.f32 %v669, 0.0
      %v798 = vmax.f32 %v670, 0.0
      %v799 = vmax.f32 %v671, 0.0
      %v800 = vmax.f32 %v672, 0.0
      %v801 = vmax.f32 %v673, 0.0
      %v802 = vmax.f32 %v674, 0.0
      %v803 = vmax.f32 %v675, 0.0
      %v804 = vmax.f32 %v676, 0.0
      %v805 = vmax.f32 %v677, 0.0
      %v806 = vmax.f32 %v678, 0.0
      %v807 = vmax.f32 %v679, 0.0
      %v808 = vmax.f32 %v680, 0.0
      %v809 = vmax.f32 %v681, 0.0
      %v810 = vmax.f32 %v682, 0.0
      %v811 = vmax.f32 %v683, 0.0
      %v812 = vmax.f32 %v684, 0.0
      %v813 = vmax.f32 %v685, 0.0
      %v814 = vmax.f32 %v686, 0.0
      %v815 = vmax.f32 %v687, 0.0
      %v816 = vmax.f32 %v688, 0.0
      %v817 = vmax.f32 %v689, 0.0
      %v818 = vmax.f32 %v690, 0.0
      %v819 = vmax.f32 %v691, 0.0
      %v820 = vmax.f32 %v692, 0.0
      %v821 = vmax.f32 %v693, 0.0
      %v822 = vmax.f32 %v694, 0.0
      %v823 = vmax.f32 %v695, 0.0
      %v824 = vmax.f32 %v696, 0.0
      %v825 = vmax.f32 %v697, 0.0
      %v826 = vmax.f32 %v698, 0.0
      %v827 = vmax.f32 %v699, 0.0
      %v828 = vpack.c.bf16 %v701, %v700
      %v829 = vpack.c.bf16 %v703, %v702
      %v830 = vpack.c.bf16 %v705, %v704
      %v831 = vpack.c.bf16 %v707, %v706
      %v832 = vpack.c.bf16 %v709, %v708
      %v833 = vpack.c.bf16 %v711, %v710
      %v834 = vpack.c.bf16 %v713, %v712
      %v835 = vpack.c.bf16 %v715, %v714
      %v836 = vpack.c.bf16 %v717, %v716
      %v837 = vpack.c.bf16 %v719, %v718
      %v838 = vpack.c.bf16 %v721, %v720
      %v839 = vpack.c.bf16 %v723, %v722
      %v840 = vpack.c.bf16 %v725, %v724
      %v841 = vpack.c.bf16 %v727, %v726
      %v842 = vpack.c.bf16 %v729, %v728
      %v843 = vpack.c.bf16 %v731, %v730
      %v844 = vpack.c.bf16 %v733, %v732
      %v845 = vpack.c.bf16 %v735, %v734
      %v846 = vpack.c.bf16 %v737, %v736
      %v847 = vpack.c.bf16 %v739, %v738
      %v848 = vpack.c.bf16 %v741, %v740
      %v849 = vpack.c.bf16 %v743, %v742
      %v850 = vpack.c.bf16 %v745, %v744
      %v851 = vpack.c.bf16 %v747, %v746
      %v852 = vpack.c.bf16 %v749, %v748
      %v853 = vpack.c.bf16 %v751, %v750
      %v854 = vpack.c.bf16 %v753, %v752
      %v855 = vpack.c.bf16 %v755, %v754
      %v856 = vpack.c.bf16 %v757, %v756
      %v857 = vpack.c.bf16 %v759, %v758
      %v858 = vpack.c.bf16 %v761, %v760
      %v859 = vpack.c.bf16 %v763, %v762
      %v860 = vpack.c.bf16 %v765, %v764
      %v861 = vpack.c.bf16 %v767, %v766
      %v862 = vpack.c.bf16 %v769, %v768
      %v863 = vpack.c.bf16 %v771, %v770
      %v864 = vpack.c.bf16 %v773, %v772
      %v865 = vpack.c.bf16 %v775, %v774
      %v866 = vpack.c.bf16 %v777, %v776
      %v867 = vpack.c.bf16 %v779, %v778
      %v868 = vpack.c.bf16 %v781, %v780
      %v869 = vpack.c.bf16 %v783, %v782
      %v870 = vpack.c.bf16 %v785, %v784
      %v871 = vpack.c.bf16 %v787, %v786
      %v872 = vpack.c.bf16 %v789, %v788
      %v873 = vpack.c.bf16 %v791, %v790
      %v874 = vpack.c.bf16 %v793, %v792
      %v875 = vpack.c.bf16 %v795, %v794
      %v876 = vpack.c.bf16 %v797, %v796
      %v877 = vpack.c.bf16 %v799, %v798
      %v878 = vpack.c.bf16 %v801, %v800
      %v879 = vpack.c.bf16 %v803, %v802
      %v880 = vpack.c.bf16 %v805, %v804
      %v881 = vpack.c.bf16 %v807, %v806
      %v882 = vpack.c.bf16 %v809, %v808
      %v883 = vpack.c.bf16 %v811, %v810
      %v884 = vpack.c.bf16 %v813, %v812
      %v885 = vpack.c.bf16 %v815, %v814
      %v886 = vpack.c.bf16 %v817, %v816
      %v887 = vpack.c.bf16 %v819, %v818
      %v888 = vpack.c.bf16 %v821, %v820
      %v889 = vpack.c.bf16 %v823, %v822
      %v890 = vpack.c.bf16 %v825, %v824
      %v891 = vpack.c.bf16 %v827, %v826
      %v956 = vunpack.c.l.b16 %v828
      %v957 = vunpack.c.h.b16 %v828
      %v958 = vunpack.c.l.b16 %v829
      %v959 = vunpack.c.h.b16 %v829
      %v960 = vunpack.c.l.b16 %v830
      %v961 = vunpack.c.h.b16 %v830
      %v962 = vunpack.c.l.b16 %v831
      %v963 = vunpack.c.h.b16 %v831
      %v964 = vunpack.c.l.b16 %v832
      %v965 = vunpack.c.h.b16 %v832
      %v966 = vunpack.c.l.b16 %v833
      %v967 = vunpack.c.h.b16 %v833
      %v968 = vunpack.c.l.b16 %v834
      %v969 = vunpack.c.h.b16 %v834
      %v970 = vunpack.c.l.b16 %v835
      %v971 = vunpack.c.h.b16 %v835
      %v972 = vunpack.c.l.b16 %v836
      %v973 = vunpack.c.h.b16 %v836
      %v974 = vunpack.c.l.b16 %v837
      %v975 = vunpack.c.h.b16 %v837
      %v976 = vunpack.c.l.b16 %v838
      %v977 = vunpack.c.h.b16 %v838
      %v978 = vunpack.c.l.b16 %v839
      %v979 = vunpack.c.h.b16 %v839
      %v980 = vunpack.c.l.b16 %v840
      %v981 = vunpack.c.h.b16 %v840
      %v982 = vunpack.c.l.b16 %v841
      %v983 = vunpack.c.h.b16 %v841
      %v984 = vunpack.c.l.b16 %v842
      %v985 = vunpack.c.h.b16 %v842
      %v986 = vunpack.c.l.b16 %v843
      %v987 = vunpack.c.h.b16 %v843
      %v988 = vunpack.c.l.b16 %v844
      %v989 = vunpack.c.h.b16 %v844
      %v990 = vunpack.c.l.b16 %v845
      %v991 = vunpack.c.h.b16 %v845
      %v992 = vunpack.c.l.b16 %v846
      %v993 = vunpack.c.h.b16 %v846
      %v994 = vunpack.c.l.b16 %v847
      %v995 = vunpack.c.h.b16 %v847
      %v996 = vunpack.c.l.b16 %v848
      %v997 = vunpack.c.h.b16 %v848
      %v998 = vunpack.c.l.b16 %v849
      %v999 = vunpack.c.h.b16 %v849
      %v1000 = vunpack.c.l.b16 %v850
      %v1001 = vunpack.c.h.b16 %v850
      %v1002 = vunpack.c.l.b16 %v851
      %v1003 = vunpack.c.h.b16 %v851
      %v1004 = vunpack.c.l.b16 %v852
      %v1005 = vunpack.c.h.b16 %v852
      %v1006 = vunpack.c.l.b16 %v853
      %v1007 = vunpack.c.h.b16 %v853
      %v1008 = vunpack.c.l.b16 %v854
      %v1009 = vunpack.c.h.b16 %v854
      %v1010 = vunpack.c.l.b16 %v855
      %v1011 = vunpack.c.h.b16 %v855
      %v1012 = vunpack.c.l.b16 %v856
      %v1013 = vunpack.c.h.b16 %v856
      %v1014 = vunpack.c.l.b16 %v857
      %v1015 = vunpack.c.h.b16 %v857
      %v1016 = vunpack.c.l.b16 %v858
      %v1017 = vunpack.c.h.b16 %v858
      %v1018 = vunpack.c.l.b16 %v859
      %v1019 = vunpack.c.h.b16 %v859
      %v1020 = vunpack.c.l.b16 %v860
      %v1021 = vunpack.c.h.b16 %v860
      %v1022 = vunpack.c.l.b16 %v861
      %v1023 = vunpack.c.h.b16 %v861
      %v1024 = vunpack.c.l.b16 %v862
      %v1025 = vunpack.c.h.b16 %v862
      %v1026 = vunpack.c.l.b16 %v863
      %v1027 = vunpack.c.h.b16 %v863
      %v1028 = vunpack.c.l.b16 %v864
      %v1029 = vunpack.c.h.b16 %v864
      %v1030 = vunpack.c.l.b16 %v865
      %v1031 = vunpack.c.h.b16 %v865
      %v1032 = vunpack.c.l.b16 %v866
      %v1033 = vunpack.c.h.b16 %v866
      %v1034 = vunpack.c.l.b16 %v867
      %v1035 = vunpack.c.h.b16 %v867
      %v1036 = vunpack.c.l.b16 %v868
      %v1037 = vunpack.c.h.b16 %v868
      %v1038 = vunpack.c.l.b16 %v869
      %v1039 = vunpack.c.h.b16 %v869
      %v1040 = vunpack.c.l.b16 %v870
      %v1041 = vunpack.c.h.b16 %v870
      %v1042 = vunpack.c.l.b16 %v871
      %v1043 = vunpack.c.h.b16 %v871
      %v1044 = vunpack.c.l.b16 %v872
      %v1045 = vunpack.c.h.b16 %v872
      %v1046 = vunpack.c.l.b16 %v873
      %v1047 = vunpack.c.h.b16 %v873
      %v1048 = vunpack.c.l.b16 %v874
      %v1049 = vunpack.c.h.b16 %v874
      %v1050 = vunpack.c.l.b16 %v875
      %v1051 = vunpack.c.h.b16 %v875
      %v1052 = vunpack.c.l.b16 %v876
      %v1053 = vunpack.c.h.b16 %v876
      %v1054 = vunpack.c.l.b16 %v877
      %v1055 = vunpack.c.h.b16 %v877
      %v1056 = vunpack.c.l.b16 %v878
      %v1057 = vunpack.c.h.b16 %v878
      %v1058 = vunpack.c.l.b16 %v879
      %v1059 = vunpack.c.h.b16 %v879
      %v1060 = vunpack.c.l.b16 %v880
      %v1061 = vunpack.c.h.b16 %v880
      %v1062 = vunpack.c.l.b16 %v881
      %v1063 = vunpack.c.h.b16 %v881
      %v1064 = vunpack.c.l.b16 %v882
      %v1065 = vunpack.c.h.b16 %v882
      %v1066 = vunpack.c.l.b16 %v883
      %v1067 = vunpack.c.h.b16 %v883
      %v1068 = vunpack.c.l.b16 %v884
      %v1069 = vunpack.c.h.b16 %v884
      %v1070 = vunpack.c.l.b16 %v885
      %v1071 = vunpack.c.h.b16 %v885
      %v1072 = vunpack.c.l.b16 %v886
      %v1073 = vunpack.c.h.b16 %v886
      %v1074 = vunpack.c.l.b16 %v887
      %v1075 = vunpack.c.h.b16 %v887
      %v1076 = vunpack.c.l.b16 %v888
      %v1077 = vunpack.c.h.b16 %v888
      %v1078 = vunpack.c.l.b16 %v889
      %v1079 = vunpack.c.h.b16 %v889
      %v1080 = vunpack.c.l.b16 %v890
      %v1081 = vunpack.c.h.b16 %v890
      %v1082 = vunpack.c.l.b16 %v891
      %v1083 = vunpack.c.h.b16 %v891
      %v1084 = vpack.c.b16 %v956, %v956
      %v1085 = vpack.c.b16 %v957, %v957
      %v1086 = vpack.c.b16 %v958, %v958
      %v1087 = vpack.c.b16 %v959, %v959
      %v1088 = vpack.c.b16 %v960, %v960
      %v1089 = vpack.c.b16 %v961, %v961
      %v1090 = vpack.c.b16 %v962, %v962
      %v1091 = vpack.c.b16 %v963, %v963
      %v1092 = vpack.c.b16 %v964, %v964
      %v1093 = vpack.c.b16 %v965, %v965
      %v1094 = vpack.c.b16 %v966, %v966
      %v1095 = vpack.c.b16 %v967, %v967
      %v1096 = vpack.c.b16 %v968, %v968
      %v1097 = vpack.c.b16 %v969, %v969
      %v1098 = vpack.c.b16 %v970, %v970
      %v1099 = vpack.c.b16 %v971, %v971
      %v1100 = vpack.c.b16 %v972, %v972
      %v1101 = vpack.c.b16 %v973, %v973
      %v1102 = vpack.c.b16 %v974, %v974
      %v1103 = vpack.c.b16 %v975, %v975
      %v1104 = vpack.c.b16 %v976, %v976
      %v1105 = vpack.c.b16 %v977, %v977
      %v1106 = vpack.c.b16 %v978, %v978
      %v1107 = vpack.c.b16 %v979, %v979
      %v1108 = vpack.c.b16 %v980, %v980
      %v1109 = vpack.c.b16 %v981, %v981
      %v1110 = vpack.c.b16 %v982, %v982
      %v1111 = vpack.c.b16 %v983, %v983
      %v1112 = vpack.c.b16 %v984, %v984
      %v1113 = vpack.c.b16 %v985, %v985
      %v1114 = vpack.c.b16 %v986, %v986
      %v1115 = vpack.c.b16 %v987, %v987
      %v1116 = vpack.c.b16 %v988, %v988
      %v1117 = vpack.c.b16 %v989, %v989
      %v1118 = vpack.c.b16 %v990, %v990
      %v1119 = vpack.c.b16 %v991, %v991
      %v1120 = vpack.c.b16 %v992, %v992
      %v1121 = vpack.c.b16 %v993, %v993
      %v1122 = vpack.c.b16 %v994, %v994
      %v1123 = vpack.c.b16 %v995, %v995
      %v1124 = vpack.c.b16 %v996, %v996
      %v1125 = vpack.c.b16 %v997, %v997
      %v1126 = vpack.c.b16 %v998, %v998
      %v1127 = vpack.c.b16 %v999, %v999
      %v1128 = vpack.c.b16 %v1000, %v1000
      %v1129 = vpack.c.b16 %v1001, %v1001
      %v1130 = vpack.c.b16 %v1002, %v1002
      %v1131 = vpack.c.b16 %v1003, %v1003
      %v1132 = vpack.c.b16 %v1004, %v1004
      %v1133 = vpack.c.b16 %v1005, %v1005
      %v1134 = vpack.c.b16 %v1006, %v1006
      %v1135 = vpack.c.b16 %v1007, %v1007
      %v1136 = vpack.c.b16 %v1008, %v1008
      %v1137 = vpack.c.b16 %v1009, %v1009
      %v1138 = vpack.c.b16 %v1010, %v1010
      %v1139 = vpack.c.b16 %v1011, %v1011
      %v1140 = vpack.c.b16 %v1012, %v1012
      %v1141 = vpack.c.b16 %v1013, %v1013
      %v1142 = vpack.c.b16 %v1014, %v1014
      %v1143 = vpack.c.b16 %v1015, %v1015
      %v1144 = vpack.c.b16 %v1016, %v1016
      %v1145 = vpack.c.b16 %v1017, %v1017
      %v1146 = vpack.c.b16 %v1018, %v1018
      %v1147 = vpack.c.b16 %v1019, %v1019
      %v1148 = vpack.c.b16 %v1020, %v1020
      %v1149 = vpack.c.b16 %v1021, %v1021
      %v1150 = vpack.c.b16 %v1022, %v1022
      %v1151 = vpack.c.b16 %v1023, %v1023
      %v1152 = vpack.c.b16 %v1024, %v1024
      %v1153 = vpack.c.b16 %v1025, %v1025
      %v1154 = vpack.c.b16 %v1026, %v1026
      %v1155 = vpack.c.b16 %v1027, %v1027
      %v1156 = vpack.c.b16 %v1028, %v1028
      %v1157 = vpack.c.b16 %v1029, %v1029
      %v1158 = vpack.c.b16 %v1030, %v1030
      %v1159 = vpack.c.b16 %v1031, %v1031
      %v1160 = vpack.c.b16 %v1032, %v1032
      %v1161 = vpack.c.b16 %v1033, %v1033
      %v1162 = vpack.c.b16 %v1034, %v1034
      %v1163 = vpack.c.b16 %v1035, %v1035
      %v1164 = vpack.c.b16 %v1036, %v1036
      %v1165 = vpack.c.b16 %v1037, %v1037
      %v1166 = vpack.c.b16 %v1038, %v1038
      %v1167 = vpack.c.b16 %v1039, %v1039
      %v1168 = vpack.c.b16 %v1040, %v1040
      %v1169 = vpack.c.b16 %v1041, %v1041
      %v1170 = vpack.c.b16 %v1042, %v1042
      %v1171 = vpack.c.b16 %v1043, %v1043
      %v1172 = vpack.c.b16 %v1044, %v1044
      %v1173 = vpack.c.b16 %v1045, %v1045
      %v1174 = vpack.c.b16 %v1046, %v1046
      %v1175 = vpack.c.b16 %v1047, %v1047
      %v1176 = vpack.c.b16 %v1048, %v1048
      %v1177 = vpack.c.b16 %v1049, %v1049
      %v1178 = vpack.c.b16 %v1050, %v1050
      %v1179 = vpack.c.b16 %v1051, %v1051
      %v1180 = vpack.c.b16 %v1052, %v1052
      %v1181 = vpack.c.b16 %v1053, %v1053
      %v1182 = vpack.c.b16 %v1054, %v1054
      %v1183 = vpack.c.b16 %v1055, %v1055
      %v1184 = vpack.c.b16 %v1056, %v1056
      %v1185 = vpack.c.b16 %v1057, %v1057
      %v1186 = vpack.c.b16 %v1058, %v1058
      %v1187 = vpack.c.b16 %v1059, %v1059
      %v1188 = vpack.c.b16 %v1060, %v1060
      %v1189 = vpack.c.b16 %v1061, %v1061
      %v1190 = vpack.c.b16 %v1062, %v1062
      %v1191 = vpack.c.b16 %v1063, %v1063
      %v1192 = vpack.c.b16 %v1064, %v1064
      %v1193 = vpack.c.b16 %v1065, %v1065
      %v1194 = vpack.c.b16 %v1066, %v1066
      %v1195 = vpack.c.b16 %v1067, %v1067
      %v1196 = vpack.c.b16 %v1068, %v1068
      %v1197 = vpack.c.b16 %v1069, %v1069
      %v1198 = vpack.c.b16 %v1070, %v1070
      %v1199 = vpack.c.b16 %v1071, %v1071
      %v1200 = vpack.c.b16 %v1072, %v1072
      %v1201 = vpack.c.b16 %v1073, %v1073
      %v1202 = vpack.c.b16 %v1074, %v1074
      %v1203 = vpack.c.b16 %v1075, %v1075
      %v1204 = vpack.c.b16 %v1076, %v1076
      %v1205 = vpack.c.b16 %v1077, %v1077
      %v1206 = vpack.c.b16 %v1078, %v1078
      %v1207 = vpack.c.b16 %v1079, %v1079
      %v1208 = vpack.c.b16 %v1080, %v1080
      %v1209 = vpack.c.b16 %v1081, %v1081
      %v1210 = vpack.c.b16 %v1082, %v1082
      %v1211 = vpack.c.b16 %v1083, %v1083
      %vm1340 = vcmask 519168
      %1341 = vst.msk [vmem:[%s172] sm:$0xf] %vm1340, %v1084
      %1342 = vst.msk [vmem:[%s172 + $0x4] sm:$0xf] %vm1340, %v1085
      %1343 = vst.msk [vmem:[%s172 + $0x8] sm:$0xf] %vm1340, %v1086
      %1344 = vst.msk [vmem:[%s172 + $0xc] sm:$0xf] %vm1340, %v1087
      %1345 = vst.msk [vmem:[%s172 + $0x10] sm:$0xf] %vm1340, %v1088
      %1346 = vst.msk [vmem:[%s172 + $0x14] sm:$0xf] %vm1340, %v1089
      %1347 = vst.msk [vmem:[%s172 + $0x18] sm:$0xf] %vm1340, %v1090
      %1348 = vst.msk [vmem:[%s172 + $0x1c] sm:$0xf] %vm1340, %v1091
      %1349 = vst.msk [vmem:[%s172 + $0x20] sm:$0xf] %vm1340, %v1092
      %1350 = vst.msk [vmem:[%s172 + $0x24] sm:$0xf] %vm1340, %v1093
      %1351 = vst.msk [vmem:[%s172 + $0x28] sm:$0xf] %vm1340, %v1094
      %1352 = vst.msk [vmem:[%s172 + $0x2c] sm:$0xf] %vm1340, %v1095
      %1353 = vst.msk [vmem:[%s172 + $0x30] sm:$0xf] %vm1340, %v1096
      %1354 = vst.msk [vmem:[%s172 + $0x34] sm:$0xf] %vm1340, %v1097
      %1355 = vst.msk [vmem:[%s172 + $0x38] sm:$0xf] %vm1340, %v1098
      %1356 = vst.msk [vmem:[%s172 + $0x3c] sm:$0xf] %vm1340, %v1099
      %1357 = vst.msk [vmem:[%s172 + $0x40] sm:$0xf] %vm1340, %v1100
      %1358 = vst.msk [vmem:[%s172 + $0x44] sm:$0xf] %vm1340, %v1101
      %1359 = vst.msk [vmem:[%s172 + $0x48] sm:$0xf] %vm1340, %v1102
      %1360 = vst.msk [vmem:[%s172 + $0x4c] sm:$0xf] %vm1340, %v1103
      %1361 = vst.msk [vmem:[%s172 + $0x50] sm:$0xf] %vm1340, %v1104
      %1362 = vst.msk [vmem:[%s172 + $0x54] sm:$0xf] %vm1340, %v1105
      %1363 = vst.msk [vmem:[%s172 + $0x58] sm:$0xf] %vm1340, %v1106
      %1364 = vst.msk [vmem:[%s172 + $0x5c] sm:$0xf] %vm1340, %v1107
      %1365 = vst.msk [vmem:[%s172 + $0x60] sm:$0xf] %vm1340, %v1108
      %1366 = vst.msk [vmem:[%s172 + $0x64] sm:$0xf] %vm1340, %v1109
      %1367 = vst.msk [vmem:[%s172 + $0x68] sm:$0xf] %vm1340, %v1110
      %1368 = vst.msk [vmem:[%s172 + $0x6c] sm:$0xf] %vm1340, %v1111
      %1369 = vst.msk [vmem:[%s172 + $0x70] sm:$0xf] %vm1340, %v1112
      %1370 = vst.msk [vmem:[%s172 + $0x74] sm:$0xf] %vm1340, %v1113
      %1371 = vst.msk [vmem:[%s172 + $0x78] sm:$0xf] %vm1340, %v1114
      %1372 = vst.msk [vmem:[%s172 + $0x7c] sm:$0xf] %vm1340, %v1115
      %1373 = vst.msk [vmem:[%s172 + $0x80] sm:$0xf] %vm1340, %v1116
      %1374 = vst.msk [vmem:[%s172 + $0x84] sm:$0xf] %vm1340, %v1117
      %1375 = vst.msk [vmem:[%s172 + $0x88] sm:$0xf] %vm1340, %v1118
      %1376 = vst.msk [vmem:[%s172 + $0x8c] sm:$0xf] %vm1340, %v1119
      %1377 = vst.msk [vmem:[%s172 + $0x90] sm:$0xf] %vm1340, %v1120
      %1378 = vst.msk [vmem:[%s172 + $0x94] sm:$0xf] %vm1340, %v1121
      %1379 = vst.msk [vmem:[%s172 + $0x98] sm:$0xf] %vm1340, %v1122
      %1380 = vst.msk [vmem:[%s172 + $0x9c] sm:$0xf] %vm1340, %v1123
      %1381 = vst.msk [vmem:[%s172 + $0xa0] sm:$0xf] %vm1340, %v1124
      %1382 = vst.msk [vmem:[%s172 + $0xa4] sm:$0xf] %vm1340, %v1125
      %1383 = vst.msk [vmem:[%s172 + $0xa8] sm:$0xf] %vm1340, %v1126
      %1384 = vst.msk [vmem:[%s172 + $0xac] sm:$0xf] %vm1340, %v1127
      %1385 = vst.msk [vmem:[%s172 + $0xb0] sm:$0xf] %vm1340, %v1128
      %1386 = vst.msk [vmem:[%s172 + $0xb4] sm:$0xf] %vm1340, %v1129
      %1387 = vst.msk [vmem:[%s172 + $0xb8] sm:$0xf] %vm1340, %v1130
      %1388 = vst.msk [vmem:[%s172 + $0xbc] sm:$0xf] %vm1340, %v1131
      %1389 = vst.msk [vmem:[%s172 + $0xc0] sm:$0xf] %vm1340, %v1132
      %1390 = vst.msk [vmem:[%s172 + $0xc4] sm:$0xf] %vm1340, %v1133
      %1391 = vst.msk [vmem:[%s172 + $0xc8] sm:$0xf] %vm1340, %v1134
      %1392 = vst.msk [vmem:[%s172 + $0xcc] sm:$0xf] %vm1340, %v1135
      %1393 = vst.msk [vmem:[%s172 + $0xd0] sm:$0xf] %vm1340, %v1136
      %1394 = vst.msk [vmem:[%s172 + $0xd4] sm:$0xf] %vm1340, %v1137
      %1395 = vst.msk [vmem:[%s172 + $0xd8] sm:$0xf] %vm1340, %v1138
      %1396 = vst.msk [vmem:[%s172 + $0xdc] sm:$0xf] %vm1340, %v1139
      %1397 = vst.msk [vmem:[%s172 + $0xe0] sm:$0xf] %vm1340, %v1140
      %1398 = vst.msk [vmem:[%s172 + $0xe4] sm:$0xf] %vm1340, %v1141
      %1399 = vst.msk [vmem:[%s172 + $0xe8] sm:$0xf] %vm1340, %v1142
      %1400 = vst.msk [vmem:[%s172 + $0xec] sm:$0xf] %vm1340, %v1143
      %1401 = vst.msk [vmem:[%s172 + $0xf0] sm:$0xf] %vm1340, %v1144
      %1402 = vst.msk [vmem:[%s172 + $0xf4] sm:$0xf] %vm1340, %v1145
      %1403 = vst.msk [vmem:[%s172 + $0xf8] sm:$0xf] %vm1340, %v1146
      %1404 = vst.msk [vmem:[%s172 + $0xfc] sm:$0xf] %vm1340, %v1147
      %1405 = vst.msk [vmem:[%s172 + $0x100] sm:$0xf] %vm1340, %v1148
      %1406 = vst.msk [vmem:[%s172 + $0x104] sm:$0xf] %vm1340, %v1149
      %1407 = vst.msk [vmem:[%s172 + $0x108] sm:$0xf] %vm1340, %v1150
      %1408 = vst.msk [vmem:[%s172 + $0x10c] sm:$0xf] %vm1340, %v1151
      %1409 = vst.msk [vmem:[%s172 + $0x110] sm:$0xf] %vm1340, %v1152
      %1410 = vst.msk [vmem:[%s172 + $0x114] sm:$0xf] %vm1340, %v1153
      %1411 = vst.msk [vmem:[%s172 + $0x118] sm:$0xf] %vm1340, %v1154
      %1412 = vst.msk [vmem:[%s172 + $0x11c] sm:$0xf] %vm1340, %v1155
      %1413 = vst.msk [vmem:[%s172 + $0x120] sm:$0xf] %vm1340, %v1156
      %1414 = vst.msk [vmem:[%s172 + $0x124] sm:$0xf] %vm1340, %v1157
      %1415 = vst.msk [vmem:[%s172 + $0x128] sm:$0xf] %vm1340, %v1158
      %1416 = vst.msk [vmem:[%s172 + $0x12c] sm:$0xf] %vm1340, %v1159
      %1417 = vst.msk [vmem:[%s172 + $0x130] sm:$0xf] %vm1340, %v1160
      %1418 = vst.msk [vmem:[%s172 + $0x134] sm:$0xf] %vm1340, %v1161
      %1419 = vst.msk [vmem:[%s172 + $0x138] sm:$0xf] %vm1340, %v1162
      %1420 = vst.msk [vmem:[%s172 + $0x13c] sm:$0xf] %vm1340, %v1163
      %1421 = vst.msk [vmem:[%s172 + $0x140] sm:$0xf] %vm1340, %v1164
      %1422 = vst.msk [vmem:[%s172 + $0x144] sm:$0xf] %vm1340, %v1165
      %1423 = vst.msk [vmem:[%s172 + $0x148] sm:$0xf] %vm1340, %v1166
      %1424 = vst.msk [vmem:[%s172 + $0x14c] sm:$0xf] %vm1340, %v1167
      %1425 = vst.msk [vmem:[%s172 + $0x150] sm:$0xf] %vm1340, %v1168
      %1426 = vst.msk [vmem:[%s172 + $0x154] sm:$0xf] %vm1340, %v1169
      %1427 = vst.msk [vmem:[%s172 + $0x158] sm:$0xf] %vm1340, %v1170
      %1428 = vst.msk [vmem:[%s172 + $0x15c] sm:$0xf] %vm1340, %v1171
      %1429 = vst.msk [vmem:[%s172 + $0x160] sm:$0xf] %vm1340, %v1172
      %1430 = vst.msk [vmem:[%s172 + $0x164] sm:$0xf] %vm1340, %v1173
      %1431 = vst.msk [vmem:[%s172 + $0x168] sm:$0xf] %vm1340, %v1174
      %1432 = vst.msk [vmem:[%s172 + $0x16c] sm:$0xf] %vm1340, %v1175
      %1433 = vst.msk [vmem:[%s172 + $0x170] sm:$0xf] %vm1340, %v1176
      %1434 = vst.msk [vmem:[%s172 + $0x174] sm:$0xf] %vm1340, %v1177
      %1435 = vst.msk [vmem:[%s172 + $0x178] sm:$0xf] %vm1340, %v1178
      %1436 = vst.msk [vmem:[%s172 + $0x17c] sm:$0xf] %vm1340, %v1179
      %1437 = vst.msk [vmem:[%s172 + $0x180] sm:$0xf] %vm1340, %v1180
      %1438 = vst.msk [vmem:[%s172 + $0x184] sm:$0xf] %vm1340, %v1181
      %1439 = vst.msk [vmem:[%s172 + $0x188] sm:$0xf] %vm1340, %v1182
      %1440 = vst.msk [vmem:[%s172 + $0x18c] sm:$0xf] %vm1340, %v1183
      %1441 = vst.msk [vmem:[%s172 + $0x190] sm:$0xf] %vm1340, %v1184
      %1442 = vst.msk [vmem:[%s172 + $0x194] sm:$0xf] %vm1340, %v1185
      %1443 = vst.msk [vmem:[%s172 + $0x198] sm:$0xf] %vm1340, %v1186
      %1444 = vst.msk [vmem:[%s172 + $0x19c] sm:$0xf] %vm1340, %v1187
      %1445 = vst.msk [vmem:[%s172 + $0x1a0] sm:$0xf] %vm1340, %v1188
      %1446 = vst.msk [vmem:[%s172 + $0x1a4] sm:$0xf] %vm1340, %v1189
      %1447 = vst.msk [vmem:[%s172 + $0x1a8] sm:$0xf] %vm1340, %v1190
      %1448 = vst.msk [vmem:[%s172 + $0x1ac] sm:$0xf] %vm1340, %v1191
      %1449 = vst.msk [vmem:[%s172 + $0x1b0] sm:$0xf] %vm1340, %v1192
      %1450 = vst.msk [vmem:[%s172 + $0x1b4] sm:$0xf] %vm1340, %v1193
      %1451 = vst.msk [vmem:[%s172 + $0x1b8] sm:$0xf] %vm1340, %v1194
      %1452 = vst.msk [vmem:[%s172 + $0x1bc] sm:$0xf] %vm1340, %v1195
      %1453 = vst.msk [vmem:[%s172 + $0x1c0] sm:$0xf] %vm1340, %v1196
      %1454 = vst.msk [vmem:[%s172 + $0x1c4] sm:$0xf] %vm1340, %v1197
      %1455 = vst.msk [vmem:[%s172 + $0x1c8] sm:$0xf] %vm1340, %v1198
      %1456 = vst.msk [vmem:[%s172 + $0x1cc] sm:$0xf] %vm1340, %v1199
      %1457 = vst.msk [vmem:[%s172 + $0x1d0] sm:$0xf] %vm1340, %v1200
      %1458 = vst.msk [vmem:[%s172 + $0x1d4] sm:$0xf] %vm1340, %v1201
      %1459 = vst.msk [vmem:[%s172 + $0x1d8] sm:$0xf] %vm1340, %v1202
      %1460 = vst.msk [vmem:[%s172 + $0x1dc] sm:$0xf] %vm1340, %v1203
      %1461 = vst.msk [vmem:[%s172 + $0x1e0] sm:$0xf] %vm1340, %v1204
      %1462 = vst.msk [vmem:[%s172 + $0x1e4] sm:$0xf] %vm1340, %v1205
      %1463 = vst.msk [vmem:[%s172 + $0x1e8] sm:$0xf] %vm1340, %v1206
      %1464 = vst.msk [vmem:[%s172 + $0x1ec] sm:$0xf] %vm1340, %v1207
      %1465 = vst.msk [vmem:[%s172 + $0x1f0] sm:$0xf] %vm1340, %v1208
      %1466 = vst.msk [vmem:[%s172 + $0x1f4] sm:$0xf] %vm1340, %v1209
      %1467 = vst.msk [vmem:[%s172 + $0x1f8] sm:$0xf] %vm1340, %v1210
      %1468 = vst.msk [vmem:[%s172 + $0x1fc] sm:$0xf] %vm1340, %v1211
      %s1469 = smul.u32 128, %s14
      %p1470 = scmp.lt.s32.totalorder %s1469, 255
      %s1471 = scalar_select %p1470, %s1469, 255
      %s1472 = smul.addr %s1471, 4
      %s1473 = scalar_lea.vmem %s3, %s1472
      // Predicated region
      $region33: #{generator_forward.16} parent=31 // pred_check
        %p1474 = pneg %p100
      $region34: #{generator_forward.16} parent=31 // pred_check_branch
        %1476 = sbr.rel (%p1474) target = $region36
      $region35: #{generator_forward.16} parent=31 // pred_region
        %s1477 = smul.u32 128, %s14
      $region36: #{generator_forward.16} parent=31 // pred_fallthru
        _
    $region32: #{generator_forward.16} parent=5 // pred_fallthru
      _
    %p1478 = scmp.le.s32.totalorder 2, %s9
    // Predicated region
    $region37: #{generator_forward.16} parent=5 // pred_check
      %p1479 = pneg %p1478
    $region38: #{generator_forward.16} parent=5 // pred_check_branch
      %1481 = sbr.rel (%p1479) target = $region40
    $region39: #{generator_forward.16} parent=5 // pred_region
      %s1482 = ssub.s32 %s9, 2
      // Predicated region
      $region41: #{generator_forward.16} parent=39 // pred_check
        %p1483 = pneg %p106
      $region42: #{generator_forward.16} parent=39 // pred_check_branch
        %1485 = sbr.rel (%p1483) target = $region44
      $region43: #{generator_forward.16} parent=39 // pred_region
        %s1486 = smul.u32 128, %s15
        %p1487 = scmp.lt.s32.totalorder %s1486, 255
        %s1488 = scalar_select %p1487, %s1486, 255
        %s1489 = smul.addr %s1488, 4
        %s1490 = scalar_lea.vmem %s3, %s1489
      $region44: #{generator_forward.16} parent=39 // pred_fallthru
        _
    $region40: #{generator_forward.16} parent=5 // pred_fallthru
      _
  $region6: #{generator_forward.16} parent=0 // loop_footer
    %s13 = sadd.s32 1, %s9
  $region7: #{generator_forward.16} parent=0 // loop_footer_branch
    %8 = sbr.rel target = $region3
  $region8: #{generator_forward.16} parent=0 // loop_exit
    _

// kernel: generator_forward.17
$region0: #{generator_forward.17}
  #allocation0 [shape = 'u32[]', space=smem, size = 0x4, offset = 0x4, fixed_abs, tag = 'smem constant byte address 0x4 - core index']
  #allocation1 [shape = 'u32[144,128]{1,0:T(1,128)}', space=vmem, size = 0x12000, scoped, tag = 'internal scratch']
  %s0 = inlined_call_operand.vmem [shape: bf16[4,2048,256], index: 0, kind: input, shape index: {}]
  %s1 = inlined_call_operand.vmem [shape: bf16[4,256,128], index: 1, kind: input, shape index: {}]
  %s2 = inlined_call_operand.vmem [shape: f32[8192,128], index: 2, kind: output, shape index: {}]
  %s3 = sld [smem:[#allocation0]]
  $region41: #{generator_forward.17} parent=0
    _
  %s5 = ssub.s32 1, %s3
  %s6 = scalar_select 0, %s5, %s3
  loop: start=0, step=1, limit=18
  $region2: #{generator_forward.17} parent=0 // loop_pre_header
    _
  $region3: #{generator_forward.17} parent=0 // loop_header
    %s8 = sphi 0, %s12
    %p9 = scmp.ge.s32.totalorder %s8, 18
    %s15 = sphi 0, %s27
    %s16 = sphi 0, %s23
    %s17 = sphi 0, %s15
    %s18 = sphi 0, %s16
    %s19 = sphi 0, %s17
    %s20 = sphi 0, %s18
    %s32 = sphi 0, %s34
    %s35 = sphi 0, %s32
    %s36 = sphi 0, %s35
    %s52 = sphi 0, %s36
    %s58 = sphi 0, %s60
    %s61 = sphi 0, %s58
    %s62 = sphi 0, %s61
    %s78 = sphi 0, %s62
    %s88 = sphi 0, %s90
    %s91 = sphi 0, %s88
    %s92 = sphi 0, %s91
    %s108 = sphi 0, %s92
  $region4: #{generator_forward.17} parent=0 // loop_header_branch
    %11 = sbr.rel (%p9) target = $region8
  $region5: #{generator_forward.17} parent=0 // loop_body
    %s13 = ssub.s32 %s8, 1
    %s14 = ssub.s32 %s8, 2
    %s21 = sadd.s32 1, %s16
    %p22 = scmp.ge.s32.totalorder %s21, 4
    %s23 = scalar_select %p22, 0, %s21
    %s24 = sadd.s32 1, %s15
    %s25 = scalar_select %p22, %s24, %s15
    %p26 = scmp.ge.s32.totalorder %s25, 4
    %s27 = scalar_select %p26, 0, %s25
    %s28 = ssub.s32 %s15, %s27
    %s29 = ssub.s32 %s16, %s23
    %s30 = sor.u32 %s28, %s29
    %p31 = scmp.eq.s32.totalorder %s30, 0
    %s33 = sadd.s32 %s32, 1
    %s34 = scalar_select %p31, %s32, %s33
    %p37 = pneg %p31
    %p38 = scmp.eq.s32.totalorder %s8, 15
    %p39 = por %p37, %p38
    %p40 = scmp.ne.s32.totalorder %s32, %s35
    %p41 = scmp.eq.s32.totalorder %s8, 0
    %p42 = por %p40, %p41
    %p43 = scmp.ne.s32.totalorder %s32, %s35
    %p44 = scmp.eq.s32.totalorder %s13, 15
    %p45 = por %p43, %p44
    %p46 = scmp.ne.s32.totalorder %s35, %s36
    %p47 = scmp.eq.s32.totalorder %s13, 0
    %p48 = por %p46, %p47
    %p49 = scmp.ne.s32.totalorder %s35, %s36
    %p50 = scmp.eq.s32.totalorder %s14, 15
    %p51 = por %p49, %p50
    %p53 = scmp.ne.s32.totalorder %s36, %s52
    %p54 = scmp.eq.s32.totalorder %s14, 0
    %p55 = por %p53, %p54
    %s56 = ssub.s32 %s15, %s27
    %p57 = scmp.eq.s32.totalorder %s56, 0
    %s59 = sadd.s32 %s58, 1
    %s60 = scalar_select %p57, %s58, %s59
    %p63 = pneg %p57
    %p64 = scmp.eq.s32.totalorder %s8, 15
    %p65 = por %p63, %p64
    %p66 = scmp.ne.s32.totalorder %s58, %s61
    %p67 = scmp.eq.s32.totalorder %s8, 0
    %p68 = por %p66, %p67
    %p69 = scmp.ne.s32.totalorder %s58, %s61
    %p70 = scmp.eq.s32.totalorder %s13, 15
    %p71 = por %p69, %p70
    %p72 = scmp.ne.s32.totalorder %s61, %s62
    %p73 = scmp.eq.s32.totalorder %s13, 0
    %p74 = por %p72, %p73
    %p75 = scmp.ne.s32.totalorder %s61, %s62
    %p76 = scmp.eq.s32.totalorder %s14, 15
    %p77 = por %p75, %p76
    %p79 = scmp.ne.s32.totalorder %s62, %s78
    %p80 = scmp.eq.s32.totalorder %s14, 0
    %p81 = por %p79, %p80
    %s82 = smul.u32 %s15, 4
    %s83 = sadd.s32 %s82, %s16
    %s84 = smul.u32 %s27, 4
    %s85 = sadd.s32 %s84, %s23
    %s86 = ssub.s32 %s83, %s85
    %p87 = scmp.eq.s32.totalorder %s86, 0
    %s89 = sadd.s32 %s88, 1
    %s90 = scalar_select %p87, %s88, %s89
    %p93 = pneg %p87
    %p94 = scmp.eq.s32.totalorder %s8, 15
    %p95 = por %p93, %p94
    %p96 = scmp.ne.s32.totalorder %s88, %s91
    %p97 = scmp.eq.s32.totalorder %s8, 0
    %p98 = por %p96, %p97
    %p99 = scmp.ne.s32.totalorder %s88, %s91
    %p100 = scmp.eq.s32.totalorder %s13, 15
    %p101 = por %p99, %p100
    %p102 = scmp.ne.s32.totalorder %s91, %s92
    %p103 = scmp.eq.s32.totalorder %s13, 0
    %p104 = por %p102, %p103
    %p105 = scmp.ne.s32.totalorder %s91, %s92
    %p106 = scmp.eq.s32.totalorder %s14, 15
    %p107 = por %p105, %p106
    %p109 = scmp.ne.s32.totalorder %s92, %s108
    %p110 = scmp.eq.s32.totalorder %s14, 0
    %p111 = por %p109, %p110
    %p112 = scmp.le.s32.totalorder 1, %s8
    %p113 = scmp.lt.s32.totalorder %s8, 17
    %p114 = pnand %p112, %p113
    %p115 = pneg %p114
    // Predicated region
    $region9: #{generator_forward.17} parent=5 // pred_check
      _
    $region10: #{generator_forward.17} parent=5 // pred_check_branch
      %117 = sbr.rel (%p114) target = $region12
    $region11: #{generator_forward.17} parent=5 // pred_region
      %s118 = ssub.s32 %s8, 1
    $region12: #{generator_forward.17} parent=5 // pred_fallthru
      _
    %p119 = scmp.lt.s32.totalorder %s8, 16
    // Predicated region
    $region13: #{generator_forward.17} parent=5 // pred_check
      %p120 = pneg %p119
    $region14: #{generator_forward.17} parent=5 // pred_check_branch
      %122 = sbr.rel (%p120) target = $region16
    $region15: #{generator_forward.17} parent=5 // pred_region
      // Predicated region
      $region17: #{generator_forward.17} parent=15 // pred_check
        %p123 = pneg %p42
      $region18: #{generator_forward.17} parent=15 // pred_check_branch
        %125 = sbr.rel (%p123) target = $region20
      $region19: #{generator_forward.17} parent=15 // pred_region
        %s126 = smul.u32 64, %s16
        %p127 = scmp.lt.s32.totalorder %s15, 3
        %s128 = scalar_select %p127, %s15, 3
        %p129 = scmp.lt.s32.totalorder %s126, 255
        %s130 = scalar_select %p129, %s126, 255
        %s131 = smul.addr %s130, 2
        %s132 = smul.addr %s128, 512
        %s133 = sadd.s32 %s131, %s132
        %s134 = smul.addr %s133, 4
        %s135 = scalar_lea.vmem %s0, %s134
        %s136 = smul.u32 64, %s16
      $region20: #{generator_forward.17} parent=15 // pred_fallthru
        _
      // Predicated region
      $region21: #{generator_forward.17} parent=15 // pred_check
        %p137 = pneg %p68
      $region22: #{generator_forward.17} parent=15 // pred_check_branch
        %139 = sbr.rel (%p137) target = $region24
      $region23: #{generator_forward.17} parent=15 // pred_region
        %p140 = scmp.lt.s32.totalorder %s15, 3
        %s141 = scalar_select %p140, %s15, 3
        %s142 = smul.addr %s141, 32
        %s143 = smul.addr %s142, 4
        %s144 = scalar_lea.vmem %s1, %s143
      $region24: #{generator_forward.17} parent=15 // pred_fallthru
        _
    $region16: #{generator_forward.17} parent=5 // pred_fallthru
      _
    %p145 = scmp.le.s32.totalorder 1, %s8
    %p146 = scmp.lt.s32.totalorder %s8, 17
    %p147 = pnand %p145, %p146
    %p148 = pneg %p147
    // Predicated region
    $region25: #{generator_forward.17} parent=5 // pred_check
      _
    $region26: #{generator_forward.17} parent=5 // pred_check_branch
      %150 = sbr.rel (%p147) target = $region28
    $region27: #{generator_forward.17} parent=5 // pred_region
      %s151 = ssub.s32 %s8, 1
      %s152 = smul.u32 64, %s18
      %p153 = scmp.lt.s32.totalorder %s17, 3
      %s154 = scalar_select %p153, %s17, 3
      %p155 = scmp.lt.s32.totalorder %s152, 255
      %s156 = scalar_select %p155, %s152, 255
      %s157 = smul.addr %s156, 2
      %s158 = smul.addr %s154, 512
      %s159 = sadd.s32 %s157, %s158
      %s160 = smul.addr %s159, 4
      %s161 = scalar_lea.vmem %s0, %s160
      %p162 = pneg %p48
      %p163 = pneg %p45
      %p164 = scmp.lt.s32.totalorder %s17, 3
      %s165 = scalar_select %p164, %s17, 3
      %s166 = smul.addr %s165, 32
      %s167 = smul.addr %s166, 4
      %s168 = scalar_lea.vmem %s1, %s167
      %p169 = pneg %p74
      %p170 = pneg %p71
      %p171 = pneg %p104
      %p172 = pneg %p101
      %s173 = smul.u32 %s17, 4
      %s174 = sadd.s32 %s173, %s18
      %s175 = smul.u32 64, %s174
      %p176 = scmp.lt.s32.totalorder %s175, 1023
      %s177 = scalar_select %p176, %s175, 1023
      %s178 = smul.addr %s177, 8
      %s179 = scalar_lea.vmem %s2, %s178
      %s180 = smul.u32 64, %s18
      %p181 = scmp.lt.s32.totalorder %s17, 3
      %s182 = scalar_select %p181, %s17, 3
      %p183 = scmp.lt.s32.totalorder %s180, 255
      %s184 = scalar_select %p183, %s180, 255
      %s185 = smul.addr %s184, 2
      %s186 = smul.addr %s182, 512
      %s187 = sadd.s32 %s185, %s186
      %s188 = smul.addr %s187, 4
      %s189 = scalar_lea.vmem %s0, %s188
      %s190 = smul.u32 64, %s18
      %p191 = scmp.lt.s32.totalorder %s17, 3
      %s192 = scalar_select %p191, %s17, 3
      %s193 = smul.addr %s192, 32
      %s194 = smul.addr %s193, 4
      %s195 = scalar_lea.vmem %s1, %s194
      %s196 = smul.u32 %s17, 4
      %s197 = sadd.s32 %s196, %s18
      %s198 = smul.u32 64, %s197
      %p199 = scmp.lt.s32.totalorder %s198, 1023
      %s200 = scalar_select %p199, %s198, 1023
      %s201 = smul.addr %s200, 8
      %s202 = scalar_lea.vmem %s2, %s201
      %s203 = smul.u32 %s17, 4
      %s204 = sadd.s32 %s203, %s18
      %s205 = smul.u32 64, %s204
      %v207 = vld [vmem:[%s189] sm:$0xff]
      %v208 = vld [vmem:[%s189 + $0x8] sm:$0xff]
      %v209 = vld [vmem:[%s189 + $0x10] sm:$0xff]
      %v210 = vld [vmem:[%s189 + $0x18] sm:$0xff]
      %v211 = vld [vmem:[%s189 + $0x20] sm:$0xff]
      %v212 = vld [vmem:[%s189 + $0x28] sm:$0xff]
      %v213 = vld [vmem:[%s189 + $0x30] sm:$0xff]
      %v214 = vld [vmem:[%s189 + $0x38] sm:$0xff]
      %v215 = vld [vmem:[%s189 + $0x40] sm:$0xff]
      %v216 = vld [vmem:[%s189 + $0x48] sm:$0xff]
      %v217 = vld [vmem:[%s189 + $0x50] sm:$0xff]
      %v218 = vld [vmem:[%s189 + $0x58] sm:$0xff]
      %v219 = vld [vmem:[%s189 + $0x60] sm:$0xff]
      %v220 = vld [vmem:[%s189 + $0x68] sm:$0xff]
      %v221 = vld [vmem:[%s189 + $0x70] sm:$0xff]
      %v222 = vld [vmem:[%s189 + $0x78] sm:$0xff]
      %v223 = vld [vmem:[%s189 + $0x80] sm:$0xff]
      %v224 = vld [vmem:[%s189 + $0x88] sm:$0xff]
      %v225 = vld [vmem:[%s189 + $0x90] sm:$0xff]
      %v226 = vld [vmem:[%s189 + $0x98] sm:$0xff]
      %v227 = vld [vmem:[%s189 + $0xa0] sm:$0xff]
      %v228 = vld [vmem:[%s189 + $0xa8] sm:$0xff]
      %v229 = vld [vmem:[%s189 + $0xb0] sm:$0xff]
      %v230 = vld [vmem:[%s189 + $0xb8] sm:$0xff]
      %v231 = vld [vmem:[%s189 + $0xc0] sm:$0xff]
      %v232 = vld [vmem:[%s189 + $0xc8] sm:$0xff]
      %v233 = vld [vmem:[%s189 + $0xd0] sm:$0xff]
      %v234 = vld [vmem:[%s189 + $0xd8] sm:$0xff]
      %v235 = vld [vmem:[%s189 + $0xe0] sm:$0xff]
      %v236 = vld [vmem:[%s189 + $0xe8] sm:$0xff]
      %v237 = vld [vmem:[%s189 + $0xf0] sm:$0xff]
      %v238 = vld [vmem:[%s189 + $0xf8] sm:$0xff]
      %v239 = vld [vmem:[%s189 + $0x100] sm:$0xff]
      %v240 = vld [vmem:[%s189 + $0x108] sm:$0xff]
      %v241 = vld [vmem:[%s189 + $0x110] sm:$0xff]
      %v242 = vld [vmem:[%s189 + $0x118] sm:$0xff]
      %v243 = vld [vmem:[%s189 + $0x120] sm:$0xff]
      %v244 = vld [vmem:[%s189 + $0x128] sm:$0xff]
      %v245 = vld [vmem:[%s189 + $0x130] sm:$0xff]
      %v246 = vld [vmem:[%s189 + $0x138] sm:$0xff]
      %v247 = vld [vmem:[%s189 + $0x140] sm:$0xff]
      %v248 = vld [vmem:[%s189 + $0x148] sm:$0xff]
      %v249 = vld [vmem:[%s189 + $0x150] sm:$0xff]
      %v250 = vld [vmem:[%s189 + $0x158] sm:$0xff]
      %v251 = vld [vmem:[%s189 + $0x160] sm:$0xff]
      %v252 = vld [vmem:[%s189 + $0x168] sm:$0xff]
      %v253 = vld [vmem:[%s189 + $0x170] sm:$0xff]
      %v254 = vld [vmem:[%s189 + $0x178] sm:$0xff]
      %v255 = vld [vmem:[%s189 + $0x180] sm:$0xff]
      %v256 = vld [vmem:[%s189 + $0x188] sm:$0xff]
      %v257 = vld [vmem:[%s189 + $0x190] sm:$0xff]
      %v258 = vld [vmem:[%s189 + $0x198] sm:$0xff]
      %v259 = vld [vmem:[%s189 + $0x1a0] sm:$0xff]
      %v260 = vld [vmem:[%s189 + $0x1a8] sm:$0xff]
      %v261 = vld [vmem:[%s189 + $0x1b0] sm:$0xff]
      %v262 = vld [vmem:[%s189 + $0x1b8] sm:$0xff]
      %v263 = vld [vmem:[%s189 + $0x1c0] sm:$0xff]
      %v264 = vld [vmem:[%s189 + $0x1c8] sm:$0xff]
      %v265 = vld [vmem:[%s189 + $0x1d0] sm:$0xff]
      %v266 = vld [vmem:[%s189 + $0x1d8] sm:$0xff]
      %v267 = vld [vmem:[%s189 + $0x1e0] sm:$0xff]
      %v268 = vld [vmem:[%s189 + $0x1e8] sm:$0xff]
      %v269 = vld [vmem:[%s189 + $0x1f0] sm:$0xff]
      %v270 = vld [vmem:[%s189 + $0x1f8] sm:$0xff]
      %v271 = vld [vmem:[%s195] sm:$0xf]
      %v272 = vld [vmem:[%s195 + $0x4] sm:$0xf]
      %v273 = vld [vmem:[%s195 + $0x8] sm:$0xf]
      %v274 = vld [vmem:[%s195 + $0xc] sm:$0xf]
      %v275 = vld [vmem:[%s195 + $0x10] sm:$0xf]
      %v276 = vld [vmem:[%s195 + $0x14] sm:$0xf]
      %v277 = vld [vmem:[%s195 + $0x18] sm:$0xf]
      %v278 = vld [vmem:[%s195 + $0x1c] sm:$0xf]
      %v279 = vld [vmem:[%s195 + $0x20] sm:$0xf]
      %v280 = vld [vmem:[%s195 + $0x24] sm:$0xf]
      %v281 = vld [vmem:[%s195 + $0x28] sm:$0xf]
      %v282 = vld [vmem:[%s195 + $0x2c] sm:$0xf]
      %v283 = vld [vmem:[%s195 + $0x30] sm:$0xf]
      %v284 = vld [vmem:[%s195 + $0x34] sm:$0xf]
      %v285 = vld [vmem:[%s195 + $0x38] sm:$0xf]
      %v286 = vld [vmem:[%s195 + $0x3c] sm:$0xf]
      %v287 = vld [vmem:[%s195 + $0x40] sm:$0xf]
      %v288 = vld [vmem:[%s195 + $0x44] sm:$0xf]
      %v289 = vld [vmem:[%s195 + $0x48] sm:$0xf]
      %v290 = vld [vmem:[%s195 + $0x4c] sm:$0xf]
      %v291 = vld [vmem:[%s195 + $0x50] sm:$0xf]
      %v292 = vld [vmem:[%s195 + $0x54] sm:$0xf]
      %v293 = vld [vmem:[%s195 + $0x58] sm:$0xf]
      %v294 = vld [vmem:[%s195 + $0x5c] sm:$0xf]
      %v295 = vld [vmem:[%s195 + $0x60] sm:$0xf]
      %v296 = vld [vmem:[%s195 + $0x64] sm:$0xf]
      %v297 = vld [vmem:[%s195 + $0x68] sm:$0xf]
      %v298 = vld [vmem:[%s195 + $0x6c] sm:$0xf]
      %v299 = vld [vmem:[%s195 + $0x70] sm:$0xf]
      %v300 = vld [vmem:[%s195 + $0x74] sm:$0xf]
      %v301 = vld [vmem:[%s195 + $0x78] sm:$0xf]
      %v302 = vld [vmem:[%s195 + $0x7c] sm:$0xf]
      %v367 = vunpack.c.l.b16 %v207
      %v368 = vunpack.c.h.b16 %v207
      %v369 = vunpack.c.l.b16 %v208
      %v370 = vunpack.c.h.b16 %v208
      %v371 = vunpack.c.l.b16 %v209
      %v372 = vunpack.c.h.b16 %v209
      %v373 = vunpack.c.l.b16 %v210
      %v374 = vunpack.c.h.b16 %v210
      %v375 = vunpack.c.l.b16 %v211
      %v376 = vunpack.c.h.b16 %v211
      %v377 = vunpack.c.l.b16 %v212
      %v378 = vunpack.c.h.b16 %v212
      %v379 = vunpack.c.l.b16 %v213
      %v380 = vunpack.c.h.b16 %v213
      %v381 = vunpack.c.l.b16 %v214
      %v382 = vunpack.c.h.b16 %v214
      %v383 = vunpack.c.l.b16 %v215
      %v384 = vunpack.c.h.b16 %v215
      %v385 = vunpack.c.l.b16 %v216
      %v386 = vunpack.c.h.b16 %v216
      %v387 = vunpack.c.l.b16 %v217
      %v388 = vunpack.c.h.b16 %v217
      %v389 = vunpack.c.l.b16 %v218
      %v390 = vunpack.c.h.b16 %v218
      %v391 = vunpack.c.l.b16 %v219
      %v392 = vunpack.c.h.b16 %v219
      %v393 = vunpack.c.l.b16 %v220
      %v394 = vunpack.c.h.b16 %v220
      %v395 = vunpack.c.l.b16 %v221
      %v396 = vunpack.c.h.b16 %v221
      %v397 = vunpack.c.l.b16 %v222
      %v398 = vunpack.c.h.b16 %v222
      %v399 = vunpack.c.l.b16 %v223
      %v400 = vunpack.c.h.b16 %v223
      %v401 = vunpack.c.l.b16 %v224
      %v402 = vunpack.c.h.b16 %v224
      %v403 = vunpack.c.l.b16 %v225
      %v404 = vunpack.c.h.b16 %v225
      %v405 = vunpack.c.l.b16 %v226
      %v406 = vunpack.c.h.b16 %v226
      %v407 = vunpack.c.l.b16 %v227
      %v408 = vunpack.c.h.b16 %v227
      %v409 = vunpack.c.l.b16 %v228
      %v410 = vunpack.c.h.b16 %v228
      %v411 = vunpack.c.l.b16 %v229
      %v412 = vunpack.c.h.b16 %v229
      %v413 = vunpack.c.l.b16 %v230
      %v414 = vunpack.c.h.b16 %v230
      %v415 = vunpack.c.l.b16 %v231
      %v416 = vunpack.c.h.b16 %v231
      %v417 = vunpack.c.l.b16 %v232
      %v418 = vunpack.c.h.b16 %v232
      %v419 = vunpack.c.l.b16 %v233
      %v420 = vunpack.c.h.b16 %v233
      %v421 = vunpack.c.l.b16 %v234
      %v422 = vunpack.c.h.b16 %v234
      %v423 = vunpack.c.l.b16 %v235
      %v424 = vunpack.c.h.b16 %v235
      %v425 = vunpack.c.l.b16 %v236
      %v426 = vunpack.c.h.b16 %v236
      %v427 = vunpack.c.l.b16 %v237
      %v428 = vunpack.c.h.b16 %v237
      %v429 = vunpack.c.l.b16 %v238
      %v430 = vunpack.c.h.b16 %v238
      %v431 = vunpack.c.l.b16 %v239
      %v432 = vunpack.c.h.b16 %v239
      %v433 = vunpack.c.l.b16 %v240
      %v434 = vunpack.c.h.b16 %v240
      %v435 = vunpack.c.l.b16 %v241
      %v436 = vunpack.c.h.b16 %v241
      %v437 = vunpack.c.l.b16 %v242
      %v438 = vunpack.c.h.b16 %v242
      %v439 = vunpack.c.l.b16 %v243
      %v440 = vunpack.c.h.b16 %v243
      %v441 = vunpack.c.l.b16 %v244
      %v442 = vunpack.c.h.b16 %v244
      %v443 = vunpack.c.l.b16 %v245
      %v444 = vunpack.c.h.b16 %v245
      %v445 = vunpack.c.l.b16 %v246
      %v446 = vunpack.c.h.b16 %v246
      %v447 = vunpack.c.l.b16 %v247
      %v448 = vunpack.c.h.b16 %v247
      %v449 = vunpack.c.l.b16 %v248
      %v450 = vunpack.c.h.b16 %v248
      %v451 = vunpack.c.l.b16 %v249
      %v452 = vunpack.c.h.b16 %v249
      %v453 = vunpack.c.l.b16 %v250
      %v454 = vunpack.c.h.b16 %v250
      %v455 = vunpack.c.l.b16 %v251
      %v456 = vunpack.c.h.b16 %v251
      %v457 = vunpack.c.l.b16 %v252
      %v458 = vunpack.c.h.b16 %v252
      %v459 = vunpack.c.l.b16 %v253
      %v460 = vunpack.c.h.b16 %v253
      %v461 = vunpack.c.l.b16 %v254
      %v462 = vunpack.c.h.b16 %v254
      %v463 = vunpack.c.l.b16 %v255
      %v464 = vunpack.c.h.b16 %v255
      %v465 = vunpack.c.l.b16 %v256
      %v466 = vunpack.c.h.b16 %v256
      %v467 = vunpack.c.l.b16 %v257
      %v468 = vunpack.c.h.b16 %v257
      %v469 = vunpack.c.l.b16 %v258
      %v470 = vunpack.c.h.b16 %v258
      %v471 = vunpack.c.l.b16 %v259
      %v472 = vunpack.c.h.b16 %v259
      %v473 = vunpack.c.l.b16 %v260
      %v474 = vunpack.c.h.b16 %v260
      %v475 = vunpack.c.l.b16 %v261
      %v476 = vunpack.c.h.b16 %v261
      %v477 = vunpack.c.l.b16 %v262
      %v478 = vunpack.c.h.b16 %v262
      %v479 = vunpack.c.l.b16 %v263
      %v480 = vunpack.c.h.b16 %v263
      %v481 = vunpack.c.l.b16 %v264
      %v482 = vunpack.c.h.b16 %v264
      %v483 = vunpack.c.l.b16 %v265
      %v484 = vunpack.c.h.b16 %v265
      %v485 = vunpack.c.l.b16 %v266
      %v486 = vunpack.c.h.b16 %v266
      %v487 = vunpack.c.l.b16 %v267
      %v488 = vunpack.c.h.b16 %v267
      %v489 = vunpack.c.l.b16 %v268
      %v490 = vunpack.c.h.b16 %v268
      %v491 = vunpack.c.l.b16 %v269
      %v492 = vunpack.c.h.b16 %v269
      %v493 = vunpack.c.l.b16 %v270
      %v494 = vunpack.c.h.b16 %v270
      %v495 = vpack.c.b16 %v369, %v367
      %v496 = vpack.c.b16 %v370, %v368
      %v497 = vpack.c.b16 %v373, %v371
      %v498 = vpack.c.b16 %v374, %v372
      %v499 = vpack.c.b16 %v377, %v375
      %v500 = vpack.c.b16 %v378, %v376
      %v501 = vpack.c.b16 %v381, %v379
      %v502 = vpack.c.b16 %v382, %v380
      %v503 = vpack.c.b16 %v385, %v383
      %v504 = vpack.c.b16 %v386, %v384
      %v505 = vpack.c.b16 %v389, %v387
      %v506 = vpack.c.b16 %v390, %v388
      %v507 = vpack.c.b16 %v393, %v391
      %v508 = vpack.c.b16 %v394, %v392
      %v509 = vpack.c.b16 %v397, %v395
      %v510 = vpack.c.b16 %v398, %v396
      %v511 = vpack.c.b16 %v401, %v399
      %v512 = vpack.c.b16 %v402, %v400
      %v513 = vpack.c.b16 %v405, %v403
      %v514 = vpack.c.b16 %v406, %v404
      %v515 = vpack.c.b16 %v409, %v407
      %v516 = vpack.c.b16 %v410, %v408
      %v517 = vpack.c.b16 %v413, %v411
      %v518 = vpack.c.b16 %v414, %v412
      %v519 = vpack.c.b16 %v417, %v415
      %v520 = vpack.c.b16 %v418, %v416
      %v521 = vpack.c.b16 %v421, %v419
      %v522 = vpack.c.b16 %v422, %v420
      %v523 = vpack.c.b16 %v425, %v423
      %v524 = vpack.c.b16 %v426, %v424
      %v525 = vpack.c.b16 %v429, %v427
      %v526 = vpack.c.b16 %v430, %v428
      %v527 = vpack.c.b16 %v433, %v431
      %v528 = vpack.c.b16 %v434, %v432
      %v529 = vpack.c.b16 %v437, %v435
      %v530 = vpack.c.b16 %v438, %v436
      %v531 = vpack.c.b16 %v441, %v439
      %v532 = vpack.c.b16 %v442, %v440
      %v533 = vpack.c.b16 %v445, %v443
      %v534 = vpack.c.b16 %v446, %v444
      %v535 = vpack.c.b16 %v449, %v447
      %v536 = vpack.c.b16 %v450, %v448
      %v537 = vpack.c.b16 %v453, %v451
      %v538 = vpack.c.b16 %v454, %v452
      %v539 = vpack.c.b16 %v457, %v455
      %v540 = vpack.c.b16 %v458, %v456
      %v541 = vpack.c.b16 %v461, %v459
      %v542 = vpack.c.b16 %v462, %v460
      %v543 = vpack.c.b16 %v465, %v463
      %v544 = vpack.c.b16 %v466, %v464
      %v545 = vpack.c.b16 %v469, %v467
      %v546 = vpack.c.b16 %v470, %v468
      %v547 = vpack.c.b16 %v473, %v471
      %v548 = vpack.c.b16 %v474, %v472
      %v549 = vpack.c.b16 %v477, %v475
      %v550 = vpack.c.b16 %v478, %v476
      %v551 = vpack.c.b16 %v481, %v479
      %v552 = vpack.c.b16 %v482, %v480
      %v553 = vpack.c.b16 %v485, %v483
      %v554 = vpack.c.b16 %v486, %v484
      %v555 = vpack.c.b16 %v489, %v487
      %v556 = vpack.c.b16 %v490, %v488
      %v557 = vpack.c.b16 %v493, %v491
      %v558 = vpack.c.b16 %v494, %v492
      %v655 = vunpack.c.l.b16 %v271
      %v656 = vunpack.c.l.b16 %v272
      %v657 = vunpack.c.l.b16 %v273
      %v658 = vunpack.c.l.b16 %v274
      %v659 = vunpack.c.l.b16 %v275
      %v660 = vunpack.c.l.b16 %v276
      %v661 = vunpack.c.l.b16 %v277
      %v662 = vunpack.c.l.b16 %v278
      %v663 = vunpack.c.l.b16 %v279
      %v664 = vunpack.c.l.b16 %v280
      %v665 = vunpack.c.l.b16 %v281
      %v666 = vunpack.c.l.b16 %v282
      %v667 = vunpack.c.l.b16 %v283
      %v668 = vunpack.c.l.b16 %v284
      %v669 = vunpack.c.l.b16 %v285
      %v670 = vunpack.c.l.b16 %v286
      %v671 = vunpack.c.l.b16 %v287
      %v672 = vunpack.c.l.b16 %v288
      %v673 = vunpack.c.l.b16 %v289
      %v674 = vunpack.c.l.b16 %v290
      %v675 = vunpack.c.l.b16 %v291
      %v676 = vunpack.c.l.b16 %v292
      %v677 = vunpack.c.l.b16 %v293
      %v678 = vunpack.c.l.b16 %v294
      %v679 = vunpack.c.l.b16 %v295
      %v680 = vunpack.c.l.b16 %v296
      %v681 = vunpack.c.l.b16 %v297
      %v682 = vunpack.c.l.b16 %v298
      %v683 = vunpack.c.l.b16 %v299
      %v684 = vunpack.c.l.b16 %v300
      %v685 = vunpack.c.l.b16 %v301
      %v686 = vunpack.c.l.b16 %v302
      %v687 = vpack.c.b16 %v656, %v655
      %v688 = vpack.c.b16 %v658, %v657
      %v689 = vpack.c.b16 %v660, %v659
      %v690 = vpack.c.b16 %v662, %v661
      %v691 = vpack.c.b16 %v664, %v663
      %v692 = vpack.c.b16 %v666, %v665
      %v693 = vpack.c.b16 %v668, %v667
      %v694 = vpack.c.b16 %v670, %v669
      %v695 = vpack.c.b16 %v672, %v671
      %v696 = vpack.c.b16 %v674, %v673
      %v697 = vpack.c.b16 %v676, %v675
      %v698 = vpack.c.b16 %v678, %v677
      %v699 = vpack.c.b16 %v680, %v679
      %v700 = vpack.c.b16 %v682, %v681
      %v701 = vpack.c.b16 %v684, %v683
      %v702 = vpack.c.b16 %v686, %v685
      %719 = vmatprep.subr.bf16.mxu0 0
      %720 = vmatpush1.bf16.msra.mxu0 %v687
      %721 = vmatprep.subr.bf16.mxu0 0
      %722 = vmatpush1.bf16.msra.mxu0 %v688
      %723 = vmatprep.subr.bf16.mxu0 0
      %724 = vmatpush1.bf16.msra.mxu0 %v689
      %725 = vmatprep.subr.bf16.mxu0 0
      %726 = vmatpush1.bf16.msra.mxu0 %v690
      %727 = vmatprep.subr.bf16.mxu0 0
      %728 = vmatpush1.bf16.msra.mxu0 %v691
      %729 = vmatprep.subr.bf16.mxu0 0
      %730 = vmatpush1.bf16.msra.mxu0 %v692
      %731 = vmatprep.subr.bf16.mxu0 0
      %732 = vmatpush1.bf16.msra.mxu0 %v693
      %733 = vmatprep.subr.bf16.mxu0 0
      %734 = vmatpush1.bf16.msra.mxu0 %v694
      %735 = vmatprep.subr.bf16.mxu0 0
      %736 = vmatpush1.bf16.msra.mxu0 %v695
      %737 = vmatprep.subr.bf16.mxu0 0
      %738 = vmatpush1.bf16.msra.mxu0 %v696
      %739 = vmatprep.subr.bf16.mxu0 0
      %740 = vmatpush1.bf16.msra.mxu0 %v697
      %741 = vmatprep.subr.bf16.mxu0 0
      %742 = vmatpush1.bf16.msra.mxu0 %v698
      %743 = vmatprep.subr.bf16.mxu0 0
      %744 = vmatpush1.bf16.msra.mxu0 %v699
      %745 = vmatprep.subr.bf16.mxu0 0
      %746 = vmatpush1.bf16.msra.mxu0 %v700
      %747 = vmatprep.subr.bf16.mxu0 0
      %748 = vmatpush1.bf16.msra.mxu0 %v701
      %749 = vmatprep.subr.bf16.mxu0 0
      %750 = vmatpush1.bf16.msra.mxu0 %v702
      %751 = vmatprep.mubr.bf16.mxu0 %v496
      %752 = vmatmul.mubr.bf16.gmra.mrb[0].mxu0 %v495
      %v753 = vpop.f32.mrb[0].mxu0
      %v754 = vadd.f32 0.0, %v753
      %v755 = vpop.f32.mrb[0].mxu0
      %v756 = vpop.f32.mrb[0].mxu0
      %v757 = vadd.f32 0.0, %v756
      %v758 = vpop.f32.mrb[0].mxu0
      %759 = vmatprep.mubr.bf16.mxu0 %v498
      %760 = vmatmul.mubr.bf16.gmra.mrb[0].mxu0 %v497
      %v761 = vpop.f32.mrb[0].mxu0
      %v762 = vadd.f32 0.0, %v761
      %v763 = vpop.f32.mrb[0].mxu0
      %v764 = vpop.f32.mrb[0].mxu0
      %v765 = vadd.f32 0.0, %v764
      %v766 = vpop.f32.mrb[0].mxu0
      %767 = vmatprep.mubr.bf16.mxu0 %v500
      %768 = vmatmul.mubr.bf16.gmra.mrb[0].mxu0 %v499
      %v769 = vpop.f32.mrb[0].mxu0
      %v770 = vadd.f32 0.0, %v769
      %v771 = vpop.f32.mrb[0].mxu0
      %v772 = vpop.f32.mrb[0].mxu0
      %v773 = vadd.f32 0.0, %v772
      %v774 = vpop.f32.mrb[0].mxu0
      %775 = vmatprep.mubr.bf16.mxu0 %v502
      %776 = vmatmul.mubr.bf16.gmra.mrb[0].mxu0 %v501
      %v777 = vpop.f32.mrb[0].mxu0
      %v778 = vadd.f32 0.0, %v777
      %v779 = vpop.f32.mrb[0].mxu0
      %v780 = vpop.f32.mrb[0].mxu0
      %v781 = vadd.f32 0.0, %v780
      %v782 = vpop.f32.mrb[0].mxu0
      %783 = vmatprep.mubr.bf16.mxu0 %v504
      %784 = vmatmul.mubr.bf16.gmra.mrb[0].mxu0 %v503
      %v785 = vpop.f32.mrb[0].mxu0
      %v786 = vadd.f32 0.0, %v785
      %v787 = vpop.f32.mrb[0].mxu0
      %v788 = vpop.f32.mrb[0].mxu0
      %v789 = vadd.f32 0.0, %v788
      %v790 = vpop.f32.mrb[0].mxu0
      %791 = vmatprep.mubr.bf16.mxu0 %v506
      %792 = vmatmul.mubr.bf16.gmra.mrb[0].mxu0 %v505
      %v793 = vpop.f32.mrb[0].mxu0
      %v794 = vadd.f32 0.0, %v793
      %v795 = vpop.f32.mrb[0].mxu0
      %v796 = vpop.f32.mrb[0].mxu0
      %v797 = vadd.f32 0.0, %v796
      %v798 = vpop.f32.mrb[0].mxu0
      %799 = vmatprep.mubr.bf16.mxu0 %v508
      %800 = vmatmul.mubr.bf16.gmra.mrb[0].mxu0 %v507
      %v801 = vpop.f32.mrb[0].mxu0
      %v802 = vadd.f32 0.0, %v801
      %v803 = vpop.f32.mrb[0].mxu0
      %v804 = vpop.f32.mrb[0].mxu0
      %v805 = vadd.f32 0.0, %v804
      %v806 = vpop.f32.mrb[0].mxu0
      %807 = vmatprep.mubr.bf16.mxu0 %v510
      %808 = vmatmul.mubr.bf16.gmra.mrb[0].mxu0 %v509
      %v809 = vpop.f32.mrb[0].mxu0
      %v810 = vadd.f32 0.0, %v809
      %v811 = vpop.f32.mrb[0].mxu0
      %v812 = vpop.f32.mrb[0].mxu0
      %v813 = vadd.f32 0.0, %v812
      %v814 = vpop.f32.mrb[0].mxu0
      %815 = vmatprep.mubr.bf16.mxu0 %v512
      %816 = vmatmul.mubr.bf16.gmra.mrb[0].mxu0 %v511
      %v817 = vpop.f32.mrb[0].mxu0
      %v818 = vadd.f32 0.0, %v817
      %v819 = vpop.f32.mrb[0].mxu0
      %v820 = vpop.f32.mrb[0].mxu0
      %v821 = vadd.f32 0.0, %v820
      %v822 = vpop.f32.mrb[0].mxu0
      %823 = vmatprep.mubr.bf16.mxu0 %v514
      %824 = vmatmul.mubr.bf16.gmra.mrb[0].mxu0 %v513
      %v825 = vpop.f32.mrb[0].mxu0
      %v826 = vadd.f32 0.0, %v825
      %v827 = vpop.f32.mrb[0].mxu0
      %v828 = vpop.f32.mrb[0].mxu0
      %v829 = vadd.f32 0.0, %v828
      %v830 = vpop.f32.mrb[0].mxu0
      %831 = vmatprep.mubr.bf16.mxu0 %v516
      %832 = vmatmul.mubr.bf16.gmra.mrb[0].mxu0 %v515
      %v833 = vpop.f32.mrb[0].mxu0
      %v834 = vadd.f32 0.0, %v833
      %v835 = vpop.f32.mrb[0].mxu0
      %v836 = vpop.f32.mrb[0].mxu0
      %v837 = vadd.f32 0.0, %v836
      %v838 = vpop.f32.mrb[0].mxu0
      %839 = vmatprep.mubr.bf16.mxu0 %v518
      %840 = vmatmul.mubr.bf16.gmra.mrb[0].mxu0 %v517
      %v841 = vpop.f32.mrb[0].mxu0
      %v842 = vadd.f32 0.0, %v841
      %v843 = vpop.f32.mrb[0].mxu0
      %v844 = vpop.f32.mrb[0].mxu0
      %v845 = vadd.f32 0.0, %v844
      %v846 = vpop.f32.mrb[0].mxu0
      %847 = vmatprep.mubr.bf16.mxu0 %v520
      %848 = vmatmul.mubr.bf16.gmra.mrb[0].mxu0 %v519
      %v849 = vpop.f32.mrb[0].mxu0
      %v850 = vadd.f32 0.0, %v849
      %v851 = vpop.f32.mrb[0].mxu0
      %v852 = vpop.f32.mrb[0].mxu0
      %v853 = vadd.f32 0.0, %v852
      %v854 = vpop.f32.mrb[0].mxu0
      %855 = vmatprep.mubr.bf16.mxu0 %v522
      %856 = vmatmul.mubr.bf16.gmra.mrb[0].mxu0 %v521
      %v857 = vpop.f32.mrb[0].mxu0
      %v858 = vadd.f32 0.0, %v857
      %v859 = vpop.f32.mrb[0].mxu0
      %v860 = vpop.f32.mrb[0].mxu0
      %v861 = vadd.f32 0.0, %v860
      %v862 = vpop.f32.mrb[0].mxu0
      %863 = vmatprep.mubr.bf16.mxu0 %v524
      %864 = vmatmul.mubr.bf16.gmra.mrb[0].mxu0 %v523
      %v865 = vpop.f32.mrb[0].mxu0
      %v866 = vadd.f32 0.0, %v865
      %v867 = vpop.f32.mrb[0].mxu0
      %v868 = vpop.f32.mrb[0].mxu0
      %v869 = vadd.f32 0.0, %v868
      %v870 = vpop.f32.mrb[0].mxu0
      %871 = vmatprep.mubr.bf16.mxu0 %v526
      %872 = vmatmul.mubr.bf16.gmra.mrb[0].mxu0 %v525
      %v873 = vpop.f32.mrb[0].mxu0
      %v874 = vadd.f32 0.0, %v873
      %v875 = vpop.f32.mrb[0].mxu0
      %v876 = vpop.f32.mrb[0].mxu0
      %v877 = vadd.f32 0.0, %v876
      %v878 = vpop.f32.mrb[0].mxu0
      %879 = vmatprep.mubr.bf16.mxu0 %v528
      %880 = vmatmul.mubr.bf16.gmra.mrb[0].mxu0 %v527
      %v881 = vpop.f32.mrb[0].mxu0
      %v882 = vadd.f32 0.0, %v881
      %v883 = vpop.f32.mrb[0].mxu0
      %v884 = vpop.f32.mrb[0].mxu0
      %v885 = vadd.f32 0.0, %v884
      %v886 = vpop.f32.mrb[0].mxu0
      %887 = vmatprep.mubr.bf16.mxu0 %v530
      %888 = vmatmul.mubr.bf16.gmra.mrb[0].mxu0 %v529
      %v889 = vpop.f32.mrb[0].mxu0
      %v890 = vadd.f32 0.0, %v889
      %v891 = vpop.f32.mrb[0].mxu0
      %v892 = vpop.f32.mrb[0].mxu0
      %v893 = vadd.f32 0.0, %v892
      %v894 = vpop.f32.mrb[0].mxu0
      %895 = vmatprep.mubr.bf16.mxu0 %v532
      %896 = vmatmul.mubr.bf16.gmra.mrb[0].mxu0 %v531
      %v897 = vpop.f32.mrb[0].mxu0
      %v898 = vadd.f32 0.0, %v897
      %v899 = vpop.f32.mrb[0].mxu0
      %v900 = vpop.f32.mrb[0].mxu0
      %v901 = vadd.f32 0.0, %v900
      %v902 = vpop.f32.mrb[0].mxu0
      %903 = vmatprep.mubr.bf16.mxu0 %v534
      %904 = vmatmul.mubr.bf16.gmra.mrb[0].mxu0 %v533
      %v905 = vpop.f32.mrb[0].mxu0
      %v906 = vadd.f32 0.0, %v905
      %v907 = vpop.f32.mrb[0].mxu0
      %v908 = vpop.f32.mrb[0].mxu0
      %v909 = vadd.f32 0.0, %v908
      %v910 = vpop.f32.mrb[0].mxu0
      %911 = vmatprep.mubr.bf16.mxu0 %v536
      %912 = vmatmul.mubr.bf16.gmra.mrb[0].mxu0 %v535
      %v913 = vpop.f32.mrb[0].mxu0
      %v914 = vadd.f32 0.0, %v913
      %v915 = vpop.f32.mrb[0].mxu0
      %v916 = vpop.f32.mrb[0].mxu0
      %v917 = vadd.f32 0.0, %v916
      %v918 = vpop.f32.mrb[0].mxu0
      %919 = vmatprep.mubr.bf16.mxu0 %v538
      %920 = vmatmul.mubr.bf16.gmra.mrb[0].mxu0 %v537
      %v921 = vpop.f32.mrb[0].mxu0
      %v922 = vadd.f32 0.0, %v921
      %v923 = vpop.f32.mrb[0].mxu0
      %v924 = vpop.f32.mrb[0].mxu0
      %v925 = vadd.f32 0.0, %v924
      %v926 = vpop.f32.mrb[0].mxu0
      %927 = vmatprep.mubr.bf16.mxu0 %v540
      %928 = vmatmul.mubr.bf16.gmra.mrb[0].mxu0 %v539
      %v929 = vpop.f32.mrb[0].mxu0
      %v930 = vadd.f32 0.0, %v929
      %v931 = vpop.f32.mrb[0].mxu0
      %v932 = vpop.f32.mrb[0].mxu0
      %v933 = vadd.f32 0.0, %v932
      %v934 = vpop.f32.mrb[0].mxu0
      %935 = vmatprep.mubr.bf16.mxu0 %v542
      %936 = vmatmul.mubr.bf16.gmra.mrb[0].mxu0 %v541
      %v937 = vpop.f32.mrb[0].mxu0
      %v938 = vadd.f32 0.0, %v937
      %v939 = vpop.f32.mrb[0].mxu0
      %v940 = vpop.f32.mrb[0].mxu0
      %v941 = vadd.f32 0.0, %v940
      %v942 = vpop.f32.mrb[0].mxu0
      %943 = vmatprep.mubr.bf16.mxu0 %v544
      %944 = vmatmul.mubr.bf16.gmra.mrb[0].mxu0 %v543
      %v945 = vpop.f32.mrb[0].mxu0
      %v946 = vadd.f32 0.0, %v945
      %v947 = vpop.f32.mrb[0].mxu0
      %v948 = vpop.f32.mrb[0].mxu0
      %v949 = vadd.f32 0.0, %v948
      %v950 = vpop.f32.mrb[0].mxu0
      %951 = vmatprep.mubr.bf16.mxu0 %v546
      %952 = vmatmul.mubr.bf16.gmra.mrb[0].mxu0 %v545
      %v953 = vpop.f32.mrb[0].mxu0
      %v954 = vadd.f32 0.0, %v953
      %v955 = vpop.f32.mrb[0].mxu0
      %v956 = vpop.f32.mrb[0].mxu0
      %v957 = vadd.f32 0.0, %v956
      %v958 = vpop.f32.mrb[0].mxu0
      %959 = vmatprep.mubr.bf16.mxu0 %v548
      %960 = vmatmul.mubr.bf16.gmra.mrb[0].mxu0 %v547
      %v961 = vpop.f32.mrb[0].mxu0
      %v962 = vadd.f32 0.0, %v961
      %v963 = vpop.f32.mrb[0].mxu0
      %v964 = vpop.f32.mrb[0].mxu0
      %v965 = vadd.f32 0.0, %v964
      %v966 = vpop.f32.mrb[0].mxu0
      %967 = vmatprep.mubr.bf16.mxu0 %v550
      %968 = vmatmul.mubr.bf16.gmra.mrb[0].mxu0 %v549
      %v969 = vpop.f32.mrb[0].mxu0
      %v970 = vadd.f32 0.0, %v969
      %v971 = vpop.f32.mrb[0].mxu0
      %v972 = vpop.f32.mrb[0].mxu0
      %v973 = vadd.f32 0.0, %v972
      %v974 = vpop.f32.mrb[0].mxu0
      %975 = vmatprep.mubr.bf16.mxu0 %v552
      %976 = vmatmul.mubr.bf16.gmra.mrb[0].mxu0 %v551
      %v977 = vpop.f32.mrb[0].mxu0
      %v978 = vadd.f32 0.0, %v977
      %v979 = vpop.f32.mrb[0].mxu0
      %v980 = vpop.f32.mrb[0].mxu0
      %v981 = vadd.f32 0.0, %v980
      %v982 = vpop.f32.mrb[0].mxu0
      %983 = vmatprep.mubr.bf16.mxu0 %v554
      %984 = vmatmul.mubr.bf16.gmra.mrb[0].mxu0 %v553
      %v985 = vpop.f32.mrb[0].mxu0
      %v986 = vadd.f32 0.0, %v985
      %v987 = vpop.f32.mrb[0].mxu0
      %v988 = vpop.f32.mrb[0].mxu0
      %v989 = vadd.f32 0.0, %v988
      %v990 = vpop.f32.mrb[0].mxu0
      %991 = vmatprep.mubr.bf16.mxu0 %v556
      %992 = vmatmul.mubr.bf16.gmra.mrb[0].mxu0 %v555
      %v993 = vpop.f32.mrb[0].mxu0
      %v994 = vadd.f32 0.0, %v993
      %v995 = vpop.f32.mrb[0].mxu0
      %v996 = vpop.f32.mrb[0].mxu0
      %v997 = vadd.f32 0.0, %v996
      %v998 = vpop.f32.mrb[0].mxu0
      %999 = vmatprep.mubr.bf16.mxu0 %v558
      %1000 = vmatmul.mubr.bf16.gmra.mrb[0].mxu0 %v557
      %v1001 = vpop.f32.mrb[0].mxu0
      %v1002 = vadd.f32 0.0, %v1001
      %v1003 = vpop.f32.mrb[0].mxu0
      %v1004 = vpop.f32.mrb[0].mxu0
      %v1005 = vadd.f32 0.0, %v1004
      %v1006 = vpop.f32.mrb[0].mxu0
      %1007 = vdwg.mxu0
      %v1008 = vtanh.pop %v754
      %v1009 = vtanh.pop %v757
      %v1010 = vtanh.pop %v762
      %v1011 = vtanh.pop %v765
      %v1012 = vtanh.pop %v770
      %v1013 = vtanh.pop %v773
      %v1014 = vtanh.pop %v778
      %v1015 = vtanh.pop %v781
      %v1016 = vtanh.pop %v786
      %v1017 = vtanh.pop %v789
      %v1018 = vtanh.pop %v794
      %v1019 = vtanh.pop %v797
      %v1020 = vtanh.pop %v802
      %v1021 = vtanh.pop %v805
      %v1022 = vtanh.pop %v810
      %v1023 = vtanh.pop %v813
      %v1024 = vtanh.pop %v818
      %v1025 = vtanh.pop %v821
      %v1026 = vtanh.pop %v826
      %v1027 = vtanh.pop %v829
      %v1028 = vtanh.pop %v834
      %v1029 = vtanh.pop %v837
      %v1030 = vtanh.pop %v842
      %v1031 = vtanh.pop %v845
      %v1032 = vtanh.pop %v850
      %v1033 = vtanh.pop %v853
      %v1034 = vtanh.pop %v858
      %v1035 = vtanh.pop %v861
      %v1036 = vtanh.pop %v866
      %v1037 = vtanh.pop %v869
      %v1038 = vtanh.pop %v874
      %v1039 = vtanh.pop %v877
      %v1040 = vtanh.pop %v882
      %v1041 = vtanh.pop %v885
      %v1042 = vtanh.pop %v890
      %v1043 = vtanh.pop %v893
      %v1044 = vtanh.pop %v898
      %v1045 = vtanh.pop %v901
      %v1046 = vtanh.pop %v906
      %v1047 = vtanh.pop %v909
      %v1048 = vtanh.pop %v914
      %v1049 = vtanh.pop %v917
      %v1050 = vtanh.pop %v922
      %v1051 = vtanh.pop %v925
      %v1052 = vtanh.pop %v930
      %v1053 = vtanh.pop %v933
      %v1054 = vtanh.pop %v938
      %v1055 = vtanh.pop %v941
      %v1056 = vtanh.pop %v946
      %v1057 = vtanh.pop %v949
      %v1058 = vtanh.pop %v954
      %v1059 = vtanh.pop %v957
      %v1060 = vtanh.pop %v962
      %v1061 = vtanh.pop %v965
      %v1062 = vtanh.pop %v970
      %v1063 = vtanh.pop %v973
      %v1064 = vtanh.pop %v978
      %v1065 = vtanh.pop %v981
      %v1066 = vtanh.pop %v986
      %v1067 = vtanh.pop %v989
      %v1068 = vtanh.pop %v994
      %v1069 = vtanh.pop %v997
      %v1070 = vtanh.pop %v1002
      %v1071 = vtanh.pop %v1005
      %1072 = vst [vmem:[%s202] sm:$0xff] %v1008
      %1073 = vst [vmem:[%s202 + $0x8] sm:$0xff] %v1009
      %1074 = vst [vmem:[%s202 + $0x10] sm:$0xff] %v1010
      %1075 = vst [vmem:[%s202 + $0x18] sm:$0xff] %v1011
      %1076 = vst [vmem:[%s202 + $0x20] sm:$0xff] %v1012
      %1077 = vst [vmem:[%s202 + $0x28] sm:$0xff] %v1013
      %1078 = vst [vmem:[%s202 + $0x30] sm:$0xff] %v1014
      %1079 = vst [vmem:[%s202 + $0x38] sm:$0xff] %v1015
      %1080 = vst [vmem:[%s202 + $0x40] sm:$0xff] %v1016
      %1081 = vst [vmem:[%s202 + $0x48] sm:$0xff] %v1017
      %1082 = vst [vmem:[%s202 + $0x50] sm:$0xff] %v1018
      %1083 = vst [vmem:[%s202 + $0x58] sm:$0xff] %v1019
      %1084 = vst [vmem:[%s202 + $0x60] sm:$0xff] %v1020
      %1085 = vst [vmem:[%s202 + $0x68] sm:$0xff] %v1021
      %1086 = vst [vmem:[%s202 + $0x70] sm:$0xff] %v1022
      %1087 = vst [vmem:[%s202 + $0x78] sm:$0xff] %v1023
      %1088 = vst [vmem:[%s202 + $0x80] sm:$0xff] %v1024
      %1089 = vst [vmem:[%s202 + $0x88] sm:$0xff] %v1025
      %1090 = vst [vmem:[%s202 + $0x90] sm:$0xff] %v1026
      %1091 = vst [vmem:[%s202 + $0x98] sm:$0xff] %v1027
      %1092 = vst [vmem:[%s202 + $0xa0] sm:$0xff] %v1028
      %1093 = vst [vmem:[%s202 + $0xa8] sm:$0xff] %v1029
      %1094 = vst [vmem:[%s202 + $0xb0] sm:$0xff] %v1030
      %1095 = vst [vmem:[%s202 + $0xb8] sm:$0xff] %v1031
      %1096 = vst [vmem:[%s202 + $0xc0] sm:$0xff] %v1032
      %1097 = vst [vmem:[%s202 + $0xc8] sm:$0xff] %v1033
      %1098 = vst [vmem:[%s202 + $0xd0] sm:$0xff] %v1034
      %1099 = vst [vmem:[%s202 + $0xd8] sm:$0xff] %v1035
      %1100 = vst [vmem:[%s202 + $0xe0] sm:$0xff] %v1036
      %1101 = vst [vmem:[%s202 + $0xe8] sm:$0xff] %v1037
      %1102 = vst [vmem:[%s202 + $0xf0] sm:$0xff] %v1038
      %1103 = vst [vmem:[%s202 + $0xf8] sm:$0xff] %v1039
      %1104 = vst [vmem:[%s202 + $0x100] sm:$0xff] %v1040
      %1105 = vst [vmem:[%s202 + $0x108] sm:$0xff] %v1041
      %1106 = vst [vmem:[%s202 + $0x110] sm:$0xff] %v1042
      %1107 = vst [vmem:[%s202 + $0x118] sm:$0xff] %v1043
      %1108 = vst [vmem:[%s202 + $0x120] sm:$0xff] %v1044
      %1109 = vst [vmem:[%s202 + $0x128] sm:$0xff] %v1045
      %1110 = vst [vmem:[%s202 + $0x130] sm:$0xff] %v1046
      %1111 = vst [vmem:[%s202 + $0x138] sm:$0xff] %v1047
      %1112 = vst [vmem:[%s202 + $0x140] sm:$0xff] %v1048
      %1113 = vst [vmem:[%s202 + $0x148] sm:$0xff] %v1049
      %1114 = vst [vmem:[%s202 + $0x150] sm:$0xff] %v1050
      %1115 = vst [vmem:[%s202 + $0x158] sm:$0xff] %v1051
      %1116 = vst [vmem:[%s202 + $0x160] sm:$0xff] %v1052
      %1117 = vst [vmem:[%s202 + $0x168] sm:$0xff] %v1053
      %1118 = vst [vmem:[%s202 + $0x170] sm:$0xff] %v1054
      %1119 = vst [vmem:[%s202 + $0x178] sm:$0xff] %v1055
      %1120 = vst [vmem:[%s202 + $0x180] sm:$0xff] %v1056
      %1121 = vst [vmem:[%s202 + $0x188] sm:$0xff] %v1057
      %1122 = vst [vmem:[%s202 + $0x190] sm:$0xff] %v1058
      %1123 = vst [vmem:[%s202 + $0x198] sm:$0xff] %v1059
      %1124 = vst [vmem:[%s202 + $0x1a0] sm:$0xff] %v1060
      %1125 = vst [vmem:[%s202 + $0x1a8] sm:$0xff] %v1061
      %1126 = vst [vmem:[%s202 + $0x1b0] sm:$0xff] %v1062
      %1127 = vst [vmem:[%s202 + $0x1b8] sm:$0xff] %v1063
      %1128 = vst [vmem:[%s202 + $0x1c0] sm:$0xff] %v1064
      %1129 = vst [vmem:[%s202 + $0x1c8] sm:$0xff] %v1065
      %1130 = vst [vmem:[%s202 + $0x1d0] sm:$0xff] %v1066
      %1131 = vst [vmem:[%s202 + $0x1d8] sm:$0xff] %v1067
      %1132 = vst [vmem:[%s202 + $0x1e0] sm:$0xff] %v1068
      %1133 = vst [vmem:[%s202 + $0x1e8] sm:$0xff] %v1069
      %1134 = vst [vmem:[%s202 + $0x1f0] sm:$0xff] %v1070
      %1135 = vst [vmem:[%s202 + $0x1f8] sm:$0xff] %v1071
      %s1136 = smul.u32 %s17, 4
      %s1137 = sadd.s32 %s1136, %s18
      %s1138 = smul.u32 64, %s1137
      %p1139 = scmp.lt.s32.totalorder %s1138, 1023
      %s1140 = scalar_select %p1139, %s1138, 1023
      %s1141 = smul.addr %s1140, 8
      %s1142 = scalar_lea.vmem %s2, %s1141
      // Predicated region
      $region29: #{generator_forward.17} parent=27 // pred_check
        %p1143 = pneg %p101
      $region30: #{generator_forward.17} parent=27 // pred_check_branch
        %1145 = sbr.rel (%p1143) target = $region32
      $region31: #{generator_forward.17} parent=27 // pred_region
        %s1146 = smul.u32 %s17, 4
        %s1147 = sadd.s32 %s1146, %s18
        %s1148 = smul.u32 64, %s1147
      $region32: #{generator_forward.17} parent=27 // pred_fallthru
        _
    $region28: #{generator_forward.17} parent=5 // pred_fallthru
      _
    %p1149 = scmp.le.s32.totalorder 2, %s8
    // Predicated region
    $region33: #{generator_forward.17} parent=5 // pred_check
      %p1150 = pneg %p1149
    $region34: #{generator_forward.17} parent=5 // pred_check_branch
      %1152 = sbr.rel (%p1150) target = $region36
    $region35: #{generator_forward.17} parent=5 // pred_region
      %s1153 = ssub.s32 %s8, 2
      // Predicated region
      $region37: #{generator_forward.17} parent=35 // pred_check
        %p1154 = pneg %p107
      $region38: #{generator_forward.17} parent=35 // pred_check_branch
        %1156 = sbr.rel (%p1154) target = $region40
      $region39: #{generator_forward.17} parent=35 // pred_region
        %s1157 = smul.u32 %s19, 4
        %s1158 = sadd.s32 %s1157, %s20
        %s1159 = smul.u32 64, %s1158
        %p1160 = scmp.lt.s32.totalorder %s1159, 1023
        %s1161 = scalar_select %p1160, %s1159, 1023
        %s1162 = smul.addr %s1161, 8
        %s1163 = scalar_lea.vmem %s2, %s1162
      $region40: #{generator_forward.17} parent=35 // pred_fallthru
        _
    $region36: #{generator_forward.17} parent=5 // pred_fallthru
      _
  $region6: #{generator_forward.17} parent=0 // loop_footer
    %s12 = sadd.s32 1, %s8
  $region7: #{generator_forward.17} parent=0 // loop_footer_branch
    %7 = sbr.rel target = $region3
  $region8: #{generator_forward.17} parent=0 // loop_exit
    _

</llo_original>
